<compile_context>
chip_gen: v7x
topology: tpu7x:2x2x1
jax: 0.10.0
libtpu: 0.0.40
codegen_flags: <defaults>
</compile_context>

<pallas_src>
import math

import numpy as np
import jax
import jax.numpy as jnp
from jax import lax
from jax.experimental import pallas as pl
from jax.experimental.pallas import tpu as pltpu

LANE = 128    # every activation slab is (rows, W*C) with W*C <= 128 lanes
GROUP = 8     # images folded into the matmul M dimension per grid step


def _is_pow2(n):
    return n > 0 and (n & (n - 1)) == 0


# ----------------------------------------------------------------------------
# Parameter construction (deterministic, mirrors the PyTorch module shapes)
# ----------------------------------------------------------------------------
def build_resnet_params(key, nf=8, num_classes=10, num_blocks=(2, 2, 2, 2)):
    keys = iter(jax.random.split(key, 256))

    def conv_p(cout, cin, k):
        fan_in = cin * k * k
        bound = 1.0 / math.sqrt(fan_in)   # kaiming_uniform_(a=sqrt(5))
        return jax.random.uniform(next(keys), (cout, cin, k, k), jnp.float32,
                                  -bound, bound)

    def bn_p(c):
        return dict(
            gamma=jax.random.uniform(next(keys), (c,), jnp.float32, 0.5, 1.5),
            beta=jax.random.uniform(next(keys), (c,), jnp.float32, -0.1, 0.1),
            mean=jax.random.uniform(next(keys), (c,), jnp.float32, -0.1, 0.1),
            var=jax.random.uniform(next(keys), (c,), jnp.float32, 0.5, 1.5),
        )

    params = {"conv1": conv_p(nf, 3, 3), "bn1": bn_p(nf)}

    blocks = []
    in_planes = nf
    for planes, stage_stride, nb in zip(
            [nf, nf * 2, nf * 4, nf * 8], [1, 2, 2, 2], num_blocks):
        strides = [stage_stride] + [1] * (nb - 1)
        for st in strides:
            blk = {
                "conv1": conv_p(planes, in_planes, 3),
                "bn1": bn_p(planes),
                "conv2": conv_p(planes, planes, 3),
                "bn2": bn_p(planes),
            }
            if st != 1 or in_planes != planes:
                blk["conv3"] = conv_p(planes, in_planes, 1)
                blk["bn3"] = bn_p(planes)
            blocks.append((blk, st))
            in_planes = planes
    params["blocks"] = blocks

    in_feat = nf * 8
    lb = 1.0 / math.sqrt(in_feat)
    params["linear_w"] = jax.random.uniform(
        next(keys), (num_classes, in_feat), jnp.float32, -lb, lb)
    params["linear_b"] = jax.random.uniform(
        next(keys), (num_classes,), jnp.float32, -lb, lb)
    return params


# ----------------------------------------------------------------------------
# Host-side weight lowering: fold BN, bake each conv into per-row-tap
# (128,128) lane-mixing matrices + a (128,) bias row.
# ----------------------------------------------------------------------------
def _fold_bn(w, bn, eps=1e-5):
    w = np.asarray(w, np.float32)
    gamma = np.asarray(bn["gamma"], np.float32)
    beta = np.asarray(bn["beta"], np.float32)
    mean = np.asarray(bn["mean"], np.float32)
    var = np.asarray(bn["var"], np.float32)
    scale = gamma / np.sqrt(var + eps)
    return w * scale[:, None, None, None], beta - mean * scale


def _conv_lane_mats(w_eff, win, wout, stride, pad):
    """One (LANE,LANE) lane-mixing matrix per kernel row ky.  Lane layout:
    idx = w*C + c.  Folds the kx taps, W-stride, W zero-padding, channel
    mixing and the BN scale.  H-direction shifts/stride are done in-kernel."""
    cout, cin, kh, kw = w_eff.shape
    assert win * cin <= LANE and wout * cout <= LANE, "W*C must fit in 128 lanes"
    mats = []
    for ky in range(kh):
        m = np.zeros((LANE, LANE), np.float32)
        for kx in range(kw):
            for wo in range(wout):
                wi = stride * wo + kx - pad
                if 0 <= wi < win:
                    m[wi * cin:(wi + 1) * cin, wo * cout:(wo + 1) * cout] += \
                        w_eff[:, :, ky, kx].T
        mats.append(m)
    return mats


def _bias_row(bias_c, wout):
    cout = bias_c.shape[0]
    row = np.zeros((LANE,), np.float32)
    for wo in range(wout):
        row[wo * cout:(wo + 1) * cout] = bias_c
    return row


def pack_network(params, hw=16, num_classes=10):
    """Returns (wpack bf16 (NM,128,128), wpair bf16 (NP,128,256),
    bpack f32 (NB,128), static cfg)."""
    mats, biases, pairs = [], [], []

    def add_mats(ms):
        i = len(mats); mats.extend(ms); return i

    def add_bias(b_c, wout):
        i = len(biases); biases.append(_bias_row(b_c, wout)); return i

    size = hw
    cin0 = params["conv1"].shape[1]
    assert size * cin0 <= LANE and _is_pow2(size)

    w_eff, b_c = _fold_bn(params["conv1"], params["bn1"])
    stem = dict(h=size, w=add_mats(_conv_lane_mats(w_eff, size, size, 1, 1)),
                b=add_bias(b_c, size))

    blocks = []
    for blk, stride in params["blocks"]:
        hin, hout = size, size // stride
        w1_eff, b1c = _fold_bn(blk["conv1"], blk["bn1"])
        w2_eff, b2c = _fold_bn(blk["conv2"], blk["bn2"])
        if stride == 1:
            assert "conv3" not in blk, "stride-1 projection shortcut unsupported"
            entry = dict(
                down=False, hin=hin,
                w1=add_mats(_conv_lane_mats(w1_eff, hin, hout, 1, 1)),
                b1=add_bias(b1c, hout),
                w2=add_mats(_conv_lane_mats(w2_eff, hout, hout, 1, 1)),
                b2=add_bias(b2c, hout))
        else:
            assert stride == 2 and "conv3" in blk
            wsc_eff, bscc = _fold_bn(blk["conv3"], blk["bn3"])
            m1 = _conv_lane_mats(w1_eff, hin, hout, stride, 1)      # ky = 0,1,2
            msc = _conv_lane_mats(wsc_eff, hin, hout, stride, 0)[0]
            entry = dict(
                down=True, hin=hin,
                w1=add_mats([m1[0], m1[2]]),          # +-1 row taps of conv1
                wp=len(pairs),                        # [centre tap | 1x1 shortcut]
                b1=add_bias(b1c, hout),
                bsc=add_bias(bscc, hout),
                w2=add_mats(_conv_lane_mats(w2_eff, hout, hout, 1, 1)),
                b2=add_bias(b2c, hout))
            pairs.append(np.concatenate([m1[1], msc], axis=1))      # (128, 256)
        blocks.append(entry)
        size = hout

    # global average pool + Linear fused into a single (LANE,LANE) matrix
    wlin = np.asarray(params["linear_w"], np.float32)   # (num_classes, C)
    blin = np.asarray(params["linear_b"], np.float32)
    c_last = wlin.shape[1]
    mhead = np.zeros((LANE, LANE), np.float32)
    for w in range(size):
        mhead[w * c_last:(w + 1) * c_last, :num_classes] = wlin.T / (size * size)
    bhead = np.zeros((LANE,), np.float32)
    bhead[:num_classes] = blin
    head = dict(h=size, w=add_mats([mhead]), b=len(biases))
    biases.append(bhead)

    cfg = dict(stem=stem, blocks=blocks, head=head, num_classes=num_classes)
    if not pairs:
        pairs = [np.zeros((LANE, 2 * LANE), np.float32)]
    wpack = jnp.asarray(np.stack(mats), dtype=jnp.bfloat16)     # (NM,128,128)
    wpair = jnp.asarray(np.stack(pairs), dtype=jnp.bfloat16)    # (NP,128,256)
    bpack = jnp.asarray(np.stack(biases), dtype=jnp.float32)    # (NB,128)
    return wpack, wpair, bpack, cfg


# ----------------------------------------------------------------------------
# The fused whole-network Pallas kernel (G images per grid step)
# ----------------------------------------------------------------------------
def make_resnet_kernel(cfg, G=GROUP):
    f32, bf16 = jnp.float32, jnp.bfloat16

    # Static (Python-level) sets of per-image heights the kernel will need.
    mask_hs = {cfg["stem"]["h"]}
    down_hs = set()
    for blk in cfg["blocks"]:
        mask_hs.add(blk["hin"])
        if blk["down"]:
            down_hs.add(blk["hin"])
            mask_hs.add(blk["hin"] // 2)
    assert all(_is_pow2(h) for h in mask_hs)
    mask_hs, down_hs = sorted(mask_hs), sorted(down_hs)
    h_last = cfg["head"]["h"]

    def kernel(x_ref, w_ref, wp_ref, b_ref, o_ref):
        # ---- hoisted constants: built exactly once per kernel invocation ----
        masks = {}                    # H -> (first-row mask, last-row mask) f32
        for H in mask_hs:
            R = G * H
            r = lax.broadcasted_iota(jnp.int32, (R, LANE), 0) & (H - 1)
            masks[H] = (jnp.where(r != 0, 1.0, 0.0),
                        jnp.where(r != H - 1, 1.0, 0.0))
        downs = {}                    # H_in -> (G*H_in/2, G*H_in) bf16 row subsample
        for H in down_hs:
            ro = lax.broadcasted_iota(jnp.int32, (G * H // 2, G * H), 0)
            ri = lax.broadcasted_iota(jnp.int32, (G * H // 2, G * H), 1)
            downs[H] = jnp.where(ri == 2 * ro, 1.0, 0.0).astype(bf16)
        gi = lax.broadcasted_iota(jnp.int32, (G, G * h_last), 0)
        rp = lax.broadcasted_iota(jnp.int32, (G, G * h_last), 1)
        s_pool = jnp.where((rp >= gi * h_last) & (rp < (gi + 1) * h_last),
                           1.0, 0.0).astype(bf16)                 # (G, G*h_last)

        def bias(i):
            return b_ref[i][None, :]                               # (1,128) f32

        def dotw(lhs, i):
            return jnp.dot(lhs, w_ref[i], preferred_element_type=f32)

        def taps3(x32, H):
            """bf16 LHS for the three row taps (ky=0,1,2) of a 3x3 / pad=1 conv.
            Row shift via pltpu.roll (XLU) + edge mask (VPU) -- no MXU select."""
            mf, ml = masks[H]
            R = x32.shape[0]
            xm = (pltpu.roll(x32, 1, axis=0) * mf).astype(bf16)      # row r <- x[r-1]
            xc = x32.astype(bf16)
            xp = (pltpu.roll(x32, R - 1, axis=0) * ml).astype(bf16)  # row r <- x[r+1]
            return xm, xc, xp

        def conv3x3_s1(x32, H, wi, bi):
            xm, xc, xp = taps3(x32, H)
            return dotw(xm, wi) + dotw(xc, wi + 1) + dotw(xp, wi + 2) + bias(bi)

        def basic_block(x32, blk):
            h = jnp.maximum(conv3x3_s1(x32, blk["hin"], blk["w1"], blk["b1"]), 0.0)
            h2 = conv3x3_s1(h, blk["hin"], blk["w2"], blk["b2"])
            return jnp.maximum(h2 + x32, 0.0)

        def down_block(x32, blk):
            H = blk["hin"]
            xm, xc, xp = taps3(x32, H)
            # conv1 centre tap and the 1x1 shortcut share the same LHS -> one
            # (R,128)@(128,256) matmul (fills the 256-wide MXU on v6e/v7x).
            zp = jnp.dot(xc, wp_ref[blk["wp"]], preferred_element_type=f32)
            z1 = dotw(xm, blk["w1"]) + zp[:, :LANE] + dotw(xp, blk["w1"] + 1)
            # one N=256 row-subsample select for both conv1 and shortcut outputs
            both = jnp.concatenate([z1, zp[:, LANE:]], axis=1).astype(bf16)
            sub = jnp.dot(downs[H], both, preferred_element_type=f32)
            h = jnp.maximum(sub[:, :LANE] + bias(blk["b1"]), 0.0)
            h2 = conv3x3_s1(h, H // 2, blk["w2"], blk["b2"])
            sc = sub[:, LANE:] + bias(blk["bsc"])
            return jnp.maximum(h2 + sc, 0.0)

        # --------------------------- network body ---------------------------
        st = cfg["stem"]
        x32 = x_ref[0].astype(f32)                                  # (G*H0, 128)
        act = jnp.maximum(conv3x3_s1(x32, st["h"], st["w"], st["b"]), 0.0)
        for blk in cfg["blocks"]:
            act = down_block(act, blk) if blk["down"] else basic_block(act, blk)

        hd = cfg["head"]
        pooled = jnp.dot(s_pool, act.astype(bf16), preferred_element_type=f32)
        logits = jnp.dot(pooled.astype(bf16), w_ref[hd["w"]],
                         preferred_element_type=f32) + bias(hd["b"])
        o_ref[0] = logits                                           # (G, 128)
    return kernel


def resnet_forward(x_nchw, wpack, wpair, bpack, cfg, G=GROUP):
    b, c, h, w = x_nchw.shape
    assert w * c <= LANE and (G * h) % 8 == 0 and G % 8 == 0
    # NCHW -> (B, H, W*C) lane-dense slab, padded to 128 lanes, bf16 for the MXU.
    x = jnp.transpose(x_nchw, (0, 2, 3, 1)).reshape(b, h, w * c)
    x = jnp.pad(x, ((0, 0), (0, 0), (0, LANE - w * c))).astype(jnp.bfloat16)
    b_pad = ((b + G - 1) // G) * G
    if b_pad != b:
        x = jnp.pad(x, ((0, b_pad - b), (0, 0), (0, 0)))
    ng = b_pad // G
    x = x.reshape(ng, G * h, LANE)            # G images stacked along the row axis

    out = pl.pallas_call(
        make_resnet_kernel(cfg, G),
        out_shape=jax.ShapeDtypeStruct((ng, G, LANE), jnp.float32),
        grid_spec=pltpu.PrefetchScalarGridSpec(
            num_scalar_prefetch=0,
            grid=(ng,),                                   # one image-group per step
            in_specs=[
                pl.BlockSpec((1, G * h, LANE), lambda i: (i, 0, 0)),  # images
                pl.BlockSpec(wpack.shape, lambda i: (0, 0, 0)),       # lane-mix weights
                pl.BlockSpec(wpair.shape, lambda i: (0, 0, 0)),       # paired (128,256)
                pl.BlockSpec(bpack.shape, lambda i: (0, 0)),          # folded-BN biases
            ],
            out_specs=pl.BlockSpec((1, G, LANE), lambda i: (i, 0, 0)),
        ),
        compiler_params=pltpu.CompilerParams(
            dimension_semantics=("parallel",),
            vmem_limit_bytes=32 * 1024 * 1024),
    )(x, wpack, wpair, bpack)
    return out.reshape(b_pad, LANE)[:b, :cfg["num_classes"]]


# ----------------------------------------------------------------------------
# Pure-JAX f32 reference (same eval-mode network) for verification
# ----------------------------------------------------------------------------
def reference_forward(params, x_nchw, eps=1e-5):
    x = jnp.transpose(x_nchw, (0, 2, 3, 1))
    hp = jax.lax.Precision.HIGHEST

    def conv(y, w, stride, pad):
        return lax.conv_general_dilated(
            y, jnp.transpose(w, (2, 3, 1, 0)), (stride, stride),
            [(pad, pad), (pad, pad)],
            dimension_numbers=("NHWC", "HWIO", "NHWC"), precision=hp)

    def bn(y, p):
        s = p["gamma"] / jnp.sqrt(p["var"] + eps)
        return y * s + (p["beta"] - p["mean"] * s)

    out = jax.nn.relu(bn(conv(x, params["conv1"], 1, 1), params["bn1"]))
    for blk, stride in params["blocks"]:
        h = jax.nn.relu(bn(conv(out, blk["conv1"], stride, 1), blk["bn1"]))
        h = bn(conv(h, blk["conv2"], 1, 1), blk["bn2"])
        sc = (bn(conv(out, blk["conv3"], stride, 0), blk["bn3"])
              if "conv3" in blk else out)
        out = jax.nn.relu(h + sc)
    feat = jnp.mean(out, axis=(1, 2))
    return jnp.dot(feat, params["linear_w"].T, precision=hp) + params["linear_b"]


# ----------------------------------------------------------------------------
if __name__ == "__main__":
    key = jax.random.PRNGKey(0)
    pkey, xkey = jax.random.split(key)

    nf, num_classes = 8, 10
    params = build_resnet_params(pkey, nf=nf, num_classes=num_classes,
                                 num_blocks=(2, 2, 2, 2))
    wpack, wpair, bpack, cfg = pack_network(params, hw=16, num_classes=num_classes)

    # small CIFAR-like input: batch=16 (2 groups of 8), 3 channels, 16x16 (NCHW)
    x = jax.random.normal(xkey, (16, 3, 16, 16), jnp.float32)

    fwd = jax.jit(lambda inp: resnet_forward(inp, wpack, wpair, bpack, cfg))
    logits = jax.block_until_ready(fwd(x))

    assert logits.shape == (16, num_classes), logits.shape
    assert bool(jnp.all(jnp.isfinite(logits)))

    # verify against the pure-JAX f32 reference (bf16 MXU => loose tolerance)
    ref = jax.block_until_ready(reference_forward(params, x))
    rel = float(jnp.max(jnp.abs(logits - ref)) / (jnp.max(jnp.abs(ref)) + 1e-6))
    assert rel < 0.1, f"mismatch vs reference: rel={rel}"

    print("KERNEL_OK")
</pallas_src>

<mosaic_0001>
module attributes {stable_mosaic.version = 11 : i64} {
  func.func @kernel(%arg0: i32, %arg1: memref<1x128x128xbf16, #tpu.memory_space<vmem>>, %arg2: memref<49x128x128xbf16, #tpu.memory_space<vmem>>, %arg3: memref<3x128x256xbf16, #tpu.memory_space<vmem>>, %arg4: memref<21x128xf32, #tpu.memory_space<vmem>>, %arg5: memref<1x8x128xf32, #tpu.memory_space<vmem>>) attributes {dimension_semantics = [#tpu.dimension_semantics<parallel>], iteration_bounds = array<i64: 2>, scalar_prefetch = 0 : i64, scratch_operands = 0 : i64, tpu.core_type = #tpu.core_type<tc>, window_params = [{transform_indices = @transform_0, window_bounds = array<i64: 1, 128, 128>}, {pipeline_mode = #tpu.pipeline_mode<synchronous>, transform_indices = @transform_1, window_bounds = array<i64: 49, 128, 128>}, {pipeline_mode = #tpu.pipeline_mode<synchronous>, transform_indices = @transform_2, window_bounds = array<i64: 3, 128, 256>}, {pipeline_mode = #tpu.pipeline_mode<synchronous>, transform_indices = @transform_3, window_bounds = array<i64: 21, 128>}, {transform_indices = @transform_4, window_bounds = array<i64: 1, 8, 128>}]} {
    %0 = tpu.iota {dimensions = array<i32: 0>} : vector<16x128xi32>
    %c1_i32 = arith.constant 1 : i32
    %1 = vector.broadcast %c1_i32 : i32 to vector<16x128xi32>
    %2 = arith.andi %0, %1 : vector<16x128xi32>
    %c0_i32 = arith.constant 0 : i32
    %3 = vector.broadcast %c0_i32 : i32 to vector<16x128xi32>
    %4 = arith.cmpi ne, %2, %3 : vector<16x128xi32>
    %cst = arith.constant 1.000000e+00 : f32
    %cst_0 = arith.constant 0.000000e+00 : f32
    %5 = vector.broadcast %cst : f32 to vector<16x128xf32>
    %6 = vector.broadcast %cst_0 : f32 to vector<16x128xf32>
    %7 = arith.select %4, %5, %6 : vector<16x128xi1>, vector<16x128xf32>
    %c1_i32_1 = arith.constant 1 : i32
    %8 = vector.broadcast %c1_i32_1 : i32 to vector<16x128xi32>
    %9 = arith.cmpi ne, %2, %8 : vector<16x128xi32>
    %cst_2 = arith.constant 1.000000e+00 : f32
    %cst_3 = arith.constant 0.000000e+00 : f32
    %10 = vector.broadcast %cst_2 : f32 to vector<16x128xf32>
    %11 = vector.broadcast %cst_3 : f32 to vector<16x128xf32>
    %12 = arith.select %9, %10, %11 : vector<16x128xi1>, vector<16x128xf32>
    %13 = tpu.iota {dimensions = array<i32: 0>} : vector<32x128xi32>
    %c3_i32 = arith.constant 3 : i32
    %14 = vector.broadcast %c3_i32 : i32 to vector<32x128xi32>
    %15 = arith.andi %13, %14 : vector<32x128xi32>
    %c0_i32_4 = arith.constant 0 : i32
    %16 = vector.broadcast %c0_i32_4 : i32 to vector<32x128xi32>
    %17 = arith.cmpi ne, %15, %16 : vector<32x128xi32>
    %cst_5 = arith.constant 1.000000e+00 : f32
    %cst_6 = arith.constant 0.000000e+00 : f32
    %18 = vector.broadcast %cst_5 : f32 to vector<32x128xf32>
    %19 = vector.broadcast %cst_6 : f32 to vector<32x128xf32>
    %20 = arith.select %17, %18, %19 : vector<32x128xi1>, vector<32x128xf32>
    %c3_i32_7 = arith.constant 3 : i32
    %21 = vector.broadcast %c3_i32_7 : i32 to vector<32x128xi32>
    %22 = arith.cmpi ne, %15, %21 : vector<32x128xi32>
    %cst_8 = arith.constant 1.000000e+00 : f32
    %cst_9 = arith.constant 0.000000e+00 : f32
    %23 = vector.broadcast %cst_8 : f32 to vector<32x128xf32>
    %24 = vector.broadcast %cst_9 : f32 to vector<32x128xf32>
    %25 = arith.select %22, %23, %24 : vector<32x128xi1>, vector<32x128xf32>
    %26 = tpu.iota {dimensions = array<i32: 0>} : vector<64x128xi32>
    %c7_i32 = arith.constant 7 : i32
    %27 = vector.broadcast %c7_i32 : i32 to vector<64x128xi32>
    %28 = arith.andi %26, %27 : vector<64x128xi32>
    %c0_i32_10 = arith.constant 0 : i32
    %29 = vector.broadcast %c0_i32_10 : i32 to vector<64x128xi32>
    %30 = arith.cmpi ne, %28, %29 : vector<64x128xi32>
    %cst_11 = arith.constant 1.000000e+00 : f32
    %cst_12 = arith.constant 0.000000e+00 : f32
    %31 = vector.broadcast %cst_11 : f32 to vector<64x128xf32>
    %32 = vector.broadcast %cst_12 : f32 to vector<64x128xf32>
    %33 = arith.select %30, %31, %32 : vector<64x128xi1>, vector<64x128xf32>
    %c7_i32_13 = arith.constant 7 : i32
    %34 = vector.broadcast %c7_i32_13 : i32 to vector<64x128xi32>
    %35 = arith.cmpi ne, %28, %34 : vector<64x128xi32>
    %cst_14 = arith.constant 1.000000e+00 : f32
    %cst_15 = arith.constant 0.000000e+00 : f32
    %36 = vector.broadcast %cst_14 : f32 to vector<64x128xf32>
    %37 = vector.broadcast %cst_15 : f32 to vector<64x128xf32>
    %38 = arith.select %35, %36, %37 : vector<64x128xi1>, vector<64x128xf32>
    %39 = tpu.iota {dimensions = array<i32: 0>} : vector<128x128xi32>
    %c15_i32 = arith.constant 15 : i32
    %40 = vector.broadcast %c15_i32 : i32 to vector<128x128xi32>
    %41 = arith.andi %39, %40 : vector<128x128xi32>
    %c0_i32_16 = arith.constant 0 : i32
    %42 = vector.broadcast %c0_i32_16 : i32 to vector<128x128xi32>
    %43 = arith.cmpi ne, %41, %42 : vector<128x128xi32>
    %cst_17 = arith.constant 1.000000e+00 : f32
    %cst_18 = arith.constant 0.000000e+00 : f32
    %44 = vector.broadcast %cst_17 : f32 to vector<128x128xf32>
    %45 = vector.broadcast %cst_18 : f32 to vector<128x128xf32>
    %46 = arith.select %43, %44, %45 : vector<128x128xi1>, vector<128x128xf32>
    %c15_i32_19 = arith.constant 15 : i32
    %47 = vector.broadcast %c15_i32_19 : i32 to vector<128x128xi32>
    %48 = arith.cmpi ne, %41, %47 : vector<128x128xi32>
    %cst_20 = arith.constant 1.000000e+00 : f32
    %cst_21 = arith.constant 0.000000e+00 : f32
    %49 = vector.broadcast %cst_20 : f32 to vector<128x128xf32>
    %50 = vector.broadcast %cst_21 : f32 to vector<128x128xf32>
    %51 = arith.select %48, %49, %50 : vector<128x128xi1>, vector<128x128xf32>
    %52 = tpu.iota {dimensions = array<i32: 0>} : vector<16x32xi32>
    %53 = tpu.iota {dimensions = array<i32: 1>} : vector<16x32xi32>
    %c2_i32 = arith.constant 2 : i32
    %54 = vector.broadcast %c2_i32 : i32 to vector<16x32xi32>
    %55 = arith.muli %54, %52 : vector<16x32xi32>
    %56 = arith.cmpi eq, %53, %55 : vector<16x32xi32>
    %cst_22 = arith.constant 1.000000e+00 : f32
    %cst_23 = arith.constant 0.000000e+00 : f32
    %57 = vector.broadcast %cst_22 : f32 to vector<16x32xf32>
    %58 = vector.broadcast %cst_23 : f32 to vector<16x32xf32>
    %59 = arith.select %56, %57, %58 : vector<16x32xi1>, vector<16x32xf32>
    %60 = arith.truncf %59 : vector<16x32xf32> to vector<16x32xbf16>
    %61 = tpu.iota {dimensions = array<i32: 0>} : vector<32x64xi32>
    %62 = tpu.iota {dimensions = array<i32: 1>} : vector<32x64xi32>
    %c2_i32_24 = arith.constant 2 : i32
    %63 = vector.broadcast %c2_i32_24 : i32 to vector<32x64xi32>
    %64 = arith.muli %63, %61 : vector<32x64xi32>
    %65 = arith.cmpi eq, %62, %64 : vector<32x64xi32>
    %cst_25 = arith.constant 1.000000e+00 : f32
    %cst_26 = arith.constant 0.000000e+00 : f32
    %66 = vector.broadcast %cst_25 : f32 to vector<32x64xf32>
    %67 = vector.broadcast %cst_26 : f32 to vector<32x64xf32>
    %68 = arith.select %65, %66, %67 : vector<32x64xi1>, vector<32x64xf32>
    %69 = arith.truncf %68 : vector<32x64xf32> to vector<32x64xbf16>
    %70 = tpu.iota {dimensions = array<i32: 0>} : vector<64x128xi32>
    %71 = tpu.iota {dimensions = array<i32: 1>} : vector<64x128xi32>
    %c2_i32_27 = arith.constant 2 : i32
    %72 = vector.broadcast %c2_i32_27 : i32 to vector<64x128xi32>
    %73 = arith.muli %72, %70 : vector<64x128xi32>
    %74 = arith.cmpi eq, %71, %73 : vector<64x128xi32>
    %cst_28 = arith.constant 1.000000e+00 : f32
    %cst_29 = arith.constant 0.000000e+00 : f32
    %75 = vector.broadcast %cst_28 : f32 to vector<64x128xf32>
    %76 = vector.broadcast %cst_29 : f32 to vector<64x128xf32>
    %77 = arith.select %74, %75, %76 : vector<64x128xi1>, vector<64x128xf32>
    %78 = arith.truncf %77 : vector<64x128xf32> to vector<64x128xbf16>
    %79 = tpu.iota {dimensions = array<i32: 0>} : vector<8x16xi32>
    %80 = tpu.iota {dimensions = array<i32: 1>} : vector<8x16xi32>
    %c2_i32_30 = arith.constant 2 : i32
    %81 = vector.broadcast %c2_i32_30 : i32 to vector<8x16xi32>
    %82 = arith.muli %79, %81 : vector<8x16xi32>
    %83 = arith.cmpi sge, %80, %82 : vector<8x16xi32>
    %c1_i32_31 = arith.constant 1 : i32
    %84 = vector.broadcast %c1_i32_31 : i32 to vector<8x16xi32>
    %85 = arith.addi %79, %84 : vector<8x16xi32>
    %c2_i32_32 = arith.constant 2 : i32
    %86 = vector.broadcast %c2_i32_32 : i32 to vector<8x16xi32>
    %87 = arith.muli %85, %86 : vector<8x16xi32>
    %88 = arith.cmpi slt, %80, %87 : vector<8x16xi32>
    %89 = arith.andi %83, %88 : vector<8x16xi1>
    %cst_33 = arith.constant 1.000000e+00 : f32
    %cst_34 = arith.constant 0.000000e+00 : f32
    %90 = vector.broadcast %cst_33 : f32 to vector<8x16xf32>
    %91 = vector.broadcast %cst_34 : f32 to vector<8x16xf32>
    %92 = arith.select %89, %90, %91 : vector<8x16xi1>, vector<8x16xf32>
    %93 = arith.truncf %92 : vector<8x16xf32> to vector<8x16xbf16>
    %c0 = arith.constant 0 : index
    %c0_35 = arith.constant 0 : index
    %c0_36 = arith.constant 0 : index
    %94 = vector.load %arg1[%c0, %c0_35, %c0_36] : memref<1x128x128xbf16, #tpu.memory_space<vmem>>, vector<1x128x128xbf16>
    %95 = vector.shape_cast %94 : vector<1x128x128xbf16> to vector<128x128xbf16>
    %96 = arith.extf %95 : vector<128x128xbf16> to vector<128x128xf32>
    %c1_i32_37 = arith.constant 1 : i32
    %97 = tpu.dynamic_rotate %96 by %c1_i32_37 dim 0 : vector<128x128xf32>, i32 -> vector<128x128xf32>
    %98 = arith.mulf %97, %46 : vector<128x128xf32>
    %99 = arith.truncf %98 : vector<128x128xf32> to vector<128x128xbf16>
    %100 = arith.truncf %96 : vector<128x128xf32> to vector<128x128xbf16>
    %c127_i32 = arith.constant 127 : i32
    %101 = tpu.dynamic_rotate %96 by %c127_i32 dim 0 : vector<128x128xf32>, i32 -> vector<128x128xf32>
    %102 = arith.mulf %101, %51 : vector<128x128xf32>
    %103 = arith.truncf %102 : vector<128x128xf32> to vector<128x128xbf16>
    %c0_38 = arith.constant 0 : index
    %c0_39 = arith.constant 0 : index
    %c0_40 = arith.constant 0 : index
    %104 = vector.load %arg2[%c0_38, %c0_39, %c0_40] : memref<49x128x128xbf16, #tpu.memory_space<vmem>>, vector<1x128x128xbf16>
    %105 = vector.shape_cast %104 : vector<1x128x128xbf16> to vector<128x128xbf16>
    %cst_41 = arith.constant dense<0.000000e+00> : vector<128x128xf32>
    %106 = tpu.matmul %99, %105, %cst_41 {dimension_numbers = #tpu.dot_dimension_numbers<[1], [0], [0], [1], [0, 0, 1, 1], [], []>} : vector<128x128xbf16>, vector<128x128xbf16>, vector<128x128xf32> -> vector<128x128xf32>
    %c1 = arith.constant 1 : index
    %c0_42 = arith.constant 0 : index
    %c0_43 = arith.constant 0 : index
    %107 = vector.load %arg2[%c1, %c0_42, %c0_43] : memref<49x128x128xbf16, #tpu.memory_space<vmem>>, vector<1x128x128xbf16>
    %108 = vector.shape_cast %107 : vector<1x128x128xbf16> to vector<128x128xbf16>
    %cst_44 = arith.constant dense<0.000000e+00> : vector<128x128xf32>
    %109 = tpu.matmul %100, %108, %cst_44 {dimension_numbers = #tpu.dot_dimension_numbers<[1], [0], [0], [1], [0, 0, 1, 1], [], []>} : vector<128x128xbf16>, vector<128x128xbf16>, vector<128x128xf32> -> vector<128x128xf32>
    %110 = arith.addf %106, %109 : vector<128x128xf32>
    %c2 = arith.constant 2 : index
    %c0_45 = arith.constant 0 : index
    %c0_46 = arith.constant 0 : index
    %111 = vector.load %arg2[%c2, %c0_45, %c0_46] : memref<49x128x128xbf16, #tpu.memory_space<vmem>>, vector<1x128x128xbf16>
    %112 = vector.shape_cast %111 : vector<1x128x128xbf16> to vector<128x128xbf16>
    %cst_47 = arith.constant dense<0.000000e+00> : vector<128x128xf32>
    %113 = tpu.matmul %103, %112, %cst_47 {dimension_numbers = #tpu.dot_dimension_numbers<[1], [0], [0], [1], [0, 0, 1, 1], [], []>} : vector<128x128xbf16>, vector<128x128xbf16>, vector<128x128xf32> -> vector<128x128xf32>
    %114 = arith.addf %110, %113 : vector<128x128xf32>
    %c0_48 = arith.constant 0 : index
    %c0_49 = arith.constant 0 : index
    %115 = vector.load %arg4[%c0_48, %c0_49] : memref<21x128xf32, #tpu.memory_space<vmem>>, vector<1x128xf32>
    %116 = vector.shape_cast %115 : vector<1x128xf32> to vector<128xf32>
    %117 = vector.shape_cast %116 : vector<128xf32> to vector<1x128xf32>
    %118 = vector.broadcast %117 : vector<1x128xf32> to vector<128x128xf32>
    %119 = arith.addf %114, %118 : vector<128x128xf32>
    %cst_50 = arith.constant 0.000000e+00 : f32
    %120 = vector.broadcast %cst_50 : f32 to vector<128x128xf32>
    %121 = arith.maximumf %119, %120 : vector<128x128xf32>
    %c1_i32_51 = arith.constant 1 : i32
    %122 = tpu.dynamic_rotate %121 by %c1_i32_51 dim 0 : vector<128x128xf32>, i32 -> vector<128x128xf32>
    %123 = arith.mulf %122, %46 : vector<128x128xf32>
    %124 = arith.truncf %123 : vector<128x128xf32> to vector<128x128xbf16>
    %125 = arith.truncf %121 : vector<128x128xf32> to vector<128x128xbf16>
    %c127_i32_52 = arith.constant 127 : i32
    %126 = tpu.dynamic_rotate %121 by %c127_i32_52 dim 0 : vector<128x128xf32>, i32 -> vector<128x128xf32>
    %127 = arith.mulf %126, %51 : vector<128x128xf32>
    %128 = arith.truncf %127 : vector<128x128xf32> to vector<128x128xbf16>
    %c3 = arith.constant 3 : index
    %c0_53 = arith.constant 0 : index
    %c0_54 = arith.constant 0 : index
    %129 = vector.load %arg2[%c3, %c0_53, %c0_54] : memref<49x128x128xbf16, #tpu.memory_space<vmem>>, vector<1x128x128xbf16>
    %130 = vector.shape_cast %129 : vector<1x128x128xbf16> to vector<128x128xbf16>
    %cst_55 = arith.constant dense<0.000000e+00> : vector<128x128xf32>
    %131 = tpu.matmul %124, %130, %cst_55 {dimension_numbers = #tpu.dot_dimension_numbers<[1], [0], [0], [1], [0, 0, 1, 1], [], []>} : vector<128x128xbf16>, vector<128x128xbf16>, vector<128x128xf32> -> vector<128x128xf32>
    %c4 = arith.constant 4 : index
    %c0_56 = arith.constant 0 : index
    %c0_57 = arith.constant 0 : index
    %132 = vector.load %arg2[%c4, %c0_56, %c0_57] : memref<49x128x128xbf16, #tpu.memory_space<vmem>>, vector<1x128x128xbf16>
    %133 = vector.shape_cast %132 : vector<1x128x128xbf16> to vector<128x128xbf16>
    %cst_58 = arith.constant dense<0.000000e+00> : vector<128x128xf32>
    %134 = tpu.matmul %125, %133, %cst_58 {dimension_numbers = #tpu.dot_dimension_numbers<[1], [0], [0], [1], [0, 0, 1, 1], [], []>} : vector<128x128xbf16>, vector<128x128xbf16>, vector<128x128xf32> -> vector<128x128xf32>
    %135 = arith.addf %131, %134 : vector<128x128xf32>
    %c5 = arith.constant 5 : index
    %c0_59 = arith.constant 0 : index
    %c0_60 = arith.constant 0 : index
    %136 = vector.load %arg2[%c5, %c0_59, %c0_60] : memref<49x128x128xbf16, #tpu.memory_space<vmem>>, vector<1x128x128xbf16>
    %137 = vector.shape_cast %136 : vector<1x128x128xbf16> to vector<128x128xbf16>
    %cst_61 = arith.constant dense<0.000000e+00> : vector<128x128xf32>
    %138 = tpu.matmul %128, %137, %cst_61 {dimension_numbers = #tpu.dot_dimension_numbers<[1], [0], [0], [1], [0, 0, 1, 1], [], []>} : vector<128x128xbf16>, vector<128x128xbf16>, vector<128x128xf32> -> vector<128x128xf32>
    %139 = arith.addf %135, %138 : vector<128x128xf32>
    %c1_62 = arith.constant 1 : index
    %c0_63 = arith.constant 0 : index
    %140 = vector.load %arg4[%c1_62, %c0_63] : memref<21x128xf32, #tpu.memory_space<vmem>>, vector<1x128xf32>
    %141 = vector.shape_cast %140 : vector<1x128xf32> to vector<128xf32>
    %142 = vector.shape_cast %141 : vector<128xf32> to vector<1x128xf32>
    %143 = vector.broadcast %142 : vector<1x128xf32> to vector<128x128xf32>
    %144 = arith.addf %139, %143 : vector<128x128xf32>
    %cst_64 = arith.constant 0.000000e+00 : f32
    %145 = vector.broadcast %cst_64 : f32 to vector<128x128xf32>
    %146 = arith.maximumf %144, %145 : vector<128x128xf32>
    %c1_i32_65 = arith.constant 1 : i32
    %147 = tpu.dynamic_rotate %146 by %c1_i32_65 dim 0 : vector<128x128xf32>, i32 -> vector<128x128xf32>
    %148 = arith.mulf %147, %46 : vector<128x128xf32>
    %149 = arith.truncf %148 : vector<128x128xf32> to vector<128x128xbf16>
    %150 = arith.truncf %146 : vector<128x128xf32> to vector<128x128xbf16>
    %c127_i32_66 = arith.constant 127 : i32
    %151 = tpu.dynamic_rotate %146 by %c127_i32_66 dim 0 : vector<128x128xf32>, i32 -> vector<128x128xf32>
    %152 = arith.mulf %151, %51 : vector<128x128xf32>
    %153 = arith.truncf %152 : vector<128x128xf32> to vector<128x128xbf16>
    %c6 = arith.constant 6 : index
    %c0_67 = arith.constant 0 : index
    %c0_68 = arith.constant 0 : index
    %154 = vector.load %arg2[%c6, %c0_67, %c0_68] : memref<49x128x128xbf16, #tpu.memory_space<vmem>>, vector<1x128x128xbf16>
    %155 = vector.shape_cast %154 : vector<1x128x128xbf16> to vector<128x128xbf16>
    %cst_69 = arith.constant dense<0.000000e+00> : vector<128x128xf32>
    %156 = tpu.matmul %149, %155, %cst_69 {dimension_numbers = #tpu.dot_dimension_numbers<[1], [0], [0], [1], [0, 0, 1, 1], [], []>} : vector<128x128xbf16>, vector<128x128xbf16>, vector<128x128xf32> -> vector<128x128xf32>
    %c7 = arith.constant 7 : index
    %c0_70 = arith.constant 0 : index
    %c0_71 = arith.constant 0 : index
    %157 = vector.load %arg2[%c7, %c0_70, %c0_71] : memref<49x128x128xbf16, #tpu.memory_space<vmem>>, vector<1x128x128xbf16>
    %158 = vector.shape_cast %157 : vector<1x128x128xbf16> to vector<128x128xbf16>
    %cst_72 = arith.constant dense<0.000000e+00> : vector<128x128xf32>
    %159 = tpu.matmul %150, %158, %cst_72 {dimension_numbers = #tpu.dot_dimension_numbers<[1], [0], [0], [1], [0, 0, 1, 1], [], []>} : vector<128x128xbf16>, vector<128x128xbf16>, vector<128x128xf32> -> vector<128x128xf32>
    %160 = arith.addf %156, %159 : vector<128x128xf32>
    %c8 = arith.constant 8 : index
    %c0_73 = arith.constant 0 : index
    %c0_74 = arith.constant 0 : index
    %161 = vector.load %arg2[%c8, %c0_73, %c0_74] : memref<49x128x128xbf16, #tpu.memory_space<vmem>>, vector<1x128x128xbf16>
    %162 = vector.shape_cast %161 : vector<1x128x128xbf16> to vector<128x128xbf16>
    %cst_75 = arith.constant dense<0.000000e+00> : vector<128x128xf32>
    %163 = tpu.matmul %153, %162, %cst_75 {dimension_numbers = #tpu.dot_dimension_numbers<[1], [0], [0], [1], [0, 0, 1, 1], [], []>} : vector<128x128xbf16>, vector<128x128xbf16>, vector<128x128xf32> -> vector<128x128xf32>
    %164 = arith.addf %160, %163 : vector<128x128xf32>
    %c2_76 = arith.constant 2 : index
    %c0_77 = arith.constant 0 : index
    %165 = vector.load %arg4[%c2_76, %c0_77] : memref<21x128xf32, #tpu.memory_space<vmem>>, vector<1x128xf32>
    %166 = vector.shape_cast %165 : vector<1x128xf32> to vector<128xf32>
    %167 = vector.shape_cast %166 : vector<128xf32> to vector<1x128xf32>
    %168 = vector.broadcast %167 : vector<1x128xf32> to vector<128x128xf32>
    %169 = arith.addf %164, %168 : vector<128x128xf32>
    %170 = arith.addf %169, %121 : vector<128x128xf32>
    %cst_78 = arith.constant 0.000000e+00 : f32
    %171 = vector.broadcast %cst_78 : f32 to vector<128x128xf32>
    %172 = arith.maximumf %170, %171 : vector<128x128xf32>
    %c1_i32_79 = arith.constant 1 : i32
    %173 = tpu.dynamic_rotate %172 by %c1_i32_79 dim 0 : vector<128x128xf32>, i32 -> vector<128x128xf32>
    %174 = arith.mulf %173, %46 : vector<128x128xf32>
    %175 = arith.truncf %174 : vector<128x128xf32> to vector<128x128xbf16>
    %176 = arith.truncf %172 : vector<128x128xf32> to vector<128x128xbf16>
    %c127_i32_80 = arith.constant 127 : i32
    %177 = tpu.dynamic_rotate %172 by %c127_i32_80 dim 0 : vector<128x128xf32>, i32 -> vector<128x128xf32>
    %178 = arith.mulf %177, %51 : vector<128x128xf32>
    %179 = arith.truncf %178 : vector<128x128xf32> to vector<128x128xbf16>
    %c9 = arith.constant 9 : index
    %c0_81 = arith.constant 0 : index
    %c0_82 = arith.constant 0 : index
    %180 = vector.load %arg2[%c9, %c0_81, %c0_82] : memref<49x128x128xbf16, #tpu.memory_space<vmem>>, vector<1x128x128xbf16>
    %181 = vector.shape_cast %180 : vector<1x128x128xbf16> to vector<128x128xbf16>
    %cst_83 = arith.constant dense<0.000000e+00> : vector<128x128xf32>
    %182 = tpu.matmul %175, %181, %cst_83 {dimension_numbers = #tpu.dot_dimension_numbers<[1], [0], [0], [1], [0, 0, 1, 1], [], []>} : vector<128x128xbf16>, vector<128x128xbf16>, vector<128x128xf32> -> vector<128x128xf32>
    %c10 = arith.constant 10 : index
    %c0_84 = arith.constant 0 : index
    %c0_85 = arith.constant 0 : index
    %183 = vector.load %arg2[%c10, %c0_84, %c0_85] : memref<49x128x128xbf16, #tpu.memory_space<vmem>>, vector<1x128x128xbf16>
    %184 = vector.shape_cast %183 : vector<1x128x128xbf16> to vector<128x128xbf16>
    %cst_86 = arith.constant dense<0.000000e+00> : vector<128x128xf32>
    %185 = tpu.matmul %176, %184, %cst_86 {dimension_numbers = #tpu.dot_dimension_numbers<[1], [0], [0], [1], [0, 0, 1, 1], [], []>} : vector<128x128xbf16>, vector<128x128xbf16>, vector<128x128xf32> -> vector<128x128xf32>
    %186 = arith.addf %182, %185 : vector<128x128xf32>
    %c11 = arith.constant 11 : index
    %c0_87 = arith.constant 0 : index
    %c0_88 = arith.constant 0 : index
    %187 = vector.load %arg2[%c11, %c0_87, %c0_88] : memref<49x128x128xbf16, #tpu.memory_space<vmem>>, vector<1x128x128xbf16>
    %188 = vector.shape_cast %187 : vector<1x128x128xbf16> to vector<128x128xbf16>
    %cst_89 = arith.constant dense<0.000000e+00> : vector<128x128xf32>
    %189 = tpu.matmul %179, %188, %cst_89 {dimension_numbers = #tpu.dot_dimension_numbers<[1], [0], [0], [1], [0, 0, 1, 1], [], []>} : vector<128x128xbf16>, vector<128x128xbf16>, vector<128x128xf32> -> vector<128x128xf32>
    %190 = arith.addf %186, %189 : vector<128x128xf32>
    %c3_90 = arith.constant 3 : index
    %c0_91 = arith.constant 0 : index
    %191 = vector.load %arg4[%c3_90, %c0_91] : memref<21x128xf32, #tpu.memory_space<vmem>>, vector<1x128xf32>
    %192 = vector.shape_cast %191 : vector<1x128xf32> to vector<128xf32>
    %193 = vector.shape_cast %192 : vector<128xf32> to vector<1x128xf32>
    %194 = vector.broadcast %193 : vector<1x128xf32> to vector<128x128xf32>
    %195 = arith.addf %190, %194 : vector<128x128xf32>
    %cst_92 = arith.constant 0.000000e+00 : f32
    %196 = vector.broadcast %cst_92 : f32 to vector<128x128xf32>
    %197 = arith.maximumf %195, %196 : vector<128x128xf32>
    %c1_i32_93 = arith.constant 1 : i32
    %198 = tpu.dynamic_rotate %197 by %c1_i32_93 dim 0 : vector<128x128xf32>, i32 -> vector<128x128xf32>
    %199 = arith.mulf %198, %46 : vector<128x128xf32>
    %200 = arith.truncf %199 : vector<128x128xf32> to vector<128x128xbf16>
    %201 = arith.truncf %197 : vector<128x128xf32> to vector<128x128xbf16>
    %c127_i32_94 = arith.constant 127 : i32
    %202 = tpu.dynamic_rotate %197 by %c127_i32_94 dim 0 : vector<128x128xf32>, i32 -> vector<128x128xf32>
    %203 = arith.mulf %202, %51 : vector<128x128xf32>
    %204 = arith.truncf %203 : vector<128x128xf32> to vector<128x128xbf16>
    %c12 = arith.constant 12 : index
    %c0_95 = arith.constant 0 : index
    %c0_96 = arith.constant 0 : index
    %205 = vector.load %arg2[%c12, %c0_95, %c0_96] : memref<49x128x128xbf16, #tpu.memory_space<vmem>>, vector<1x128x128xbf16>
    %206 = vector.shape_cast %205 : vector<1x128x128xbf16> to vector<128x128xbf16>
    %cst_97 = arith.constant dense<0.000000e+00> : vector<128x128xf32>
    %207 = tpu.matmul %200, %206, %cst_97 {dimension_numbers = #tpu.dot_dimension_numbers<[1], [0], [0], [1], [0, 0, 1, 1], [], []>} : vector<128x128xbf16>, vector<128x128xbf16>, vector<128x128xf32> -> vector<128x128xf32>
    %c13 = arith.constant 13 : index
    %c0_98 = arith.constant 0 : index
    %c0_99 = arith.constant 0 : index
    %208 = vector.load %arg2[%c13, %c0_98, %c0_99] : memref<49x128x128xbf16, #tpu.memory_space<vmem>>, vector<1x128x128xbf16>
    %209 = vector.shape_cast %208 : vector<1x128x128xbf16> to vector<128x128xbf16>
    %cst_100 = arith.constant dense<0.000000e+00> : vector<128x128xf32>
    %210 = tpu.matmul %201, %209, %cst_100 {dimension_numbers = #tpu.dot_dimension_numbers<[1], [0], [0], [1], [0, 0, 1, 1], [], []>} : vector<128x128xbf16>, vector<128x128xbf16>, vector<128x128xf32> -> vector<128x128xf32>
    %211 = arith.addf %207, %210 : vector<128x128xf32>
    %c14 = arith.constant 14 : index
    %c0_101 = arith.constant 0 : index
    %c0_102 = arith.constant 0 : index
    %212 = vector.load %arg2[%c14, %c0_101, %c0_102] : memref<49x128x128xbf16, #tpu.memory_space<vmem>>, vector<1x128x128xbf16>
    %213 = vector.shape_cast %212 : vector<1x128x128xbf16> to vector<128x128xbf16>
    %cst_103 = arith.constant dense<0.000000e+00> : vector<128x128xf32>
    %214 = tpu.matmul %204, %213, %cst_103 {dimension_numbers = #tpu.dot_dimension_numbers<[1], [0], [0], [1], [0, 0, 1, 1], [], []>} : vector<128x128xbf16>, vector<128x128xbf16>, vector<128x128xf32> -> vector<128x128xf32>
    %215 = arith.addf %211, %214 : vector<128x128xf32>
    %c4_104 = arith.constant 4 : index
    %c0_105 = arith.constant 0 : index
    %216 = vector.load %arg4[%c4_104, %c0_105] : memref<21x128xf32, #tpu.memory_space<vmem>>, vector<1x128xf32>
    %217 = vector.shape_cast %216 : vector<1x128xf32> to vector<128xf32>
    %218 = vector.shape_cast %217 : vector<128xf32> to vector<1x128xf32>
    %219 = vector.broadcast %218 : vector<1x128xf32> to vector<128x128xf32>
    %220 = arith.addf %215, %219 : vector<128x128xf32>
    %221 = arith.addf %220, %172 : vector<128x128xf32>
    %cst_106 = arith.constant 0.000000e+00 : f32
    %222 = vector.broadcast %cst_106 : f32 to vector<128x128xf32>
    %223 = arith.maximumf %221, %222 : vector<128x128xf32>
    %c1_i32_107 = arith.constant 1 : i32
    %224 = tpu.dynamic_rotate %223 by %c1_i32_107 dim 0 : vector<128x128xf32>, i32 -> vector<128x128xf32>
    %225 = arith.mulf %224, %46 : vector<128x128xf32>
    %226 = arith.truncf %225 : vector<128x128xf32> to vector<128x128xbf16>
    %227 = arith.truncf %223 : vector<128x128xf32> to vector<128x128xbf16>
    %c127_i32_108 = arith.constant 127 : i32
    %228 = tpu.dynamic_rotate %223 by %c127_i32_108 dim 0 : vector<128x128xf32>, i32 -> vector<128x128xf32>
    %229 = arith.mulf %228, %51 : vector<128x128xf32>
    %230 = arith.truncf %229 : vector<128x128xf32> to vector<128x128xbf16>
    %c0_109 = arith.constant 0 : index
    %c0_110 = arith.constant 0 : index
    %c0_111 = arith.constant 0 : index
    %231 = vector.load %arg3[%c0_109, %c0_110, %c0_111] : memref<3x128x256xbf16, #tpu.memory_space<vmem>>, vector<1x128x256xbf16>
    %232 = vector.shape_cast %231 : vector<1x128x256xbf16> to vector<128x256xbf16>
    %cst_112 = arith.constant dense<0.000000e+00> : vector<128x256xf32>
    %233 = tpu.matmul %227, %232, %cst_112 {dimension_numbers = #tpu.dot_dimension_numbers<[1], [0], [0], [1], [0, 0, 1, 1], [], []>} : vector<128x128xbf16>, vector<128x256xbf16>, vector<128x256xf32> -> vector<128x256xf32>
    %c15 = arith.constant 15 : index
    %c0_113 = arith.constant 0 : index
    %c0_114 = arith.constant 0 : index
    %234 = vector.load %arg2[%c15, %c0_113, %c0_114] : memref<49x128x128xbf16, #tpu.memory_space<vmem>>, vector<1x128x128xbf16>
    %235 = vector.shape_cast %234 : vector<1x128x128xbf16> to vector<128x128xbf16>
    %cst_115 = arith.constant dense<0.000000e+00> : vector<128x128xf32>
    %236 = tpu.matmul %226, %235, %cst_115 {dimension_numbers = #tpu.dot_dimension_numbers<[1], [0], [0], [1], [0, 0, 1, 1], [], []>} : vector<128x128xbf16>, vector<128x128xbf16>, vector<128x128xf32> -> vector<128x128xf32>
    %237 = vector.extract_strided_slice %233 {offsets = [0, 0], sizes = [128, 128], strides = [1, 1]} : vector<128x256xf32> to vector<128x128xf32>
    %238 = arith.addf %236, %237 : vector<128x128xf32>
    %c16 = arith.constant 16 : index
    %c0_116 = arith.constant 0 : index
    %c0_117 = arith.constant 0 : index
    %239 = vector.load %arg2[%c16, %c0_116, %c0_117] : memref<49x128x128xbf16, #tpu.memory_space<vmem>>, vector<1x128x128xbf16>
    %240 = vector.shape_cast %239 : vector<1x128x128xbf16> to vector<128x128xbf16>
    %cst_118 = arith.constant dense<0.000000e+00> : vector<128x128xf32>
    %241 = tpu.matmul %230, %240, %cst_118 {dimension_numbers = #tpu.dot_dimension_numbers<[1], [0], [0], [1], [0, 0, 1, 1], [], []>} : vector<128x128xbf16>, vector<128x128xbf16>, vector<128x128xf32> -> vector<128x128xf32>
    %242 = arith.addf %238, %241 : vector<128x128xf32>
    %243 = vector.extract_strided_slice %233 {offsets = [0, 128], sizes = [128, 128], strides = [1, 1]} : vector<128x256xf32> to vector<128x128xf32>
    %244 = tpu.concatenate %242, %243 in 1 : vector<128x128xf32>, vector<128x128xf32> -> vector<128x256xf32>
    %245 = arith.truncf %244 : vector<128x256xf32> to vector<128x256xbf16>
    %cst_119 = arith.constant dense<0.000000e+00> : vector<64x256xf32>
    %246 = tpu.matmul %78, %245, %cst_119 {dimension_numbers = #tpu.dot_dimension_numbers<[1], [0], [0], [1], [0, 0, 1, 1], [], []>} : vector<64x128xbf16>, vector<128x256xbf16>, vector<64x256xf32> -> vector<64x256xf32>
    %247 = vector.extract_strided_slice %246 {offsets = [0, 0], sizes = [64, 128], strides = [1, 1]} : vector<64x256xf32> to vector<64x128xf32>
    %c5_120 = arith.constant 5 : index
    %c0_121 = arith.constant 0 : index
    %248 = vector.load %arg4[%c5_120, %c0_121] : memref<21x128xf32, #tpu.memory_space<vmem>>, vector<1x128xf32>
    %249 = vector.shape_cast %248 : vector<1x128xf32> to vector<128xf32>
    %250 = vector.shape_cast %249 : vector<128xf32> to vector<1x128xf32>
    %251 = vector.broadcast %250 : vector<1x128xf32> to vector<64x128xf32>
    %252 = arith.addf %247, %251 : vector<64x128xf32>
    %cst_122 = arith.constant 0.000000e+00 : f32
    %253 = vector.broadcast %cst_122 : f32 to vector<64x128xf32>
    %254 = arith.maximumf %252, %253 : vector<64x128xf32>
    %c1_i32_123 = arith.constant 1 : i32
    %255 = tpu.dynamic_rotate %254 by %c1_i32_123 dim 0 : vector<64x128xf32>, i32 -> vector<64x128xf32>
    %256 = arith.mulf %255, %33 : vector<64x128xf32>
    %257 = arith.truncf %256 : vector<64x128xf32> to vector<64x128xbf16>
    %258 = arith.truncf %254 : vector<64x128xf32> to vector<64x128xbf16>
    %c63_i32 = arith.constant 63 : i32
    %259 = tpu.dynamic_rotate %254 by %c63_i32 dim 0 : vector<64x128xf32>, i32 -> vector<64x128xf32>
    %260 = arith.mulf %259, %38 : vector<64x128xf32>
    %261 = arith.truncf %260 : vector<64x128xf32> to vector<64x128xbf16>
    %c17 = arith.constant 17 : index
    %c0_124 = arith.constant 0 : index
    %c0_125 = arith.constant 0 : index
    %262 = vector.load %arg2[%c17, %c0_124, %c0_125] : memref<49x128x128xbf16, #tpu.memory_space<vmem>>, vector<1x128x128xbf16>
    %263 = vector.shape_cast %262 : vector<1x128x128xbf16> to vector<128x128xbf16>
    %cst_126 = arith.constant dense<0.000000e+00> : vector<64x128xf32>
    %264 = tpu.matmul %257, %263, %cst_126 {dimension_numbers = #tpu.dot_dimension_numbers<[1], [0], [0], [1], [0, 0, 1, 1], [], []>} : vector<64x128xbf16>, vector<128x128xbf16>, vector<64x128xf32> -> vector<64x128xf32>
    %c18 = arith.constant 18 : index
    %c0_127 = arith.constant 0 : index
    %c0_128 = arith.constant 0 : index
    %265 = vector.load %arg2[%c18, %c0_127, %c0_128] : memref<49x128x128xbf16, #tpu.memory_space<vmem>>, vector<1x128x128xbf16>
    %266 = vector.shape_cast %265 : vector<1x128x128xbf16> to vector<128x128xbf16>
    %cst_129 = arith.constant dense<0.000000e+00> : vector<64x128xf32>
    %267 = tpu.matmul %258, %266, %cst_129 {dimension_numbers = #tpu.dot_dimension_numbers<[1], [0], [0], [1], [0, 0, 1, 1], [], []>} : vector<64x128xbf16>, vector<128x128xbf16>, vector<64x128xf32> -> vector<64x128xf32>
    %268 = arith.addf %264, %267 : vector<64x128xf32>
    %c19 = arith.constant 19 : index
    %c0_130 = arith.constant 0 : index
    %c0_131 = arith.constant 0 : index
    %269 = vector.load %arg2[%c19, %c0_130, %c0_131] : memref<49x128x128xbf16, #tpu.memory_space<vmem>>, vector<1x128x128xbf16>
    %270 = vector.shape_cast %269 : vector<1x128x128xbf16> to vector<128x128xbf16>
    %cst_132 = arith.constant dense<0.000000e+00> : vector<64x128xf32>
    %271 = tpu.matmul %261, %270, %cst_132 {dimension_numbers = #tpu.dot_dimension_numbers<[1], [0], [0], [1], [0, 0, 1, 1], [], []>} : vector<64x128xbf16>, vector<128x128xbf16>, vector<64x128xf32> -> vector<64x128xf32>
    %272 = arith.addf %268, %271 : vector<64x128xf32>
    %c7_133 = arith.constant 7 : index
    %c0_134 = arith.constant 0 : index
    %273 = vector.load %arg4[%c7_133, %c0_134] : memref<21x128xf32, #tpu.memory_space<vmem>>, vector<1x128xf32>
    %274 = vector.shape_cast %273 : vector<1x128xf32> to vector<128xf32>
    %275 = vector.shape_cast %274 : vector<128xf32> to vector<1x128xf32>
    %276 = vector.broadcast %275 : vector<1x128xf32> to vector<64x128xf32>
    %277 = arith.addf %272, %276 : vector<64x128xf32>
    %278 = vector.extract_strided_slice %246 {offsets = [0, 128], sizes = [64, 128], strides = [1, 1]} : vector<64x256xf32> to vector<64x128xf32>
    %c6_135 = arith.constant 6 : index
    %c0_136 = arith.constant 0 : index
    %279 = vector.load %arg4[%c6_135, %c0_136] : memref<21x128xf32, #tpu.memory_space<vmem>>, vector<1x128xf32>
    %280 = vector.shape_cast %279 : vector<1x128xf32> to vector<128xf32>
    %281 = vector.shape_cast %280 : vector<128xf32> to vector<1x128xf32>
    %282 = vector.broadcast %281 : vector<1x128xf32> to vector<64x128xf32>
    %283 = arith.addf %278, %282 : vector<64x128xf32>
    %284 = arith.addf %277, %283 : vector<64x128xf32>
    %cst_137 = arith.constant 0.000000e+00 : f32
    %285 = vector.broadcast %cst_137 : f32 to vector<64x128xf32>
    %286 = arith.maximumf %284, %285 : vector<64x128xf32>
    %c1_i32_138 = arith.constant 1 : i32
    %287 = tpu.dynamic_rotate %286 by %c1_i32_138 dim 0 : vector<64x128xf32>, i32 -> vector<64x128xf32>
    %288 = arith.mulf %287, %33 : vector<64x128xf32>
    %289 = arith.truncf %288 : vector<64x128xf32> to vector<64x128xbf16>
    %290 = arith.truncf %286 : vector<64x128xf32> to vector<64x128xbf16>
    %c63_i32_139 = arith.constant 63 : i32
    %291 = tpu.dynamic_rotate %286 by %c63_i32_139 dim 0 : vector<64x128xf32>, i32 -> vector<64x128xf32>
    %292 = arith.mulf %291, %38 : vector<64x128xf32>
    %293 = arith.truncf %292 : vector<64x128xf32> to vector<64x128xbf16>
    %c20 = arith.constant 20 : index
    %c0_140 = arith.constant 0 : index
    %c0_141 = arith.constant 0 : index
    %294 = vector.load %arg2[%c20, %c0_140, %c0_141] : memref<49x128x128xbf16, #tpu.memory_space<vmem>>, vector<1x128x128xbf16>
    %295 = vector.shape_cast %294 : vector<1x128x128xbf16> to vector<128x128xbf16>
    %cst_142 = arith.constant dense<0.000000e+00> : vector<64x128xf32>
    %296 = tpu.matmul %289, %295, %cst_142 {dimension_numbers = #tpu.dot_dimension_numbers<[1], [0], [0], [1], [0, 0, 1, 1], [], []>} : vector<64x128xbf16>, vector<128x128xbf16>, vector<64x128xf32> -> vector<64x128xf32>
    %c21 = arith.constant 21 : index
    %c0_143 = arith.constant 0 : index
    %c0_144 = arith.constant 0 : index
    %297 = vector.load %arg2[%c21, %c0_143, %c0_144] : memref<49x128x128xbf16, #tpu.memory_space<vmem>>, vector<1x128x128xbf16>
    %298 = vector.shape_cast %297 : vector<1x128x128xbf16> to vector<128x128xbf16>
    %cst_145 = arith.constant dense<0.000000e+00> : vector<64x128xf32>
    %299 = tpu.matmul %290, %298, %cst_145 {dimension_numbers = #tpu.dot_dimension_numbers<[1], [0], [0], [1], [0, 0, 1, 1], [], []>} : vector<64x128xbf16>, vector<128x128xbf16>, vector<64x128xf32> -> vector<64x128xf32>
    %300 = arith.addf %296, %299 : vector<64x128xf32>
    %c22 = arith.constant 22 : index
    %c0_146 = arith.constant 0 : index
    %c0_147 = arith.constant 0 : index
    %301 = vector.load %arg2[%c22, %c0_146, %c0_147] : memref<49x128x128xbf16, #tpu.memory_space<vmem>>, vector<1x128x128xbf16>
    %302 = vector.shape_cast %301 : vector<1x128x128xbf16> to vector<128x128xbf16>
    %cst_148 = arith.constant dense<0.000000e+00> : vector<64x128xf32>
    %303 = tpu.matmul %293, %302, %cst_148 {dimension_numbers = #tpu.dot_dimension_numbers<[1], [0], [0], [1], [0, 0, 1, 1], [], []>} : vector<64x128xbf16>, vector<128x128xbf16>, vector<64x128xf32> -> vector<64x128xf32>
    %304 = arith.addf %300, %303 : vector<64x128xf32>
    %c8_149 = arith.constant 8 : index
    %c0_150 = arith.constant 0 : index
    %305 = vector.load %arg4[%c8_149, %c0_150] : memref<21x128xf32, #tpu.memory_space<vmem>>, vector<1x128xf32>
    %306 = vector.shape_cast %305 : vector<1x128xf32> to vector<128xf32>
    %307 = vector.shape_cast %306 : vector<128xf32> to vector<1x128xf32>
    %308 = vector.broadcast %307 : vector<1x128xf32> to vector<64x128xf32>
    %309 = arith.addf %304, %308 : vector<64x128xf32>
    %cst_151 = arith.constant 0.000000e+00 : f32
    %310 = vector.broadcast %cst_151 : f32 to vector<64x128xf32>
    %311 = arith.maximumf %309, %310 : vector<64x128xf32>
    %c1_i32_152 = arith.constant 1 : i32
    %312 = tpu.dynamic_rotate %311 by %c1_i32_152 dim 0 : vector<64x128xf32>, i32 -> vector<64x128xf32>
    %313 = arith.mulf %312, %33 : vector<64x128xf32>
    %314 = arith.truncf %313 : vector<64x128xf32> to vector<64x128xbf16>
    %315 = arith.truncf %311 : vector<64x128xf32> to vector<64x128xbf16>
    %c63_i32_153 = arith.constant 63 : i32
    %316 = tpu.dynamic_rotate %311 by %c63_i32_153 dim 0 : vector<64x128xf32>, i32 -> vector<64x128xf32>
    %317 = arith.mulf %316, %38 : vector<64x128xf32>
    %318 = arith.truncf %317 : vector<64x128xf32> to vector<64x128xbf16>
    %c23 = arith.constant 23 : index
    %c0_154 = arith.constant 0 : index
    %c0_155 = arith.constant 0 : index
    %319 = vector.load %arg2[%c23, %c0_154, %c0_155] : memref<49x128x128xbf16, #tpu.memory_space<vmem>>, vector<1x128x128xbf16>
    %320 = vector.shape_cast %319 : vector<1x128x128xbf16> to vector<128x128xbf16>
    %cst_156 = arith.constant dense<0.000000e+00> : vector<64x128xf32>
    %321 = tpu.matmul %314, %320, %cst_156 {dimension_numbers = #tpu.dot_dimension_numbers<[1], [0], [0], [1], [0, 0, 1, 1], [], []>} : vector<64x128xbf16>, vector<128x128xbf16>, vector<64x128xf32> -> vector<64x128xf32>
    %c24 = arith.constant 24 : index
    %c0_157 = arith.constant 0 : index
    %c0_158 = arith.constant 0 : index
    %322 = vector.load %arg2[%c24, %c0_157, %c0_158] : memref<49x128x128xbf16, #tpu.memory_space<vmem>>, vector<1x128x128xbf16>
    %323 = vector.shape_cast %322 : vector<1x128x128xbf16> to vector<128x128xbf16>
    %cst_159 = arith.constant dense<0.000000e+00> : vector<64x128xf32>
    %324 = tpu.matmul %315, %323, %cst_159 {dimension_numbers = #tpu.dot_dimension_numbers<[1], [0], [0], [1], [0, 0, 1, 1], [], []>} : vector<64x128xbf16>, vector<128x128xbf16>, vector<64x128xf32> -> vector<64x128xf32>
    %325 = arith.addf %321, %324 : vector<64x128xf32>
    %c25 = arith.constant 25 : index
    %c0_160 = arith.constant 0 : index
    %c0_161 = arith.constant 0 : index
    %326 = vector.load %arg2[%c25, %c0_160, %c0_161] : memref<49x128x128xbf16, #tpu.memory_space<vmem>>, vector<1x128x128xbf16>
    %327 = vector.shape_cast %326 : vector<1x128x128xbf16> to vector<128x128xbf16>
    %cst_162 = arith.constant dense<0.000000e+00> : vector<64x128xf32>
    %328 = tpu.matmul %318, %327, %cst_162 {dimension_numbers = #tpu.dot_dimension_numbers<[1], [0], [0], [1], [0, 0, 1, 1], [], []>} : vector<64x128xbf16>, vector<128x128xbf16>, vector<64x128xf32> -> vector<64x128xf32>
    %329 = arith.addf %325, %328 : vector<64x128xf32>
    %c9_163 = arith.constant 9 : index
    %c0_164 = arith.constant 0 : index
    %330 = vector.load %arg4[%c9_163, %c0_164] : memref<21x128xf32, #tpu.memory_space<vmem>>, vector<1x128xf32>
    %331 = vector.shape_cast %330 : vector<1x128xf32> to vector<128xf32>
    %332 = vector.shape_cast %331 : vector<128xf32> to vector<1x128xf32>
    %333 = vector.broadcast %332 : vector<1x128xf32> to vector<64x128xf32>
    %334 = arith.addf %329, %333 : vector<64x128xf32>
    %335 = arith.addf %334, %286 : vector<64x128xf32>
    %cst_165 = arith.constant 0.000000e+00 : f32
    %336 = vector.broadcast %cst_165 : f32 to vector<64x128xf32>
    %337 = arith.maximumf %335, %336 : vector<64x128xf32>
    %c1_i32_166 = arith.constant 1 : i32
    %338 = tpu.dynamic_rotate %337 by %c1_i32_166 dim 0 : vector<64x128xf32>, i32 -> vector<64x128xf32>
    %339 = arith.mulf %338, %33 : vector<64x128xf32>
    %340 = arith.truncf %339 : vector<64x128xf32> to vector<64x128xbf16>
    %341 = arith.truncf %337 : vector<64x128xf32> to vector<64x128xbf16>
    %c63_i32_167 = arith.constant 63 : i32
    %342 = tpu.dynamic_rotate %337 by %c63_i32_167 dim 0 : vector<64x128xf32>, i32 -> vector<64x128xf32>
    %343 = arith.mulf %342, %38 : vector<64x128xf32>
    %344 = arith.truncf %343 : vector<64x128xf32> to vector<64x128xbf16>
    %c1_168 = arith.constant 1 : index
    %c0_169 = arith.constant 0 : index
    %c0_170 = arith.constant 0 : index
    %345 = vector.load %arg3[%c1_168, %c0_169, %c0_170] : memref<3x128x256xbf16, #tpu.memory_space<vmem>>, vector<1x128x256xbf16>
    %346 = vector.shape_cast %345 : vector<1x128x256xbf16> to vector<128x256xbf16>
    %cst_171 = arith.constant dense<0.000000e+00> : vector<64x256xf32>
    %347 = tpu.matmul %341, %346, %cst_171 {dimension_numbers = #tpu.dot_dimension_numbers<[1], [0], [0], [1], [0, 0, 1, 1], [], []>} : vector<64x128xbf16>, vector<128x256xbf16>, vector<64x256xf32> -> vector<64x256xf32>
    %c26 = arith.constant 26 : index
    %c0_172 = arith.constant 0 : index
    %c0_173 = arith.constant 0 : index
    %348 = vector.load %arg2[%c26, %c0_172, %c0_173] : memref<49x128x128xbf16, #tpu.memory_space<vmem>>, vector<1x128x128xbf16>
    %349 = vector.shape_cast %348 : vector<1x128x128xbf16> to vector<128x128xbf16>
    %cst_174 = arith.constant dense<0.000000e+00> : vector<64x128xf32>
    %350 = tpu.matmul %340, %349, %cst_174 {dimension_numbers = #tpu.dot_dimension_numbers<[1], [0], [0], [1], [0, 0, 1, 1], [], []>} : vector<64x128xbf16>, vector<128x128xbf16>, vector<64x128xf32> -> vector<64x128xf32>
    %351 = vector.extract_strided_slice %347 {offsets = [0, 0], sizes = [64, 128], strides = [1, 1]} : vector<64x256xf32> to vector<64x128xf32>
    %352 = arith.addf %350, %351 : vector<64x128xf32>
    %c27 = arith.constant 27 : index
    %c0_175 = arith.constant 0 : index
    %c0_176 = arith.constant 0 : index
    %353 = vector.load %arg2[%c27, %c0_175, %c0_176] : memref<49x128x128xbf16, #tpu.memory_space<vmem>>, vector<1x128x128xbf16>
    %354 = vector.shape_cast %353 : vector<1x128x128xbf16> to vector<128x128xbf16>
    %cst_177 = arith.constant dense<0.000000e+00> : vector<64x128xf32>
    %355 = tpu.matmul %344, %354, %cst_177 {dimension_numbers = #tpu.dot_dimension_numbers<[1], [0], [0], [1], [0, 0, 1, 1], [], []>} : vector<64x128xbf16>, vector<128x128xbf16>, vector<64x128xf32> -> vector<64x128xf32>
    %356 = arith.addf %352, %355 : vector<64x128xf32>
    %357 = vector.extract_strided_slice %347 {offsets = [0, 128], sizes = [64, 128], strides = [1, 1]} : vector<64x256xf32> to vector<64x128xf32>
    %358 = tpu.concatenate %356, %357 in 1 : vector<64x128xf32>, vector<64x128xf32> -> vector<64x256xf32>
    %359 = arith.truncf %358 : vector<64x256xf32> to vector<64x256xbf16>
    %cst_178 = arith.constant dense<0.000000e+00> : vector<32x256xf32>
    %360 = tpu.matmul %69, %359, %cst_178 {dimension_numbers = #tpu.dot_dimension_numbers<[1], [0], [0], [1], [0, 0, 1, 1], [], []>} : vector<32x64xbf16>, vector<64x256xbf16>, vector<32x256xf32> -> vector<32x256xf32>
    %361 = vector.extract_strided_slice %360 {offsets = [0, 0], sizes = [32, 128], strides = [1, 1]} : vector<32x256xf32> to vector<32x128xf32>
    %c10_179 = arith.constant 10 : index
    %c0_180 = arith.constant 0 : index
    %362 = vector.load %arg4[%c10_179, %c0_180] : memref<21x128xf32, #tpu.memory_space<vmem>>, vector<1x128xf32>
    %363 = vector.shape_cast %362 : vector<1x128xf32> to vector<128xf32>
    %364 = vector.shape_cast %363 : vector<128xf32> to vector<1x128xf32>
    %365 = vector.broadcast %364 : vector<1x128xf32> to vector<32x128xf32>
    %366 = arith.addf %361, %365 : vector<32x128xf32>
    %cst_181 = arith.constant 0.000000e+00 : f32
    %367 = vector.broadcast %cst_181 : f32 to vector<32x128xf32>
    %368 = arith.maximumf %366, %367 : vector<32x128xf32>
    %c1_i32_182 = arith.constant 1 : i32
    %369 = tpu.dynamic_rotate %368 by %c1_i32_182 dim 0 : vector<32x128xf32>, i32 -> vector<32x128xf32>
    %370 = arith.mulf %369, %20 : vector<32x128xf32>
    %371 = arith.truncf %370 : vector<32x128xf32> to vector<32x128xbf16>
    %372 = arith.truncf %368 : vector<32x128xf32> to vector<32x128xbf16>
    %c31_i32 = arith.constant 31 : i32
    %373 = tpu.dynamic_rotate %368 by %c31_i32 dim 0 : vector<32x128xf32>, i32 -> vector<32x128xf32>
    %374 = arith.mulf %373, %25 : vector<32x128xf32>
    %375 = arith.truncf %374 : vector<32x128xf32> to vector<32x128xbf16>
    %c28 = arith.constant 28 : index
    %c0_183 = arith.constant 0 : index
    %c0_184 = arith.constant 0 : index
    %376 = vector.load %arg2[%c28, %c0_183, %c0_184] : memref<49x128x128xbf16, #tpu.memory_space<vmem>>, vector<1x128x128xbf16>
    %377 = vector.shape_cast %376 : vector<1x128x128xbf16> to vector<128x128xbf16>
    %cst_185 = arith.constant dense<0.000000e+00> : vector<32x128xf32>
    %378 = tpu.matmul %371, %377, %cst_185 {dimension_numbers = #tpu.dot_dimension_numbers<[1], [0], [0], [1], [0, 0, 1, 1], [], []>} : vector<32x128xbf16>, vector<128x128xbf16>, vector<32x128xf32> -> vector<32x128xf32>
    %c29 = arith.constant 29 : index
    %c0_186 = arith.constant 0 : index
    %c0_187 = arith.constant 0 : index
    %379 = vector.load %arg2[%c29, %c0_186, %c0_187] : memref<49x128x128xbf16, #tpu.memory_space<vmem>>, vector<1x128x128xbf16>
    %380 = vector.shape_cast %379 : vector<1x128x128xbf16> to vector<128x128xbf16>
    %cst_188 = arith.constant dense<0.000000e+00> : vector<32x128xf32>
    %381 = tpu.matmul %372, %380, %cst_188 {dimension_numbers = #tpu.dot_dimension_numbers<[1], [0], [0], [1], [0, 0, 1, 1], [], []>} : vector<32x128xbf16>, vector<128x128xbf16>, vector<32x128xf32> -> vector<32x128xf32>
    %382 = arith.addf %378, %381 : vector<32x128xf32>
    %c30 = arith.constant 30 : index
    %c0_189 = arith.constant 0 : index
    %c0_190 = arith.constant 0 : index
    %383 = vector.load %arg2[%c30, %c0_189, %c0_190] : memref<49x128x128xbf16, #tpu.memory_space<vmem>>, vector<1x128x128xbf16>
    %384 = vector.shape_cast %383 : vector<1x128x128xbf16> to vector<128x128xbf16>
    %cst_191 = arith.constant dense<0.000000e+00> : vector<32x128xf32>
    %385 = tpu.matmul %375, %384, %cst_191 {dimension_numbers = #tpu.dot_dimension_numbers<[1], [0], [0], [1], [0, 0, 1, 1], [], []>} : vector<32x128xbf16>, vector<128x128xbf16>, vector<32x128xf32> -> vector<32x128xf32>
    %386 = arith.addf %382, %385 : vector<32x128xf32>
    %c12_192 = arith.constant 12 : index
    %c0_193 = arith.constant 0 : index
    %387 = vector.load %arg4[%c12_192, %c0_193] : memref<21x128xf32, #tpu.memory_space<vmem>>, vector<1x128xf32>
    %388 = vector.shape_cast %387 : vector<1x128xf32> to vector<128xf32>
    %389 = vector.shape_cast %388 : vector<128xf32> to vector<1x128xf32>
    %390 = vector.broadcast %389 : vector<1x128xf32> to vector<32x128xf32>
    %391 = arith.addf %386, %390 : vector<32x128xf32>
    %392 = vector.extract_strided_slice %360 {offsets = [0, 128], sizes = [32, 128], strides = [1, 1]} : vector<32x256xf32> to vector<32x128xf32>
    %c11_194 = arith.constant 11 : index
    %c0_195 = arith.constant 0 : index
    %393 = vector.load %arg4[%c11_194, %c0_195] : memref<21x128xf32, #tpu.memory_space<vmem>>, vector<1x128xf32>
    %394 = vector.shape_cast %393 : vector<1x128xf32> to vector<128xf32>
    %395 = vector.shape_cast %394 : vector<128xf32> to vector<1x128xf32>
    %396 = vector.broadcast %395 : vector<1x128xf32> to vector<32x128xf32>
    %397 = arith.addf %392, %396 : vector<32x128xf32>
    %398 = arith.addf %391, %397 : vector<32x128xf32>
    %cst_196 = arith.constant 0.000000e+00 : f32
    %399 = vector.broadcast %cst_196 : f32 to vector<32x128xf32>
    %400 = arith.maximumf %398, %399 : vector<32x128xf32>
    %c1_i32_197 = arith.constant 1 : i32
    %401 = tpu.dynamic_rotate %400 by %c1_i32_197 dim 0 : vector<32x128xf32>, i32 -> vector<32x128xf32>
    %402 = arith.mulf %401, %20 : vector<32x128xf32>
    %403 = arith.truncf %402 : vector<32x128xf32> to vector<32x128xbf16>
    %404 = arith.truncf %400 : vector<32x128xf32> to vector<32x128xbf16>
    %c31_i32_198 = arith.constant 31 : i32
    %405 = tpu.dynamic_rotate %400 by %c31_i32_198 dim 0 : vector<32x128xf32>, i32 -> vector<32x128xf32>
    %406 = arith.mulf %405, %25 : vector<32x128xf32>
    %407 = arith.truncf %406 : vector<32x128xf32> to vector<32x128xbf16>
    %c31 = arith.constant 31 : index
    %c0_199 = arith.constant 0 : index
    %c0_200 = arith.constant 0 : index
    %408 = vector.load %arg2[%c31, %c0_199, %c0_200] : memref<49x128x128xbf16, #tpu.memory_space<vmem>>, vector<1x128x128xbf16>
    %409 = vector.shape_cast %408 : vector<1x128x128xbf16> to vector<128x128xbf16>
    %cst_201 = arith.constant dense<0.000000e+00> : vector<32x128xf32>
    %410 = tpu.matmul %403, %409, %cst_201 {dimension_numbers = #tpu.dot_dimension_numbers<[1], [0], [0], [1], [0, 0, 1, 1], [], []>} : vector<32x128xbf16>, vector<128x128xbf16>, vector<32x128xf32> -> vector<32x128xf32>
    %c32 = arith.constant 32 : index
    %c0_202 = arith.constant 0 : index
    %c0_203 = arith.constant 0 : index
    %411 = vector.load %arg2[%c32, %c0_202, %c0_203] : memref<49x128x128xbf16, #tpu.memory_space<vmem>>, vector<1x128x128xbf16>
    %412 = vector.shape_cast %411 : vector<1x128x128xbf16> to vector<128x128xbf16>
    %cst_204 = arith.constant dense<0.000000e+00> : vector<32x128xf32>
    %413 = tpu.matmul %404, %412, %cst_204 {dimension_numbers = #tpu.dot_dimension_numbers<[1], [0], [0], [1], [0, 0, 1, 1], [], []>} : vector<32x128xbf16>, vector<128x128xbf16>, vector<32x128xf32> -> vector<32x128xf32>
    %414 = arith.addf %410, %413 : vector<32x128xf32>
    %c33 = arith.constant 33 : index
    %c0_205 = arith.constant 0 : index
    %c0_206 = arith.constant 0 : index
    %415 = vector.load %arg2[%c33, %c0_205, %c0_206] : memref<49x128x128xbf16, #tpu.memory_space<vmem>>, vector<1x128x128xbf16>
    %416 = vector.shape_cast %415 : vector<1x128x128xbf16> to vector<128x128xbf16>
    %cst_207 = arith.constant dense<0.000000e+00> : vector<32x128xf32>
    %417 = tpu.matmul %407, %416, %cst_207 {dimension_numbers = #tpu.dot_dimension_numbers<[1], [0], [0], [1], [0, 0, 1, 1], [], []>} : vector<32x128xbf16>, vector<128x128xbf16>, vector<32x128xf32> -> vector<32x128xf32>
    %418 = arith.addf %414, %417 : vector<32x128xf32>
    %c13_208 = arith.constant 13 : index
    %c0_209 = arith.constant 0 : index
    %419 = vector.load %arg4[%c13_208, %c0_209] : memref<21x128xf32, #tpu.memory_space<vmem>>, vector<1x128xf32>
    %420 = vector.shape_cast %419 : vector<1x128xf32> to vector<128xf32>
    %421 = vector.shape_cast %420 : vector<128xf32> to vector<1x128xf32>
    %422 = vector.broadcast %421 : vector<1x128xf32> to vector<32x128xf32>
    %423 = arith.addf %418, %422 : vector<32x128xf32>
    %cst_210 = arith.constant 0.000000e+00 : f32
    %424 = vector.broadcast %cst_210 : f32 to vector<32x128xf32>
    %425 = arith.maximumf %423, %424 : vector<32x128xf32>
    %c1_i32_211 = arith.constant 1 : i32
    %426 = tpu.dynamic_rotate %425 by %c1_i32_211 dim 0 : vector<32x128xf32>, i32 -> vector<32x128xf32>
    %427 = arith.mulf %426, %20 : vector<32x128xf32>
    %428 = arith.truncf %427 : vector<32x128xf32> to vector<32x128xbf16>
    %429 = arith.truncf %425 : vector<32x128xf32> to vector<32x128xbf16>
    %c31_i32_212 = arith.constant 31 : i32
    %430 = tpu.dynamic_rotate %425 by %c31_i32_212 dim 0 : vector<32x128xf32>, i32 -> vector<32x128xf32>
    %431 = arith.mulf %430, %25 : vector<32x128xf32>
    %432 = arith.truncf %431 : vector<32x128xf32> to vector<32x128xbf16>
    %c34 = arith.constant 34 : index
    %c0_213 = arith.constant 0 : index
    %c0_214 = arith.constant 0 : index
    %433 = vector.load %arg2[%c34, %c0_213, %c0_214] : memref<49x128x128xbf16, #tpu.memory_space<vmem>>, vector<1x128x128xbf16>
    %434 = vector.shape_cast %433 : vector<1x128x128xbf16> to vector<128x128xbf16>
    %cst_215 = arith.constant dense<0.000000e+00> : vector<32x128xf32>
    %435 = tpu.matmul %428, %434, %cst_215 {dimension_numbers = #tpu.dot_dimension_numbers<[1], [0], [0], [1], [0, 0, 1, 1], [], []>} : vector<32x128xbf16>, vector<128x128xbf16>, vector<32x128xf32> -> vector<32x128xf32>
    %c35 = arith.constant 35 : index
    %c0_216 = arith.constant 0 : index
    %c0_217 = arith.constant 0 : index
    %436 = vector.load %arg2[%c35, %c0_216, %c0_217] : memref<49x128x128xbf16, #tpu.memory_space<vmem>>, vector<1x128x128xbf16>
    %437 = vector.shape_cast %436 : vector<1x128x128xbf16> to vector<128x128xbf16>
    %cst_218 = arith.constant dense<0.000000e+00> : vector<32x128xf32>
    %438 = tpu.matmul %429, %437, %cst_218 {dimension_numbers = #tpu.dot_dimension_numbers<[1], [0], [0], [1], [0, 0, 1, 1], [], []>} : vector<32x128xbf16>, vector<128x128xbf16>, vector<32x128xf32> -> vector<32x128xf32>
    %439 = arith.addf %435, %438 : vector<32x128xf32>
    %c36 = arith.constant 36 : index
    %c0_219 = arith.constant 0 : index
    %c0_220 = arith.constant 0 : index
    %440 = vector.load %arg2[%c36, %c0_219, %c0_220] : memref<49x128x128xbf16, #tpu.memory_space<vmem>>, vector<1x128x128xbf16>
    %441 = vector.shape_cast %440 : vector<1x128x128xbf16> to vector<128x128xbf16>
    %cst_221 = arith.constant dense<0.000000e+00> : vector<32x128xf32>
    %442 = tpu.matmul %432, %441, %cst_221 {dimension_numbers = #tpu.dot_dimension_numbers<[1], [0], [0], [1], [0, 0, 1, 1], [], []>} : vector<32x128xbf16>, vector<128x128xbf16>, vector<32x128xf32> -> vector<32x128xf32>
    %443 = arith.addf %439, %442 : vector<32x128xf32>
    %c14_222 = arith.constant 14 : index
    %c0_223 = arith.constant 0 : index
    %444 = vector.load %arg4[%c14_222, %c0_223] : memref<21x128xf32, #tpu.memory_space<vmem>>, vector<1x128xf32>
    %445 = vector.shape_cast %444 : vector<1x128xf32> to vector<128xf32>
    %446 = vector.shape_cast %445 : vector<128xf32> to vector<1x128xf32>
    %447 = vector.broadcast %446 : vector<1x128xf32> to vector<32x128xf32>
    %448 = arith.addf %443, %447 : vector<32x128xf32>
    %449 = arith.addf %448, %400 : vector<32x128xf32>
    %cst_224 = arith.constant 0.000000e+00 : f32
    %450 = vector.broadcast %cst_224 : f32 to vector<32x128xf32>
    %451 = arith.maximumf %449, %450 : vector<32x128xf32>
    %c1_i32_225 = arith.constant 1 : i32
    %452 = tpu.dynamic_rotate %451 by %c1_i32_225 dim 0 : vector<32x128xf32>, i32 -> vector<32x128xf32>
    %453 = arith.mulf %452, %20 : vector<32x128xf32>
    %454 = arith.truncf %453 : vector<32x128xf32> to vector<32x128xbf16>
    %455 = arith.truncf %451 : vector<32x128xf32> to vector<32x128xbf16>
    %c31_i32_226 = arith.constant 31 : i32
    %456 = tpu.dynamic_rotate %451 by %c31_i32_226 dim 0 : vector<32x128xf32>, i32 -> vector<32x128xf32>
    %457 = arith.mulf %456, %25 : vector<32x128xf32>
    %458 = arith.truncf %457 : vector<32x128xf32> to vector<32x128xbf16>
    %c2_227 = arith.constant 2 : index
    %c0_228 = arith.constant 0 : index
    %c0_229 = arith.constant 0 : index
    %459 = vector.load %arg3[%c2_227, %c0_228, %c0_229] : memref<3x128x256xbf16, #tpu.memory_space<vmem>>, vector<1x128x256xbf16>
    %460 = vector.shape_cast %459 : vector<1x128x256xbf16> to vector<128x256xbf16>
    %cst_230 = arith.constant dense<0.000000e+00> : vector<32x256xf32>
    %461 = tpu.matmul %455, %460, %cst_230 {dimension_numbers = #tpu.dot_dimension_numbers<[1], [0], [0], [1], [0, 0, 1, 1], [], []>} : vector<32x128xbf16>, vector<128x256xbf16>, vector<32x256xf32> -> vector<32x256xf32>
    %c37 = arith.constant 37 : index
    %c0_231 = arith.constant 0 : index
    %c0_232 = arith.constant 0 : index
    %462 = vector.load %arg2[%c37, %c0_231, %c0_232] : memref<49x128x128xbf16, #tpu.memory_space<vmem>>, vector<1x128x128xbf16>
    %463 = vector.shape_cast %462 : vector<1x128x128xbf16> to vector<128x128xbf16>
    %cst_233 = arith.constant dense<0.000000e+00> : vector<32x128xf32>
    %464 = tpu.matmul %454, %463, %cst_233 {dimension_numbers = #tpu.dot_dimension_numbers<[1], [0], [0], [1], [0, 0, 1, 1], [], []>} : vector<32x128xbf16>, vector<128x128xbf16>, vector<32x128xf32> -> vector<32x128xf32>
    %465 = vector.extract_strided_slice %461 {offsets = [0, 0], sizes = [32, 128], strides = [1, 1]} : vector<32x256xf32> to vector<32x128xf32>
    %466 = arith.addf %464, %465 : vector<32x128xf32>
    %c38 = arith.constant 38 : index
    %c0_234 = arith.constant 0 : index
    %c0_235 = arith.constant 0 : index
    %467 = vector.load %arg2[%c38, %c0_234, %c0_235] : memref<49x128x128xbf16, #tpu.memory_space<vmem>>, vector<1x128x128xbf16>
    %468 = vector.shape_cast %467 : vector<1x128x128xbf16> to vector<128x128xbf16>
    %cst_236 = arith.constant dense<0.000000e+00> : vector<32x128xf32>
    %469 = tpu.matmul %458, %468, %cst_236 {dimension_numbers = #tpu.dot_dimension_numbers<[1], [0], [0], [1], [0, 0, 1, 1], [], []>} : vector<32x128xbf16>, vector<128x128xbf16>, vector<32x128xf32> -> vector<32x128xf32>
    %470 = arith.addf %466, %469 : vector<32x128xf32>
    %471 = vector.extract_strided_slice %461 {offsets = [0, 128], sizes = [32, 128], strides = [1, 1]} : vector<32x256xf32> to vector<32x128xf32>
    %472 = tpu.concatenate %470, %471 in 1 : vector<32x128xf32>, vector<32x128xf32> -> vector<32x256xf32>
    %473 = arith.truncf %472 : vector<32x256xf32> to vector<32x256xbf16>
    %cst_237 = arith.constant dense<0.000000e+00> : vector<16x256xf32>
    %474 = tpu.matmul %60, %473, %cst_237 {dimension_numbers = #tpu.dot_dimension_numbers<[1], [0], [0], [1], [0, 0, 1, 1], [], []>} : vector<16x32xbf16>, vector<32x256xbf16>, vector<16x256xf32> -> vector<16x256xf32>
    %475 = vector.extract_strided_slice %474 {offsets = [0, 0], sizes = [16, 128], strides = [1, 1]} : vector<16x256xf32> to vector<16x128xf32>
    %c15_238 = arith.constant 15 : index
    %c0_239 = arith.constant 0 : index
    %476 = vector.load %arg4[%c15_238, %c0_239] : memref<21x128xf32, #tpu.memory_space<vmem>>, vector<1x128xf32>
    %477 = vector.shape_cast %476 : vector<1x128xf32> to vector<128xf32>
    %478 = vector.shape_cast %477 : vector<128xf32> to vector<1x128xf32>
    %479 = vector.broadcast %478 : vector<1x128xf32> to vector<16x128xf32>
    %480 = arith.addf %475, %479 : vector<16x128xf32>
    %cst_240 = arith.constant 0.000000e+00 : f32
    %481 = vector.broadcast %cst_240 : f32 to vector<16x128xf32>
    %482 = arith.maximumf %480, %481 : vector<16x128xf32>
    %c1_i32_241 = arith.constant 1 : i32
    %483 = tpu.dynamic_rotate %482 by %c1_i32_241 dim 0 : vector<16x128xf32>, i32 -> vector<16x128xf32>
    %484 = arith.mulf %483, %7 : vector<16x128xf32>
    %485 = arith.truncf %484 : vector<16x128xf32> to vector<16x128xbf16>
    %486 = arith.truncf %482 : vector<16x128xf32> to vector<16x128xbf16>
    %c15_i32_242 = arith.constant 15 : i32
    %487 = tpu.dynamic_rotate %482 by %c15_i32_242 dim 0 : vector<16x128xf32>, i32 -> vector<16x128xf32>
    %488 = arith.mulf %487, %12 : vector<16x128xf32>
    %489 = arith.truncf %488 : vector<16x128xf32> to vector<16x128xbf16>
    %c39 = arith.constant 39 : index
    %c0_243 = arith.constant 0 : index
    %c0_244 = arith.constant 0 : index
    %490 = vector.load %arg2[%c39, %c0_243, %c0_244] : memref<49x128x128xbf16, #tpu.memory_space<vmem>>, vector<1x128x128xbf16>
    %491 = vector.shape_cast %490 : vector<1x128x128xbf16> to vector<128x128xbf16>
    %cst_245 = arith.constant dense<0.000000e+00> : vector<16x128xf32>
    %492 = tpu.matmul %485, %491, %cst_245 {dimension_numbers = #tpu.dot_dimension_numbers<[1], [0], [0], [1], [0, 0, 1, 1], [], []>} : vector<16x128xbf16>, vector<128x128xbf16>, vector<16x128xf32> -> vector<16x128xf32>
    %c40 = arith.constant 40 : index
    %c0_246 = arith.constant 0 : index
    %c0_247 = arith.constant 0 : index
    %493 = vector.load %arg2[%c40, %c0_246, %c0_247] : memref<49x128x128xbf16, #tpu.memory_space<vmem>>, vector<1x128x128xbf16>
    %494 = vector.shape_cast %493 : vector<1x128x128xbf16> to vector<128x128xbf16>
    %cst_248 = arith.constant dense<0.000000e+00> : vector<16x128xf32>
    %495 = tpu.matmul %486, %494, %cst_248 {dimension_numbers = #tpu.dot_dimension_numbers<[1], [0], [0], [1], [0, 0, 1, 1], [], []>} : vector<16x128xbf16>, vector<128x128xbf16>, vector<16x128xf32> -> vector<16x128xf32>
    %496 = arith.addf %492, %495 : vector<16x128xf32>
    %c41 = arith.constant 41 : index
    %c0_249 = arith.constant 0 : index
    %c0_250 = arith.constant 0 : index
    %497 = vector.load %arg2[%c41, %c0_249, %c0_250] : memref<49x128x128xbf16, #tpu.memory_space<vmem>>, vector<1x128x128xbf16>
    %498 = vector.shape_cast %497 : vector<1x128x128xbf16> to vector<128x128xbf16>
    %cst_251 = arith.constant dense<0.000000e+00> : vector<16x128xf32>
    %499 = tpu.matmul %489, %498, %cst_251 {dimension_numbers = #tpu.dot_dimension_numbers<[1], [0], [0], [1], [0, 0, 1, 1], [], []>} : vector<16x128xbf16>, vector<128x128xbf16>, vector<16x128xf32> -> vector<16x128xf32>
    %500 = arith.addf %496, %499 : vector<16x128xf32>
    %c17_252 = arith.constant 17 : index
    %c0_253 = arith.constant 0 : index
    %501 = vector.load %arg4[%c17_252, %c0_253] : memref<21x128xf32, #tpu.memory_space<vmem>>, vector<1x128xf32>
    %502 = vector.shape_cast %501 : vector<1x128xf32> to vector<128xf32>
    %503 = vector.shape_cast %502 : vector<128xf32> to vector<1x128xf32>
    %504 = vector.broadcast %503 : vector<1x128xf32> to vector<16x128xf32>
    %505 = arith.addf %500, %504 : vector<16x128xf32>
    %506 = vector.extract_strided_slice %474 {offsets = [0, 128], sizes = [16, 128], strides = [1, 1]} : vector<16x256xf32> to vector<16x128xf32>
    %c16_254 = arith.constant 16 : index
    %c0_255 = arith.constant 0 : index
    %507 = vector.load %arg4[%c16_254, %c0_255] : memref<21x128xf32, #tpu.memory_space<vmem>>, vector<1x128xf32>
    %508 = vector.shape_cast %507 : vector<1x128xf32> to vector<128xf32>
    %509 = vector.shape_cast %508 : vector<128xf32> to vector<1x128xf32>
    %510 = vector.broadcast %509 : vector<1x128xf32> to vector<16x128xf32>
    %511 = arith.addf %506, %510 : vector<16x128xf32>
    %512 = arith.addf %505, %511 : vector<16x128xf32>
    %cst_256 = arith.constant 0.000000e+00 : f32
    %513 = vector.broadcast %cst_256 : f32 to vector<16x128xf32>
    %514 = arith.maximumf %512, %513 : vector<16x128xf32>
    %c1_i32_257 = arith.constant 1 : i32
    %515 = tpu.dynamic_rotate %514 by %c1_i32_257 dim 0 : vector<16x128xf32>, i32 -> vector<16x128xf32>
    %516 = arith.mulf %515, %7 : vector<16x128xf32>
    %517 = arith.truncf %516 : vector<16x128xf32> to vector<16x128xbf16>
    %518 = arith.truncf %514 : vector<16x128xf32> to vector<16x128xbf16>
    %c15_i32_258 = arith.constant 15 : i32
    %519 = tpu.dynamic_rotate %514 by %c15_i32_258 dim 0 : vector<16x128xf32>, i32 -> vector<16x128xf32>
    %520 = arith.mulf %519, %12 : vector<16x128xf32>
    %521 = arith.truncf %520 : vector<16x128xf32> to vector<16x128xbf16>
    %c42 = arith.constant 42 : index
    %c0_259 = arith.constant 0 : index
    %c0_260 = arith.constant 0 : index
    %522 = vector.load %arg2[%c42, %c0_259, %c0_260] : memref<49x128x128xbf16, #tpu.memory_space<vmem>>, vector<1x128x128xbf16>
    %523 = vector.shape_cast %522 : vector<1x128x128xbf16> to vector<128x128xbf16>
    %cst_261 = arith.constant dense<0.000000e+00> : vector<16x128xf32>
    %524 = tpu.matmul %517, %523, %cst_261 {dimension_numbers = #tpu.dot_dimension_numbers<[1], [0], [0], [1], [0, 0, 1, 1], [], []>} : vector<16x128xbf16>, vector<128x128xbf16>, vector<16x128xf32> -> vector<16x128xf32>
    %c43 = arith.constant 43 : index
    %c0_262 = arith.constant 0 : index
    %c0_263 = arith.constant 0 : index
    %525 = vector.load %arg2[%c43, %c0_262, %c0_263] : memref<49x128x128xbf16, #tpu.memory_space<vmem>>, vector<1x128x128xbf16>
    %526 = vector.shape_cast %525 : vector<1x128x128xbf16> to vector<128x128xbf16>
    %cst_264 = arith.constant dense<0.000000e+00> : vector<16x128xf32>
    %527 = tpu.matmul %518, %526, %cst_264 {dimension_numbers = #tpu.dot_dimension_numbers<[1], [0], [0], [1], [0, 0, 1, 1], [], []>} : vector<16x128xbf16>, vector<128x128xbf16>, vector<16x128xf32> -> vector<16x128xf32>
    %528 = arith.addf %524, %527 : vector<16x128xf32>
    %c44 = arith.constant 44 : index
    %c0_265 = arith.constant 0 : index
    %c0_266 = arith.constant 0 : index
    %529 = vector.load %arg2[%c44, %c0_265, %c0_266] : memref<49x128x128xbf16, #tpu.memory_space<vmem>>, vector<1x128x128xbf16>
    %530 = vector.shape_cast %529 : vector<1x128x128xbf16> to vector<128x128xbf16>
    %cst_267 = arith.constant dense<0.000000e+00> : vector<16x128xf32>
    %531 = tpu.matmul %521, %530, %cst_267 {dimension_numbers = #tpu.dot_dimension_numbers<[1], [0], [0], [1], [0, 0, 1, 1], [], []>} : vector<16x128xbf16>, vector<128x128xbf16>, vector<16x128xf32> -> vector<16x128xf32>
    %532 = arith.addf %528, %531 : vector<16x128xf32>
    %c18_268 = arith.constant 18 : index
    %c0_269 = arith.constant 0 : index
    %533 = vector.load %arg4[%c18_268, %c0_269] : memref<21x128xf32, #tpu.memory_space<vmem>>, vector<1x128xf32>
    %534 = vector.shape_cast %533 : vector<1x128xf32> to vector<128xf32>
    %535 = vector.shape_cast %534 : vector<128xf32> to vector<1x128xf32>
    %536 = vector.broadcast %535 : vector<1x128xf32> to vector<16x128xf32>
    %537 = arith.addf %532, %536 : vector<16x128xf32>
    %cst_270 = arith.constant 0.000000e+00 : f32
    %538 = vector.broadcast %cst_270 : f32 to vector<16x128xf32>
    %539 = arith.maximumf %537, %538 : vector<16x128xf32>
    %c1_i32_271 = arith.constant 1 : i32
    %540 = tpu.dynamic_rotate %539 by %c1_i32_271 dim 0 : vector<16x128xf32>, i32 -> vector<16x128xf32>
    %541 = arith.mulf %540, %7 : vector<16x128xf32>
    %542 = arith.truncf %541 : vector<16x128xf32> to vector<16x128xbf16>
    %543 = arith.truncf %539 : vector<16x128xf32> to vector<16x128xbf16>
    %c15_i32_272 = arith.constant 15 : i32
    %544 = tpu.dynamic_rotate %539 by %c15_i32_272 dim 0 : vector<16x128xf32>, i32 -> vector<16x128xf32>
    %545 = arith.mulf %544, %12 : vector<16x128xf32>
    %546 = arith.truncf %545 : vector<16x128xf32> to vector<16x128xbf16>
    %c45 = arith.constant 45 : index
    %c0_273 = arith.constant 0 : index
    %c0_274 = arith.constant 0 : index
    %547 = vector.load %arg2[%c45, %c0_273, %c0_274] : memref<49x128x128xbf16, #tpu.memory_space<vmem>>, vector<1x128x128xbf16>
    %548 = vector.shape_cast %547 : vector<1x128x128xbf16> to vector<128x128xbf16>
    %cst_275 = arith.constant dense<0.000000e+00> : vector<16x128xf32>
    %549 = tpu.matmul %542, %548, %cst_275 {dimension_numbers = #tpu.dot_dimension_numbers<[1], [0], [0], [1], [0, 0, 1, 1], [], []>} : vector<16x128xbf16>, vector<128x128xbf16>, vector<16x128xf32> -> vector<16x128xf32>
    %c46 = arith.constant 46 : index
    %c0_276 = arith.constant 0 : index
    %c0_277 = arith.constant 0 : index
    %550 = vector.load %arg2[%c46, %c0_276, %c0_277] : memref<49x128x128xbf16, #tpu.memory_space<vmem>>, vector<1x128x128xbf16>
    %551 = vector.shape_cast %550 : vector<1x128x128xbf16> to vector<128x128xbf16>
    %cst_278 = arith.constant dense<0.000000e+00> : vector<16x128xf32>
    %552 = tpu.matmul %543, %551, %cst_278 {dimension_numbers = #tpu.dot_dimension_numbers<[1], [0], [0], [1], [0, 0, 1, 1], [], []>} : vector<16x128xbf16>, vector<128x128xbf16>, vector<16x128xf32> -> vector<16x128xf32>
    %553 = arith.addf %549, %552 : vector<16x128xf32>
    %c47 = arith.constant 47 : index
    %c0_279 = arith.constant 0 : index
    %c0_280 = arith.constant 0 : index
    %554 = vector.load %arg2[%c47, %c0_279, %c0_280] : memref<49x128x128xbf16, #tpu.memory_space<vmem>>, vector<1x128x128xbf16>
    %555 = vector.shape_cast %554 : vector<1x128x128xbf16> to vector<128x128xbf16>
    %cst_281 = arith.constant dense<0.000000e+00> : vector<16x128xf32>
    %556 = tpu.matmul %546, %555, %cst_281 {dimension_numbers = #tpu.dot_dimension_numbers<[1], [0], [0], [1], [0, 0, 1, 1], [], []>} : vector<16x128xbf16>, vector<128x128xbf16>, vector<16x128xf32> -> vector<16x128xf32>
    %557 = arith.addf %553, %556 : vector<16x128xf32>
    %c19_282 = arith.constant 19 : index
    %c0_283 = arith.constant 0 : index
    %558 = vector.load %arg4[%c19_282, %c0_283] : memref<21x128xf32, #tpu.memory_space<vmem>>, vector<1x128xf32>
    %559 = vector.shape_cast %558 : vector<1x128xf32> to vector<128xf32>
    %560 = vector.shape_cast %559 : vector<128xf32> to vector<1x128xf32>
    %561 = vector.broadcast %560 : vector<1x128xf32> to vector<16x128xf32>
    %562 = arith.addf %557, %561 : vector<16x128xf32>
    %563 = arith.addf %562, %514 : vector<16x128xf32>
    %cst_284 = arith.constant 0.000000e+00 : f32
    %564 = vector.broadcast %cst_284 : f32 to vector<16x128xf32>
    %565 = arith.maximumf %563, %564 : vector<16x128xf32>
    %566 = arith.truncf %565 : vector<16x128xf32> to vector<16x128xbf16>
    %cst_285 = arith.constant dense<0.000000e+00> : vector<8x128xf32>
    %567 = tpu.matmul %93, %566, %cst_285 {dimension_numbers = #tpu.dot_dimension_numbers<[1], [0], [0], [1], [0, 0, 1, 1], [], []>} : vector<8x16xbf16>, vector<16x128xbf16>, vector<8x128xf32> -> vector<8x128xf32>
    %568 = arith.truncf %567 : vector<8x128xf32> to vector<8x128xbf16>
    %c48 = arith.constant 48 : index
    %c0_286 = arith.constant 0 : index
    %c0_287 = arith.constant 0 : index
    %569 = vector.load %arg2[%c48, %c0_286, %c0_287] : memref<49x128x128xbf16, #tpu.memory_space<vmem>>, vector<1x128x128xbf16>
    %570 = vector.shape_cast %569 : vector<1x128x128xbf16> to vector<128x128xbf16>
    %cst_288 = arith.constant dense<0.000000e+00> : vector<8x128xf32>
    %571 = tpu.matmul %568, %570, %cst_288 {dimension_numbers = #tpu.dot_dimension_numbers<[1], [0], [0], [1], [0, 0, 1, 1], [], []>} : vector<8x128xbf16>, vector<128x128xbf16>, vector<8x128xf32> -> vector<8x128xf32>
    %c20_289 = arith.constant 20 : index
    %c0_290 = arith.constant 0 : index
    %572 = vector.load %arg4[%c20_289, %c0_290] : memref<21x128xf32, #tpu.memory_space<vmem>>, vector<1x128xf32>
    %573 = vector.shape_cast %572 : vector<1x128xf32> to vector<128xf32>
    %574 = vector.shape_cast %573 : vector<128xf32> to vector<1x128xf32>
    %575 = vector.broadcast %574 : vector<1x128xf32> to vector<8x128xf32>
    %576 = arith.addf %571, %575 : vector<8x128xf32>
    %c0_291 = arith.constant 0 : index
    %c0_292 = arith.constant 0 : index
    %c0_293 = arith.constant 0 : index
    %577 = vector.load %arg5[%c0_291, %c0_292, %c0_293] : memref<1x8x128xf32, #tpu.memory_space<vmem>>, vector<1x8x128xf32>
    %578 = vector.shape_cast %577 : vector<1x8x128xf32> to vector<8x128xf32>
    %579 = vector.shape_cast %576 : vector<8x128xf32> to vector<1x8x128xf32>
    tpu.vector_store %arg5[%c0_291, %c0_292, %c0_293], %579 {strides = array<i32>} : memref<1x8x128xf32, #tpu.memory_space<vmem>>, vector<1x8x128xf32>,
    return
  }
  func.func @transform_0(%arg0: i32) -> (i32, i32, i32) {
    %c0_i32 = arith.constant 0 : i32
    %c0_i32_0 = arith.constant 0 : i32
    %c0_i32_1 = arith.constant 0 : i32
    return %arg0, %c0_i32, %c0_i32_0 : i32, i32, i32
  }
  func.func @transform_1(%arg0: i32) -> (i32, i32, i32) {
    %c0_i32 = arith.constant 0 : i32
    %c0_i32_0 = arith.constant 0 : i32
    %c0_i32_1 = arith.constant 0 : i32
    %c0_i32_2 = arith.constant 0 : i32
    return %c0_i32, %c0_i32_0, %c0_i32_1 : i32, i32, i32
  }
  func.func @transform_2(%arg0: i32) -> (i32, i32, i32) {
    %c0_i32 = arith.constant 0 : i32
    %c0_i32_0 = arith.constant 0 : i32
    %c0_i32_1 = arith.constant 0 : i32
    %c0_i32_2 = arith.constant 0 : i32
    return %c0_i32, %c0_i32_0, %c0_i32_1 : i32, i32, i32
  }
  func.func @transform_3(%arg0: i32) -> (i32, i32) {
    %c0_i32 = arith.constant 0 : i32
    %c0_i32_0 = arith.constant 0 : i32
    %c0_i32_1 = arith.constant 0 : i32
    return %c0_i32, %c0_i32_0 : i32, i32
  }
  func.func @transform_4(%arg0: i32) -> (i32, i32, i32) {
    %c0_i32 = arith.constant 0 : i32
    %c0_i32_0 = arith.constant 0 : i32
    %c0_i32_1 = arith.constant 0 : i32
    return %arg0, %c0_i32, %c0_i32_0 : i32, i32, i32
  }
}

</mosaic_0001>

<llo_original>
// kernel: _lambda_.1
$region0: #{_lambda_.1}
  #allocation0 [shape = 'u32[]', space=smem, size = 0x4, offset = 0x4, fixed_abs, tag = 'smem constant byte address 0x4 - core index']
  #allocation1 [shape = 'u32[144,128]{1,0:T(1,128)}', space=vmem, size = 0x12000, scoped, tag = 'internal scratch']
  %s0 = inlined_call_operand.vmem [shape: bf16[2,128,128], index: 0, kind: input, shape index: {}]
  %s1 = inlined_call_operand.vmem [shape: bf16[49,128,128], index: 1, kind: input, shape index: {}]
  %s2 = inlined_call_operand.vmem [shape: bf16[3,128,256], index: 2, kind: input, shape index: {}]
  %s3 = inlined_call_operand.vmem [shape: f32[21,128], index: 3, kind: input, shape index: {}]
  %s4 = inlined_call_operand.hbm [shape: f32[2,8,128], index: 4, kind: output, shape index: {}]
  %s5 = sld [smem:[#allocation0]]
  $region49: #{_lambda_.1} parent=0
    _
  %s7 = ssub.s32 1, %s5
  %s8 = scalar_select 0, %s7, %s5
  $region1: #{_lambda_.1} parent=0
    #allocation2 [shape = 'u8[8192]{0}', space=vmem, size = 0x2000, scoped, tag = 'output window, operand 0']
    #allocation3 [shape = 's32[2]{0}', space=sflag, size = 0x8, scoped, tag = 'scoped memory for _lambda_.1']
    %9 = vsyncpa [#allocation3], 0
    %s10 = scalar_lea.sflag [#allocation3], 1
    %11 = vsyncpa %s10, 0
    loop: start=0, step=1, limit=4
    $region2: #{_lambda_.1} parent=1 // loop_pre_header
      _
    $region3: #{_lambda_.1} parent=1 // loop_header
      %s13 = sphi 0, %s17
      %p14 = scmp.ge.s32.totalorder %s13, 4
      %s23 = sphi 0, %s25
      %s26 = sphi 0, %s23
      %s27 = sphi 0, %s26
      %s43 = sphi 0, %s27
      %s47 = sphi 0, %s47
      %s49 = sphi 0, %s47
      %s50 = sphi 0, %s49
      %s64 = sphi 0, %s50
      %s68 = sphi 0, %s68
      %s70 = sphi 0, %s68
      %s71 = sphi 0, %s70
      %s85 = sphi 0, %s71
      %s89 = sphi 0, %s89
      %s91 = sphi 0, %s89
      %s92 = sphi 0, %s91
      %s106 = sphi 0, %s92
      %s112 = sphi 0, %s114
      %s115 = sphi 0, %s112
      %s116 = sphi 0, %s115
      %s132 = sphi 0, %s116
    $region4: #{_lambda_.1} parent=1 // loop_header_branch
      %16 = sbr.rel (%p14) target = $region8
    $region5: #{_lambda_.1} parent=1 // loop_body
      %s18 = ssub.s32 %s13, 1
      %s19 = ssub.s32 %s13, 2
      %s20 = sadd.s32 %s13, 1
      %s21 = ssub.s32 %s13, %s20
      %p22 = scmp.eq.s32.totalorder %s21, 0
      %s24 = sadd.s32 %s23, 1
      %s25 = scalar_select %p22, %s23, %s24
      %p28 = pneg %p22
      %p29 = scmp.eq.s32.totalorder %s13, 1
      %p30 = por %p28, %p29
      %p31 = scmp.ne.s32.totalorder %s23, %s26
      %p32 = scmp.eq.s32.totalorder %s13, 0
      %p33 = por %p31, %p32
      %p34 = scmp.ne.s32.totalorder %s23, %s26
      %p35 = scmp.eq.s32.totalorder %s18, 1
      %p36 = por %p34, %p35
      %p37 = scmp.ne.s32.totalorder %s26, %s27
      %p38 = scmp.eq.s32.totalorder %s18, 0
      %p39 = por %p37, %p38
      %p40 = scmp.ne.s32.totalorder %s26, %s27
      %p41 = scmp.eq.s32.totalorder %s19, 1
      %p42 = por %p40, %p41
      %p44 = scmp.ne.s32.totalorder %s27, %s43
      %p45 = scmp.eq.s32.totalorder %s19, 0
      %p46 = por %p44, %p45
      %s48 = sadd.s32 %s47, 1
      %p51 = scmp.eq.s32.totalorder %s13, 1
      %p52 = scmp.ne.s32.totalorder %s47, %s49
      %p53 = scmp.eq.s32.totalorder %s13, 0
      %p54 = por %p52, %p53
      %p55 = scmp.ne.s32.totalorder %s47, %s49
      %p56 = scmp.eq.s32.totalorder %s18, 1
      %p57 = por %p55, %p56
      %p58 = scmp.ne.s32.totalorder %s49, %s50
      %p59 = scmp.eq.s32.totalorder %s18, 0
      %p60 = por %p58, %p59
      %p61 = scmp.ne.s32.totalorder %s49, %s50
      %p62 = scmp.eq.s32.totalorder %s19, 1
      %p63 = por %p61, %p62
      %p65 = scmp.ne.s32.totalorder %s50, %s64
      %p66 = scmp.eq.s32.totalorder %s19, 0
      %p67 = por %p65, %p66
      %s69 = sadd.s32 %s68, 1
      %p72 = scmp.eq.s32.totalorder %s13, 1
      %p73 = scmp.ne.s32.totalorder %s68, %s70
      %p74 = scmp.eq.s32.totalorder %s13, 0
      %p75 = por %p73, %p74
      %p76 = scmp.ne.s32.totalorder %s68, %s70
      %p77 = scmp.eq.s32.totalorder %s18, 1
      %p78 = por %p76, %p77
      %p79 = scmp.ne.s32.totalorder %s70, %s71
      %p80 = scmp.eq.s32.totalorder %s18, 0
      %p81 = por %p79, %p80
      %p82 = scmp.ne.s32.totalorder %s70, %s71
      %p83 = scmp.eq.s32.totalorder %s19, 1
      %p84 = por %p82, %p83
      %p86 = scmp.ne.s32.totalorder %s71, %s85
      %p87 = scmp.eq.s32.totalorder %s19, 0
      %p88 = por %p86, %p87
      %s90 = sadd.s32 %s89, 1
      %p93 = scmp.eq.s32.totalorder %s13, 1
      %p94 = scmp.ne.s32.totalorder %s89, %s91
      %p95 = scmp.eq.s32.totalorder %s13, 0
      %p96 = por %p94, %p95
      %p97 = scmp.ne.s32.totalorder %s89, %s91
      %p98 = scmp.eq.s32.totalorder %s18, 1
      %p99 = por %p97, %p98
      %p100 = scmp.ne.s32.totalorder %s91, %s92
      %p101 = scmp.eq.s32.totalorder %s18, 0
      %p102 = por %p100, %p101
      %p103 = scmp.ne.s32.totalorder %s91, %s92
      %p104 = scmp.eq.s32.totalorder %s19, 1
      %p105 = por %p103, %p104
      %p107 = scmp.ne.s32.totalorder %s92, %s106
      %p108 = scmp.eq.s32.totalorder %s19, 0
      %p109 = por %p107, %p108
      %s110 = ssub.s32 %s13, %s20
      %p111 = scmp.eq.s32.totalorder %s110, 0
      %s113 = sadd.s32 %s112, 1
      %s114 = scalar_select %p111, %s112, %s113
      %p117 = pneg %p111
      %p118 = scmp.eq.s32.totalorder %s13, 1
      %p119 = por %p117, %p118
      %p120 = scmp.ne.s32.totalorder %s112, %s115
      %p121 = scmp.eq.s32.totalorder %s13, 0
      %p122 = por %p120, %p121
      %p123 = scmp.ne.s32.totalorder %s112, %s115
      %p124 = scmp.eq.s32.totalorder %s18, 1
      %p125 = por %p123, %p124
      %p126 = scmp.ne.s32.totalorder %s115, %s116
      %p127 = scmp.eq.s32.totalorder %s18, 0
      %p128 = por %p126, %p127
      %p129 = scmp.ne.s32.totalorder %s115, %s116
      %p130 = scmp.eq.s32.totalorder %s19, 1
      %p131 = por %p129, %p130
      %p133 = scmp.ne.s32.totalorder %s116, %s132
      %p134 = scmp.eq.s32.totalorder %s19, 0
      %p135 = por %p133, %p134
      %p136 = scmp.le.s32.totalorder 1, %s13
      %p137 = scmp.lt.s32.totalorder %s13, 3
      %p138 = pnand %p136, %p137
      %p139 = pneg %p138
      // Predicated region
      $region9: #{_lambda_.1} parent=5 // pred_check
        _
      $region10: #{_lambda_.1} parent=5 // pred_check_branch
        %141 = sbr.rel (%p138) target = $region12
      $region11: #{_lambda_.1} parent=5 // pred_region
        %s142 = ssub.s32 %s13, 1
        // Predicated region
        $region13: #{_lambda_.1} parent=11 // pred_check
          %p143 = pneg %p60
        $region14: #{_lambda_.1} parent=11 // pred_check_branch
          %145 = sbr.rel (%p143) target = $region16
        $region15: #{_lambda_.1} parent=11 // pred_region
          _
        $region16: #{_lambda_.1} parent=11 // pred_fallthru
          _
        // Predicated region
        $region17: #{_lambda_.1} parent=11 // pred_check
          %p146 = pneg %p81
        $region18: #{_lambda_.1} parent=11 // pred_check_branch
          %148 = sbr.rel (%p146) target = $region20
        $region19: #{_lambda_.1} parent=11 // pred_region
          _
        $region20: #{_lambda_.1} parent=11 // pred_fallthru
          _
        // Predicated region
        $region21: #{_lambda_.1} parent=11 // pred_check
          %p149 = pneg %p102
        $region22: #{_lambda_.1} parent=11 // pred_check_branch
          %151 = sbr.rel (%p149) target = $region24
        $region23: #{_lambda_.1} parent=11 // pred_region
          _
        $region24: #{_lambda_.1} parent=11 // pred_fallthru
          _
      $region12: #{_lambda_.1} parent=5 // pred_fallthru
        _
      %p152 = scmp.lt.s32.totalorder %s13, 2
      // Predicated region
      $region25: #{_lambda_.1} parent=5 // pred_check
        %p153 = pneg %p152
      $region26: #{_lambda_.1} parent=5 // pred_check_branch
        %155 = sbr.rel (%p153) target = $region28
      $region27: #{_lambda_.1} parent=5 // pred_region
        // Predicated region
        $region29: #{_lambda_.1} parent=27 // pred_check
          %p156 = pneg %p33
        $region30: #{_lambda_.1} parent=27 // pred_check_branch
          %158 = sbr.rel (%p156) target = $region32
        $region31: #{_lambda_.1} parent=27 // pred_region
          %p159 = scmp.lt.s32.totalorder %s13, 1
          %s160 = scalar_select %p159, %s13, 1
          %s161 = smul.addr %s160, 16
          %s162 = smul.addr %s161, 4
          %s163 = scalar_lea.vmem %s0, %s162
        $region32: #{_lambda_.1} parent=27 // pred_fallthru
          _
      $region28: #{_lambda_.1} parent=5 // pred_fallthru
        _
      %p164 = scmp.le.s32.totalorder 1, %s13
      %p165 = scmp.lt.s32.totalorder %s13, 3
      %p166 = pnand %p164, %p165
      %p167 = pneg %p166
      // Predicated region
      $region33: #{_lambda_.1} parent=5 // pred_check
        _
      $region34: #{_lambda_.1} parent=5 // pred_check_branch
        %169 = sbr.rel (%p166) target = $region36
      $region35: #{_lambda_.1} parent=5 // pred_region
        %s170 = ssub.s32 %s13, 1
        %p171 = scmp.lt.s32.totalorder %s18, 1
        %s172 = scalar_select %p171, %s18, 1
        %s173 = smul.addr %s172, 16
        %s174 = smul.addr %s173, 4
        %s175 = scalar_lea.vmem %s0, %s174
        %p176 = pneg %p39
        %p177 = pneg %p36
        %p178 = pneg %p60
        %p179 = pneg %p57
        %p180 = pneg %p81
        %p181 = pneg %p78
        %p182 = pneg %p102
        %p183 = pneg %p99
        %p184 = pneg %p128
        %p185 = pneg %p125
        %s186 = sand.u32 %s115, 1
        %s187 = scalar_lea.sflag [#allocation3], %s186
        %s188 = sand.u32 %s115, 1
        %s189 = smul.addr %s188, 8
        %s190 = scalar_lea.vmem [#allocation2], %s189
        %p191 = scmp.lt.s32.totalorder %s18, 1
        %s192 = scalar_select %p191, %s18, 1
        %s193 = smul.addr %s192, 16
        %s194 = smul.addr %s193, 4
        %s195 = scalar_lea.vmem %s0, %s194
        %v197 = vlaneseq
        %v198 = vshrl.u32 %v197, 7
        %v199 = vadd.s32 %v198, 8
        %v200 = vand.u32 %v198, 1
        %v201 = vand.u32 %v199, 1
        %vm202 = vcmp.ne.s32.totalorder %v200, 0
        %vm203 = vcmp.ne.s32.totalorder %v201, 0
        %v204 = vsel %vm202, 1.0, 0.0
        %v205 = vsel %vm203, 1.0, 0.0
        %vm206 = vcmp.ne.s32.totalorder %v200, 1
        %vm207 = vcmp.ne.s32.totalorder %v201, 1
        %v208 = vsel %vm206, 1.0, 0.0
        %v209 = vsel %vm207, 1.0, 0.0
        %v210 = vadd.s32 %v198, 16
        %v211 = vadd.s32 %v198, 24
        %v212 = vand.u32 %v198, 3
        %v213 = vand.u32 %v199, 3
        %v214 = vand.u32 %v210, 3
        %v215 = vand.u32 %v211, 3
        %vm216 = vcmp.ne.s32.totalorder %v212, 0
        %vm217 = vcmp.ne.s32.totalorder %v213, 0
        %vm218 = vcmp.ne.s32.totalorder %v214, 0
        %vm219 = vcmp.ne.s32.totalorder %v215, 0
        %v220 = vsel %vm216, 1.0, 0.0
        %v221 = vsel %vm217, 1.0, 0.0
        %v222 = vsel %vm218, 1.0, 0.0
        %v223 = vsel %vm219, 1.0, 0.0
        %vm224 = vcmp.ne.s32.totalorder %v212, 3
        %vm225 = vcmp.ne.s32.totalorder %v213, 3
        %vm226 = vcmp.ne.s32.totalorder %v214, 3
        %vm227 = vcmp.ne.s32.totalorder %v215, 3
        %v228 = vsel %vm224, 1.0, 0.0
        %v229 = vsel %vm225, 1.0, 0.0
        %v230 = vsel %vm226, 1.0, 0.0
        %v231 = vsel %vm227, 1.0, 0.0
        %v232 = vadd.s32 %v198, 32
        %v233 = vadd.s32 %v198, 40
        %v234 = vadd.s32 %v198, 48
        %v235 = vadd.s32 %v198, 56
        %v236 = vand.u32 %v198, 7
        %v237 = vand.u32 %v199, 7
        %v238 = vand.u32 %v210, 7
        %v239 = vand.u32 %v211, 7
        %v240 = vand.u32 %v232, 7
        %v241 = vand.u32 %v233, 7
        %v242 = vand.u32 %v234, 7
        %v243 = vand.u32 %v235, 7
        %vm244 = vcmp.ne.s32.totalorder %v236, 0
        %vm245 = vcmp.ne.s32.totalorder %v237, 0
        %vm246 = vcmp.ne.s32.totalorder %v238, 0
        %vm247 = vcmp.ne.s32.totalorder %v239, 0
        %vm248 = vcmp.ne.s32.totalorder %v240, 0
        %vm249 = vcmp.ne.s32.totalorder %v241, 0
        %vm250 = vcmp.ne.s32.totalorder %v242, 0
        %vm251 = vcmp.ne.s32.totalorder %v243, 0
        %v252 = vsel %vm244, 1.0, 0.0
        %v253 = vsel %vm245, 1.0, 0.0
        %v254 = vsel %vm246, 1.0, 0.0
        %v255 = vsel %vm247, 1.0, 0.0
        %v256 = vsel %vm248, 1.0, 0.0
        %v257 = vsel %vm249, 1.0, 0.0
        %v258 = vsel %vm250, 1.0, 0.0
        %v259 = vsel %vm251, 1.0, 0.0
        %vm260 = vcmp.ne.s32.totalorder %v236, 7
        %vm261 = vcmp.ne.s32.totalorder %v237, 7
        %vm262 = vcmp.ne.s32.totalorder %v238, 7
        %vm263 = vcmp.ne.s32.totalorder %v239, 7
        %vm264 = vcmp.ne.s32.totalorder %v240, 7
        %vm265 = vcmp.ne.s32.totalorder %v241, 7
        %vm266 = vcmp.ne.s32.totalorder %v242, 7
        %vm267 = vcmp.ne.s32.totalorder %v243, 7
        %v268 = vsel %vm260, 1.0, 0.0
        %v269 = vsel %vm261, 1.0, 0.0
        %v270 = vsel %vm262, 1.0, 0.0
        %v271 = vsel %vm263, 1.0, 0.0
        %v272 = vsel %vm264, 1.0, 0.0
        %v273 = vsel %vm265, 1.0, 0.0
        %v274 = vsel %vm266, 1.0, 0.0
        %v275 = vsel %vm267, 1.0, 0.0
        %v276 = vadd.s32 %v198, 64
        %v277 = vadd.s32 %v198, 72
        %v278 = vadd.s32 %v198, 80
        %v279 = vadd.s32 %v198, 88
        %v280 = vadd.s32 %v198, 96
        %v281 = vadd.s32 %v198, 104
        %v282 = vadd.s32 %v198, 112
        %v283 = vadd.s32 %v198, 120
        %v284 = vand.u32 %v198, 15
        %v285 = vand.u32 %v199, 15
        %v286 = vand.u32 %v210, 15
        %v287 = vand.u32 %v211, 15
        %v288 = vand.u32 %v232, 15
        %v289 = vand.u32 %v233, 15
        %v290 = vand.u32 %v234, 15
        %v291 = vand.u32 %v235, 15
        %v292 = vand.u32 %v276, 15
        %v293 = vand.u32 %v277, 15
        %v294 = vand.u32 %v278, 15
        %v295 = vand.u32 %v279, 15
        %v296 = vand.u32 %v280, 15
        %v297 = vand.u32 %v281, 15
        %v298 = vand.u32 %v282, 15
        %v299 = vand.u32 %v283, 15
        %vm300 = vcmp.ne.s32.totalorder %v284, 0
        %vm301 = vcmp.ne.s32.totalorder %v285, 0
        %vm302 = vcmp.ne.s32.totalorder %v286, 0
        %vm303 = vcmp.ne.s32.totalorder %v287, 0
        %vm304 = vcmp.ne.s32.totalorder %v288, 0
        %vm305 = vcmp.ne.s32.totalorder %v289, 0
        %vm306 = vcmp.ne.s32.totalorder %v290, 0
        %vm307 = vcmp.ne.s32.totalorder %v291, 0
        %vm308 = vcmp.ne.s32.totalorder %v292, 0
        %vm309 = vcmp.ne.s32.totalorder %v293, 0
        %vm310 = vcmp.ne.s32.totalorder %v294, 0
        %vm311 = vcmp.ne.s32.totalorder %v295, 0
        %vm312 = vcmp.ne.s32.totalorder %v296, 0
        %vm313 = vcmp.ne.s32.totalorder %v297, 0
        %vm314 = vcmp.ne.s32.totalorder %v298, 0
        %vm315 = vcmp.ne.s32.totalorder %v299, 0
        %v316 = vsel %vm300, 1.0, 0.0
        %v317 = vsel %vm301, 1.0, 0.0
        %v318 = vsel %vm302, 1.0, 0.0
        %v319 = vsel %vm303, 1.0, 0.0
        %v320 = vsel %vm304, 1.0, 0.0
        %v321 = vsel %vm305, 1.0, 0.0
        %v322 = vsel %vm306, 1.0, 0.0
        %v323 = vsel %vm307, 1.0, 0.0
        %v324 = vsel %vm308, 1.0, 0.0
        %v325 = vsel %vm309, 1.0, 0.0
        %v326 = vsel %vm310, 1.0, 0.0
        %v327 = vsel %vm311, 1.0, 0.0
        %v328 = vsel %vm312, 1.0, 0.0
        %v329 = vsel %vm313, 1.0, 0.0
        %v330 = vsel %vm314, 1.0, 0.0
        %v331 = vsel %vm315, 1.0, 0.0
        %vm332 = vcmp.ne.s32.totalorder %v284, 15
        %vm333 = vcmp.ne.s32.totalorder %v285, 15
        %vm334 = vcmp.ne.s32.totalorder %v286, 15
        %vm335 = vcmp.ne.s32.totalorder %v287, 15
        %vm336 = vcmp.ne.s32.totalorder %v288, 15
        %vm337 = vcmp.ne.s32.totalorder %v289, 15
        %vm338 = vcmp.ne.s32.totalorder %v290, 15
        %vm339 = vcmp.ne.s32.totalorder %v291, 15
        %vm340 = vcmp.ne.s32.totalorder %v292, 15
        %vm341 = vcmp.ne.s32.totalorder %v293, 15
        %vm342 = vcmp.ne.s32.totalorder %v294, 15
        %vm343 = vcmp.ne.s32.totalorder %v295, 15
        %vm344 = vcmp.ne.s32.totalorder %v296, 15
        %vm345 = vcmp.ne.s32.totalorder %v297, 15
        %vm346 = vcmp.ne.s32.totalorder %v298, 15
        %vm347 = vcmp.ne.s32.totalorder %v299, 15
        %v348 = vsel %vm332, 1.0, 0.0
        %v349 = vsel %vm333, 1.0, 0.0
        %v350 = vsel %vm334, 1.0, 0.0
        %v351 = vsel %vm335, 1.0, 0.0
        %v352 = vsel %vm336, 1.0, 0.0
        %v353 = vsel %vm337, 1.0, 0.0
        %v354 = vsel %vm338, 1.0, 0.0
        %v355 = vsel %vm339, 1.0, 0.0
        %v356 = vsel %vm340, 1.0, 0.0
        %v357 = vsel %vm341, 1.0, 0.0
        %v358 = vsel %vm342, 1.0, 0.0
        %v359 = vsel %vm343, 1.0, 0.0
        %v360 = vsel %vm344, 1.0, 0.0
        %v361 = vsel %vm345, 1.0, 0.0
        %v362 = vsel %vm346, 1.0, 0.0
        %v363 = vsel %vm347, 1.0, 0.0
        %v364 = vlaneseq
        %v365 = vand.u32 %v364, 127
        %v366 = vmul.u32 %v198, 2
        %v367 = vmul.u32 %v199, 2
        %vm368 = vcmp.eq.s32.totalorder %v365, %v366
        %vm369 = vcmp.eq.s32.totalorder %v365, %v367
        %v370 = vsel %vm368, 1.0, 0.0
        %v371 = vsel %vm369, 1.0, 0.0
        %v372 = vpack.c.bf16 %v371, %v370
        %v373 = vmul.u32 %v210, 2
        %v374 = vmul.u32 %v211, 2
        %vm375 = vcmp.eq.s32.totalorder %v365, %v373
        %vm376 = vcmp.eq.s32.totalorder %v365, %v374
        %v377 = vsel %vm375, 1.0, 0.0
        %v378 = vsel %vm376, 1.0, 0.0
        %v379 = vpack.c.bf16 %v378, %v377
        %v380 = vmul.u32 %v232, 2
        %v381 = vmul.u32 %v233, 2
        %v382 = vmul.u32 %v234, 2
        %v383 = vmul.u32 %v235, 2
        %vm384 = vcmp.eq.s32.totalorder %v365, %v380
        %vm385 = vcmp.eq.s32.totalorder %v365, %v381
        %vm386 = vcmp.eq.s32.totalorder %v365, %v382
        %vm387 = vcmp.eq.s32.totalorder %v365, %v383
        %v388 = vsel %vm384, 1.0, 0.0
        %v389 = vsel %vm385, 1.0, 0.0
        %v390 = vsel %vm386, 1.0, 0.0
        %v391 = vsel %vm387, 1.0, 0.0
        %v392 = vpack.c.bf16 %v389, %v388
        %v393 = vpack.c.bf16 %v391, %v390
        %vm394 = vcmp.ge.s32.totalorder %v365, %v366
        %v395 = vadd.s32 %v198, 1
        %v396 = vmul.u32 %v395, 2
        %vm397 = vcmp.lt.s32.totalorder %v365, %v396
        %vm398 = vmand %vm394, %vm397
        %v399 = vsel %vm398, 1.0, 0.0
        %v400 = vpack.c.bf16 %v399, %v399
        %v401 = vld [vmem:[%s195] sm:$0xf]
        %v402 = vld [vmem:[%s195 + $0x4] sm:$0xf]
        %v403 = vld [vmem:[%s195 + $0x8] sm:$0xf]
        %v404 = vld [vmem:[%s195 + $0xc] sm:$0xf]
        %v405 = vld [vmem:[%s195 + $0x10] sm:$0xf]
        %v406 = vld [vmem:[%s195 + $0x14] sm:$0xf]
        %v407 = vld [vmem:[%s195 + $0x18] sm:$0xf]
        %v408 = vld [vmem:[%s195 + $0x1c] sm:$0xf]
        %v409 = vld [vmem:[%s195 + $0x20] sm:$0xf]
        %v410 = vld [vmem:[%s195 + $0x24] sm:$0xf]
        %v411 = vld [vmem:[%s195 + $0x28] sm:$0xf]
        %v412 = vld [vmem:[%s195 + $0x2c] sm:$0xf]
        %v413 = vld [vmem:[%s195 + $0x30] sm:$0xf]
        %v414 = vld [vmem:[%s195 + $0x34] sm:$0xf]
        %v415 = vld [vmem:[%s195 + $0x38] sm:$0xf]
        %v416 = vld [vmem:[%s195 + $0x3c] sm:$0xf]
        %v417 = vunpack.c.l.bf16 %v401
        %v418 = vunpack.c.l.bf16 %v402
        %v419 = vunpack.c.l.bf16 %v403
        %v420 = vunpack.c.l.bf16 %v404
        %v421 = vunpack.c.l.bf16 %v405
        %v422 = vunpack.c.l.bf16 %v406
        %v423 = vunpack.c.l.bf16 %v407
        %v424 = vunpack.c.l.bf16 %v408
        %v425 = vunpack.c.l.bf16 %v409
        %v426 = vunpack.c.l.bf16 %v410
        %v427 = vunpack.c.l.bf16 %v411
        %v428 = vunpack.c.l.bf16 %v412
        %v429 = vunpack.c.l.bf16 %v413
        %v430 = vunpack.c.l.bf16 %v414
        %v431 = vunpack.c.l.bf16 %v415
        %v432 = vunpack.c.l.bf16 %v416
        %v433 = vrot.slane %v417, 7
        %v434 = vrot.slane %v418, 7
        %v435 = vrot.slane %v419, 7
        %v436 = vrot.slane %v420, 7
        %v437 = vrot.slane %v421, 7
        %v438 = vrot.slane %v422, 7
        %v439 = vrot.slane %v423, 7
        %v440 = vrot.slane %v424, 7
        %v441 = vrot.slane %v425, 7
        %v442 = vrot.slane %v426, 7
        %v443 = vrot.slane %v427, 7
        %v444 = vrot.slane %v428, 7
        %v445 = vrot.slane %v429, 7
        %v446 = vrot.slane %v430, 7
        %v447 = vrot.slane %v431, 7
        %v448 = vrot.slane %v432, 7
        %vm449 = vcmp.lt.s32.totalorder %v198, 1
        %v450 = vsel %vm449, %v447, %v448
        %v451 = vsel %vm449, %v446, %v447
        %v452 = vsel %vm449, %v445, %v446
        %v453 = vsel %vm449, %v444, %v445
        %v454 = vsel %vm449, %v443, %v444
        %v455 = vsel %vm449, %v442, %v443
        %v456 = vsel %vm449, %v441, %v442
        %v457 = vsel %vm449, %v440, %v441
        %v458 = vsel %vm449, %v439, %v440
        %v459 = vsel %vm449, %v438, %v439
        %v460 = vsel %vm449, %v437, %v438
        %v461 = vsel %vm449, %v436, %v437
        %v462 = vsel %vm449, %v435, %v436
        %v463 = vsel %vm449, %v434, %v435
        %v464 = vsel %vm449, %v433, %v434
        %v465 = vsel %vm449, %v448, %v433
        %v466 = vmul.f32 %v465, %v316
        %v467 = vmul.f32 %v464, %v317
        %v468 = vmul.f32 %v463, %v318
        %v469 = vmul.f32 %v462, %v319
        %v470 = vmul.f32 %v461, %v320
        %v471 = vmul.f32 %v460, %v321
        %v472 = vmul.f32 %v459, %v322
        %v473 = vmul.f32 %v458, %v323
        %v474 = vmul.f32 %v457, %v324
        %v475 = vmul.f32 %v456, %v325
        %v476 = vmul.f32 %v455, %v326
        %v477 = vmul.f32 %v454, %v327
        %v478 = vmul.f32 %v453, %v328
        %v479 = vmul.f32 %v452, %v329
        %v480 = vmul.f32 %v451, %v330
        %v481 = vmul.f32 %v450, %v331
        %v482 = vpack.c.bf16 %v467, %v466
        %v483 = vpack.c.bf16 %v469, %v468
        %v484 = vpack.c.bf16 %v471, %v470
        %v485 = vpack.c.bf16 %v473, %v472
        %v486 = vpack.c.bf16 %v475, %v474
        %v487 = vpack.c.bf16 %v477, %v476
        %v488 = vpack.c.bf16 %v479, %v478
        %v489 = vpack.c.bf16 %v481, %v480
        %v490 = vrot.slane %v417, 1
        %v491 = vrot.slane %v418, 1
        %v492 = vrot.slane %v419, 1
        %v493 = vrot.slane %v420, 1
        %v494 = vrot.slane %v421, 1
        %v495 = vrot.slane %v422, 1
        %v496 = vrot.slane %v423, 1
        %v497 = vrot.slane %v424, 1
        %v498 = vrot.slane %v425, 1
        %v499 = vrot.slane %v426, 1
        %v500 = vrot.slane %v427, 1
        %v501 = vrot.slane %v428, 1
        %v502 = vrot.slane %v429, 1
        %v503 = vrot.slane %v430, 1
        %v504 = vrot.slane %v431, 1
        %v505 = vrot.slane %v432, 1
        %vm506 = vcmp.lt.s32.totalorder %v198, 7
        %v507 = vsel %vm506, %v504, %v505
        %v508 = vsel %vm506, %v503, %v504
        %v509 = vsel %vm506, %v502, %v503
        %v510 = vsel %vm506, %v501, %v502
        %v511 = vsel %vm506, %v500, %v501
        %v512 = vsel %vm506, %v499, %v500
        %v513 = vsel %vm506, %v498, %v499
        %v514 = vsel %vm506, %v497, %v498
        %v515 = vsel %vm506, %v496, %v497
        %v516 = vsel %vm506, %v495, %v496
        %v517 = vsel %vm506, %v494, %v495
        %v518 = vsel %vm506, %v493, %v494
        %v519 = vsel %vm506, %v492, %v493
        %v520 = vsel %vm506, %v491, %v492
        %v521 = vsel %vm506, %v490, %v491
        %v522 = vsel %vm506, %v505, %v490
        %v523 = vmul.f32 %v521, %v348
        %v524 = vmul.f32 %v520, %v349
        %v525 = vmul.f32 %v519, %v350
        %v526 = vmul.f32 %v518, %v351
        %v527 = vmul.f32 %v517, %v352
        %v528 = vmul.f32 %v516, %v353
        %v529 = vmul.f32 %v515, %v354
        %v530 = vmul.f32 %v514, %v355
        %v531 = vmul.f32 %v513, %v356
        %v532 = vmul.f32 %v512, %v357
        %v533 = vmul.f32 %v511, %v358
        %v534 = vmul.f32 %v510, %v359
        %v535 = vmul.f32 %v509, %v360
        %v536 = vmul.f32 %v508, %v361
        %v537 = vmul.f32 %v507, %v362
        %v538 = vmul.f32 %v522, %v363
        %v539 = vpack.c.bf16 %v524, %v523
        %v540 = vpack.c.bf16 %v526, %v525
        %v541 = vpack.c.bf16 %v528, %v527
        %v542 = vpack.c.bf16 %v530, %v529
        %v543 = vpack.c.bf16 %v532, %v531
        %v544 = vpack.c.bf16 %v534, %v533
        %v545 = vpack.c.bf16 %v536, %v535
        %v546 = vpack.c.bf16 %v538, %v537
        %v547 = vld [vmem:[%s1] sm:$0xf]
        %v548 = vld [vmem:[%s1 + $0x4] sm:$0xf]
        %v549 = vld [vmem:[%s1 + $0x8] sm:$0xf]
        %v550 = vld [vmem:[%s1 + $0xc] sm:$0xf]
        %v551 = vld [vmem:[%s1 + $0x10] sm:$0xf]
        %v552 = vld [vmem:[%s1 + $0x14] sm:$0xf]
        %v553 = vld [vmem:[%s1 + $0x18] sm:$0xf]
        %v554 = vld [vmem:[%s1 + $0x1c] sm:$0xf]
        %v555 = vld [vmem:[%s1 + $0x20] sm:$0xf]
        %v556 = vld [vmem:[%s1 + $0x24] sm:$0xf]
        %v557 = vld [vmem:[%s1 + $0x28] sm:$0xf]
        %v558 = vld [vmem:[%s1 + $0x2c] sm:$0xf]
        %v559 = vld [vmem:[%s1 + $0x30] sm:$0xf]
        %v560 = vld [vmem:[%s1 + $0x34] sm:$0xf]
        %v561 = vld [vmem:[%s1 + $0x38] sm:$0xf]
        %v562 = vld [vmem:[%s1 + $0x3c] sm:$0xf]
        %s563 = scalar_lea.vmem %s1, 64
        %v564 = vld [vmem:[%s563] sm:$0xf]
        %v565 = vld [vmem:[%s563 + $0x4] sm:$0xf]
        %v566 = vld [vmem:[%s563 + $0x8] sm:$0xf]
        %v567 = vld [vmem:[%s563 + $0xc] sm:$0xf]
        %v568 = vld [vmem:[%s563 + $0x10] sm:$0xf]
        %v569 = vld [vmem:[%s563 + $0x14] sm:$0xf]
        %v570 = vld [vmem:[%s563 + $0x18] sm:$0xf]
        %v571 = vld [vmem:[%s563 + $0x1c] sm:$0xf]
        %v572 = vld [vmem:[%s563 + $0x20] sm:$0xf]
        %v573 = vld [vmem:[%s563 + $0x24] sm:$0xf]
        %v574 = vld [vmem:[%s563 + $0x28] sm:$0xf]
        %v575 = vld [vmem:[%s563 + $0x2c] sm:$0xf]
        %v576 = vld [vmem:[%s563 + $0x30] sm:$0xf]
        %v577 = vld [vmem:[%s563 + $0x34] sm:$0xf]
        %v578 = vld [vmem:[%s563 + $0x38] sm:$0xf]
        %v579 = vld [vmem:[%s563 + $0x3c] sm:$0xf]
        %v596 = vunpack.c.l.b16 %v401
        %v597 = vunpack.c.l.b16 %v402
        %v598 = vunpack.c.l.b16 %v403
        %v599 = vunpack.c.l.b16 %v404
        %v600 = vunpack.c.l.b16 %v405
        %v601 = vunpack.c.l.b16 %v406
        %v602 = vunpack.c.l.b16 %v407
        %v603 = vunpack.c.l.b16 %v408
        %v604 = vunpack.c.l.b16 %v409
        %v605 = vunpack.c.l.b16 %v410
        %v606 = vunpack.c.l.b16 %v411
        %v607 = vunpack.c.l.b16 %v412
        %v608 = vunpack.c.l.b16 %v413
        %v609 = vunpack.c.l.b16 %v414
        %v610 = vunpack.c.l.b16 %v415
        %v611 = vunpack.c.l.b16 %v416
        %v612 = vpack.c.b16 %v597, %v596
        %v613 = vpack.c.b16 %v599, %v598
        %v614 = vpack.c.b16 %v601, %v600
        %v615 = vpack.c.b16 %v603, %v602
        %v616 = vpack.c.b16 %v605, %v604
        %v617 = vpack.c.b16 %v607, %v606
        %v618 = vpack.c.b16 %v609, %v608
        %v619 = vpack.c.b16 %v611, %v610
        %v644 = vunpack.c.l.b16 %v564
        %v645 = vunpack.c.l.b16 %v565
        %v646 = vunpack.c.l.b16 %v566
        %v647 = vunpack.c.l.b16 %v567
        %v648 = vunpack.c.l.b16 %v568
        %v649 = vunpack.c.l.b16 %v569
        %v650 = vunpack.c.l.b16 %v570
        %v651 = vunpack.c.l.b16 %v571
        %v652 = vunpack.c.l.b16 %v572
        %v653 = vunpack.c.l.b16 %v573
        %v654 = vunpack.c.l.b16 %v574
        %v655 = vunpack.c.l.b16 %v575
        %v656 = vunpack.c.l.b16 %v576
        %v657 = vunpack.c.l.b16 %v577
        %v658 = vunpack.c.l.b16 %v578
        %v659 = vunpack.c.l.b16 %v579
        %v660 = vpack.c.b16 %v645, %v644
        %v661 = vpack.c.b16 %v647, %v646
        %v662 = vpack.c.b16 %v649, %v648
        %v663 = vpack.c.b16 %v651, %v650
        %v664 = vpack.c.b16 %v653, %v652
        %v665 = vpack.c.b16 %v655, %v654
        %v666 = vpack.c.b16 %v657, %v656
        %v667 = vpack.c.b16 %v659, %v658
        %676 = vmatprep.subr.bf16.mxu0 0
        %677 = vmatpush1.bf16.msra.mxu0 %v660
        %678 = vmatprep.subr.bf16.mxu0 0
        %679 = vmatpush1.bf16.msra.mxu0 %v661
        %680 = vmatprep.subr.bf16.mxu0 0
        %681 = vmatpush1.bf16.msra.mxu0 %v662
        %682 = vmatprep.subr.bf16.mxu0 0
        %683 = vmatpush1.bf16.msra.mxu0 %v663
        %684 = vmatprep.subr.bf16.mxu0 0
        %685 = vmatpush1.bf16.msra.mxu0 %v664
        %686 = vmatprep.subr.bf16.mxu0 0
        %687 = vmatpush1.bf16.msra.mxu0 %v665
        %688 = vmatprep.subr.bf16.mxu0 0
        %689 = vmatpush1.bf16.msra.mxu0 %v666
        %690 = vmatprep.subr.bf16.mxu0 0
        %691 = vmatpush1.bf16.msra.mxu0 %v667
        %692 = vmatprep.subr.bf16.mxu0 0
        %693 = vmatpush1.bf16.msra.mxu0 0
        %694 = vmatprep.subr.bf16.mxu0 0
        %695 = vmatpush1.bf16.msra.mxu0 0
        %696 = vmatprep.subr.bf16.mxu0 0
        %697 = vmatpush1.bf16.msra.mxu0 0
        %698 = vmatprep.subr.bf16.mxu0 0
        %699 = vmatpush1.bf16.msra.mxu0 0
        %700 = vmatprep.subr.bf16.mxu0 0
        %701 = vmatpush1.bf16.msra.mxu0 0
        %702 = vmatprep.subr.bf16.mxu0 0
        %703 = vmatpush1.bf16.msra.mxu0 0
        %704 = vmatprep.subr.bf16.mxu0 0
        %705 = vmatpush1.bf16.msra.mxu0 0
        %706 = vmatprep.subr.bf16.mxu0 0
        %707 = vmatpush1.bf16.msra.mxu0 0
        %708 = vmatprep.mubr.bf16.mxu0 0
        %709 = vmatmul.mubr.bf16.gmra.mrb[0].mxu0 %v612
        %v710 = vpop.f32.mrb[0].mxu0
        %v711 = vadd.f32 0.0, %v710
        %v712 = vpop.f32.mrb[0].mxu0
        %v713 = vpop.f32.mrb[0].mxu0
        %v714 = vadd.f32 0.0, %v713
        %v715 = vpop.f32.mrb[0].mxu0
        %716 = vmatprep.mubr.bf16.mxu0 0
        %717 = vmatmul.mubr.bf16.gmra.mrb[0].mxu0 %v613
        %v718 = vpop.f32.mrb[0].mxu0
        %v719 = vadd.f32 0.0, %v718
        %v720 = vpop.f32.mrb[0].mxu0
        %v721 = vpop.f32.mrb[0].mxu0
        %v722 = vadd.f32 0.0, %v721
        %v723 = vpop.f32.mrb[0].mxu0
        %724 = vmatprep.mubr.bf16.mxu0 0
        %725 = vmatmul.mubr.bf16.gmra.mrb[0].mxu0 %v614
        %v726 = vpop.f32.mrb[0].mxu0
        %v727 = vadd.f32 0.0, %v726
        %v728 = vpop.f32.mrb[0].mxu0
        %v729 = vpop.f32.mrb[0].mxu0
        %v730 = vadd.f32 0.0, %v729
        %v731 = vpop.f32.mrb[0].mxu0
        %732 = vmatprep.mubr.bf16.mxu0 0
        %733 = vmatmul.mubr.bf16.gmra.mrb[0].mxu0 %v615
        %v734 = vpop.f32.mrb[0].mxu0
        %v735 = vadd.f32 0.0, %v734
        %v736 = vpop.f32.mrb[0].mxu0
        %v737 = vpop.f32.mrb[0].mxu0
        %v738 = vadd.f32 0.0, %v737
        %v739 = vpop.f32.mrb[0].mxu0
        %740 = vmatprep.mubr.bf16.mxu0 0
        %741 = vmatmul.mubr.bf16.gmra.mrb[0].mxu0 %v616
        %v742 = vpop.f32.mrb[0].mxu0
        %v743 = vadd.f32 0.0, %v742
        %v744 = vpop.f32.mrb[0].mxu0
        %v745 = vpop.f32.mrb[0].mxu0
        %v746 = vadd.f32 0.0, %v745
        %v747 = vpop.f32.mrb[0].mxu0
        %748 = vmatprep.mubr.bf16.mxu0 0
        %749 = vmatmul.mubr.bf16.gmra.mrb[0].mxu0 %v617
        %v750 = vpop.f32.mrb[0].mxu0
        %v751 = vadd.f32 0.0, %v750
        %v752 = vpop.f32.mrb[0].mxu0
        %v753 = vpop.f32.mrb[0].mxu0
        %v754 = vadd.f32 0.0, %v753
        %v755 = vpop.f32.mrb[0].mxu0
        %756 = vmatprep.mubr.bf16.mxu0 0
        %757 = vmatmul.mubr.bf16.gmra.mrb[0].mxu0 %v618
        %v758 = vpop.f32.mrb[0].mxu0
        %v759 = vadd.f32 0.0, %v758
        %v760 = vpop.f32.mrb[0].mxu0
        %v761 = vpop.f32.mrb[0].mxu0
        %v762 = vadd.f32 0.0, %v761
        %v763 = vpop.f32.mrb[0].mxu0
        %764 = vmatprep.mubr.bf16.mxu0 0
        %765 = vmatmul.mubr.bf16.gmra.mrb[0].mxu0 %v619
        %v766 = vpop.f32.mrb[0].mxu0
        %v767 = vadd.f32 0.0, %v766
        %v768 = vpop.f32.mrb[0].mxu0
        %v769 = vpop.f32.mrb[0].mxu0
        %v770 = vadd.f32 0.0, %v769
        %v771 = vpop.f32.mrb[0].mxu0
        %772 = vdwg.mxu0
        %v789 = vunpack.c.l.b16 %v547
        %v790 = vunpack.c.l.b16 %v548
        %v791 = vunpack.c.l.b16 %v549
        %v792 = vunpack.c.l.b16 %v550
        %v793 = vunpack.c.l.b16 %v551
        %v794 = vunpack.c.l.b16 %v552
        %v795 = vunpack.c.l.b16 %v553
        %v796 = vunpack.c.l.b16 %v554
        %v797 = vunpack.c.l.b16 %v555
        %v798 = vunpack.c.l.b16 %v556
        %v799 = vunpack.c.l.b16 %v557
        %v800 = vunpack.c.l.b16 %v558
        %v801 = vunpack.c.l.b16 %v559
        %v802 = vunpack.c.l.b16 %v560
        %v803 = vunpack.c.l.b16 %v561
        %v804 = vunpack.c.l.b16 %v562
        %v805 = vpack.c.b16 %v790, %v789
        %v806 = vpack.c.b16 %v792, %v791
        %v807 = vpack.c.b16 %v794, %v793
        %v808 = vpack.c.b16 %v796, %v795
        %v809 = vpack.c.b16 %v798, %v797
        %v810 = vpack.c.b16 %v800, %v799
        %v811 = vpack.c.b16 %v802, %v801
        %v812 = vpack.c.b16 %v804, %v803
        %821 = vmatprep.subr.bf16.mxu0 0
        %822 = vmatpush1.bf16.msra.mxu0 %v805
        %823 = vmatprep.subr.bf16.mxu0 0
        %824 = vmatpush1.bf16.msra.mxu0 %v806
        %825 = vmatprep.subr.bf16.mxu0 0
        %826 = vmatpush1.bf16.msra.mxu0 %v807
        %827 = vmatprep.subr.bf16.mxu0 0
        %828 = vmatpush1.bf16.msra.mxu0 %v808
        %829 = vmatprep.subr.bf16.mxu0 0
        %830 = vmatpush1.bf16.msra.mxu0 %v809
        %831 = vmatprep.subr.bf16.mxu0 0
        %832 = vmatpush1.bf16.msra.mxu0 %v810
        %833 = vmatprep.subr.bf16.mxu0 0
        %834 = vmatpush1.bf16.msra.mxu0 %v811
        %835 = vmatprep.subr.bf16.mxu0 0
        %836 = vmatpush1.bf16.msra.mxu0 %v812
        %837 = vmatprep.subr.bf16.mxu0 0
        %838 = vmatpush1.bf16.msra.mxu0 0
        %839 = vmatprep.subr.bf16.mxu0 0
        %840 = vmatpush1.bf16.msra.mxu0 0
        %841 = vmatprep.subr.bf16.mxu0 0
        %842 = vmatpush1.bf16.msra.mxu0 0
        %843 = vmatprep.subr.bf16.mxu0 0
        %844 = vmatpush1.bf16.msra.mxu0 0
        %845 = vmatprep.subr.bf16.mxu0 0
        %846 = vmatpush1.bf16.msra.mxu0 0
        %847 = vmatprep.subr.bf16.mxu0 0
        %848 = vmatpush1.bf16.msra.mxu0 0
        %849 = vmatprep.subr.bf16.mxu0 0
        %850 = vmatpush1.bf16.msra.mxu0 0
        %851 = vmatprep.subr.bf16.mxu0 0
        %852 = vmatpush1.bf16.msra.mxu0 0
        %853 = vmatprep.mubr.bf16.mxu0 0
        %854 = vmatmul.mubr.bf16.gmra.mrb[0].mxu0 %v482
        %v855 = vpop.f32.mrb[0].mxu0
        %v856 = vadd.f32 %v711, %v855
        %v857 = vpop.f32.mrb[0].mxu0
        %v858 = vpop.f32.mrb[0].mxu0
        %v859 = vadd.f32 %v714, %v858
        %v860 = vpop.f32.mrb[0].mxu0
        %861 = vmatprep.mubr.bf16.mxu0 0
        %862 = vmatmul.mubr.bf16.gmra.mrb[0].mxu0 %v483
        %v863 = vpop.f32.mrb[0].mxu0
        %v864 = vadd.f32 %v719, %v863
        %v865 = vpop.f32.mrb[0].mxu0
        %v866 = vpop.f32.mrb[0].mxu0
        %v867 = vadd.f32 %v722, %v866
        %v868 = vpop.f32.mrb[0].mxu0
        %869 = vmatprep.mubr.bf16.mxu0 0
        %870 = vmatmul.mubr.bf16.gmra.mrb[0].mxu0 %v484
        %v871 = vpop.f32.mrb[0].mxu0
        %v872 = vadd.f32 %v727, %v871
        %v873 = vpop.f32.mrb[0].mxu0
        %v874 = vpop.f32.mrb[0].mxu0
        %v875 = vadd.f32 %v730, %v874
        %v876 = vpop.f32.mrb[0].mxu0
        %877 = vmatprep.mubr.bf16.mxu0 0
        %878 = vmatmul.mubr.bf16.gmra.mrb[0].mxu0 %v485
        %v879 = vpop.f32.mrb[0].mxu0
        %v880 = vadd.f32 %v735, %v879
        %v881 = vpop.f32.mrb[0].mxu0
        %v882 = vpop.f32.mrb[0].mxu0
        %v883 = vadd.f32 %v738, %v882
        %v884 = vpop.f32.mrb[0].mxu0
        %885 = vmatprep.mubr.bf16.mxu0 0
        %886 = vmatmul.mubr.bf16.gmra.mrb[0].mxu0 %v486
        %v887 = vpop.f32.mrb[0].mxu0
        %v888 = vadd.f32 %v743, %v887
        %v889 = vpop.f32.mrb[0].mxu0
        %v890 = vpop.f32.mrb[0].mxu0
        %v891 = vadd.f32 %v746, %v890
        %v892 = vpop.f32.mrb[0].mxu0
        %893 = vmatprep.mubr.bf16.mxu0 0
        %894 = vmatmul.mubr.bf16.gmra.mrb[0].mxu0 %v487
        %v895 = vpop.f32.mrb[0].mxu0
        %v896 = vadd.f32 %v751, %v895
        %v897 = vpop.f32.mrb[0].mxu0
        %v898 = vpop.f32.mrb[0].mxu0
        %v899 = vadd.f32 %v754, %v898
        %v900 = vpop.f32.mrb[0].mxu0
        %901 = vmatprep.mubr.bf16.mxu0 0
        %902 = vmatmul.mubr.bf16.gmra.mrb[0].mxu0 %v488
        %v903 = vpop.f32.mrb[0].mxu0
        %v904 = vadd.f32 %v759, %v903
        %v905 = vpop.f32.mrb[0].mxu0
        %v906 = vpop.f32.mrb[0].mxu0
        %v907 = vadd.f32 %v762, %v906
        %v908 = vpop.f32.mrb[0].mxu0
        %909 = vmatprep.mubr.bf16.mxu0 0
        %910 = vmatmul.mubr.bf16.gmra.mrb[0].mxu0 %v489
        %v911 = vpop.f32.mrb[0].mxu0
        %v912 = vadd.f32 %v767, %v911
        %v913 = vpop.f32.mrb[0].mxu0
        %v914 = vpop.f32.mrb[0].mxu0
        %v915 = vadd.f32 %v770, %v914
        %v916 = vpop.f32.mrb[0].mxu0
        %917 = vdwg.mxu0
        %s918 = scalar_lea.vmem %s1, 128
        %v919 = vld [vmem:[%s918] sm:$0xf]
        %v920 = vld [vmem:[%s918 + $0x4] sm:$0xf]
        %v921 = vld [vmem:[%s918 + $0x8] sm:$0xf]
        %v922 = vld [vmem:[%s918 + $0xc] sm:$0xf]
        %v923 = vld [vmem:[%s918 + $0x10] sm:$0xf]
        %v924 = vld [vmem:[%s918 + $0x14] sm:$0xf]
        %v925 = vld [vmem:[%s918 + $0x18] sm:$0xf]
        %v926 = vld [vmem:[%s918 + $0x1c] sm:$0xf]
        %v927 = vld [vmem:[%s918 + $0x20] sm:$0xf]
        %v928 = vld [vmem:[%s918 + $0x24] sm:$0xf]
        %v929 = vld [vmem:[%s918 + $0x28] sm:$0xf]
        %v930 = vld [vmem:[%s918 + $0x2c] sm:$0xf]
        %v931 = vld [vmem:[%s918 + $0x30] sm:$0xf]
        %v932 = vld [vmem:[%s918 + $0x34] sm:$0xf]
        %v933 = vld [vmem:[%s918 + $0x38] sm:$0xf]
        %v934 = vld [vmem:[%s918 + $0x3c] sm:$0xf]
        %v951 = vunpack.c.l.b16 %v919
        %v952 = vunpack.c.l.b16 %v920
        %v953 = vunpack.c.l.b16 %v921
        %v954 = vunpack.c.l.b16 %v922
        %v955 = vunpack.c.l.b16 %v923
        %v956 = vunpack.c.l.b16 %v924
        %v957 = vunpack.c.l.b16 %v925
        %v958 = vunpack.c.l.b16 %v926
        %v959 = vunpack.c.l.b16 %v927
        %v960 = vunpack.c.l.b16 %v928
        %v961 = vunpack.c.l.b16 %v929
        %v962 = vunpack.c.l.b16 %v930
        %v963 = vunpack.c.l.b16 %v931
        %v964 = vunpack.c.l.b16 %v932
        %v965 = vunpack.c.l.b16 %v933
        %v966 = vunpack.c.l.b16 %v934
        %v967 = vpack.c.b16 %v952, %v951
        %v968 = vpack.c.b16 %v954, %v953
        %v969 = vpack.c.b16 %v956, %v955
        %v970 = vpack.c.b16 %v958, %v957
        %v971 = vpack.c.b16 %v960, %v959
        %v972 = vpack.c.b16 %v962, %v961
        %v973 = vpack.c.b16 %v964, %v963
        %v974 = vpack.c.b16 %v966, %v965
        %983 = vmatprep.subr.bf16.mxu0 0
        %984 = vmatpush1.bf16.msra.mxu0 %v967
        %985 = vmatprep.subr.bf16.mxu0 0
        %986 = vmatpush1.bf16.msra.mxu0 %v968
        %987 = vmatprep.subr.bf16.mxu0 0
        %988 = vmatpush1.bf16.msra.mxu0 %v969
        %989 = vmatprep.subr.bf16.mxu0 0
        %990 = vmatpush1.bf16.msra.mxu0 %v970
        %991 = vmatprep.subr.bf16.mxu0 0
        %992 = vmatpush1.bf16.msra.mxu0 %v971
        %993 = vmatprep.subr.bf16.mxu0 0
        %994 = vmatpush1.bf16.msra.mxu0 %v972
        %995 = vmatprep.subr.bf16.mxu0 0
        %996 = vmatpush1.bf16.msra.mxu0 %v973
        %997 = vmatprep.subr.bf16.mxu0 0
        %998 = vmatpush1.bf16.msra.mxu0 %v974
        %999 = vmatprep.subr.bf16.mxu0 0
        %1000 = vmatpush1.bf16.msra.mxu0 0
        %1001 = vmatprep.subr.bf16.mxu0 0
        %1002 = vmatpush1.bf16.msra.mxu0 0
        %1003 = vmatprep.subr.bf16.mxu0 0
        %1004 = vmatpush1.bf16.msra.mxu0 0
        %1005 = vmatprep.subr.bf16.mxu0 0
        %1006 = vmatpush1.bf16.msra.mxu0 0
        %1007 = vmatprep.subr.bf16.mxu0 0
        %1008 = vmatpush1.bf16.msra.mxu0 0
        %1009 = vmatprep.subr.bf16.mxu0 0
        %1010 = vmatpush1.bf16.msra.mxu0 0
        %1011 = vmatprep.subr.bf16.mxu0 0
        %1012 = vmatpush1.bf16.msra.mxu0 0
        %1013 = vmatprep.subr.bf16.mxu0 0
        %1014 = vmatpush1.bf16.msra.mxu0 0
        %1015 = vmatprep.mubr.bf16.mxu0 0
        %1016 = vmatmul.mubr.bf16.gmra.mrb[0].mxu0 %v539
        %v1017 = vpop.f32.mrb[0].mxu0
        %v1018 = vadd.f32 0.0, %v1017
        %v1019 = vpop.f32.mrb[0].mxu0
        %v1020 = vpop.f32.mrb[0].mxu0
        %v1021 = vadd.f32 0.0, %v1020
        %v1022 = vpop.f32.mrb[0].mxu0
        %1023 = vmatprep.mubr.bf16.mxu0 0
        %1024 = vmatmul.mubr.bf16.gmra.mrb[0].mxu0 %v540
        %v1025 = vpop.f32.mrb[0].mxu0
        %v1026 = vadd.f32 0.0, %v1025
        %v1027 = vpop.f32.mrb[0].mxu0
        %v1028 = vpop.f32.mrb[0].mxu0
        %v1029 = vadd.f32 0.0, %v1028
        %v1030 = vpop.f32.mrb[0].mxu0
        %1031 = vmatprep.mubr.bf16.mxu0 0
        %1032 = vmatmul.mubr.bf16.gmra.mrb[0].mxu0 %v541
        %v1033 = vpop.f32.mrb[0].mxu0
        %v1034 = vadd.f32 0.0, %v1033
        %v1035 = vpop.f32.mrb[0].mxu0
        %v1036 = vpop.f32.mrb[0].mxu0
        %v1037 = vadd.f32 0.0, %v1036
        %v1038 = vpop.f32.mrb[0].mxu0
        %1039 = vmatprep.mubr.bf16.mxu0 0
        %1040 = vmatmul.mubr.bf16.gmra.mrb[0].mxu0 %v542
        %v1041 = vpop.f32.mrb[0].mxu0
        %v1042 = vadd.f32 0.0, %v1041
        %v1043 = vpop.f32.mrb[0].mxu0
        %v1044 = vpop.f32.mrb[0].mxu0
        %v1045 = vadd.f32 0.0, %v1044
        %v1046 = vpop.f32.mrb[0].mxu0
        %1047 = vmatprep.mubr.bf16.mxu0 0
        %1048 = vmatmul.mubr.bf16.gmra.mrb[0].mxu0 %v543
        %v1049 = vpop.f32.mrb[0].mxu0
        %v1050 = vadd.f32 0.0, %v1049
        %v1051 = vpop.f32.mrb[0].mxu0
        %v1052 = vpop.f32.mrb[0].mxu0
        %v1053 = vadd.f32 0.0, %v1052
        %v1054 = vpop.f32.mrb[0].mxu0
        %1055 = vmatprep.mubr.bf16.mxu0 0
        %1056 = vmatmul.mubr.bf16.gmra.mrb[0].mxu0 %v544
        %v1057 = vpop.f32.mrb[0].mxu0
        %v1058 = vadd.f32 0.0, %v1057
        %v1059 = vpop.f32.mrb[0].mxu0
        %v1060 = vpop.f32.mrb[0].mxu0
        %v1061 = vadd.f32 0.0, %v1060
        %v1062 = vpop.f32.mrb[0].mxu0
        %1063 = vmatprep.mubr.bf16.mxu0 0
        %1064 = vmatmul.mubr.bf16.gmra.mrb[0].mxu0 %v545
        %v1065 = vpop.f32.mrb[0].mxu0
        %v1066 = vadd.f32 0.0, %v1065
        %v1067 = vpop.f32.mrb[0].mxu0
        %v1068 = vpop.f32.mrb[0].mxu0
        %v1069 = vadd.f32 0.0, %v1068
        %v1070 = vpop.f32.mrb[0].mxu0
        %1071 = vmatprep.mubr.bf16.mxu0 0
        %1072 = vmatmul.mubr.bf16.gmra.mrb[0].mxu0 %v546
        %v1073 = vpop.f32.mrb[0].mxu0
        %v1074 = vadd.f32 0.0, %v1073
        %v1075 = vpop.f32.mrb[0].mxu0
        %v1076 = vpop.f32.mrb[0].mxu0
        %v1077 = vadd.f32 0.0, %v1076
        %v1078 = vpop.f32.mrb[0].mxu0
        %1079 = vdwg.mxu0
        %v1080 = vadd.f32 %v856, %v1018
        %v1081 = vadd.f32 %v859, %v1021
        %v1082 = vadd.f32 %v864, %v1026
        %v1083 = vadd.f32 %v867, %v1029
        %v1084 = vadd.f32 %v872, %v1034
        %v1085 = vadd.f32 %v875, %v1037
        %v1086 = vadd.f32 %v880, %v1042
        %v1087 = vadd.f32 %v883, %v1045
        %v1088 = vadd.f32 %v888, %v1050
        %v1089 = vadd.f32 %v891, %v1053
        %v1090 = vadd.f32 %v896, %v1058
        %v1091 = vadd.f32 %v899, %v1061
        %v1092 = vadd.f32 %v904, %v1066
        %v1093 = vadd.f32 %v907, %v1069
        %v1094 = vadd.f32 %v912, %v1074
        %v1095 = vadd.f32 %v915, %v1077
        %v1096 = vld [vmem:[%s3] sm:$0x1]
        %v1097 = vlaneseq
        %v1098 = vshrl.u32 %v1097, 7
        %v1099 = vsub.s32 0, %v1098
        %v1100 = vrot.slane %v1096, %v1099
        %v1101 = vadd.f32 %v1080, %v1100
        %v1102 = vadd.f32 %v1081, %v1100
        %v1103 = vadd.f32 %v1082, %v1100
        %v1104 = vadd.f32 %v1083, %v1100
        %v1105 = vadd.f32 %v1084, %v1100
        %v1106 = vadd.f32 %v1085, %v1100
        %v1107 = vadd.f32 %v1086, %v1100
        %v1108 = vadd.f32 %v1087, %v1100
        %v1109 = vadd.f32 %v1088, %v1100
        %v1110 = vadd.f32 %v1089, %v1100
        %v1111 = vadd.f32 %v1090, %v1100
        %v1112 = vadd.f32 %v1091, %v1100
        %v1113 = vadd.f32 %v1092, %v1100
        %v1114 = vadd.f32 %v1093, %v1100
        %v1115 = vadd.f32 %v1094, %v1100
        %v1116 = vadd.f32 %v1095, %v1100
        %v1117 = vmax.f32 %v1101, 0.0
        %v1118 = vmax.f32 %v1102, 0.0
        %v1119 = vmax.f32 %v1103, 0.0
        %v1120 = vmax.f32 %v1104, 0.0
        %v1121 = vmax.f32 %v1105, 0.0
        %v1122 = vmax.f32 %v1106, 0.0
        %v1123 = vmax.f32 %v1107, 0.0
        %v1124 = vmax.f32 %v1108, 0.0
        %v1125 = vmax.f32 %v1109, 0.0
        %v1126 = vmax.f32 %v1110, 0.0
        %v1127 = vmax.f32 %v1111, 0.0
        %v1128 = vmax.f32 %v1112, 0.0
        %v1129 = vmax.f32 %v1113, 0.0
        %v1130 = vmax.f32 %v1114, 0.0
        %v1131 = vmax.f32 %v1115, 0.0
        %v1132 = vmax.f32 %v1116, 0.0
        %v1133 = vrot.slane %v1117, 7
        %v1134 = vrot.slane %v1118, 7
        %v1135 = vrot.slane %v1119, 7
        %v1136 = vrot.slane %v1120, 7
        %v1137 = vrot.slane %v1121, 7
        %v1138 = vrot.slane %v1122, 7
        %v1139 = vrot.slane %v1123, 7
        %v1140 = vrot.slane %v1124, 7
        %v1141 = vrot.slane %v1125, 7
        %v1142 = vrot.slane %v1126, 7
        %v1143 = vrot.slane %v1127, 7
        %v1144 = vrot.slane %v1128, 7
        %v1145 = vrot.slane %v1129, 7
        %v1146 = vrot.slane %v1130, 7
        %v1147 = vrot.slane %v1131, 7
        %v1148 = vrot.slane %v1132, 7
        %v1149 = vsel %vm449, %v1147, %v1148
        %v1150 = vsel %vm449, %v1146, %v1147
        %v1151 = vsel %vm449, %v1145, %v1146
        %v1152 = vsel %vm449, %v1144, %v1145
        %v1153 = vsel %vm449, %v1143, %v1144
        %v1154 = vsel %vm449, %v1142, %v1143
        %v1155 = vsel %vm449, %v1141, %v1142
        %v1156 = vsel %vm449, %v1140, %v1141
        %v1157 = vsel %vm449, %v1139, %v1140
        %v1158 = vsel %vm449, %v1138, %v1139
        %v1159 = vsel %vm449, %v1137, %v1138
        %v1160 = vsel %vm449, %v1136, %v1137
        %v1161 = vsel %vm449, %v1135, %v1136
        %v1162 = vsel %vm449, %v1134, %v1135
        %v1163 = vsel %vm449, %v1133, %v1134
        %v1164 = vsel %vm449, %v1148, %v1133
        %v1165 = vmul.f32 %v1164, %v316
        %v1166 = vmul.f32 %v1163, %v317
        %v1167 = vmul.f32 %v1162, %v318
        %v1168 = vmul.f32 %v1161, %v319
        %v1169 = vmul.f32 %v1160, %v320
        %v1170 = vmul.f32 %v1159, %v321
        %v1171 = vmul.f32 %v1158, %v322
        %v1172 = vmul.f32 %v1157, %v323
        %v1173 = vmul.f32 %v1156, %v324
        %v1174 = vmul.f32 %v1155, %v325
        %v1175 = vmul.f32 %v1154, %v326
        %v1176 = vmul.f32 %v1153, %v327
        %v1177 = vmul.f32 %v1152, %v328
        %v1178 = vmul.f32 %v1151, %v329
        %v1179 = vmul.f32 %v1150, %v330
        %v1180 = vmul.f32 %v1149, %v331
        %v1181 = vpack.c.bf16 %v1166, %v1165
        %v1182 = vpack.c.bf16 %v1168, %v1167
        %v1183 = vpack.c.bf16 %v1170, %v1169
        %v1184 = vpack.c.bf16 %v1172, %v1171
        %v1185 = vpack.c.bf16 %v1174, %v1173
        %v1186 = vpack.c.bf16 %v1176, %v1175
        %v1187 = vpack.c.bf16 %v1178, %v1177
        %v1188 = vpack.c.bf16 %v1180, %v1179
        %v1189 = vpack.c.bf16 %v1118, %v1117
        %v1190 = vpack.c.bf16 %v1120, %v1119
        %v1191 = vpack.c.bf16 %v1122, %v1121
        %v1192 = vpack.c.bf16 %v1124, %v1123
        %v1193 = vpack.c.bf16 %v1126, %v1125
        %v1194 = vpack.c.bf16 %v1128, %v1127
        %v1195 = vpack.c.bf16 %v1130, %v1129
        %v1196 = vpack.c.bf16 %v1132, %v1131
        %v1197 = vrot.slane %v1117, 1
        %v1198 = vrot.slane %v1118, 1
        %v1199 = vrot.slane %v1119, 1
        %v1200 = vrot.slane %v1120, 1
        %v1201 = vrot.slane %v1121, 1
        %v1202 = vrot.slane %v1122, 1
        %v1203 = vrot.slane %v1123, 1
        %v1204 = vrot.slane %v1124, 1
        %v1205 = vrot.slane %v1125, 1
        %v1206 = vrot.slane %v1126, 1
        %v1207 = vrot.slane %v1127, 1
        %v1208 = vrot.slane %v1128, 1
        %v1209 = vrot.slane %v1129, 1
        %v1210 = vrot.slane %v1130, 1
        %v1211 = vrot.slane %v1131, 1
        %v1212 = vrot.slane %v1132, 1
        %v1213 = vsel %vm506, %v1211, %v1212
        %v1214 = vsel %vm506, %v1210, %v1211
        %v1215 = vsel %vm506, %v1209, %v1210
        %v1216 = vsel %vm506, %v1208, %v1209
        %v1217 = vsel %vm506, %v1207, %v1208
        %v1218 = vsel %vm506, %v1206, %v1207
        %v1219 = vsel %vm506, %v1205, %v1206
        %v1220 = vsel %vm506, %v1204, %v1205
        %v1221 = vsel %vm506, %v1203, %v1204
        %v1222 = vsel %vm506, %v1202, %v1203
        %v1223 = vsel %vm506, %v1201, %v1202
        %v1224 = vsel %vm506, %v1200, %v1201
        %v1225 = vsel %vm506, %v1199, %v1200
        %v1226 = vsel %vm506, %v1198, %v1199
        %v1227 = vsel %vm506, %v1197, %v1198
        %v1228 = vsel %vm506, %v1212, %v1197
        %v1229 = vmul.f32 %v1227, %v348
        %v1230 = vmul.f32 %v1226, %v349
        %v1231 = vmul.f32 %v1225, %v350
        %v1232 = vmul.f32 %v1224, %v351
        %v1233 = vmul.f32 %v1223, %v352
        %v1234 = vmul.f32 %v1222, %v353
        %v1235 = vmul.f32 %v1221, %v354
        %v1236 = vmul.f32 %v1220, %v355
        %v1237 = vmul.f32 %v1219, %v356
        %v1238 = vmul.f32 %v1218, %v357
        %v1239 = vmul.f32 %v1217, %v358
        %v1240 = vmul.f32 %v1216, %v359
        %v1241 = vmul.f32 %v1215, %v360
        %v1242 = vmul.f32 %v1214, %v361
        %v1243 = vmul.f32 %v1213, %v362
        %v1244 = vmul.f32 %v1228, %v363
        %v1245 = vpack.c.bf16 %v1230, %v1229
        %v1246 = vpack.c.bf16 %v1232, %v1231
        %v1247 = vpack.c.bf16 %v1234, %v1233
        %v1248 = vpack.c.bf16 %v1236, %v1235
        %v1249 = vpack.c.bf16 %v1238, %v1237
        %v1250 = vpack.c.bf16 %v1240, %v1239
        %v1251 = vpack.c.bf16 %v1242, %v1241
        %v1252 = vpack.c.bf16 %v1244, %v1243
        %s1253 = scalar_lea.vmem %s1, 192
        %v1254 = vld [vmem:[%s1253] sm:$0xf]
        %v1255 = vld [vmem:[%s1253 + $0x4] sm:$0xf]
        %v1256 = vld [vmem:[%s1253 + $0x8] sm:$0xf]
        %v1257 = vld [vmem:[%s1253 + $0xc] sm:$0xf]
        %v1258 = vld [vmem:[%s1253 + $0x10] sm:$0xf]
        %v1259 = vld [vmem:[%s1253 + $0x14] sm:$0xf]
        %v1260 = vld [vmem:[%s1253 + $0x18] sm:$0xf]
        %v1261 = vld [vmem:[%s1253 + $0x1c] sm:$0xf]
        %v1262 = vld [vmem:[%s1253 + $0x20] sm:$0xf]
        %v1263 = vld [vmem:[%s1253 + $0x24] sm:$0xf]
        %v1264 = vld [vmem:[%s1253 + $0x28] sm:$0xf]
        %v1265 = vld [vmem:[%s1253 + $0x2c] sm:$0xf]
        %v1266 = vld [vmem:[%s1253 + $0x30] sm:$0xf]
        %v1267 = vld [vmem:[%s1253 + $0x34] sm:$0xf]
        %v1268 = vld [vmem:[%s1253 + $0x38] sm:$0xf]
        %v1269 = vld [vmem:[%s1253 + $0x3c] sm:$0xf]
        %s1270 = scalar_lea.vmem %s1, 256
        %v1271 = vld [vmem:[%s1270] sm:$0xf]
        %v1272 = vld [vmem:[%s1270 + $0x4] sm:$0xf]
        %v1273 = vld [vmem:[%s1270 + $0x8] sm:$0xf]
        %v1274 = vld [vmem:[%s1270 + $0xc] sm:$0xf]
        %v1275 = vld [vmem:[%s1270 + $0x10] sm:$0xf]
        %v1276 = vld [vmem:[%s1270 + $0x14] sm:$0xf]
        %v1277 = vld [vmem:[%s1270 + $0x18] sm:$0xf]
        %v1278 = vld [vmem:[%s1270 + $0x1c] sm:$0xf]
        %v1279 = vld [vmem:[%s1270 + $0x20] sm:$0xf]
        %v1280 = vld [vmem:[%s1270 + $0x24] sm:$0xf]
        %v1281 = vld [vmem:[%s1270 + $0x28] sm:$0xf]
        %v1282 = vld [vmem:[%s1270 + $0x2c] sm:$0xf]
        %v1283 = vld [vmem:[%s1270 + $0x30] sm:$0xf]
        %v1284 = vld [vmem:[%s1270 + $0x34] sm:$0xf]
        %v1285 = vld [vmem:[%s1270 + $0x38] sm:$0xf]
        %v1286 = vld [vmem:[%s1270 + $0x3c] sm:$0xf]
        %v1303 = vunpack.c.l.b16 %v1271
        %v1304 = vunpack.c.l.b16 %v1272
        %v1305 = vunpack.c.l.b16 %v1273
        %v1306 = vunpack.c.l.b16 %v1274
        %v1307 = vunpack.c.l.b16 %v1275
        %v1308 = vunpack.c.l.b16 %v1276
        %v1309 = vunpack.c.l.b16 %v1277
        %v1310 = vunpack.c.l.b16 %v1278
        %v1311 = vunpack.c.l.b16 %v1279
        %v1312 = vunpack.c.l.b16 %v1280
        %v1313 = vunpack.c.l.b16 %v1281
        %v1314 = vunpack.c.l.b16 %v1282
        %v1315 = vunpack.c.l.b16 %v1283
        %v1316 = vunpack.c.l.b16 %v1284
        %v1317 = vunpack.c.l.b16 %v1285
        %v1318 = vunpack.c.l.b16 %v1286
        %v1319 = vpack.c.b16 %v1304, %v1303
        %v1320 = vpack.c.b16 %v1306, %v1305
        %v1321 = vpack.c.b16 %v1308, %v1307
        %v1322 = vpack.c.b16 %v1310, %v1309
        %v1323 = vpack.c.b16 %v1312, %v1311
        %v1324 = vpack.c.b16 %v1314, %v1313
        %v1325 = vpack.c.b16 %v1316, %v1315
        %v1326 = vpack.c.b16 %v1318, %v1317
        %1335 = vmatprep.subr.bf16.mxu0 0
        %1336 = vmatpush1.bf16.msra.mxu0 %v1319
        %1337 = vmatprep.subr.bf16.mxu0 0
        %1338 = vmatpush1.bf16.msra.mxu0 %v1320
        %1339 = vmatprep.subr.bf16.mxu0 0
        %1340 = vmatpush1.bf16.msra.mxu0 %v1321
        %1341 = vmatprep.subr.bf16.mxu0 0
        %1342 = vmatpush1.bf16.msra.mxu0 %v1322
        %1343 = vmatprep.subr.bf16.mxu0 0
        %1344 = vmatpush1.bf16.msra.mxu0 %v1323
        %1345 = vmatprep.subr.bf16.mxu0 0
        %1346 = vmatpush1.bf16.msra.mxu0 %v1324
        %1347 = vmatprep.subr.bf16.mxu0 0
        %1348 = vmatpush1.bf16.msra.mxu0 %v1325
        %1349 = vmatprep.subr.bf16.mxu0 0
        %1350 = vmatpush1.bf16.msra.mxu0 %v1326
        %1351 = vmatprep.subr.bf16.mxu0 0
        %1352 = vmatpush1.bf16.msra.mxu0 0
        %1353 = vmatprep.subr.bf16.mxu0 0
        %1354 = vmatpush1.bf16.msra.mxu0 0
        %1355 = vmatprep.subr.bf16.mxu0 0
        %1356 = vmatpush1.bf16.msra.mxu0 0
        %1357 = vmatprep.subr.bf16.mxu0 0
        %1358 = vmatpush1.bf16.msra.mxu0 0
        %1359 = vmatprep.subr.bf16.mxu0 0
        %1360 = vmatpush1.bf16.msra.mxu0 0
        %1361 = vmatprep.subr.bf16.mxu0 0
        %1362 = vmatpush1.bf16.msra.mxu0 0
        %1363 = vmatprep.subr.bf16.mxu0 0
        %1364 = vmatpush1.bf16.msra.mxu0 0
        %1365 = vmatprep.subr.bf16.mxu0 0
        %1366 = vmatpush1.bf16.msra.mxu0 0
        %1367 = vmatprep.mubr.bf16.mxu0 0
        %1368 = vmatmul.mubr.bf16.gmra.mrb[0].mxu0 %v1189
        %v1369 = vpop.f32.mrb[0].mxu0
        %v1370 = vadd.f32 0.0, %v1369
        %v1371 = vpop.f32.mrb[0].mxu0
        %v1372 = vpop.f32.mrb[0].mxu0
        %v1373 = vadd.f32 0.0, %v1372
        %v1374 = vpop.f32.mrb[0].mxu0
        %1375 = vmatprep.mubr.bf16.mxu0 0
        %1376 = vmatmul.mubr.bf16.gmra.mrb[0].mxu0 %v1190
        %v1377 = vpop.f32.mrb[0].mxu0
        %v1378 = vadd.f32 0.0, %v1377
        %v1379 = vpop.f32.mrb[0].mxu0
        %v1380 = vpop.f32.mrb[0].mxu0
        %v1381 = vadd.f32 0.0, %v1380
        %v1382 = vpop.f32.mrb[0].mxu0
        %1383 = vmatprep.mubr.bf16.mxu0 0
        %1384 = vmatmul.mubr.bf16.gmra.mrb[0].mxu0 %v1191
        %v1385 = vpop.f32.mrb[0].mxu0
        %v1386 = vadd.f32 0.0, %v1385
        %v1387 = vpop.f32.mrb[0].mxu0
        %v1388 = vpop.f32.mrb[0].mxu0
        %v1389 = vadd.f32 0.0, %v1388
        %v1390 = vpop.f32.mrb[0].mxu0
        %1391 = vmatprep.mubr.bf16.mxu0 0
        %1392 = vmatmul.mubr.bf16.gmra.mrb[0].mxu0 %v1192
        %v1393 = vpop.f32.mrb[0].mxu0
        %v1394 = vadd.f32 0.0, %v1393
        %v1395 = vpop.f32.mrb[0].mxu0
        %v1396 = vpop.f32.mrb[0].mxu0
        %v1397 = vadd.f32 0.0, %v1396
        %v1398 = vpop.f32.mrb[0].mxu0
        %1399 = vmatprep.mubr.bf16.mxu0 0
        %1400 = vmatmul.mubr.bf16.gmra.mrb[0].mxu0 %v1193
        %v1401 = vpop.f32.mrb[0].mxu0
        %v1402 = vadd.f32 0.0, %v1401
        %v1403 = vpop.f32.mrb[0].mxu0
        %v1404 = vpop.f32.mrb[0].mxu0
        %v1405 = vadd.f32 0.0, %v1404
        %v1406 = vpop.f32.mrb[0].mxu0
        %1407 = vmatprep.mubr.bf16.mxu0 0
        %1408 = vmatmul.mubr.bf16.gmra.mrb[0].mxu0 %v1194
        %v1409 = vpop.f32.mrb[0].mxu0
        %v1410 = vadd.f32 0.0, %v1409
        %v1411 = vpop.f32.mrb[0].mxu0
        %v1412 = vpop.f32.mrb[0].mxu0
        %v1413 = vadd.f32 0.0, %v1412
        %v1414 = vpop.f32.mrb[0].mxu0
        %1415 = vmatprep.mubr.bf16.mxu0 0
        %1416 = vmatmul.mubr.bf16.gmra.mrb[0].mxu0 %v1195
        %v1417 = vpop.f32.mrb[0].mxu0
        %v1418 = vadd.f32 0.0, %v1417
        %v1419 = vpop.f32.mrb[0].mxu0
        %v1420 = vpop.f32.mrb[0].mxu0
        %v1421 = vadd.f32 0.0, %v1420
        %v1422 = vpop.f32.mrb[0].mxu0
        %1423 = vmatprep.mubr.bf16.mxu0 0
        %1424 = vmatmul.mubr.bf16.gmra.mrb[0].mxu0 %v1196
        %v1425 = vpop.f32.mrb[0].mxu0
        %v1426 = vadd.f32 0.0, %v1425
        %v1427 = vpop.f32.mrb[0].mxu0
        %v1428 = vpop.f32.mrb[0].mxu0
        %v1429 = vadd.f32 0.0, %v1428
        %v1430 = vpop.f32.mrb[0].mxu0
        %1431 = vdwg.mxu0
        %v1448 = vunpack.c.l.b16 %v1254
        %v1449 = vunpack.c.l.b16 %v1255
        %v1450 = vunpack.c.l.b16 %v1256
        %v1451 = vunpack.c.l.b16 %v1257
        %v1452 = vunpack.c.l.b16 %v1258
        %v1453 = vunpack.c.l.b16 %v1259
        %v1454 = vunpack.c.l.b16 %v1260
        %v1455 = vunpack.c.l.b16 %v1261
        %v1456 = vunpack.c.l.b16 %v1262
        %v1457 = vunpack.c.l.b16 %v1263
        %v1458 = vunpack.c.l.b16 %v1264
        %v1459 = vunpack.c.l.b16 %v1265
        %v1460 = vunpack.c.l.b16 %v1266
        %v1461 = vunpack.c.l.b16 %v1267
        %v1462 = vunpack.c.l.b16 %v1268
        %v1463 = vunpack.c.l.b16 %v1269
        %v1464 = vpack.c.b16 %v1449, %v1448
        %v1465 = vpack.c.b16 %v1451, %v1450
        %v1466 = vpack.c.b16 %v1453, %v1452
        %v1467 = vpack.c.b16 %v1455, %v1454
        %v1468 = vpack.c.b16 %v1457, %v1456
        %v1469 = vpack.c.b16 %v1459, %v1458
        %v1470 = vpack.c.b16 %v1461, %v1460
        %v1471 = vpack.c.b16 %v1463, %v1462
        %1480 = vmatprep.subr.bf16.mxu0 0
        %1481 = vmatpush1.bf16.msra.mxu0 %v1464
        %1482 = vmatprep.subr.bf16.mxu0 0
        %1483 = vmatpush1.bf16.msra.mxu0 %v1465
        %1484 = vmatprep.subr.bf16.mxu0 0
        %1485 = vmatpush1.bf16.msra.mxu0 %v1466
        %1486 = vmatprep.subr.bf16.mxu0 0
        %1487 = vmatpush1.bf16.msra.mxu0 %v1467
        %1488 = vmatprep.subr.bf16.mxu0 0
        %1489 = vmatpush1.bf16.msra.mxu0 %v1468
        %1490 = vmatprep.subr.bf16.mxu0 0
        %1491 = vmatpush1.bf16.msra.mxu0 %v1469
        %1492 = vmatprep.subr.bf16.mxu0 0
        %1493 = vmatpush1.bf16.msra.mxu0 %v1470
        %1494 = vmatprep.subr.bf16.mxu0 0
        %1495 = vmatpush1.bf16.msra.mxu0 %v1471
        %1496 = vmatprep.subr.bf16.mxu0 0
        %1497 = vmatpush1.bf16.msra.mxu0 0
        %1498 = vmatprep.subr.bf16.mxu0 0
        %1499 = vmatpush1.bf16.msra.mxu0 0
        %1500 = vmatprep.subr.bf16.mxu0 0
        %1501 = vmatpush1.bf16.msra.mxu0 0
        %1502 = vmatprep.subr.bf16.mxu0 0
        %1503 = vmatpush1.bf16.msra.mxu0 0
        %1504 = vmatprep.subr.bf16.mxu0 0
        %1505 = vmatpush1.bf16.msra.mxu0 0
        %1506 = vmatprep.subr.bf16.mxu0 0
        %1507 = vmatpush1.bf16.msra.mxu0 0
        %1508 = vmatprep.subr.bf16.mxu0 0
        %1509 = vmatpush1.bf16.msra.mxu0 0
        %1510 = vmatprep.subr.bf16.mxu0 0
        %1511 = vmatpush1.bf16.msra.mxu0 0
        %1512 = vmatprep.mubr.bf16.mxu0 0
        %1513 = vmatmul.mubr.bf16.gmra.mrb[0].mxu0 %v1181
        %v1514 = vpop.f32.mrb[0].mxu0
        %v1515 = vadd.f32 %v1370, %v1514
        %v1516 = vpop.f32.mrb[0].mxu0
        %v1517 = vpop.f32.mrb[0].mxu0
        %v1518 = vadd.f32 %v1373, %v1517
        %v1519 = vpop.f32.mrb[0].mxu0
        %1520 = vmatprep.mubr.bf16.mxu0 0
        %1521 = vmatmul.mubr.bf16.gmra.mrb[0].mxu0 %v1182
        %v1522 = vpop.f32.mrb[0].mxu0
        %v1523 = vadd.f32 %v1378, %v1522
        %v1524 = vpop.f32.mrb[0].mxu0
        %v1525 = vpop.f32.mrb[0].mxu0
        %v1526 = vadd.f32 %v1381, %v1525
        %v1527 = vpop.f32.mrb[0].mxu0
        %1528 = vmatprep.mubr.bf16.mxu0 0
        %1529 = vmatmul.mubr.bf16.gmra.mrb[0].mxu0 %v1183
        %v1530 = vpop.f32.mrb[0].mxu0
        %v1531 = vadd.f32 %v1386, %v1530
        %v1532 = vpop.f32.mrb[0].mxu0
        %v1533 = vpop.f32.mrb[0].mxu0
        %v1534 = vadd.f32 %v1389, %v1533
        %v1535 = vpop.f32.mrb[0].mxu0
        %1536 = vmatprep.mubr.bf16.mxu0 0
        %1537 = vmatmul.mubr.bf16.gmra.mrb[0].mxu0 %v1184
        %v1538 = vpop.f32.mrb[0].mxu0
        %v1539 = vadd.f32 %v1394, %v1538
        %v1540 = vpop.f32.mrb[0].mxu0
        %v1541 = vpop.f32.mrb[0].mxu0
        %v1542 = vadd.f32 %v1397, %v1541
        %v1543 = vpop.f32.mrb[0].mxu0
        %1544 = vmatprep.mubr.bf16.mxu0 0
        %1545 = vmatmul.mubr.bf16.gmra.mrb[0].mxu0 %v1185
        %v1546 = vpop.f32.mrb[0].mxu0
        %v1547 = vadd.f32 %v1402, %v1546
        %v1548 = vpop.f32.mrb[0].mxu0
        %v1549 = vpop.f32.mrb[0].mxu0
        %v1550 = vadd.f32 %v1405, %v1549
        %v1551 = vpop.f32.mrb[0].mxu0
        %1552 = vmatprep.mubr.bf16.mxu0 0
        %1553 = vmatmul.mubr.bf16.gmra.mrb[0].mxu0 %v1186
        %v1554 = vpop.f32.mrb[0].mxu0
        %v1555 = vadd.f32 %v1410, %v1554
        %v1556 = vpop.f32.mrb[0].mxu0
        %v1557 = vpop.f32.mrb[0].mxu0
        %v1558 = vadd.f32 %v1413, %v1557
        %v1559 = vpop.f32.mrb[0].mxu0
        %1560 = vmatprep.mubr.bf16.mxu0 0
        %1561 = vmatmul.mubr.bf16.gmra.mrb[0].mxu0 %v1187
        %v1562 = vpop.f32.mrb[0].mxu0
        %v1563 = vadd.f32 %v1418, %v1562
        %v1564 = vpop.f32.mrb[0].mxu0
        %v1565 = vpop.f32.mrb[0].mxu0
        %v1566 = vadd.f32 %v1421, %v1565
        %v1567 = vpop.f32.mrb[0].mxu0
        %1568 = vmatprep.mubr.bf16.mxu0 0
        %1569 = vmatmul.mubr.bf16.gmra.mrb[0].mxu0 %v1188
        %v1570 = vpop.f32.mrb[0].mxu0
        %v1571 = vadd.f32 %v1426, %v1570
        %v1572 = vpop.f32.mrb[0].mxu0
        %v1573 = vpop.f32.mrb[0].mxu0
        %v1574 = vadd.f32 %v1429, %v1573
        %v1575 = vpop.f32.mrb[0].mxu0
        %1576 = vdwg.mxu0
        %s1577 = scalar_lea.vmem %s1, 320
        %v1578 = vld [vmem:[%s1577] sm:$0xf]
        %v1579 = vld [vmem:[%s1577 + $0x4] sm:$0xf]
        %v1580 = vld [vmem:[%s1577 + $0x8] sm:$0xf]
        %v1581 = vld [vmem:[%s1577 + $0xc] sm:$0xf]
        %v1582 = vld [vmem:[%s1577 + $0x10] sm:$0xf]
        %v1583 = vld [vmem:[%s1577 + $0x14] sm:$0xf]
        %v1584 = vld [vmem:[%s1577 + $0x18] sm:$0xf]
        %v1585 = vld [vmem:[%s1577 + $0x1c] sm:$0xf]
        %v1586 = vld [vmem:[%s1577 + $0x20] sm:$0xf]
        %v1587 = vld [vmem:[%s1577 + $0x24] sm:$0xf]
        %v1588 = vld [vmem:[%s1577 + $0x28] sm:$0xf]
        %v1589 = vld [vmem:[%s1577 + $0x2c] sm:$0xf]
        %v1590 = vld [vmem:[%s1577 + $0x30] sm:$0xf]
        %v1591 = vld [vmem:[%s1577 + $0x34] sm:$0xf]
        %v1592 = vld [vmem:[%s1577 + $0x38] sm:$0xf]
        %v1593 = vld [vmem:[%s1577 + $0x3c] sm:$0xf]
        %v1610 = vunpack.c.l.b16 %v1578
        %v1611 = vunpack.c.l.b16 %v1579
        %v1612 = vunpack.c.l.b16 %v1580
        %v1613 = vunpack.c.l.b16 %v1581
        %v1614 = vunpack.c.l.b16 %v1582
        %v1615 = vunpack.c.l.b16 %v1583
        %v1616 = vunpack.c.l.b16 %v1584
        %v1617 = vunpack.c.l.b16 %v1585
        %v1618 = vunpack.c.l.b16 %v1586
        %v1619 = vunpack.c.l.b16 %v1587
        %v1620 = vunpack.c.l.b16 %v1588
        %v1621 = vunpack.c.l.b16 %v1589
        %v1622 = vunpack.c.l.b16 %v1590
        %v1623 = vunpack.c.l.b16 %v1591
        %v1624 = vunpack.c.l.b16 %v1592
        %v1625 = vunpack.c.l.b16 %v1593
        %v1626 = vpack.c.b16 %v1611, %v1610
        %v1627 = vpack.c.b16 %v1613, %v1612
        %v1628 = vpack.c.b16 %v1615, %v1614
        %v1629 = vpack.c.b16 %v1617, %v1616
        %v1630 = vpack.c.b16 %v1619, %v1618
        %v1631 = vpack.c.b16 %v1621, %v1620
        %v1632 = vpack.c.b16 %v1623, %v1622
        %v1633 = vpack.c.b16 %v1625, %v1624
        %1642 = vmatprep.subr.bf16.mxu0 0
        %1643 = vmatpush1.bf16.msra.mxu0 %v1626
        %1644 = vmatprep.subr.bf16.mxu0 0
        %1645 = vmatpush1.bf16.msra.mxu0 %v1627
        %1646 = vmatprep.subr.bf16.mxu0 0
        %1647 = vmatpush1.bf16.msra.mxu0 %v1628
        %1648 = vmatprep.subr.bf16.mxu0 0
        %1649 = vmatpush1.bf16.msra.mxu0 %v1629
        %1650 = vmatprep.subr.bf16.mxu0 0
        %1651 = vmatpush1.bf16.msra.mxu0 %v1630
        %1652 = vmatprep.subr.bf16.mxu0 0
        %1653 = vmatpush1.bf16.msra.mxu0 %v1631
        %1654 = vmatprep.subr.bf16.mxu0 0
        %1655 = vmatpush1.bf16.msra.mxu0 %v1632
        %1656 = vmatprep.subr.bf16.mxu0 0
        %1657 = vmatpush1.bf16.msra.mxu0 %v1633
        %1658 = vmatprep.subr.bf16.mxu0 0
        %1659 = vmatpush1.bf16.msra.mxu0 0
        %1660 = vmatprep.subr.bf16.mxu0 0
        %1661 = vmatpush1.bf16.msra.mxu0 0
        %1662 = vmatprep.subr.bf16.mxu0 0
        %1663 = vmatpush1.bf16.msra.mxu0 0
        %1664 = vmatprep.subr.bf16.mxu0 0
        %1665 = vmatpush1.bf16.msra.mxu0 0
        %1666 = vmatprep.subr.bf16.mxu0 0
        %1667 = vmatpush1.bf16.msra.mxu0 0
        %1668 = vmatprep.subr.bf16.mxu0 0
        %1669 = vmatpush1.bf16.msra.mxu0 0
        %1670 = vmatprep.subr.bf16.mxu0 0
        %1671 = vmatpush1.bf16.msra.mxu0 0
        %1672 = vmatprep.subr.bf16.mxu0 0
        %1673 = vmatpush1.bf16.msra.mxu0 0
        %1674 = vmatprep.mubr.bf16.mxu0 0
        %1675 = vmatmul.mubr.bf16.gmra.mrb[0].mxu0 %v1245
        %v1676 = vpop.f32.mrb[0].mxu0
        %v1677 = vadd.f32 0.0, %v1676
        %v1678 = vpop.f32.mrb[0].mxu0
        %v1679 = vpop.f32.mrb[0].mxu0
        %v1680 = vadd.f32 0.0, %v1679
        %v1681 = vpop.f32.mrb[0].mxu0
        %1682 = vmatprep.mubr.bf16.mxu0 0
        %1683 = vmatmul.mubr.bf16.gmra.mrb[0].mxu0 %v1246
        %v1684 = vpop.f32.mrb[0].mxu0
        %v1685 = vadd.f32 0.0, %v1684
        %v1686 = vpop.f32.mrb[0].mxu0
        %v1687 = vpop.f32.mrb[0].mxu0
        %v1688 = vadd.f32 0.0, %v1687
        %v1689 = vpop.f32.mrb[0].mxu0
        %1690 = vmatprep.mubr.bf16.mxu0 0
        %1691 = vmatmul.mubr.bf16.gmra.mrb[0].mxu0 %v1247
        %v1692 = vpop.f32.mrb[0].mxu0
        %v1693 = vadd.f32 0.0, %v1692
        %v1694 = vpop.f32.mrb[0].mxu0
        %v1695 = vpop.f32.mrb[0].mxu0
        %v1696 = vadd.f32 0.0, %v1695
        %v1697 = vpop.f32.mrb[0].mxu0
        %1698 = vmatprep.mubr.bf16.mxu0 0
        %1699 = vmatmul.mubr.bf16.gmra.mrb[0].mxu0 %v1248
        %v1700 = vpop.f32.mrb[0].mxu0
        %v1701 = vadd.f32 0.0, %v1700
        %v1702 = vpop.f32.mrb[0].mxu0
        %v1703 = vpop.f32.mrb[0].mxu0
        %v1704 = vadd.f32 0.0, %v1703
        %v1705 = vpop.f32.mrb[0].mxu0
        %1706 = vmatprep.mubr.bf16.mxu0 0
        %1707 = vmatmul.mubr.bf16.gmra.mrb[0].mxu0 %v1249
        %v1708 = vpop.f32.mrb[0].mxu0
        %v1709 = vadd.f32 0.0, %v1708
        %v1710 = vpop.f32.mrb[0].mxu0
        %v1711 = vpop.f32.mrb[0].mxu0
        %v1712 = vadd.f32 0.0, %v1711
        %v1713 = vpop.f32.mrb[0].mxu0
        %1714 = vmatprep.mubr.bf16.mxu0 0
        %1715 = vmatmul.mubr.bf16.gmra.mrb[0].mxu0 %v1250
        %v1716 = vpop.f32.mrb[0].mxu0
        %v1717 = vadd.f32 0.0, %v1716
        %v1718 = vpop.f32.mrb[0].mxu0
        %v1719 = vpop.f32.mrb[0].mxu0
        %v1720 = vadd.f32 0.0, %v1719
        %v1721 = vpop.f32.mrb[0].mxu0
        %1722 = vmatprep.mubr.bf16.mxu0 0
        %1723 = vmatmul.mubr.bf16.gmra.mrb[0].mxu0 %v1251
        %v1724 = vpop.f32.mrb[0].mxu0
        %v1725 = vadd.f32 0.0, %v1724
        %v1726 = vpop.f32.mrb[0].mxu0
        %v1727 = vpop.f32.mrb[0].mxu0
        %v1728 = vadd.f32 0.0, %v1727
        %v1729 = vpop.f32.mrb[0].mxu0
        %1730 = vmatprep.mubr.bf16.mxu0 0
        %1731 = vmatmul.mubr.bf16.gmra.mrb[0].mxu0 %v1252
        %v1732 = vpop.f32.mrb[0].mxu0
        %v1733 = vadd.f32 0.0, %v1732
        %v1734 = vpop.f32.mrb[0].mxu0
        %v1735 = vpop.f32.mrb[0].mxu0
        %v1736 = vadd.f32 0.0, %v1735
        %v1737 = vpop.f32.mrb[0].mxu0
        %1738 = vdwg.mxu0
        %v1739 = vadd.f32 %v1515, %v1677
        %v1740 = vadd.f32 %v1518, %v1680
        %v1741 = vadd.f32 %v1523, %v1685
        %v1742 = vadd.f32 %v1526, %v1688
        %v1743 = vadd.f32 %v1531, %v1693
        %v1744 = vadd.f32 %v1534, %v1696
        %v1745 = vadd.f32 %v1539, %v1701
        %v1746 = vadd.f32 %v1542, %v1704
        %v1747 = vadd.f32 %v1547, %v1709
        %v1748 = vadd.f32 %v1550, %v1712
        %v1749 = vadd.f32 %v1555, %v1717
        %v1750 = vadd.f32 %v1558, %v1720
        %v1751 = vadd.f32 %v1563, %v1725
        %v1752 = vadd.f32 %v1566, %v1728
        %v1753 = vadd.f32 %v1571, %v1733
        %v1754 = vadd.f32 %v1574, %v1736
        %v1755 = vld [vmem:[%s3 + $0x1] sm:$0x1]
        %v1756 = vlaneseq
        %v1757 = vshrl.u32 %v1756, 7
        %v1758 = vsub.s32 0, %v1757
        %v1759 = vrot.slane %v1755, %v1758
        %v1760 = vadd.f32 %v1739, %v1759
        %v1761 = vadd.f32 %v1740, %v1759
        %v1762 = vadd.f32 %v1741, %v1759
        %v1763 = vadd.f32 %v1742, %v1759
        %v1764 = vadd.f32 %v1743, %v1759
        %v1765 = vadd.f32 %v1744, %v1759
        %v1766 = vadd.f32 %v1745, %v1759
        %v1767 = vadd.f32 %v1746, %v1759
        %v1768 = vadd.f32 %v1747, %v1759
        %v1769 = vadd.f32 %v1748, %v1759
        %v1770 = vadd.f32 %v1749, %v1759
        %v1771 = vadd.f32 %v1750, %v1759
        %v1772 = vadd.f32 %v1751, %v1759
        %v1773 = vadd.f32 %v1752, %v1759
        %v1774 = vadd.f32 %v1753, %v1759
        %v1775 = vadd.f32 %v1754, %v1759
        %v1776 = vmax.f32 %v1760, 0.0
        %v1777 = vmax.f32 %v1761, 0.0
        %v1778 = vmax.f32 %v1762, 0.0
        %v1779 = vmax.f32 %v1763, 0.0
        %v1780 = vmax.f32 %v1764, 0.0
        %v1781 = vmax.f32 %v1765, 0.0
        %v1782 = vmax.f32 %v1766, 0.0
        %v1783 = vmax.f32 %v1767, 0.0
        %v1784 = vmax.f32 %v1768, 0.0
        %v1785 = vmax.f32 %v1769, 0.0
        %v1786 = vmax.f32 %v1770, 0.0
        %v1787 = vmax.f32 %v1771, 0.0
        %v1788 = vmax.f32 %v1772, 0.0
        %v1789 = vmax.f32 %v1773, 0.0
        %v1790 = vmax.f32 %v1774, 0.0
        %v1791 = vmax.f32 %v1775, 0.0
        %v1792 = vrot.slane %v1776, 7
        %v1793 = vrot.slane %v1777, 7
        %v1794 = vrot.slane %v1778, 7
        %v1795 = vrot.slane %v1779, 7
        %v1796 = vrot.slane %v1780, 7
        %v1797 = vrot.slane %v1781, 7
        %v1798 = vrot.slane %v1782, 7
        %v1799 = vrot.slane %v1783, 7
        %v1800 = vrot.slane %v1784, 7
        %v1801 = vrot.slane %v1785, 7
        %v1802 = vrot.slane %v1786, 7
        %v1803 = vrot.slane %v1787, 7
        %v1804 = vrot.slane %v1788, 7
        %v1805 = vrot.slane %v1789, 7
        %v1806 = vrot.slane %v1790, 7
        %v1807 = vrot.slane %v1791, 7
        %v1808 = vsel %vm449, %v1806, %v1807
        %v1809 = vsel %vm449, %v1805, %v1806
        %v1810 = vsel %vm449, %v1804, %v1805
        %v1811 = vsel %vm449, %v1803, %v1804
        %v1812 = vsel %vm449, %v1802, %v1803
        %v1813 = vsel %vm449, %v1801, %v1802
        %v1814 = vsel %vm449, %v1800, %v1801
        %v1815 = vsel %vm449, %v1799, %v1800
        %v1816 = vsel %vm449, %v1798, %v1799
        %v1817 = vsel %vm449, %v1797, %v1798
        %v1818 = vsel %vm449, %v1796, %v1797
        %v1819 = vsel %vm449, %v1795, %v1796
        %v1820 = vsel %vm449, %v1794, %v1795
        %v1821 = vsel %vm449, %v1793, %v1794
        %v1822 = vsel %vm449, %v1792, %v1793
        %v1823 = vsel %vm449, %v1807, %v1792
        %v1824 = vmul.f32 %v1823, %v316
        %v1825 = vmul.f32 %v1822, %v317
        %v1826 = vmul.f32 %v1821, %v318
        %v1827 = vmul.f32 %v1820, %v319
        %v1828 = vmul.f32 %v1819, %v320
        %v1829 = vmul.f32 %v1818, %v321
        %v1830 = vmul.f32 %v1817, %v322
        %v1831 = vmul.f32 %v1816, %v323
        %v1832 = vmul.f32 %v1815, %v324
        %v1833 = vmul.f32 %v1814, %v325
        %v1834 = vmul.f32 %v1813, %v326
        %v1835 = vmul.f32 %v1812, %v327
        %v1836 = vmul.f32 %v1811, %v328
        %v1837 = vmul.f32 %v1810, %v329
        %v1838 = vmul.f32 %v1809, %v330
        %v1839 = vmul.f32 %v1808, %v331
        %v1840 = vpack.c.bf16 %v1825, %v1824
        %v1841 = vpack.c.bf16 %v1827, %v1826
        %v1842 = vpack.c.bf16 %v1829, %v1828
        %v1843 = vpack.c.bf16 %v1831, %v1830
        %v1844 = vpack.c.bf16 %v1833, %v1832
        %v1845 = vpack.c.bf16 %v1835, %v1834
        %v1846 = vpack.c.bf16 %v1837, %v1836
        %v1847 = vpack.c.bf16 %v1839, %v1838
        %v1848 = vpack.c.bf16 %v1777, %v1776
        %v1849 = vpack.c.bf16 %v1779, %v1778
        %v1850 = vpack.c.bf16 %v1781, %v1780
        %v1851 = vpack.c.bf16 %v1783, %v1782
        %v1852 = vpack.c.bf16 %v1785, %v1784
        %v1853 = vpack.c.bf16 %v1787, %v1786
        %v1854 = vpack.c.bf16 %v1789, %v1788
        %v1855 = vpack.c.bf16 %v1791, %v1790
        %v1856 = vrot.slane %v1776, 1
        %v1857 = vrot.slane %v1777, 1
        %v1858 = vrot.slane %v1778, 1
        %v1859 = vrot.slane %v1779, 1
        %v1860 = vrot.slane %v1780, 1
        %v1861 = vrot.slane %v1781, 1
        %v1862 = vrot.slane %v1782, 1
        %v1863 = vrot.slane %v1783, 1
        %v1864 = vrot.slane %v1784, 1
        %v1865 = vrot.slane %v1785, 1
        %v1866 = vrot.slane %v1786, 1
        %v1867 = vrot.slane %v1787, 1
        %v1868 = vrot.slane %v1788, 1
        %v1869 = vrot.slane %v1789, 1
        %v1870 = vrot.slane %v1790, 1
        %v1871 = vrot.slane %v1791, 1
        %v1872 = vsel %vm506, %v1870, %v1871
        %v1873 = vsel %vm506, %v1869, %v1870
        %v1874 = vsel %vm506, %v1868, %v1869
        %v1875 = vsel %vm506, %v1867, %v1868
        %v1876 = vsel %vm506, %v1866, %v1867
        %v1877 = vsel %vm506, %v1865, %v1866
        %v1878 = vsel %vm506, %v1864, %v1865
        %v1879 = vsel %vm506, %v1863, %v1864
        %v1880 = vsel %vm506, %v1862, %v1863
        %v1881 = vsel %vm506, %v1861, %v1862
        %v1882 = vsel %vm506, %v1860, %v1861
        %v1883 = vsel %vm506, %v1859, %v1860
        %v1884 = vsel %vm506, %v1858, %v1859
        %v1885 = vsel %vm506, %v1857, %v1858
        %v1886 = vsel %vm506, %v1856, %v1857
        %v1887 = vsel %vm506, %v1871, %v1856
        %v1888 = vmul.f32 %v1886, %v348
        %v1889 = vmul.f32 %v1885, %v349
        %v1890 = vmul.f32 %v1884, %v350
        %v1891 = vmul.f32 %v1883, %v351
        %v1892 = vmul.f32 %v1882, %v352
        %v1893 = vmul.f32 %v1881, %v353
        %v1894 = vmul.f32 %v1880, %v354
        %v1895 = vmul.f32 %v1879, %v355
        %v1896 = vmul.f32 %v1878, %v356
        %v1897 = vmul.f32 %v1877, %v357
        %v1898 = vmul.f32 %v1876, %v358
        %v1899 = vmul.f32 %v1875, %v359
        %v1900 = vmul.f32 %v1874, %v360
        %v1901 = vmul.f32 %v1873, %v361
        %v1902 = vmul.f32 %v1872, %v362
        %v1903 = vmul.f32 %v1887, %v363
        %v1904 = vpack.c.bf16 %v1889, %v1888
        %v1905 = vpack.c.bf16 %v1891, %v1890
        %v1906 = vpack.c.bf16 %v1893, %v1892
        %v1907 = vpack.c.bf16 %v1895, %v1894
        %v1908 = vpack.c.bf16 %v1897, %v1896
        %v1909 = vpack.c.bf16 %v1899, %v1898
        %v1910 = vpack.c.bf16 %v1901, %v1900
        %v1911 = vpack.c.bf16 %v1903, %v1902
        %s1912 = scalar_lea.vmem %s1, 384
        %v1913 = vld [vmem:[%s1912] sm:$0xf]
        %v1914 = vld [vmem:[%s1912 + $0x4] sm:$0xf]
        %v1915 = vld [vmem:[%s1912 + $0x8] sm:$0xf]
        %v1916 = vld [vmem:[%s1912 + $0xc] sm:$0xf]
        %v1917 = vld [vmem:[%s1912 + $0x10] sm:$0xf]
        %v1918 = vld [vmem:[%s1912 + $0x14] sm:$0xf]
        %v1919 = vld [vmem:[%s1912 + $0x18] sm:$0xf]
        %v1920 = vld [vmem:[%s1912 + $0x1c] sm:$0xf]
        %v1921 = vld [vmem:[%s1912 + $0x20] sm:$0xf]
        %v1922 = vld [vmem:[%s1912 + $0x24] sm:$0xf]
        %v1923 = vld [vmem:[%s1912 + $0x28] sm:$0xf]
        %v1924 = vld [vmem:[%s1912 + $0x2c] sm:$0xf]
        %v1925 = vld [vmem:[%s1912 + $0x30] sm:$0xf]
        %v1926 = vld [vmem:[%s1912 + $0x34] sm:$0xf]
        %v1927 = vld [vmem:[%s1912 + $0x38] sm:$0xf]
        %v1928 = vld [vmem:[%s1912 + $0x3c] sm:$0xf]
        %s1929 = scalar_lea.vmem %s1, 448
        %v1930 = vld [vmem:[%s1929] sm:$0xf]
        %v1931 = vld [vmem:[%s1929 + $0x4] sm:$0xf]
        %v1932 = vld [vmem:[%s1929 + $0x8] sm:$0xf]
        %v1933 = vld [vmem:[%s1929 + $0xc] sm:$0xf]
        %v1934 = vld [vmem:[%s1929 + $0x10] sm:$0xf]
        %v1935 = vld [vmem:[%s1929 + $0x14] sm:$0xf]
        %v1936 = vld [vmem:[%s1929 + $0x18] sm:$0xf]
        %v1937 = vld [vmem:[%s1929 + $0x1c] sm:$0xf]
        %v1938 = vld [vmem:[%s1929 + $0x20] sm:$0xf]
        %v1939 = vld [vmem:[%s1929 + $0x24] sm:$0xf]
        %v1940 = vld [vmem:[%s1929 + $0x28] sm:$0xf]
        %v1941 = vld [vmem:[%s1929 + $0x2c] sm:$0xf]
        %v1942 = vld [vmem:[%s1929 + $0x30] sm:$0xf]
        %v1943 = vld [vmem:[%s1929 + $0x34] sm:$0xf]
        %v1944 = vld [vmem:[%s1929 + $0x38] sm:$0xf]
        %v1945 = vld [vmem:[%s1929 + $0x3c] sm:$0xf]
        %v1962 = vunpack.c.l.b16 %v1930
        %v1963 = vunpack.c.l.b16 %v1931
        %v1964 = vunpack.c.l.b16 %v1932
        %v1965 = vunpack.c.l.b16 %v1933
        %v1966 = vunpack.c.l.b16 %v1934
        %v1967 = vunpack.c.l.b16 %v1935
        %v1968 = vunpack.c.l.b16 %v1936
        %v1969 = vunpack.c.l.b16 %v1937
        %v1970 = vunpack.c.l.b16 %v1938
        %v1971 = vunpack.c.l.b16 %v1939
        %v1972 = vunpack.c.l.b16 %v1940
        %v1973 = vunpack.c.l.b16 %v1941
        %v1974 = vunpack.c.l.b16 %v1942
        %v1975 = vunpack.c.l.b16 %v1943
        %v1976 = vunpack.c.l.b16 %v1944
        %v1977 = vunpack.c.l.b16 %v1945
        %v1978 = vpack.c.b16 %v1963, %v1962
        %v1979 = vpack.c.b16 %v1965, %v1964
        %v1980 = vpack.c.b16 %v1967, %v1966
        %v1981 = vpack.c.b16 %v1969, %v1968
        %v1982 = vpack.c.b16 %v1971, %v1970
        %v1983 = vpack.c.b16 %v1973, %v1972
        %v1984 = vpack.c.b16 %v1975, %v1974
        %v1985 = vpack.c.b16 %v1977, %v1976
        %1994 = vmatprep.subr.bf16.mxu0 0
        %1995 = vmatpush1.bf16.msra.mxu0 %v1978
        %1996 = vmatprep.subr.bf16.mxu0 0
        %1997 = vmatpush1.bf16.msra.mxu0 %v1979
        %1998 = vmatprep.subr.bf16.mxu0 0
        %1999 = vmatpush1.bf16.msra.mxu0 %v1980
        %2000 = vmatprep.subr.bf16.mxu0 0
        %2001 = vmatpush1.bf16.msra.mxu0 %v1981
        %2002 = vmatprep.subr.bf16.mxu0 0
        %2003 = vmatpush1.bf16.msra.mxu0 %v1982
        %2004 = vmatprep.subr.bf16.mxu0 0
        %2005 = vmatpush1.bf16.msra.mxu0 %v1983
        %2006 = vmatprep.subr.bf16.mxu0 0
        %2007 = vmatpush1.bf16.msra.mxu0 %v1984
        %2008 = vmatprep.subr.bf16.mxu0 0
        %2009 = vmatpush1.bf16.msra.mxu0 %v1985
        %2010 = vmatprep.subr.bf16.mxu0 0
        %2011 = vmatpush1.bf16.msra.mxu0 0
        %2012 = vmatprep.subr.bf16.mxu0 0
        %2013 = vmatpush1.bf16.msra.mxu0 0
        %2014 = vmatprep.subr.bf16.mxu0 0
        %2015 = vmatpush1.bf16.msra.mxu0 0
        %2016 = vmatprep.subr.bf16.mxu0 0
        %2017 = vmatpush1.bf16.msra.mxu0 0
        %2018 = vmatprep.subr.bf16.mxu0 0
        %2019 = vmatpush1.bf16.msra.mxu0 0
        %2020 = vmatprep.subr.bf16.mxu0 0
        %2021 = vmatpush1.bf16.msra.mxu0 0
        %2022 = vmatprep.subr.bf16.mxu0 0
        %2023 = vmatpush1.bf16.msra.mxu0 0
        %2024 = vmatprep.subr.bf16.mxu0 0
        %2025 = vmatpush1.bf16.msra.mxu0 0
        %2026 = vmatprep.mubr.bf16.mxu0 0
        %2027 = vmatmul.mubr.bf16.gmra.mrb[0].mxu0 %v1848
        %v2028 = vpop.f32.mrb[0].mxu0
        %v2029 = vadd.f32 0.0, %v2028
        %v2030 = vpop.f32.mrb[0].mxu0
        %v2031 = vpop.f32.mrb[0].mxu0
        %v2032 = vadd.f32 0.0, %v2031
        %v2033 = vpop.f32.mrb[0].mxu0
        %2034 = vmatprep.mubr.bf16.mxu0 0
        %2035 = vmatmul.mubr.bf16.gmra.mrb[0].mxu0 %v1849
        %v2036 = vpop.f32.mrb[0].mxu0
        %v2037 = vadd.f32 0.0, %v2036
        %v2038 = vpop.f32.mrb[0].mxu0
        %v2039 = vpop.f32.mrb[0].mxu0
        %v2040 = vadd.f32 0.0, %v2039
        %v2041 = vpop.f32.mrb[0].mxu0
        %2042 = vmatprep.mubr.bf16.mxu0 0
        %2043 = vmatmul.mubr.bf16.gmra.mrb[0].mxu0 %v1850
        %v2044 = vpop.f32.mrb[0].mxu0
        %v2045 = vadd.f32 0.0, %v2044
        %v2046 = vpop.f32.mrb[0].mxu0
        %v2047 = vpop.f32.mrb[0].mxu0
        %v2048 = vadd.f32 0.0, %v2047
        %v2049 = vpop.f32.mrb[0].mxu0
        %2050 = vmatprep.mubr.bf16.mxu0 0
        %2051 = vmatmul.mubr.bf16.gmra.mrb[0].mxu0 %v1851
        %v2052 = vpop.f32.mrb[0].mxu0
        %v2053 = vadd.f32 0.0, %v2052
        %v2054 = vpop.f32.mrb[0].mxu0
        %v2055 = vpop.f32.mrb[0].mxu0
        %v2056 = vadd.f32 0.0, %v2055
        %v2057 = vpop.f32.mrb[0].mxu0
        %2058 = vmatprep.mubr.bf16.mxu0 0
        %2059 = vmatmul.mubr.bf16.gmra.mrb[0].mxu0 %v1852
        %v2060 = vpop.f32.mrb[0].mxu0
        %v2061 = vadd.f32 0.0, %v2060
        %v2062 = vpop.f32.mrb[0].mxu0
        %v2063 = vpop.f32.mrb[0].mxu0
        %v2064 = vadd.f32 0.0, %v2063
        %v2065 = vpop.f32.mrb[0].mxu0
        %2066 = vmatprep.mubr.bf16.mxu0 0
        %2067 = vmatmul.mubr.bf16.gmra.mrb[0].mxu0 %v1853
        %v2068 = vpop.f32.mrb[0].mxu0
        %v2069 = vadd.f32 0.0, %v2068
        %v2070 = vpop.f32.mrb[0].mxu0
        %v2071 = vpop.f32.mrb[0].mxu0
        %v2072 = vadd.f32 0.0, %v2071
        %v2073 = vpop.f32.mrb[0].mxu0
        %2074 = vmatprep.mubr.bf16.mxu0 0
        %2075 = vmatmul.mubr.bf16.gmra.mrb[0].mxu0 %v1854
        %v2076 = vpop.f32.mrb[0].mxu0
        %v2077 = vadd.f32 0.0, %v2076
        %v2078 = vpop.f32.mrb[0].mxu0
        %v2079 = vpop.f32.mrb[0].mxu0
        %v2080 = vadd.f32 0.0, %v2079
        %v2081 = vpop.f32.mrb[0].mxu0
        %2082 = vmatprep.mubr.bf16.mxu0 0
        %2083 = vmatmul.mubr.bf16.gmra.mrb[0].mxu0 %v1855
        %v2084 = vpop.f32.mrb[0].mxu0
        %v2085 = vadd.f32 0.0, %v2084
        %v2086 = vpop.f32.mrb[0].mxu0
        %v2087 = vpop.f32.mrb[0].mxu0
        %v2088 = vadd.f32 0.0, %v2087
        %v2089 = vpop.f32.mrb[0].mxu0
        %2090 = vdwg.mxu0
        %v2107 = vunpack.c.l.b16 %v1913
        %v2108 = vunpack.c.l.b16 %v1914
        %v2109 = vunpack.c.l.b16 %v1915
        %v2110 = vunpack.c.l.b16 %v1916
        %v2111 = vunpack.c.l.b16 %v1917
        %v2112 = vunpack.c.l.b16 %v1918
        %v2113 = vunpack.c.l.b16 %v1919
        %v2114 = vunpack.c.l.b16 %v1920
        %v2115 = vunpack.c.l.b16 %v1921
        %v2116 = vunpack.c.l.b16 %v1922
        %v2117 = vunpack.c.l.b16 %v1923
        %v2118 = vunpack.c.l.b16 %v1924
        %v2119 = vunpack.c.l.b16 %v1925
        %v2120 = vunpack.c.l.b16 %v1926
        %v2121 = vunpack.c.l.b16 %v1927
        %v2122 = vunpack.c.l.b16 %v1928
        %v2123 = vpack.c.b16 %v2108, %v2107
        %v2124 = vpack.c.b16 %v2110, %v2109
        %v2125 = vpack.c.b16 %v2112, %v2111
        %v2126 = vpack.c.b16 %v2114, %v2113
        %v2127 = vpack.c.b16 %v2116, %v2115
        %v2128 = vpack.c.b16 %v2118, %v2117
        %v2129 = vpack.c.b16 %v2120, %v2119
        %v2130 = vpack.c.b16 %v2122, %v2121
        %2139 = vmatprep.subr.bf16.mxu0 0
        %2140 = vmatpush1.bf16.msra.mxu0 %v2123
        %2141 = vmatprep.subr.bf16.mxu0 0
        %2142 = vmatpush1.bf16.msra.mxu0 %v2124
        %2143 = vmatprep.subr.bf16.mxu0 0
        %2144 = vmatpush1.bf16.msra.mxu0 %v2125
        %2145 = vmatprep.subr.bf16.mxu0 0
        %2146 = vmatpush1.bf16.msra.mxu0 %v2126
        %2147 = vmatprep.subr.bf16.mxu0 0
        %2148 = vmatpush1.bf16.msra.mxu0 %v2127
        %2149 = vmatprep.subr.bf16.mxu0 0
        %2150 = vmatpush1.bf16.msra.mxu0 %v2128
        %2151 = vmatprep.subr.bf16.mxu0 0
        %2152 = vmatpush1.bf16.msra.mxu0 %v2129
        %2153 = vmatprep.subr.bf16.mxu0 0
        %2154 = vmatpush1.bf16.msra.mxu0 %v2130
        %2155 = vmatprep.subr.bf16.mxu0 0
        %2156 = vmatpush1.bf16.msra.mxu0 0
        %2157 = vmatprep.subr.bf16.mxu0 0
        %2158 = vmatpush1.bf16.msra.mxu0 0
        %2159 = vmatprep.subr.bf16.mxu0 0
        %2160 = vmatpush1.bf16.msra.mxu0 0
        %2161 = vmatprep.subr.bf16.mxu0 0
        %2162 = vmatpush1.bf16.msra.mxu0 0
        %2163 = vmatprep.subr.bf16.mxu0 0
        %2164 = vmatpush1.bf16.msra.mxu0 0
        %2165 = vmatprep.subr.bf16.mxu0 0
        %2166 = vmatpush1.bf16.msra.mxu0 0
        %2167 = vmatprep.subr.bf16.mxu0 0
        %2168 = vmatpush1.bf16.msra.mxu0 0
        %2169 = vmatprep.subr.bf16.mxu0 0
        %2170 = vmatpush1.bf16.msra.mxu0 0
        %2171 = vmatprep.mubr.bf16.mxu0 0
        %2172 = vmatmul.mubr.bf16.gmra.mrb[0].mxu0 %v1840
        %v2173 = vpop.f32.mrb[0].mxu0
        %v2174 = vadd.f32 %v2029, %v2173
        %v2175 = vpop.f32.mrb[0].mxu0
        %v2176 = vpop.f32.mrb[0].mxu0
        %v2177 = vadd.f32 %v2032, %v2176
        %v2178 = vpop.f32.mrb[0].mxu0
        %2179 = vmatprep.mubr.bf16.mxu0 0
        %2180 = vmatmul.mubr.bf16.gmra.mrb[0].mxu0 %v1841
        %v2181 = vpop.f32.mrb[0].mxu0
        %v2182 = vadd.f32 %v2037, %v2181
        %v2183 = vpop.f32.mrb[0].mxu0
        %v2184 = vpop.f32.mrb[0].mxu0
        %v2185 = vadd.f32 %v2040, %v2184
        %v2186 = vpop.f32.mrb[0].mxu0
        %2187 = vmatprep.mubr.bf16.mxu0 0
        %2188 = vmatmul.mubr.bf16.gmra.mrb[0].mxu0 %v1842
        %v2189 = vpop.f32.mrb[0].mxu0
        %v2190 = vadd.f32 %v2045, %v2189
        %v2191 = vpop.f32.mrb[0].mxu0
        %v2192 = vpop.f32.mrb[0].mxu0
        %v2193 = vadd.f32 %v2048, %v2192
        %v2194 = vpop.f32.mrb[0].mxu0
        %2195 = vmatprep.mubr.bf16.mxu0 0
        %2196 = vmatmul.mubr.bf16.gmra.mrb[0].mxu0 %v1843
        %v2197 = vpop.f32.mrb[0].mxu0
        %v2198 = vadd.f32 %v2053, %v2197
        %v2199 = vpop.f32.mrb[0].mxu0
        %v2200 = vpop.f32.mrb[0].mxu0
        %v2201 = vadd.f32 %v2056, %v2200
        %v2202 = vpop.f32.mrb[0].mxu0
        %2203 = vmatprep.mubr.bf16.mxu0 0
        %2204 = vmatmul.mubr.bf16.gmra.mrb[0].mxu0 %v1844
        %v2205 = vpop.f32.mrb[0].mxu0
        %v2206 = vadd.f32 %v2061, %v2205
        %v2207 = vpop.f32.mrb[0].mxu0
        %v2208 = vpop.f32.mrb[0].mxu0
        %v2209 = vadd.f32 %v2064, %v2208
        %v2210 = vpop.f32.mrb[0].mxu0
        %2211 = vmatprep.mubr.bf16.mxu0 0
        %2212 = vmatmul.mubr.bf16.gmra.mrb[0].mxu0 %v1845
        %v2213 = vpop.f32.mrb[0].mxu0
        %v2214 = vadd.f32 %v2069, %v2213
        %v2215 = vpop.f32.mrb[0].mxu0
        %v2216 = vpop.f32.mrb[0].mxu0
        %v2217 = vadd.f32 %v2072, %v2216
        %v2218 = vpop.f32.mrb[0].mxu0
        %2219 = vmatprep.mubr.bf16.mxu0 0
        %2220 = vmatmul.mubr.bf16.gmra.mrb[0].mxu0 %v1846
        %v2221 = vpop.f32.mrb[0].mxu0
        %v2222 = vadd.f32 %v2077, %v2221
        %v2223 = vpop.f32.mrb[0].mxu0
        %v2224 = vpop.f32.mrb[0].mxu0
        %v2225 = vadd.f32 %v2080, %v2224
        %v2226 = vpop.f32.mrb[0].mxu0
        %2227 = vmatprep.mubr.bf16.mxu0 0
        %2228 = vmatmul.mubr.bf16.gmra.mrb[0].mxu0 %v1847
        %v2229 = vpop.f32.mrb[0].mxu0
        %v2230 = vadd.f32 %v2085, %v2229
        %v2231 = vpop.f32.mrb[0].mxu0
        %v2232 = vpop.f32.mrb[0].mxu0
        %v2233 = vadd.f32 %v2088, %v2232
        %v2234 = vpop.f32.mrb[0].mxu0
        %2235 = vdwg.mxu0
        %s2236 = scalar_lea.vmem %s1, 512
        %v2237 = vld [vmem:[%s2236] sm:$0xf]
        %v2238 = vld [vmem:[%s2236 + $0x4] sm:$0xf]
        %v2239 = vld [vmem:[%s2236 + $0x8] sm:$0xf]
        %v2240 = vld [vmem:[%s2236 + $0xc] sm:$0xf]
        %v2241 = vld [vmem:[%s2236 + $0x10] sm:$0xf]
        %v2242 = vld [vmem:[%s2236 + $0x14] sm:$0xf]
        %v2243 = vld [vmem:[%s2236 + $0x18] sm:$0xf]
        %v2244 = vld [vmem:[%s2236 + $0x1c] sm:$0xf]
        %v2245 = vld [vmem:[%s2236 + $0x20] sm:$0xf]
        %v2246 = vld [vmem:[%s2236 + $0x24] sm:$0xf]
        %v2247 = vld [vmem:[%s2236 + $0x28] sm:$0xf]
        %v2248 = vld [vmem:[%s2236 + $0x2c] sm:$0xf]
        %v2249 = vld [vmem:[%s2236 + $0x30] sm:$0xf]
        %v2250 = vld [vmem:[%s2236 + $0x34] sm:$0xf]
        %v2251 = vld [vmem:[%s2236 + $0x38] sm:$0xf]
        %v2252 = vld [vmem:[%s2236 + $0x3c] sm:$0xf]
        %v2269 = vunpack.c.l.b16 %v2237
        %v2270 = vunpack.c.l.b16 %v2238
        %v2271 = vunpack.c.l.b16 %v2239
        %v2272 = vunpack.c.l.b16 %v2240
        %v2273 = vunpack.c.l.b16 %v2241
        %v2274 = vunpack.c.l.b16 %v2242
        %v2275 = vunpack.c.l.b16 %v2243
        %v2276 = vunpack.c.l.b16 %v2244
        %v2277 = vunpack.c.l.b16 %v2245
        %v2278 = vunpack.c.l.b16 %v2246
        %v2279 = vunpack.c.l.b16 %v2247
        %v2280 = vunpack.c.l.b16 %v2248
        %v2281 = vunpack.c.l.b16 %v2249
        %v2282 = vunpack.c.l.b16 %v2250
        %v2283 = vunpack.c.l.b16 %v2251
        %v2284 = vunpack.c.l.b16 %v2252
        %v2285 = vpack.c.b16 %v2270, %v2269
        %v2286 = vpack.c.b16 %v2272, %v2271
        %v2287 = vpack.c.b16 %v2274, %v2273
        %v2288 = vpack.c.b16 %v2276, %v2275
        %v2289 = vpack.c.b16 %v2278, %v2277
        %v2290 = vpack.c.b16 %v2280, %v2279
        %v2291 = vpack.c.b16 %v2282, %v2281
        %v2292 = vpack.c.b16 %v2284, %v2283
        %2301 = vmatprep.subr.bf16.mxu0 0
        %2302 = vmatpush1.bf16.msra.mxu0 %v2285
        %2303 = vmatprep.subr.bf16.mxu0 0
        %2304 = vmatpush1.bf16.msra.mxu0 %v2286
        %2305 = vmatprep.subr.bf16.mxu0 0
        %2306 = vmatpush1.bf16.msra.mxu0 %v2287
        %2307 = vmatprep.subr.bf16.mxu0 0
        %2308 = vmatpush1.bf16.msra.mxu0 %v2288
        %2309 = vmatprep.subr.bf16.mxu0 0
        %2310 = vmatpush1.bf16.msra.mxu0 %v2289
        %2311 = vmatprep.subr.bf16.mxu0 0
        %2312 = vmatpush1.bf16.msra.mxu0 %v2290
        %2313 = vmatprep.subr.bf16.mxu0 0
        %2314 = vmatpush1.bf16.msra.mxu0 %v2291
        %2315 = vmatprep.subr.bf16.mxu0 0
        %2316 = vmatpush1.bf16.msra.mxu0 %v2292
        %2317 = vmatprep.subr.bf16.mxu0 0
        %2318 = vmatpush1.bf16.msra.mxu0 0
        %2319 = vmatprep.subr.bf16.mxu0 0
        %2320 = vmatpush1.bf16.msra.mxu0 0
        %2321 = vmatprep.subr.bf16.mxu0 0
        %2322 = vmatpush1.bf16.msra.mxu0 0
        %2323 = vmatprep.subr.bf16.mxu0 0
        %2324 = vmatpush1.bf16.msra.mxu0 0
        %2325 = vmatprep.subr.bf16.mxu0 0
        %2326 = vmatpush1.bf16.msra.mxu0 0
        %2327 = vmatprep.subr.bf16.mxu0 0
        %2328 = vmatpush1.bf16.msra.mxu0 0
        %2329 = vmatprep.subr.bf16.mxu0 0
        %2330 = vmatpush1.bf16.msra.mxu0 0
        %2331 = vmatprep.subr.bf16.mxu0 0
        %2332 = vmatpush1.bf16.msra.mxu0 0
        %2333 = vmatprep.mubr.bf16.mxu0 0
        %2334 = vmatmul.mubr.bf16.gmra.mrb[0].mxu0 %v1904
        %v2335 = vpop.f32.mrb[0].mxu0
        %v2336 = vadd.f32 0.0, %v2335
        %v2337 = vpop.f32.mrb[0].mxu0
        %v2338 = vpop.f32.mrb[0].mxu0
        %v2339 = vadd.f32 0.0, %v2338
        %v2340 = vpop.f32.mrb[0].mxu0
        %2341 = vmatprep.mubr.bf16.mxu0 0
        %2342 = vmatmul.mubr.bf16.gmra.mrb[0].mxu0 %v1905
        %v2343 = vpop.f32.mrb[0].mxu0
        %v2344 = vadd.f32 0.0, %v2343
        %v2345 = vpop.f32.mrb[0].mxu0
        %v2346 = vpop.f32.mrb[0].mxu0
        %v2347 = vadd.f32 0.0, %v2346
        %v2348 = vpop.f32.mrb[0].mxu0
        %2349 = vmatprep.mubr.bf16.mxu0 0
        %2350 = vmatmul.mubr.bf16.gmra.mrb[0].mxu0 %v1906
        %v2351 = vpop.f32.mrb[0].mxu0
        %v2352 = vadd.f32 0.0, %v2351
        %v2353 = vpop.f32.mrb[0].mxu0
        %v2354 = vpop.f32.mrb[0].mxu0
        %v2355 = vadd.f32 0.0, %v2354
        %v2356 = vpop.f32.mrb[0].mxu0
        %2357 = vmatprep.mubr.bf16.mxu0 0
        %2358 = vmatmul.mubr.bf16.gmra.mrb[0].mxu0 %v1907
        %v2359 = vpop.f32.mrb[0].mxu0
        %v2360 = vadd.f32 0.0, %v2359
        %v2361 = vpop.f32.mrb[0].mxu0
        %v2362 = vpop.f32.mrb[0].mxu0
        %v2363 = vadd.f32 0.0, %v2362
        %v2364 = vpop.f32.mrb[0].mxu0
        %2365 = vmatprep.mubr.bf16.mxu0 0
        %2366 = vmatmul.mubr.bf16.gmra.mrb[0].mxu0 %v1908
        %v2367 = vpop.f32.mrb[0].mxu0
        %v2368 = vadd.f32 0.0, %v2367
        %v2369 = vpop.f32.mrb[0].mxu0
        %v2370 = vpop.f32.mrb[0].mxu0
        %v2371 = vadd.f32 0.0, %v2370
        %v2372 = vpop.f32.mrb[0].mxu0
        %2373 = vmatprep.mubr.bf16.mxu0 0
        %2374 = vmatmul.mubr.bf16.gmra.mrb[0].mxu0 %v1909
        %v2375 = vpop.f32.mrb[0].mxu0
        %v2376 = vadd.f32 0.0, %v2375
        %v2377 = vpop.f32.mrb[0].mxu0
        %v2378 = vpop.f32.mrb[0].mxu0
        %v2379 = vadd.f32 0.0, %v2378
        %v2380 = vpop.f32.mrb[0].mxu0
        %2381 = vmatprep.mubr.bf16.mxu0 0
        %2382 = vmatmul.mubr.bf16.gmra.mrb[0].mxu0 %v1910
        %v2383 = vpop.f32.mrb[0].mxu0
        %v2384 = vadd.f32 0.0, %v2383
        %v2385 = vpop.f32.mrb[0].mxu0
        %v2386 = vpop.f32.mrb[0].mxu0
        %v2387 = vadd.f32 0.0, %v2386
        %v2388 = vpop.f32.mrb[0].mxu0
        %2389 = vmatprep.mubr.bf16.mxu0 0
        %2390 = vmatmul.mubr.bf16.gmra.mrb[0].mxu0 %v1911
        %v2391 = vpop.f32.mrb[0].mxu0
        %v2392 = vadd.f32 0.0, %v2391
        %v2393 = vpop.f32.mrb[0].mxu0
        %v2394 = vpop.f32.mrb[0].mxu0
        %v2395 = vadd.f32 0.0, %v2394
        %v2396 = vpop.f32.mrb[0].mxu0
        %2397 = vdwg.mxu0
        %v2398 = vadd.f32 %v2174, %v2336
        %v2399 = vadd.f32 %v2177, %v2339
        %v2400 = vadd.f32 %v2182, %v2344
        %v2401 = vadd.f32 %v2185, %v2347
        %v2402 = vadd.f32 %v2190, %v2352
        %v2403 = vadd.f32 %v2193, %v2355
        %v2404 = vadd.f32 %v2198, %v2360
        %v2405 = vadd.f32 %v2201, %v2363
        %v2406 = vadd.f32 %v2206, %v2368
        %v2407 = vadd.f32 %v2209, %v2371
        %v2408 = vadd.f32 %v2214, %v2376
        %v2409 = vadd.f32 %v2217, %v2379
        %v2410 = vadd.f32 %v2222, %v2384
        %v2411 = vadd.f32 %v2225, %v2387
        %v2412 = vadd.f32 %v2230, %v2392
        %v2413 = vadd.f32 %v2233, %v2395
        %v2414 = vld [vmem:[%s3 + $0x2] sm:$0x1]
        %v2415 = vlaneseq
        %v2416 = vshrl.u32 %v2415, 7
        %v2417 = vsub.s32 0, %v2416
        %v2418 = vrot.slane %v2414, %v2417
        %v2419 = vadd.f32 %v2398, %v2418
        %v2420 = vadd.f32 %v2399, %v2418
        %v2421 = vadd.f32 %v2400, %v2418
        %v2422 = vadd.f32 %v2401, %v2418
        %v2423 = vadd.f32 %v2402, %v2418
        %v2424 = vadd.f32 %v2403, %v2418
        %v2425 = vadd.f32 %v2404, %v2418
        %v2426 = vadd.f32 %v2405, %v2418
        %v2427 = vadd.f32 %v2406, %v2418
        %v2428 = vadd.f32 %v2407, %v2418
        %v2429 = vadd.f32 %v2408, %v2418
        %v2430 = vadd.f32 %v2409, %v2418
        %v2431 = vadd.f32 %v2410, %v2418
        %v2432 = vadd.f32 %v2411, %v2418
        %v2433 = vadd.f32 %v2412, %v2418
        %v2434 = vadd.f32 %v2413, %v2418
        %v2435 = vadd.f32 %v2419, %v1117
        %v2436 = vadd.f32 %v2420, %v1118
        %v2437 = vadd.f32 %v2421, %v1119
        %v2438 = vadd.f32 %v2422, %v1120
        %v2439 = vadd.f32 %v2423, %v1121
        %v2440 = vadd.f32 %v2424, %v1122
        %v2441 = vadd.f32 %v2425, %v1123
        %v2442 = vadd.f32 %v2426, %v1124
        %v2443 = vadd.f32 %v2427, %v1125
        %v2444 = vadd.f32 %v2428, %v1126
        %v2445 = vadd.f32 %v2429, %v1127
        %v2446 = vadd.f32 %v2430, %v1128
        %v2447 = vadd.f32 %v2431, %v1129
        %v2448 = vadd.f32 %v2432, %v1130
        %v2449 = vadd.f32 %v2433, %v1131
        %v2450 = vadd.f32 %v2434, %v1132
        %v2451 = vmax.f32 %v2435, 0.0
        %v2452 = vmax.f32 %v2436, 0.0
        %v2453 = vmax.f32 %v2437, 0.0
        %v2454 = vmax.f32 %v2438, 0.0
        %v2455 = vmax.f32 %v2439, 0.0
        %v2456 = vmax.f32 %v2440, 0.0
        %v2457 = vmax.f32 %v2441, 0.0
        %v2458 = vmax.f32 %v2442, 0.0
        %v2459 = vmax.f32 %v2443, 0.0
        %v2460 = vmax.f32 %v2444, 0.0
        %v2461 = vmax.f32 %v2445, 0.0
        %v2462 = vmax.f32 %v2446, 0.0
        %v2463 = vmax.f32 %v2447, 0.0
        %v2464 = vmax.f32 %v2448, 0.0
        %v2465 = vmax.f32 %v2449, 0.0
        %v2466 = vmax.f32 %v2450, 0.0
        %v2467 = vrot.slane %v2451, 7
        %v2468 = vrot.slane %v2452, 7
        %v2469 = vrot.slane %v2453, 7
        %v2470 = vrot.slane %v2454, 7
        %v2471 = vrot.slane %v2455, 7
        %v2472 = vrot.slane %v2456, 7
        %v2473 = vrot.slane %v2457, 7
        %v2474 = vrot.slane %v2458, 7
        %v2475 = vrot.slane %v2459, 7
        %v2476 = vrot.slane %v2460, 7
        %v2477 = vrot.slane %v2461, 7
        %v2478 = vrot.slane %v2462, 7
        %v2479 = vrot.slane %v2463, 7
        %v2480 = vrot.slane %v2464, 7
        %v2481 = vrot.slane %v2465, 7
        %v2482 = vrot.slane %v2466, 7
        %v2483 = vsel %vm449, %v2481, %v2482
        %v2484 = vsel %vm449, %v2480, %v2481
        %v2485 = vsel %vm449, %v2479, %v2480
        %v2486 = vsel %vm449, %v2478, %v2479
        %v2487 = vsel %vm449, %v2477, %v2478
        %v2488 = vsel %vm449, %v2476, %v2477
        %v2489 = vsel %vm449, %v2475, %v2476
        %v2490 = vsel %vm449, %v2474, %v2475
        %v2491 = vsel %vm449, %v2473, %v2474
        %v2492 = vsel %vm449, %v2472, %v2473
        %v2493 = vsel %vm449, %v2471, %v2472
        %v2494 = vsel %vm449, %v2470, %v2471
        %v2495 = vsel %vm449, %v2469, %v2470
        %v2496 = vsel %vm449, %v2468, %v2469
        %v2497 = vsel %vm449, %v2467, %v2468
        %v2498 = vsel %vm449, %v2482, %v2467
        %v2499 = vmul.f32 %v2498, %v316
        %v2500 = vmul.f32 %v2497, %v317
        %v2501 = vmul.f32 %v2496, %v318
        %v2502 = vmul.f32 %v2495, %v319
        %v2503 = vmul.f32 %v2494, %v320
        %v2504 = vmul.f32 %v2493, %v321
        %v2505 = vmul.f32 %v2492, %v322
        %v2506 = vmul.f32 %v2491, %v323
        %v2507 = vmul.f32 %v2490, %v324
        %v2508 = vmul.f32 %v2489, %v325
        %v2509 = vmul.f32 %v2488, %v326
        %v2510 = vmul.f32 %v2487, %v327
        %v2511 = vmul.f32 %v2486, %v328
        %v2512 = vmul.f32 %v2485, %v329
        %v2513 = vmul.f32 %v2484, %v330
        %v2514 = vmul.f32 %v2483, %v331
        %v2515 = vpack.c.bf16 %v2500, %v2499
        %v2516 = vpack.c.bf16 %v2502, %v2501
        %v2517 = vpack.c.bf16 %v2504, %v2503
        %v2518 = vpack.c.bf16 %v2506, %v2505
        %v2519 = vpack.c.bf16 %v2508, %v2507
        %v2520 = vpack.c.bf16 %v2510, %v2509
        %v2521 = vpack.c.bf16 %v2512, %v2511
        %v2522 = vpack.c.bf16 %v2514, %v2513
        %v2523 = vpack.c.bf16 %v2452, %v2451
        %v2524 = vpack.c.bf16 %v2454, %v2453
        %v2525 = vpack.c.bf16 %v2456, %v2455
        %v2526 = vpack.c.bf16 %v2458, %v2457
        %v2527 = vpack.c.bf16 %v2460, %v2459
        %v2528 = vpack.c.bf16 %v2462, %v2461
        %v2529 = vpack.c.bf16 %v2464, %v2463
        %v2530 = vpack.c.bf16 %v2466, %v2465
        %v2531 = vrot.slane %v2451, 1
        %v2532 = vrot.slane %v2452, 1
        %v2533 = vrot.slane %v2453, 1
        %v2534 = vrot.slane %v2454, 1
        %v2535 = vrot.slane %v2455, 1
        %v2536 = vrot.slane %v2456, 1
        %v2537 = vrot.slane %v2457, 1
        %v2538 = vrot.slane %v2458, 1
        %v2539 = vrot.slane %v2459, 1
        %v2540 = vrot.slane %v2460, 1
        %v2541 = vrot.slane %v2461, 1
        %v2542 = vrot.slane %v2462, 1
        %v2543 = vrot.slane %v2463, 1
        %v2544 = vrot.slane %v2464, 1
        %v2545 = vrot.slane %v2465, 1
        %v2546 = vrot.slane %v2466, 1
        %v2547 = vsel %vm506, %v2545, %v2546
        %v2548 = vsel %vm506, %v2544, %v2545
        %v2549 = vsel %vm506, %v2543, %v2544
        %v2550 = vsel %vm506, %v2542, %v2543
        %v2551 = vsel %vm506, %v2541, %v2542
        %v2552 = vsel %vm506, %v2540, %v2541
        %v2553 = vsel %vm506, %v2539, %v2540
        %v2554 = vsel %vm506, %v2538, %v2539
        %v2555 = vsel %vm506, %v2537, %v2538
        %v2556 = vsel %vm506, %v2536, %v2537
        %v2557 = vsel %vm506, %v2535, %v2536
        %v2558 = vsel %vm506, %v2534, %v2535
        %v2559 = vsel %vm506, %v2533, %v2534
        %v2560 = vsel %vm506, %v2532, %v2533
        %v2561 = vsel %vm506, %v2531, %v2532
        %v2562 = vsel %vm506, %v2546, %v2531
        %v2563 = vmul.f32 %v2561, %v348
        %v2564 = vmul.f32 %v2560, %v349
        %v2565 = vmul.f32 %v2559, %v350
        %v2566 = vmul.f32 %v2558, %v351
        %v2567 = vmul.f32 %v2557, %v352
        %v2568 = vmul.f32 %v2556, %v353
        %v2569 = vmul.f32 %v2555, %v354
        %v2570 = vmul.f32 %v2554, %v355
        %v2571 = vmul.f32 %v2553, %v356
        %v2572 = vmul.f32 %v2552, %v357
        %v2573 = vmul.f32 %v2551, %v358
        %v2574 = vmul.f32 %v2550, %v359
        %v2575 = vmul.f32 %v2549, %v360
        %v2576 = vmul.f32 %v2548, %v361
        %v2577 = vmul.f32 %v2547, %v362
        %v2578 = vmul.f32 %v2562, %v363
        %v2579 = vpack.c.bf16 %v2564, %v2563
        %v2580 = vpack.c.bf16 %v2566, %v2565
        %v2581 = vpack.c.bf16 %v2568, %v2567
        %v2582 = vpack.c.bf16 %v2570, %v2569
        %v2583 = vpack.c.bf16 %v2572, %v2571
        %v2584 = vpack.c.bf16 %v2574, %v2573
        %v2585 = vpack.c.bf16 %v2576, %v2575
        %v2586 = vpack.c.bf16 %v2578, %v2577
        %s2587 = scalar_lea.vmem %s1, 576
        %v2588 = vld [vmem:[%s2587] sm:$0xf]
        %v2589 = vld [vmem:[%s2587 + $0x4] sm:$0xf]
        %v2590 = vld [vmem:[%s2587 + $0x8] sm:$0xf]
        %v2591 = vld [vmem:[%s2587 + $0xc] sm:$0xf]
        %v2592 = vld [vmem:[%s2587 + $0x10] sm:$0xf]
        %v2593 = vld [vmem:[%s2587 + $0x14] sm:$0xf]
        %v2594 = vld [vmem:[%s2587 + $0x18] sm:$0xf]
        %v2595 = vld [vmem:[%s2587 + $0x1c] sm:$0xf]
        %v2596 = vld [vmem:[%s2587 + $0x20] sm:$0xf]
        %v2597 = vld [vmem:[%s2587 + $0x24] sm:$0xf]
        %v2598 = vld [vmem:[%s2587 + $0x28] sm:$0xf]
        %v2599 = vld [vmem:[%s2587 + $0x2c] sm:$0xf]
        %v2600 = vld [vmem:[%s2587 + $0x30] sm:$0xf]
        %v2601 = vld [vmem:[%s2587 + $0x34] sm:$0xf]
        %v2602 = vld [vmem:[%s2587 + $0x38] sm:$0xf]
        %v2603 = vld [vmem:[%s2587 + $0x3c] sm:$0xf]
        %s2604 = scalar_lea.vmem %s1, 640
        %v2605 = vld [vmem:[%s2604] sm:$0xf]
        %v2606 = vld [vmem:[%s2604 + $0x4] sm:$0xf]
        %v2607 = vld [vmem:[%s2604 + $0x8] sm:$0xf]
        %v2608 = vld [vmem:[%s2604 + $0xc] sm:$0xf]
        %v2609 = vld [vmem:[%s2604 + $0x10] sm:$0xf]
        %v2610 = vld [vmem:[%s2604 + $0x14] sm:$0xf]
        %v2611 = vld [vmem:[%s2604 + $0x18] sm:$0xf]
        %v2612 = vld [vmem:[%s2604 + $0x1c] sm:$0xf]
        %v2613 = vld [vmem:[%s2604 + $0x20] sm:$0xf]
        %v2614 = vld [vmem:[%s2604 + $0x24] sm:$0xf]
        %v2615 = vld [vmem:[%s2604 + $0x28] sm:$0xf]
        %v2616 = vld [vmem:[%s2604 + $0x2c] sm:$0xf]
        %v2617 = vld [vmem:[%s2604 + $0x30] sm:$0xf]
        %v2618 = vld [vmem:[%s2604 + $0x34] sm:$0xf]
        %v2619 = vld [vmem:[%s2604 + $0x38] sm:$0xf]
        %v2620 = vld [vmem:[%s2604 + $0x3c] sm:$0xf]
        %v2637 = vunpack.c.l.b16 %v2605
        %v2638 = vunpack.c.l.b16 %v2606
        %v2639 = vunpack.c.l.b16 %v2607
        %v2640 = vunpack.c.l.b16 %v2608
        %v2641 = vunpack.c.l.b16 %v2609
        %v2642 = vunpack.c.l.b16 %v2610
        %v2643 = vunpack.c.l.b16 %v2611
        %v2644 = vunpack.c.l.b16 %v2612
        %v2645 = vunpack.c.l.b16 %v2613
        %v2646 = vunpack.c.l.b16 %v2614
        %v2647 = vunpack.c.l.b16 %v2615
        %v2648 = vunpack.c.l.b16 %v2616
        %v2649 = vunpack.c.l.b16 %v2617
        %v2650 = vunpack.c.l.b16 %v2618
        %v2651 = vunpack.c.l.b16 %v2619
        %v2652 = vunpack.c.l.b16 %v2620
        %v2653 = vpack.c.b16 %v2638, %v2637
        %v2654 = vpack.c.b16 %v2640, %v2639
        %v2655 = vpack.c.b16 %v2642, %v2641
        %v2656 = vpack.c.b16 %v2644, %v2643
        %v2657 = vpack.c.b16 %v2646, %v2645
        %v2658 = vpack.c.b16 %v2648, %v2647
        %v2659 = vpack.c.b16 %v2650, %v2649
        %v2660 = vpack.c.b16 %v2652, %v2651
        %2669 = vmatprep.subr.bf16.mxu0 0
        %2670 = vmatpush1.bf16.msra.mxu0 %v2653
        %2671 = vmatprep.subr.bf16.mxu0 0
        %2672 = vmatpush1.bf16.msra.mxu0 %v2654
        %2673 = vmatprep.subr.bf16.mxu0 0
        %2674 = vmatpush1.bf16.msra.mxu0 %v2655
        %2675 = vmatprep.subr.bf16.mxu0 0
        %2676 = vmatpush1.bf16.msra.mxu0 %v2656
        %2677 = vmatprep.subr.bf16.mxu0 0
        %2678 = vmatpush1.bf16.msra.mxu0 %v2657
        %2679 = vmatprep.subr.bf16.mxu0 0
        %2680 = vmatpush1.bf16.msra.mxu0 %v2658
        %2681 = vmatprep.subr.bf16.mxu0 0
        %2682 = vmatpush1.bf16.msra.mxu0 %v2659
        %2683 = vmatprep.subr.bf16.mxu0 0
        %2684 = vmatpush1.bf16.msra.mxu0 %v2660
        %2685 = vmatprep.subr.bf16.mxu0 0
        %2686 = vmatpush1.bf16.msra.mxu0 0
        %2687 = vmatprep.subr.bf16.mxu0 0
        %2688 = vmatpush1.bf16.msra.mxu0 0
        %2689 = vmatprep.subr.bf16.mxu0 0
        %2690 = vmatpush1.bf16.msra.mxu0 0
        %2691 = vmatprep.subr.bf16.mxu0 0
        %2692 = vmatpush1.bf16.msra.mxu0 0
        %2693 = vmatprep.subr.bf16.mxu0 0
        %2694 = vmatpush1.bf16.msra.mxu0 0
        %2695 = vmatprep.subr.bf16.mxu0 0
        %2696 = vmatpush1.bf16.msra.mxu0 0
        %2697 = vmatprep.subr.bf16.mxu0 0
        %2698 = vmatpush1.bf16.msra.mxu0 0
        %2699 = vmatprep.subr.bf16.mxu0 0
        %2700 = vmatpush1.bf16.msra.mxu0 0
        %2701 = vmatprep.mubr.bf16.mxu0 0
        %2702 = vmatmul.mubr.bf16.gmra.mrb[0].mxu0 %v2523
        %v2703 = vpop.f32.mrb[0].mxu0
        %v2704 = vadd.f32 0.0, %v2703
        %v2705 = vpop.f32.mrb[0].mxu0
        %v2706 = vpop.f32.mrb[0].mxu0
        %v2707 = vadd.f32 0.0, %v2706
        %v2708 = vpop.f32.mrb[0].mxu0
        %2709 = vmatprep.mubr.bf16.mxu0 0
        %2710 = vmatmul.mubr.bf16.gmra.mrb[0].mxu0 %v2524
        %v2711 = vpop.f32.mrb[0].mxu0
        %v2712 = vadd.f32 0.0, %v2711
        %v2713 = vpop.f32.mrb[0].mxu0
        %v2714 = vpop.f32.mrb[0].mxu0
        %v2715 = vadd.f32 0.0, %v2714
        %v2716 = vpop.f32.mrb[0].mxu0
        %2717 = vmatprep.mubr.bf16.mxu0 0
        %2718 = vmatmul.mubr.bf16.gmra.mrb[0].mxu0 %v2525
        %v2719 = vpop.f32.mrb[0].mxu0
        %v2720 = vadd.f32 0.0, %v2719
        %v2721 = vpop.f32.mrb[0].mxu0
        %v2722 = vpop.f32.mrb[0].mxu0
        %v2723 = vadd.f32 0.0, %v2722
        %v2724 = vpop.f32.mrb[0].mxu0
        %2725 = vmatprep.mubr.bf16.mxu0 0
        %2726 = vmatmul.mubr.bf16.gmra.mrb[0].mxu0 %v2526
        %v2727 = vpop.f32.mrb[0].mxu0
        %v2728 = vadd.f32 0.0, %v2727
        %v2729 = vpop.f32.mrb[0].mxu0
        %v2730 = vpop.f32.mrb[0].mxu0
        %v2731 = vadd.f32 0.0, %v2730
        %v2732 = vpop.f32.mrb[0].mxu0
        %2733 = vmatprep.mubr.bf16.mxu0 0
        %2734 = vmatmul.mubr.bf16.gmra.mrb[0].mxu0 %v2527
        %v2735 = vpop.f32.mrb[0].mxu0
        %v2736 = vadd.f32 0.0, %v2735
        %v2737 = vpop.f32.mrb[0].mxu0
        %v2738 = vpop.f32.mrb[0].mxu0
        %v2739 = vadd.f32 0.0, %v2738
        %v2740 = vpop.f32.mrb[0].mxu0
        %2741 = vmatprep.mubr.bf16.mxu0 0
        %2742 = vmatmul.mubr.bf16.gmra.mrb[0].mxu0 %v2528
        %v2743 = vpop.f32.mrb[0].mxu0
        %v2744 = vadd.f32 0.0, %v2743
        %v2745 = vpop.f32.mrb[0].mxu0
        %v2746 = vpop.f32.mrb[0].mxu0
        %v2747 = vadd.f32 0.0, %v2746
        %v2748 = vpop.f32.mrb[0].mxu0
        %2749 = vmatprep.mubr.bf16.mxu0 0
        %2750 = vmatmul.mubr.bf16.gmra.mrb[0].mxu0 %v2529
        %v2751 = vpop.f32.mrb[0].mxu0
        %v2752 = vadd.f32 0.0, %v2751
        %v2753 = vpop.f32.mrb[0].mxu0
        %v2754 = vpop.f32.mrb[0].mxu0
        %v2755 = vadd.f32 0.0, %v2754
        %v2756 = vpop.f32.mrb[0].mxu0
        %2757 = vmatprep.mubr.bf16.mxu0 0
        %2758 = vmatmul.mubr.bf16.gmra.mrb[0].mxu0 %v2530
        %v2759 = vpop.f32.mrb[0].mxu0
        %v2760 = vadd.f32 0.0, %v2759
        %v2761 = vpop.f32.mrb[0].mxu0
        %v2762 = vpop.f32.mrb[0].mxu0
        %v2763 = vadd.f32 0.0, %v2762
        %v2764 = vpop.f32.mrb[0].mxu0
        %2765 = vdwg.mxu0
        %v2782 = vunpack.c.l.b16 %v2588
        %v2783 = vunpack.c.l.b16 %v2589
        %v2784 = vunpack.c.l.b16 %v2590
        %v2785 = vunpack.c.l.b16 %v2591
        %v2786 = vunpack.c.l.b16 %v2592
        %v2787 = vunpack.c.l.b16 %v2593
        %v2788 = vunpack.c.l.b16 %v2594
        %v2789 = vunpack.c.l.b16 %v2595
        %v2790 = vunpack.c.l.b16 %v2596
        %v2791 = vunpack.c.l.b16 %v2597
        %v2792 = vunpack.c.l.b16 %v2598
        %v2793 = vunpack.c.l.b16 %v2599
        %v2794 = vunpack.c.l.b16 %v2600
        %v2795 = vunpack.c.l.b16 %v2601
        %v2796 = vunpack.c.l.b16 %v2602
        %v2797 = vunpack.c.l.b16 %v2603
        %v2798 = vpack.c.b16 %v2783, %v2782
        %v2799 = vpack.c.b16 %v2785, %v2784
        %v2800 = vpack.c.b16 %v2787, %v2786
        %v2801 = vpack.c.b16 %v2789, %v2788
        %v2802 = vpack.c.b16 %v2791, %v2790
        %v2803 = vpack.c.b16 %v2793, %v2792
        %v2804 = vpack.c.b16 %v2795, %v2794
        %v2805 = vpack.c.b16 %v2797, %v2796
        %2814 = vmatprep.subr.bf16.mxu0 0
        %2815 = vmatpush1.bf16.msra.mxu0 %v2798
        %2816 = vmatprep.subr.bf16.mxu0 0
        %2817 = vmatpush1.bf16.msra.mxu0 %v2799
        %2818 = vmatprep.subr.bf16.mxu0 0
        %2819 = vmatpush1.bf16.msra.mxu0 %v2800
        %2820 = vmatprep.subr.bf16.mxu0 0
        %2821 = vmatpush1.bf16.msra.mxu0 %v2801
        %2822 = vmatprep.subr.bf16.mxu0 0
        %2823 = vmatpush1.bf16.msra.mxu0 %v2802
        %2824 = vmatprep.subr.bf16.mxu0 0
        %2825 = vmatpush1.bf16.msra.mxu0 %v2803
        %2826 = vmatprep.subr.bf16.mxu0 0
        %2827 = vmatpush1.bf16.msra.mxu0 %v2804
        %2828 = vmatprep.subr.bf16.mxu0 0
        %2829 = vmatpush1.bf16.msra.mxu0 %v2805
        %2830 = vmatprep.subr.bf16.mxu0 0
        %2831 = vmatpush1.bf16.msra.mxu0 0
        %2832 = vmatprep.subr.bf16.mxu0 0
        %2833 = vmatpush1.bf16.msra.mxu0 0
        %2834 = vmatprep.subr.bf16.mxu0 0
        %2835 = vmatpush1.bf16.msra.mxu0 0
        %2836 = vmatprep.subr.bf16.mxu0 0
        %2837 = vmatpush1.bf16.msra.mxu0 0
        %2838 = vmatprep.subr.bf16.mxu0 0
        %2839 = vmatpush1.bf16.msra.mxu0 0
        %2840 = vmatprep.subr.bf16.mxu0 0
        %2841 = vmatpush1.bf16.msra.mxu0 0
        %2842 = vmatprep.subr.bf16.mxu0 0
        %2843 = vmatpush1.bf16.msra.mxu0 0
        %2844 = vmatprep.subr.bf16.mxu0 0
        %2845 = vmatpush1.bf16.msra.mxu0 0
        %2846 = vmatprep.mubr.bf16.mxu0 0
        %2847 = vmatmul.mubr.bf16.gmra.mrb[0].mxu0 %v2515
        %v2848 = vpop.f32.mrb[0].mxu0
        %v2849 = vadd.f32 %v2704, %v2848
        %v2850 = vpop.f32.mrb[0].mxu0
        %v2851 = vpop.f32.mrb[0].mxu0
        %v2852 = vadd.f32 %v2707, %v2851
        %v2853 = vpop.f32.mrb[0].mxu0
        %2854 = vmatprep.mubr.bf16.mxu0 0
        %2855 = vmatmul.mubr.bf16.gmra.mrb[0].mxu0 %v2516
        %v2856 = vpop.f32.mrb[0].mxu0
        %v2857 = vadd.f32 %v2712, %v2856
        %v2858 = vpop.f32.mrb[0].mxu0
        %v2859 = vpop.f32.mrb[0].mxu0
        %v2860 = vadd.f32 %v2715, %v2859
        %v2861 = vpop.f32.mrb[0].mxu0
        %2862 = vmatprep.mubr.bf16.mxu0 0
        %2863 = vmatmul.mubr.bf16.gmra.mrb[0].mxu0 %v2517
        %v2864 = vpop.f32.mrb[0].mxu0
        %v2865 = vadd.f32 %v2720, %v2864
        %v2866 = vpop.f32.mrb[0].mxu0
        %v2867 = vpop.f32.mrb[0].mxu0
        %v2868 = vadd.f32 %v2723, %v2867
        %v2869 = vpop.f32.mrb[0].mxu0
        %2870 = vmatprep.mubr.bf16.mxu0 0
        %2871 = vmatmul.mubr.bf16.gmra.mrb[0].mxu0 %v2518
        %v2872 = vpop.f32.mrb[0].mxu0
        %v2873 = vadd.f32 %v2728, %v2872
        %v2874 = vpop.f32.mrb[0].mxu0
        %v2875 = vpop.f32.mrb[0].mxu0
        %v2876 = vadd.f32 %v2731, %v2875
        %v2877 = vpop.f32.mrb[0].mxu0
        %2878 = vmatprep.mubr.bf16.mxu0 0
        %2879 = vmatmul.mubr.bf16.gmra.mrb[0].mxu0 %v2519
        %v2880 = vpop.f32.mrb[0].mxu0
        %v2881 = vadd.f32 %v2736, %v2880
        %v2882 = vpop.f32.mrb[0].mxu0
        %v2883 = vpop.f32.mrb[0].mxu0
        %v2884 = vadd.f32 %v2739, %v2883
        %v2885 = vpop.f32.mrb[0].mxu0
        %2886 = vmatprep.mubr.bf16.mxu0 0
        %2887 = vmatmul.mubr.bf16.gmra.mrb[0].mxu0 %v2520
        %v2888 = vpop.f32.mrb[0].mxu0
        %v2889 = vadd.f32 %v2744, %v2888
        %v2890 = vpop.f32.mrb[0].mxu0
        %v2891 = vpop.f32.mrb[0].mxu0
        %v2892 = vadd.f32 %v2747, %v2891
        %v2893 = vpop.f32.mrb[0].mxu0
        %2894 = vmatprep.mubr.bf16.mxu0 0
        %2895 = vmatmul.mubr.bf16.gmra.mrb[0].mxu0 %v2521
        %v2896 = vpop.f32.mrb[0].mxu0
        %v2897 = vadd.f32 %v2752, %v2896
        %v2898 = vpop.f32.mrb[0].mxu0
        %v2899 = vpop.f32.mrb[0].mxu0
        %v2900 = vadd.f32 %v2755, %v2899
        %v2901 = vpop.f32.mrb[0].mxu0
        %2902 = vmatprep.mubr.bf16.mxu0 0
        %2903 = vmatmul.mubr.bf16.gmra.mrb[0].mxu0 %v2522
        %v2904 = vpop.f32.mrb[0].mxu0
        %v2905 = vadd.f32 %v2760, %v2904
        %v2906 = vpop.f32.mrb[0].mxu0
        %v2907 = vpop.f32.mrb[0].mxu0
        %v2908 = vadd.f32 %v2763, %v2907
        %v2909 = vpop.f32.mrb[0].mxu0
        %2910 = vdwg.mxu0
        %s2911 = scalar_lea.vmem %s1, 704
        %v2912 = vld [vmem:[%s2911] sm:$0xf]
        %v2913 = vld [vmem:[%s2911 + $0x4] sm:$0xf]
        %v2914 = vld [vmem:[%s2911 + $0x8] sm:$0xf]
        %v2915 = vld [vmem:[%s2911 + $0xc] sm:$0xf]
        %v2916 = vld [vmem:[%s2911 + $0x10] sm:$0xf]
        %v2917 = vld [vmem:[%s2911 + $0x14] sm:$0xf]
        %v2918 = vld [vmem:[%s2911 + $0x18] sm:$0xf]
        %v2919 = vld [vmem:[%s2911 + $0x1c] sm:$0xf]
        %v2920 = vld [vmem:[%s2911 + $0x20] sm:$0xf]
        %v2921 = vld [vmem:[%s2911 + $0x24] sm:$0xf]
        %v2922 = vld [vmem:[%s2911 + $0x28] sm:$0xf]
        %v2923 = vld [vmem:[%s2911 + $0x2c] sm:$0xf]
        %v2924 = vld [vmem:[%s2911 + $0x30] sm:$0xf]
        %v2925 = vld [vmem:[%s2911 + $0x34] sm:$0xf]
        %v2926 = vld [vmem:[%s2911 + $0x38] sm:$0xf]
        %v2927 = vld [vmem:[%s2911 + $0x3c] sm:$0xf]
        %v2944 = vunpack.c.l.b16 %v2912
        %v2945 = vunpack.c.l.b16 %v2913
        %v2946 = vunpack.c.l.b16 %v2914
        %v2947 = vunpack.c.l.b16 %v2915
        %v2948 = vunpack.c.l.b16 %v2916
        %v2949 = vunpack.c.l.b16 %v2917
        %v2950 = vunpack.c.l.b16 %v2918
        %v2951 = vunpack.c.l.b16 %v2919
        %v2952 = vunpack.c.l.b16 %v2920
        %v2953 = vunpack.c.l.b16 %v2921
        %v2954 = vunpack.c.l.b16 %v2922
        %v2955 = vunpack.c.l.b16 %v2923
        %v2956 = vunpack.c.l.b16 %v2924
        %v2957 = vunpack.c.l.b16 %v2925
        %v2958 = vunpack.c.l.b16 %v2926
        %v2959 = vunpack.c.l.b16 %v2927
        %v2960 = vpack.c.b16 %v2945, %v2944
        %v2961 = vpack.c.b16 %v2947, %v2946
        %v2962 = vpack.c.b16 %v2949, %v2948
        %v2963 = vpack.c.b16 %v2951, %v2950
        %v2964 = vpack.c.b16 %v2953, %v2952
        %v2965 = vpack.c.b16 %v2955, %v2954
        %v2966 = vpack.c.b16 %v2957, %v2956
        %v2967 = vpack.c.b16 %v2959, %v2958
        %2976 = vmatprep.subr.bf16.mxu0 0
        %2977 = vmatpush1.bf16.msra.mxu0 %v2960
        %2978 = vmatprep.subr.bf16.mxu0 0
        %2979 = vmatpush1.bf16.msra.mxu0 %v2961
        %2980 = vmatprep.subr.bf16.mxu0 0
        %2981 = vmatpush1.bf16.msra.mxu0 %v2962
        %2982 = vmatprep.subr.bf16.mxu0 0
        %2983 = vmatpush1.bf16.msra.mxu0 %v2963
        %2984 = vmatprep.subr.bf16.mxu0 0
        %2985 = vmatpush1.bf16.msra.mxu0 %v2964
        %2986 = vmatprep.subr.bf16.mxu0 0
        %2987 = vmatpush1.bf16.msra.mxu0 %v2965
        %2988 = vmatprep.subr.bf16.mxu0 0
        %2989 = vmatpush1.bf16.msra.mxu0 %v2966
        %2990 = vmatprep.subr.bf16.mxu0 0
        %2991 = vmatpush1.bf16.msra.mxu0 %v2967
        %2992 = vmatprep.subr.bf16.mxu0 0
        %2993 = vmatpush1.bf16.msra.mxu0 0
        %2994 = vmatprep.subr.bf16.mxu0 0
        %2995 = vmatpush1.bf16.msra.mxu0 0
        %2996 = vmatprep.subr.bf16.mxu0 0
        %2997 = vmatpush1.bf16.msra.mxu0 0
        %2998 = vmatprep.subr.bf16.mxu0 0
        %2999 = vmatpush1.bf16.msra.mxu0 0
        %3000 = vmatprep.subr.bf16.mxu0 0
        %3001 = vmatpush1.bf16.msra.mxu0 0
        %3002 = vmatprep.subr.bf16.mxu0 0
        %3003 = vmatpush1.bf16.msra.mxu0 0
        %3004 = vmatprep.subr.bf16.mxu0 0
        %3005 = vmatpush1.bf16.msra.mxu0 0
        %3006 = vmatprep.subr.bf16.mxu0 0
        %3007 = vmatpush1.bf16.msra.mxu0 0
        %3008 = vmatprep.mubr.bf16.mxu0 0
        %3009 = vmatmul.mubr.bf16.gmra.mrb[0].mxu0 %v2579
        %v3010 = vpop.f32.mrb[0].mxu0
        %v3011 = vadd.f32 0.0, %v3010
        %v3012 = vpop.f32.mrb[0].mxu0
        %v3013 = vpop.f32.mrb[0].mxu0
        %v3014 = vadd.f32 0.0, %v3013
        %v3015 = vpop.f32.mrb[0].mxu0
        %3016 = vmatprep.mubr.bf16.mxu0 0
        %3017 = vmatmul.mubr.bf16.gmra.mrb[0].mxu0 %v2580
        %v3018 = vpop.f32.mrb[0].mxu0
        %v3019 = vadd.f32 0.0, %v3018
        %v3020 = vpop.f32.mrb[0].mxu0
        %v3021 = vpop.f32.mrb[0].mxu0
        %v3022 = vadd.f32 0.0, %v3021
        %v3023 = vpop.f32.mrb[0].mxu0
        %3024 = vmatprep.mubr.bf16.mxu0 0
        %3025 = vmatmul.mubr.bf16.gmra.mrb[0].mxu0 %v2581
        %v3026 = vpop.f32.mrb[0].mxu0
        %v3027 = vadd.f32 0.0, %v3026
        %v3028 = vpop.f32.mrb[0].mxu0
        %v3029 = vpop.f32.mrb[0].mxu0
        %v3030 = vadd.f32 0.0, %v3029
        %v3031 = vpop.f32.mrb[0].mxu0
        %3032 = vmatprep.mubr.bf16.mxu0 0
        %3033 = vmatmul.mubr.bf16.gmra.mrb[0].mxu0 %v2582
        %v3034 = vpop.f32.mrb[0].mxu0
        %v3035 = vadd.f32 0.0, %v3034
        %v3036 = vpop.f32.mrb[0].mxu0
        %v3037 = vpop.f32.mrb[0].mxu0
        %v3038 = vadd.f32 0.0, %v3037
        %v3039 = vpop.f32.mrb[0].mxu0
        %3040 = vmatprep.mubr.bf16.mxu0 0
        %3041 = vmatmul.mubr.bf16.gmra.mrb[0].mxu0 %v2583
        %v3042 = vpop.f32.mrb[0].mxu0
        %v3043 = vadd.f32 0.0, %v3042
        %v3044 = vpop.f32.mrb[0].mxu0
        %v3045 = vpop.f32.mrb[0].mxu0
        %v3046 = vadd.f32 0.0, %v3045
        %v3047 = vpop.f32.mrb[0].mxu0
        %3048 = vmatprep.mubr.bf16.mxu0 0
        %3049 = vmatmul.mubr.bf16.gmra.mrb[0].mxu0 %v2584
        %v3050 = vpop.f32.mrb[0].mxu0
        %v3051 = vadd.f32 0.0, %v3050
        %v3052 = vpop.f32.mrb[0].mxu0
        %v3053 = vpop.f32.mrb[0].mxu0
        %v3054 = vadd.f32 0.0, %v3053
        %v3055 = vpop.f32.mrb[0].mxu0
        %3056 = vmatprep.mubr.bf16.mxu0 0
        %3057 = vmatmul.mubr.bf16.gmra.mrb[0].mxu0 %v2585
        %v3058 = vpop.f32.mrb[0].mxu0
        %v3059 = vadd.f32 0.0, %v3058
        %v3060 = vpop.f32.mrb[0].mxu0
        %v3061 = vpop.f32.mrb[0].mxu0
        %v3062 = vadd.f32 0.0, %v3061
        %v3063 = vpop.f32.mrb[0].mxu0
        %3064 = vmatprep.mubr.bf16.mxu0 0
        %3065 = vmatmul.mubr.bf16.gmra.mrb[0].mxu0 %v2586
        %v3066 = vpop.f32.mrb[0].mxu0
        %v3067 = vadd.f32 0.0, %v3066
        %v3068 = vpop.f32.mrb[0].mxu0
        %v3069 = vpop.f32.mrb[0].mxu0
        %v3070 = vadd.f32 0.0, %v3069
        %v3071 = vpop.f32.mrb[0].mxu0
        %3072 = vdwg.mxu0
        %v3073 = vadd.f32 %v2849, %v3011
        %v3074 = vadd.f32 %v2852, %v3014
        %v3075 = vadd.f32 %v2857, %v3019
        %v3076 = vadd.f32 %v2860, %v3022
        %v3077 = vadd.f32 %v2865, %v3027
        %v3078 = vadd.f32 %v2868, %v3030
        %v3079 = vadd.f32 %v2873, %v3035
        %v3080 = vadd.f32 %v2876, %v3038
        %v3081 = vadd.f32 %v2881, %v3043
        %v3082 = vadd.f32 %v2884, %v3046
        %v3083 = vadd.f32 %v2889, %v3051
        %v3084 = vadd.f32 %v2892, %v3054
        %v3085 = vadd.f32 %v2897, %v3059
        %v3086 = vadd.f32 %v2900, %v3062
        %v3087 = vadd.f32 %v2905, %v3067
        %v3088 = vadd.f32 %v2908, %v3070
        %v3089 = vld [vmem:[%s3 + $0x3] sm:$0x1]
        %v3090 = vlaneseq
        %v3091 = vshrl.u32 %v3090, 7
        %v3092 = vsub.s32 0, %v3091
        %v3093 = vrot.slane %v3089, %v3092
        %v3094 = vadd.f32 %v3073, %v3093
        %v3095 = vadd.f32 %v3074, %v3093
        %v3096 = vadd.f32 %v3075, %v3093
        %v3097 = vadd.f32 %v3076, %v3093
        %v3098 = vadd.f32 %v3077, %v3093
        %v3099 = vadd.f32 %v3078, %v3093
        %v3100 = vadd.f32 %v3079, %v3093
        %v3101 = vadd.f32 %v3080, %v3093
        %v3102 = vadd.f32 %v3081, %v3093
        %v3103 = vadd.f32 %v3082, %v3093
        %v3104 = vadd.f32 %v3083, %v3093
        %v3105 = vadd.f32 %v3084, %v3093
        %v3106 = vadd.f32 %v3085, %v3093
        %v3107 = vadd.f32 %v3086, %v3093
        %v3108 = vadd.f32 %v3087, %v3093
        %v3109 = vadd.f32 %v3088, %v3093
        %v3110 = vmax.f32 %v3094, 0.0
        %v3111 = vmax.f32 %v3095, 0.0
        %v3112 = vmax.f32 %v3096, 0.0
        %v3113 = vmax.f32 %v3097, 0.0
        %v3114 = vmax.f32 %v3098, 0.0
        %v3115 = vmax.f32 %v3099, 0.0
        %v3116 = vmax.f32 %v3100, 0.0
        %v3117 = vmax.f32 %v3101, 0.0
        %v3118 = vmax.f32 %v3102, 0.0
        %v3119 = vmax.f32 %v3103, 0.0
        %v3120 = vmax.f32 %v3104, 0.0
        %v3121 = vmax.f32 %v3105, 0.0
        %v3122 = vmax.f32 %v3106, 0.0
        %v3123 = vmax.f32 %v3107, 0.0
        %v3124 = vmax.f32 %v3108, 0.0
        %v3125 = vmax.f32 %v3109, 0.0
        %v3126 = vrot.slane %v3110, 7
        %v3127 = vrot.slane %v3111, 7
        %v3128 = vrot.slane %v3112, 7
        %v3129 = vrot.slane %v3113, 7
        %v3130 = vrot.slane %v3114, 7
        %v3131 = vrot.slane %v3115, 7
        %v3132 = vrot.slane %v3116, 7
        %v3133 = vrot.slane %v3117, 7
        %v3134 = vrot.slane %v3118, 7
        %v3135 = vrot.slane %v3119, 7
        %v3136 = vrot.slane %v3120, 7
        %v3137 = vrot.slane %v3121, 7
        %v3138 = vrot.slane %v3122, 7
        %v3139 = vrot.slane %v3123, 7
        %v3140 = vrot.slane %v3124, 7
        %v3141 = vrot.slane %v3125, 7
        %v3142 = vsel %vm449, %v3140, %v3141
        %v3143 = vsel %vm449, %v3139, %v3140
        %v3144 = vsel %vm449, %v3138, %v3139
        %v3145 = vsel %vm449, %v3137, %v3138
        %v3146 = vsel %vm449, %v3136, %v3137
        %v3147 = vsel %vm449, %v3135, %v3136
        %v3148 = vsel %vm449, %v3134, %v3135
        %v3149 = vsel %vm449, %v3133, %v3134
        %v3150 = vsel %vm449, %v3132, %v3133
        %v3151 = vsel %vm449, %v3131, %v3132
        %v3152 = vsel %vm449, %v3130, %v3131
        %v3153 = vsel %vm449, %v3129, %v3130
        %v3154 = vsel %vm449, %v3128, %v3129
        %v3155 = vsel %vm449, %v3127, %v3128
        %v3156 = vsel %vm449, %v3126, %v3127
        %v3157 = vsel %vm449, %v3141, %v3126
        %v3158 = vmul.f32 %v3157, %v316
        %v3159 = vmul.f32 %v3156, %v317
        %v3160 = vmul.f32 %v3155, %v318
        %v3161 = vmul.f32 %v3154, %v319
        %v3162 = vmul.f32 %v3153, %v320
        %v3163 = vmul.f32 %v3152, %v321
        %v3164 = vmul.f32 %v3151, %v322
        %v3165 = vmul.f32 %v3150, %v323
        %v3166 = vmul.f32 %v3149, %v324
        %v3167 = vmul.f32 %v3148, %v325
        %v3168 = vmul.f32 %v3147, %v326
        %v3169 = vmul.f32 %v3146, %v327
        %v3170 = vmul.f32 %v3145, %v328
        %v3171 = vmul.f32 %v3144, %v329
        %v3172 = vmul.f32 %v3143, %v330
        %v3173 = vmul.f32 %v3142, %v331
        %v3174 = vpack.c.bf16 %v3159, %v3158
        %v3175 = vpack.c.bf16 %v3161, %v3160
        %v3176 = vpack.c.bf16 %v3163, %v3162
        %v3177 = vpack.c.bf16 %v3165, %v3164
        %v3178 = vpack.c.bf16 %v3167, %v3166
        %v3179 = vpack.c.bf16 %v3169, %v3168
        %v3180 = vpack.c.bf16 %v3171, %v3170
        %v3181 = vpack.c.bf16 %v3173, %v3172
        %v3182 = vpack.c.bf16 %v3111, %v3110
        %v3183 = vpack.c.bf16 %v3113, %v3112
        %v3184 = vpack.c.bf16 %v3115, %v3114
        %v3185 = vpack.c.bf16 %v3117, %v3116
        %v3186 = vpack.c.bf16 %v3119, %v3118
        %v3187 = vpack.c.bf16 %v3121, %v3120
        %v3188 = vpack.c.bf16 %v3123, %v3122
        %v3189 = vpack.c.bf16 %v3125, %v3124
        %v3190 = vrot.slane %v3110, 1
        %v3191 = vrot.slane %v3111, 1
        %v3192 = vrot.slane %v3112, 1
        %v3193 = vrot.slane %v3113, 1
        %v3194 = vrot.slane %v3114, 1
        %v3195 = vrot.slane %v3115, 1
        %v3196 = vrot.slane %v3116, 1
        %v3197 = vrot.slane %v3117, 1
        %v3198 = vrot.slane %v3118, 1
        %v3199 = vrot.slane %v3119, 1
        %v3200 = vrot.slane %v3120, 1
        %v3201 = vrot.slane %v3121, 1
        %v3202 = vrot.slane %v3122, 1
        %v3203 = vrot.slane %v3123, 1
        %v3204 = vrot.slane %v3124, 1
        %v3205 = vrot.slane %v3125, 1
        %v3206 = vsel %vm506, %v3204, %v3205
        %v3207 = vsel %vm506, %v3203, %v3204
        %v3208 = vsel %vm506, %v3202, %v3203
        %v3209 = vsel %vm506, %v3201, %v3202
        %v3210 = vsel %vm506, %v3200, %v3201
        %v3211 = vsel %vm506, %v3199, %v3200
        %v3212 = vsel %vm506, %v3198, %v3199
        %v3213 = vsel %vm506, %v3197, %v3198
        %v3214 = vsel %vm506, %v3196, %v3197
        %v3215 = vsel %vm506, %v3195, %v3196
        %v3216 = vsel %vm506, %v3194, %v3195
        %v3217 = vsel %vm506, %v3193, %v3194
        %v3218 = vsel %vm506, %v3192, %v3193
        %v3219 = vsel %vm506, %v3191, %v3192
        %v3220 = vsel %vm506, %v3190, %v3191
        %v3221 = vsel %vm506, %v3205, %v3190
        %v3222 = vmul.f32 %v3220, %v348
        %v3223 = vmul.f32 %v3219, %v349
        %v3224 = vmul.f32 %v3218, %v350
        %v3225 = vmul.f32 %v3217, %v351
        %v3226 = vmul.f32 %v3216, %v352
        %v3227 = vmul.f32 %v3215, %v353
        %v3228 = vmul.f32 %v3214, %v354
        %v3229 = vmul.f32 %v3213, %v355
        %v3230 = vmul.f32 %v3212, %v356
        %v3231 = vmul.f32 %v3211, %v357
        %v3232 = vmul.f32 %v3210, %v358
        %v3233 = vmul.f32 %v3209, %v359
        %v3234 = vmul.f32 %v3208, %v360
        %v3235 = vmul.f32 %v3207, %v361
        %v3236 = vmul.f32 %v3206, %v362
        %v3237 = vmul.f32 %v3221, %v363
        %v3238 = vpack.c.bf16 %v3223, %v3222
        %v3239 = vpack.c.bf16 %v3225, %v3224
        %v3240 = vpack.c.bf16 %v3227, %v3226
        %v3241 = vpack.c.bf16 %v3229, %v3228
        %v3242 = vpack.c.bf16 %v3231, %v3230
        %v3243 = vpack.c.bf16 %v3233, %v3232
        %v3244 = vpack.c.bf16 %v3235, %v3234
        %v3245 = vpack.c.bf16 %v3237, %v3236
        %s3246 = scalar_lea.vmem %s1, 768
        %v3247 = vld [vmem:[%s3246] sm:$0xf]
        %v3248 = vld [vmem:[%s3246 + $0x4] sm:$0xf]
        %v3249 = vld [vmem:[%s3246 + $0x8] sm:$0xf]
        %v3250 = vld [vmem:[%s3246 + $0xc] sm:$0xf]
        %v3251 = vld [vmem:[%s3246 + $0x10] sm:$0xf]
        %v3252 = vld [vmem:[%s3246 + $0x14] sm:$0xf]
        %v3253 = vld [vmem:[%s3246 + $0x18] sm:$0xf]
        %v3254 = vld [vmem:[%s3246 + $0x1c] sm:$0xf]
        %v3255 = vld [vmem:[%s3246 + $0x20] sm:$0xf]
        %v3256 = vld [vmem:[%s3246 + $0x24] sm:$0xf]
        %v3257 = vld [vmem:[%s3246 + $0x28] sm:$0xf]
        %v3258 = vld [vmem:[%s3246 + $0x2c] sm:$0xf]
        %v3259 = vld [vmem:[%s3246 + $0x30] sm:$0xf]
        %v3260 = vld [vmem:[%s3246 + $0x34] sm:$0xf]
        %v3261 = vld [vmem:[%s3246 + $0x38] sm:$0xf]
        %v3262 = vld [vmem:[%s3246 + $0x3c] sm:$0xf]
        %s3263 = scalar_lea.vmem %s1, 832
        %v3264 = vld [vmem:[%s3263] sm:$0xf]
        %v3265 = vld [vmem:[%s3263 + $0x4] sm:$0xf]
        %v3266 = vld [vmem:[%s3263 + $0x8] sm:$0xf]
        %v3267 = vld [vmem:[%s3263 + $0xc] sm:$0xf]
        %v3268 = vld [vmem:[%s3263 + $0x10] sm:$0xf]
        %v3269 = vld [vmem:[%s3263 + $0x14] sm:$0xf]
        %v3270 = vld [vmem:[%s3263 + $0x18] sm:$0xf]
        %v3271 = vld [vmem:[%s3263 + $0x1c] sm:$0xf]
        %v3272 = vld [vmem:[%s3263 + $0x20] sm:$0xf]
        %v3273 = vld [vmem:[%s3263 + $0x24] sm:$0xf]
        %v3274 = vld [vmem:[%s3263 + $0x28] sm:$0xf]
        %v3275 = vld [vmem:[%s3263 + $0x2c] sm:$0xf]
        %v3276 = vld [vmem:[%s3263 + $0x30] sm:$0xf]
        %v3277 = vld [vmem:[%s3263 + $0x34] sm:$0xf]
        %v3278 = vld [vmem:[%s3263 + $0x38] sm:$0xf]
        %v3279 = vld [vmem:[%s3263 + $0x3c] sm:$0xf]
        %v3296 = vunpack.c.l.b16 %v3264
        %v3297 = vunpack.c.l.b16 %v3265
        %v3298 = vunpack.c.l.b16 %v3266
        %v3299 = vunpack.c.l.b16 %v3267
        %v3300 = vunpack.c.l.b16 %v3268
        %v3301 = vunpack.c.l.b16 %v3269
        %v3302 = vunpack.c.l.b16 %v3270
        %v3303 = vunpack.c.l.b16 %v3271
        %v3304 = vunpack.c.l.b16 %v3272
        %v3305 = vunpack.c.l.b16 %v3273
        %v3306 = vunpack.c.l.b16 %v3274
        %v3307 = vunpack.c.l.b16 %v3275
        %v3308 = vunpack.c.l.b16 %v3276
        %v3309 = vunpack.c.l.b16 %v3277
        %v3310 = vunpack.c.l.b16 %v3278
        %v3311 = vunpack.c.l.b16 %v3279
        %v3312 = vpack.c.b16 %v3297, %v3296
        %v3313 = vpack.c.b16 %v3299, %v3298
        %v3314 = vpack.c.b16 %v3301, %v3300
        %v3315 = vpack.c.b16 %v3303, %v3302
        %v3316 = vpack.c.b16 %v3305, %v3304
        %v3317 = vpack.c.b16 %v3307, %v3306
        %v3318 = vpack.c.b16 %v3309, %v3308
        %v3319 = vpack.c.b16 %v3311, %v3310
        %3328 = vmatprep.subr.bf16.mxu0 0
        %3329 = vmatpush1.bf16.msra.mxu0 %v3312
        %3330 = vmatprep.subr.bf16.mxu0 0
        %3331 = vmatpush1.bf16.msra.mxu0 %v3313
        %3332 = vmatprep.subr.bf16.mxu0 0
        %3333 = vmatpush1.bf16.msra.mxu0 %v3314
        %3334 = vmatprep.subr.bf16.mxu0 0
        %3335 = vmatpush1.bf16.msra.mxu0 %v3315
        %3336 = vmatprep.subr.bf16.mxu0 0
        %3337 = vmatpush1.bf16.msra.mxu0 %v3316
        %3338 = vmatprep.subr.bf16.mxu0 0
        %3339 = vmatpush1.bf16.msra.mxu0 %v3317
        %3340 = vmatprep.subr.bf16.mxu0 0
        %3341 = vmatpush1.bf16.msra.mxu0 %v3318
        %3342 = vmatprep.subr.bf16.mxu0 0
        %3343 = vmatpush1.bf16.msra.mxu0 %v3319
        %3344 = vmatprep.subr.bf16.mxu0 0
        %3345 = vmatpush1.bf16.msra.mxu0 0
        %3346 = vmatprep.subr.bf16.mxu0 0
        %3347 = vmatpush1.bf16.msra.mxu0 0
        %3348 = vmatprep.subr.bf16.mxu0 0
        %3349 = vmatpush1.bf16.msra.mxu0 0
        %3350 = vmatprep.subr.bf16.mxu0 0
        %3351 = vmatpush1.bf16.msra.mxu0 0
        %3352 = vmatprep.subr.bf16.mxu0 0
        %3353 = vmatpush1.bf16.msra.mxu0 0
        %3354 = vmatprep.subr.bf16.mxu0 0
        %3355 = vmatpush1.bf16.msra.mxu0 0
        %3356 = vmatprep.subr.bf16.mxu0 0
        %3357 = vmatpush1.bf16.msra.mxu0 0
        %3358 = vmatprep.subr.bf16.mxu0 0
        %3359 = vmatpush1.bf16.msra.mxu0 0
        %3360 = vmatprep.mubr.bf16.mxu0 0
        %3361 = vmatmul.mubr.bf16.gmra.mrb[0].mxu0 %v3182
        %v3362 = vpop.f32.mrb[0].mxu0
        %v3363 = vadd.f32 0.0, %v3362
        %v3364 = vpop.f32.mrb[0].mxu0
        %v3365 = vpop.f32.mrb[0].mxu0
        %v3366 = vadd.f32 0.0, %v3365
        %v3367 = vpop.f32.mrb[0].mxu0
        %3368 = vmatprep.mubr.bf16.mxu0 0
        %3369 = vmatmul.mubr.bf16.gmra.mrb[0].mxu0 %v3183
        %v3370 = vpop.f32.mrb[0].mxu0
        %v3371 = vadd.f32 0.0, %v3370
        %v3372 = vpop.f32.mrb[0].mxu0
        %v3373 = vpop.f32.mrb[0].mxu0
        %v3374 = vadd.f32 0.0, %v3373
        %v3375 = vpop.f32.mrb[0].mxu0
        %3376 = vmatprep.mubr.bf16.mxu0 0
        %3377 = vmatmul.mubr.bf16.gmra.mrb[0].mxu0 %v3184
        %v3378 = vpop.f32.mrb[0].mxu0
        %v3379 = vadd.f32 0.0, %v3378
        %v3380 = vpop.f32.mrb[0].mxu0
        %v3381 = vpop.f32.mrb[0].mxu0
        %v3382 = vadd.f32 0.0, %v3381
        %v3383 = vpop.f32.mrb[0].mxu0
        %3384 = vmatprep.mubr.bf16.mxu0 0
        %3385 = vmatmul.mubr.bf16.gmra.mrb[0].mxu0 %v3185
        %v3386 = vpop.f32.mrb[0].mxu0
        %v3387 = vadd.f32 0.0, %v3386
        %v3388 = vpop.f32.mrb[0].mxu0
        %v3389 = vpop.f32.mrb[0].mxu0
        %v3390 = vadd.f32 0.0, %v3389
        %v3391 = vpop.f32.mrb[0].mxu0
        %3392 = vmatprep.mubr.bf16.mxu0 0
        %3393 = vmatmul.mubr.bf16.gmra.mrb[0].mxu0 %v3186
        %v3394 = vpop.f32.mrb[0].mxu0
        %v3395 = vadd.f32 0.0, %v3394
        %v3396 = vpop.f32.mrb[0].mxu0
        %v3397 = vpop.f32.mrb[0].mxu0
        %v3398 = vadd.f32 0.0, %v3397
        %v3399 = vpop.f32.mrb[0].mxu0
        %3400 = vmatprep.mubr.bf16.mxu0 0
        %3401 = vmatmul.mubr.bf16.gmra.mrb[0].mxu0 %v3187
        %v3402 = vpop.f32.mrb[0].mxu0
        %v3403 = vadd.f32 0.0, %v3402
        %v3404 = vpop.f32.mrb[0].mxu0
        %v3405 = vpop.f32.mrb[0].mxu0
        %v3406 = vadd.f32 0.0, %v3405
        %v3407 = vpop.f32.mrb[0].mxu0
        %3408 = vmatprep.mubr.bf16.mxu0 0
        %3409 = vmatmul.mubr.bf16.gmra.mrb[0].mxu0 %v3188
        %v3410 = vpop.f32.mrb[0].mxu0
        %v3411 = vadd.f32 0.0, %v3410
        %v3412 = vpop.f32.mrb[0].mxu0
        %v3413 = vpop.f32.mrb[0].mxu0
        %v3414 = vadd.f32 0.0, %v3413
        %v3415 = vpop.f32.mrb[0].mxu0
        %3416 = vmatprep.mubr.bf16.mxu0 0
        %3417 = vmatmul.mubr.bf16.gmra.mrb[0].mxu0 %v3189
        %v3418 = vpop.f32.mrb[0].mxu0
        %v3419 = vadd.f32 0.0, %v3418
        %v3420 = vpop.f32.mrb[0].mxu0
        %v3421 = vpop.f32.mrb[0].mxu0
        %v3422 = vadd.f32 0.0, %v3421
        %v3423 = vpop.f32.mrb[0].mxu0
        %3424 = vdwg.mxu0
        %v3441 = vunpack.c.l.b16 %v3247
        %v3442 = vunpack.c.l.b16 %v3248
        %v3443 = vunpack.c.l.b16 %v3249
        %v3444 = vunpack.c.l.b16 %v3250
        %v3445 = vunpack.c.l.b16 %v3251
        %v3446 = vunpack.c.l.b16 %v3252
        %v3447 = vunpack.c.l.b16 %v3253
        %v3448 = vunpack.c.l.b16 %v3254
        %v3449 = vunpack.c.l.b16 %v3255
        %v3450 = vunpack.c.l.b16 %v3256
        %v3451 = vunpack.c.l.b16 %v3257
        %v3452 = vunpack.c.l.b16 %v3258
        %v3453 = vunpack.c.l.b16 %v3259
        %v3454 = vunpack.c.l.b16 %v3260
        %v3455 = vunpack.c.l.b16 %v3261
        %v3456 = vunpack.c.l.b16 %v3262
        %v3457 = vpack.c.b16 %v3442, %v3441
        %v3458 = vpack.c.b16 %v3444, %v3443
        %v3459 = vpack.c.b16 %v3446, %v3445
        %v3460 = vpack.c.b16 %v3448, %v3447
        %v3461 = vpack.c.b16 %v3450, %v3449
        %v3462 = vpack.c.b16 %v3452, %v3451
        %v3463 = vpack.c.b16 %v3454, %v3453
        %v3464 = vpack.c.b16 %v3456, %v3455
        %3473 = vmatprep.subr.bf16.mxu0 0
        %3474 = vmatpush1.bf16.msra.mxu0 %v3457
        %3475 = vmatprep.subr.bf16.mxu0 0
        %3476 = vmatpush1.bf16.msra.mxu0 %v3458
        %3477 = vmatprep.subr.bf16.mxu0 0
        %3478 = vmatpush1.bf16.msra.mxu0 %v3459
        %3479 = vmatprep.subr.bf16.mxu0 0
        %3480 = vmatpush1.bf16.msra.mxu0 %v3460
        %3481 = vmatprep.subr.bf16.mxu0 0
        %3482 = vmatpush1.bf16.msra.mxu0 %v3461
        %3483 = vmatprep.subr.bf16.mxu0 0
        %3484 = vmatpush1.bf16.msra.mxu0 %v3462
        %3485 = vmatprep.subr.bf16.mxu0 0
        %3486 = vmatpush1.bf16.msra.mxu0 %v3463
        %3487 = vmatprep.subr.bf16.mxu0 0
        %3488 = vmatpush1.bf16.msra.mxu0 %v3464
        %3489 = vmatprep.subr.bf16.mxu0 0
        %3490 = vmatpush1.bf16.msra.mxu0 0
        %3491 = vmatprep.subr.bf16.mxu0 0
        %3492 = vmatpush1.bf16.msra.mxu0 0
        %3493 = vmatprep.subr.bf16.mxu0 0
        %3494 = vmatpush1.bf16.msra.mxu0 0
        %3495 = vmatprep.subr.bf16.mxu0 0
        %3496 = vmatpush1.bf16.msra.mxu0 0
        %3497 = vmatprep.subr.bf16.mxu0 0
        %3498 = vmatpush1.bf16.msra.mxu0 0
        %3499 = vmatprep.subr.bf16.mxu0 0
        %3500 = vmatpush1.bf16.msra.mxu0 0
        %3501 = vmatprep.subr.bf16.mxu0 0
        %3502 = vmatpush1.bf16.msra.mxu0 0
        %3503 = vmatprep.subr.bf16.mxu0 0
        %3504 = vmatpush1.bf16.msra.mxu0 0
        %3505 = vmatprep.mubr.bf16.mxu0 0
        %3506 = vmatmul.mubr.bf16.gmra.mrb[0].mxu0 %v3174
        %v3507 = vpop.f32.mrb[0].mxu0
        %v3508 = vadd.f32 %v3363, %v3507
        %v3509 = vpop.f32.mrb[0].mxu0
        %v3510 = vpop.f32.mrb[0].mxu0
        %v3511 = vadd.f32 %v3366, %v3510
        %v3512 = vpop.f32.mrb[0].mxu0
        %3513 = vmatprep.mubr.bf16.mxu0 0
        %3514 = vmatmul.mubr.bf16.gmra.mrb[0].mxu0 %v3175
        %v3515 = vpop.f32.mrb[0].mxu0
        %v3516 = vadd.f32 %v3371, %v3515
        %v3517 = vpop.f32.mrb[0].mxu0
        %v3518 = vpop.f32.mrb[0].mxu0
        %v3519 = vadd.f32 %v3374, %v3518
        %v3520 = vpop.f32.mrb[0].mxu0
        %3521 = vmatprep.mubr.bf16.mxu0 0
        %3522 = vmatmul.mubr.bf16.gmra.mrb[0].mxu0 %v3176
        %v3523 = vpop.f32.mrb[0].mxu0
        %v3524 = vadd.f32 %v3379, %v3523
        %v3525 = vpop.f32.mrb[0].mxu0
        %v3526 = vpop.f32.mrb[0].mxu0
        %v3527 = vadd.f32 %v3382, %v3526
        %v3528 = vpop.f32.mrb[0].mxu0
        %3529 = vmatprep.mubr.bf16.mxu0 0
        %3530 = vmatmul.mubr.bf16.gmra.mrb[0].mxu0 %v3177
        %v3531 = vpop.f32.mrb[0].mxu0
        %v3532 = vadd.f32 %v3387, %v3531
        %v3533 = vpop.f32.mrb[0].mxu0
        %v3534 = vpop.f32.mrb[0].mxu0
        %v3535 = vadd.f32 %v3390, %v3534
        %v3536 = vpop.f32.mrb[0].mxu0
        %3537 = vmatprep.mubr.bf16.mxu0 0
        %3538 = vmatmul.mubr.bf16.gmra.mrb[0].mxu0 %v3178
        %v3539 = vpop.f32.mrb[0].mxu0
        %v3540 = vadd.f32 %v3395, %v3539
        %v3541 = vpop.f32.mrb[0].mxu0
        %v3542 = vpop.f32.mrb[0].mxu0
        %v3543 = vadd.f32 %v3398, %v3542
        %v3544 = vpop.f32.mrb[0].mxu0
        %3545 = vmatprep.mubr.bf16.mxu0 0
        %3546 = vmatmul.mubr.bf16.gmra.mrb[0].mxu0 %v3179
        %v3547 = vpop.f32.mrb[0].mxu0
        %v3548 = vadd.f32 %v3403, %v3547
        %v3549 = vpop.f32.mrb[0].mxu0
        %v3550 = vpop.f32.mrb[0].mxu0
        %v3551 = vadd.f32 %v3406, %v3550
        %v3552 = vpop.f32.mrb[0].mxu0
        %3553 = vmatprep.mubr.bf16.mxu0 0
        %3554 = vmatmul.mubr.bf16.gmra.mrb[0].mxu0 %v3180
        %v3555 = vpop.f32.mrb[0].mxu0
        %v3556 = vadd.f32 %v3411, %v3555
        %v3557 = vpop.f32.mrb[0].mxu0
        %v3558 = vpop.f32.mrb[0].mxu0
        %v3559 = vadd.f32 %v3414, %v3558
        %v3560 = vpop.f32.mrb[0].mxu0
        %3561 = vmatprep.mubr.bf16.mxu0 0
        %3562 = vmatmul.mubr.bf16.gmra.mrb[0].mxu0 %v3181
        %v3563 = vpop.f32.mrb[0].mxu0
        %v3564 = vadd.f32 %v3419, %v3563
        %v3565 = vpop.f32.mrb[0].mxu0
        %v3566 = vpop.f32.mrb[0].mxu0
        %v3567 = vadd.f32 %v3422, %v3566
        %v3568 = vpop.f32.mrb[0].mxu0
        %3569 = vdwg.mxu0
        %s3570 = scalar_lea.vmem %s1, 896
        %v3571 = vld [vmem:[%s3570] sm:$0xf]
        %v3572 = vld [vmem:[%s3570 + $0x4] sm:$0xf]
        %v3573 = vld [vmem:[%s3570 + $0x8] sm:$0xf]
        %v3574 = vld [vmem:[%s3570 + $0xc] sm:$0xf]
        %v3575 = vld [vmem:[%s3570 + $0x10] sm:$0xf]
        %v3576 = vld [vmem:[%s3570 + $0x14] sm:$0xf]
        %v3577 = vld [vmem:[%s3570 + $0x18] sm:$0xf]
        %v3578 = vld [vmem:[%s3570 + $0x1c] sm:$0xf]
        %v3579 = vld [vmem:[%s3570 + $0x20] sm:$0xf]
        %v3580 = vld [vmem:[%s3570 + $0x24] sm:$0xf]
        %v3581 = vld [vmem:[%s3570 + $0x28] sm:$0xf]
        %v3582 = vld [vmem:[%s3570 + $0x2c] sm:$0xf]
        %v3583 = vld [vmem:[%s3570 + $0x30] sm:$0xf]
        %v3584 = vld [vmem:[%s3570 + $0x34] sm:$0xf]
        %v3585 = vld [vmem:[%s3570 + $0x38] sm:$0xf]
        %v3586 = vld [vmem:[%s3570 + $0x3c] sm:$0xf]
        %v3603 = vunpack.c.l.b16 %v3571
        %v3604 = vunpack.c.l.b16 %v3572
        %v3605 = vunpack.c.l.b16 %v3573
        %v3606 = vunpack.c.l.b16 %v3574
        %v3607 = vunpack.c.l.b16 %v3575
        %v3608 = vunpack.c.l.b16 %v3576
        %v3609 = vunpack.c.l.b16 %v3577
        %v3610 = vunpack.c.l.b16 %v3578
        %v3611 = vunpack.c.l.b16 %v3579
        %v3612 = vunpack.c.l.b16 %v3580
        %v3613 = vunpack.c.l.b16 %v3581
        %v3614 = vunpack.c.l.b16 %v3582
        %v3615 = vunpack.c.l.b16 %v3583
        %v3616 = vunpack.c.l.b16 %v3584
        %v3617 = vunpack.c.l.b16 %v3585
        %v3618 = vunpack.c.l.b16 %v3586
        %v3619 = vpack.c.b16 %v3604, %v3603
        %v3620 = vpack.c.b16 %v3606, %v3605
        %v3621 = vpack.c.b16 %v3608, %v3607
        %v3622 = vpack.c.b16 %v3610, %v3609
        %v3623 = vpack.c.b16 %v3612, %v3611
        %v3624 = vpack.c.b16 %v3614, %v3613
        %v3625 = vpack.c.b16 %v3616, %v3615
        %v3626 = vpack.c.b16 %v3618, %v3617
        %3635 = vmatprep.subr.bf16.mxu0 0
        %3636 = vmatpush1.bf16.msra.mxu0 %v3619
        %3637 = vmatprep.subr.bf16.mxu0 0
        %3638 = vmatpush1.bf16.msra.mxu0 %v3620
        %3639 = vmatprep.subr.bf16.mxu0 0
        %3640 = vmatpush1.bf16.msra.mxu0 %v3621
        %3641 = vmatprep.subr.bf16.mxu0 0
        %3642 = vmatpush1.bf16.msra.mxu0 %v3622
        %3643 = vmatprep.subr.bf16.mxu0 0
        %3644 = vmatpush1.bf16.msra.mxu0 %v3623
        %3645 = vmatprep.subr.bf16.mxu0 0
        %3646 = vmatpush1.bf16.msra.mxu0 %v3624
        %3647 = vmatprep.subr.bf16.mxu0 0
        %3648 = vmatpush1.bf16.msra.mxu0 %v3625
        %3649 = vmatprep.subr.bf16.mxu0 0
        %3650 = vmatpush1.bf16.msra.mxu0 %v3626
        %3651 = vmatprep.subr.bf16.mxu0 0
        %3652 = vmatpush1.bf16.msra.mxu0 0
        %3653 = vmatprep.subr.bf16.mxu0 0
        %3654 = vmatpush1.bf16.msra.mxu0 0
        %3655 = vmatprep.subr.bf16.mxu0 0
        %3656 = vmatpush1.bf16.msra.mxu0 0
        %3657 = vmatprep.subr.bf16.mxu0 0
        %3658 = vmatpush1.bf16.msra.mxu0 0
        %3659 = vmatprep.subr.bf16.mxu0 0
        %3660 = vmatpush1.bf16.msra.mxu0 0
        %3661 = vmatprep.subr.bf16.mxu0 0
        %3662 = vmatpush1.bf16.msra.mxu0 0
        %3663 = vmatprep.subr.bf16.mxu0 0
        %3664 = vmatpush1.bf16.msra.mxu0 0
        %3665 = vmatprep.subr.bf16.mxu0 0
        %3666 = vmatpush1.bf16.msra.mxu0 0
        %3667 = vmatprep.mubr.bf16.mxu0 0
        %3668 = vmatmul.mubr.bf16.gmra.mrb[0].mxu0 %v3238
        %v3669 = vpop.f32.mrb[0].mxu0
        %v3670 = vadd.f32 0.0, %v3669
        %v3671 = vpop.f32.mrb[0].mxu0
        %v3672 = vpop.f32.mrb[0].mxu0
        %v3673 = vadd.f32 0.0, %v3672
        %v3674 = vpop.f32.mrb[0].mxu0
        %3675 = vmatprep.mubr.bf16.mxu0 0
        %3676 = vmatmul.mubr.bf16.gmra.mrb[0].mxu0 %v3239
        %v3677 = vpop.f32.mrb[0].mxu0
        %v3678 = vadd.f32 0.0, %v3677
        %v3679 = vpop.f32.mrb[0].mxu0
        %v3680 = vpop.f32.mrb[0].mxu0
        %v3681 = vadd.f32 0.0, %v3680
        %v3682 = vpop.f32.mrb[0].mxu0
        %3683 = vmatprep.mubr.bf16.mxu0 0
        %3684 = vmatmul.mubr.bf16.gmra.mrb[0].mxu0 %v3240
        %v3685 = vpop.f32.mrb[0].mxu0
        %v3686 = vadd.f32 0.0, %v3685
        %v3687 = vpop.f32.mrb[0].mxu0
        %v3688 = vpop.f32.mrb[0].mxu0
        %v3689 = vadd.f32 0.0, %v3688
        %v3690 = vpop.f32.mrb[0].mxu0
        %3691 = vmatprep.mubr.bf16.mxu0 0
        %3692 = vmatmul.mubr.bf16.gmra.mrb[0].mxu0 %v3241
        %v3693 = vpop.f32.mrb[0].mxu0
        %v3694 = vadd.f32 0.0, %v3693
        %v3695 = vpop.f32.mrb[0].mxu0
        %v3696 = vpop.f32.mrb[0].mxu0
        %v3697 = vadd.f32 0.0, %v3696
        %v3698 = vpop.f32.mrb[0].mxu0
        %3699 = vmatprep.mubr.bf16.mxu0 0
        %3700 = vmatmul.mubr.bf16.gmra.mrb[0].mxu0 %v3242
        %v3701 = vpop.f32.mrb[0].mxu0
        %v3702 = vadd.f32 0.0, %v3701
        %v3703 = vpop.f32.mrb[0].mxu0
        %v3704 = vpop.f32.mrb[0].mxu0
        %v3705 = vadd.f32 0.0, %v3704
        %v3706 = vpop.f32.mrb[0].mxu0
        %3707 = vmatprep.mubr.bf16.mxu0 0
        %3708 = vmatmul.mubr.bf16.gmra.mrb[0].mxu0 %v3243
        %v3709 = vpop.f32.mrb[0].mxu0
        %v3710 = vadd.f32 0.0, %v3709
        %v3711 = vpop.f32.mrb[0].mxu0
        %v3712 = vpop.f32.mrb[0].mxu0
        %v3713 = vadd.f32 0.0, %v3712
        %v3714 = vpop.f32.mrb[0].mxu0
        %3715 = vmatprep.mubr.bf16.mxu0 0
        %3716 = vmatmul.mubr.bf16.gmra.mrb[0].mxu0 %v3244
        %v3717 = vpop.f32.mrb[0].mxu0
        %v3718 = vadd.f32 0.0, %v3717
        %v3719 = vpop.f32.mrb[0].mxu0
        %v3720 = vpop.f32.mrb[0].mxu0
        %v3721 = vadd.f32 0.0, %v3720
        %v3722 = vpop.f32.mrb[0].mxu0
        %3723 = vmatprep.mubr.bf16.mxu0 0
        %3724 = vmatmul.mubr.bf16.gmra.mrb[0].mxu0 %v3245
        %v3725 = vpop.f32.mrb[0].mxu0
        %v3726 = vadd.f32 0.0, %v3725
        %v3727 = vpop.f32.mrb[0].mxu0
        %v3728 = vpop.f32.mrb[0].mxu0
        %v3729 = vadd.f32 0.0, %v3728
        %v3730 = vpop.f32.mrb[0].mxu0
        %3731 = vdwg.mxu0
        %v3732 = vadd.f32 %v3508, %v3670
        %v3733 = vadd.f32 %v3511, %v3673
        %v3734 = vadd.f32 %v3516, %v3678
        %v3735 = vadd.f32 %v3519, %v3681
        %v3736 = vadd.f32 %v3524, %v3686
        %v3737 = vadd.f32 %v3527, %v3689
        %v3738 = vadd.f32 %v3532, %v3694
        %v3739 = vadd.f32 %v3535, %v3697
        %v3740 = vadd.f32 %v3540, %v3702
        %v3741 = vadd.f32 %v3543, %v3705
        %v3742 = vadd.f32 %v3548, %v3710
        %v3743 = vadd.f32 %v3551, %v3713
        %v3744 = vadd.f32 %v3556, %v3718
        %v3745 = vadd.f32 %v3559, %v3721
        %v3746 = vadd.f32 %v3564, %v3726
        %v3747 = vadd.f32 %v3567, %v3729
        %v3748 = vld [vmem:[%s3 + $0x4] sm:$0x1]
        %v3749 = vlaneseq
        %v3750 = vshrl.u32 %v3749, 7
        %v3751 = vsub.s32 0, %v3750
        %v3752 = vrot.slane %v3748, %v3751
        %v3753 = vadd.f32 %v3732, %v3752
        %v3754 = vadd.f32 %v3733, %v3752
        %v3755 = vadd.f32 %v3734, %v3752
        %v3756 = vadd.f32 %v3735, %v3752
        %v3757 = vadd.f32 %v3736, %v3752
        %v3758 = vadd.f32 %v3737, %v3752
        %v3759 = vadd.f32 %v3738, %v3752
        %v3760 = vadd.f32 %v3739, %v3752
        %v3761 = vadd.f32 %v3740, %v3752
        %v3762 = vadd.f32 %v3741, %v3752
        %v3763 = vadd.f32 %v3742, %v3752
        %v3764 = vadd.f32 %v3743, %v3752
        %v3765 = vadd.f32 %v3744, %v3752
        %v3766 = vadd.f32 %v3745, %v3752
        %v3767 = vadd.f32 %v3746, %v3752
        %v3768 = vadd.f32 %v3747, %v3752
        %v3769 = vadd.f32 %v3753, %v2451
        %v3770 = vadd.f32 %v3754, %v2452
        %v3771 = vadd.f32 %v3755, %v2453
        %v3772 = vadd.f32 %v3756, %v2454
        %v3773 = vadd.f32 %v3757, %v2455
        %v3774 = vadd.f32 %v3758, %v2456
        %v3775 = vadd.f32 %v3759, %v2457
        %v3776 = vadd.f32 %v3760, %v2458
        %v3777 = vadd.f32 %v3761, %v2459
        %v3778 = vadd.f32 %v3762, %v2460
        %v3779 = vadd.f32 %v3763, %v2461
        %v3780 = vadd.f32 %v3764, %v2462
        %v3781 = vadd.f32 %v3765, %v2463
        %v3782 = vadd.f32 %v3766, %v2464
        %v3783 = vadd.f32 %v3767, %v2465
        %v3784 = vadd.f32 %v3768, %v2466
        %v3785 = vmax.f32 %v3769, 0.0
        %v3786 = vmax.f32 %v3770, 0.0
        %v3787 = vmax.f32 %v3771, 0.0
        %v3788 = vmax.f32 %v3772, 0.0
        %v3789 = vmax.f32 %v3773, 0.0
        %v3790 = vmax.f32 %v3774, 0.0
        %v3791 = vmax.f32 %v3775, 0.0
        %v3792 = vmax.f32 %v3776, 0.0
        %v3793 = vmax.f32 %v3777, 0.0
        %v3794 = vmax.f32 %v3778, 0.0
        %v3795 = vmax.f32 %v3779, 0.0
        %v3796 = vmax.f32 %v3780, 0.0
        %v3797 = vmax.f32 %v3781, 0.0
        %v3798 = vmax.f32 %v3782, 0.0
        %v3799 = vmax.f32 %v3783, 0.0
        %v3800 = vmax.f32 %v3784, 0.0
        %v3801 = vrot.slane %v3785, 7
        %v3802 = vrot.slane %v3786, 7
        %v3803 = vrot.slane %v3787, 7
        %v3804 = vrot.slane %v3788, 7
        %v3805 = vrot.slane %v3789, 7
        %v3806 = vrot.slane %v3790, 7
        %v3807 = vrot.slane %v3791, 7
        %v3808 = vrot.slane %v3792, 7
        %v3809 = vrot.slane %v3793, 7
        %v3810 = vrot.slane %v3794, 7
        %v3811 = vrot.slane %v3795, 7
        %v3812 = vrot.slane %v3796, 7
        %v3813 = vrot.slane %v3797, 7
        %v3814 = vrot.slane %v3798, 7
        %v3815 = vrot.slane %v3799, 7
        %v3816 = vrot.slane %v3800, 7
        %v3817 = vsel %vm449, %v3815, %v3816
        %v3818 = vsel %vm449, %v3814, %v3815
        %v3819 = vsel %vm449, %v3813, %v3814
        %v3820 = vsel %vm449, %v3812, %v3813
        %v3821 = vsel %vm449, %v3811, %v3812
        %v3822 = vsel %vm449, %v3810, %v3811
        %v3823 = vsel %vm449, %v3809, %v3810
        %v3824 = vsel %vm449, %v3808, %v3809
        %v3825 = vsel %vm449, %v3807, %v3808
        %v3826 = vsel %vm449, %v3806, %v3807
        %v3827 = vsel %vm449, %v3805, %v3806
        %v3828 = vsel %vm449, %v3804, %v3805
        %v3829 = vsel %vm449, %v3803, %v3804
        %v3830 = vsel %vm449, %v3802, %v3803
        %v3831 = vsel %vm449, %v3801, %v3802
        %v3832 = vsel %vm449, %v3816, %v3801
        %v3833 = vmul.f32 %v3832, %v316
        %v3834 = vmul.f32 %v3831, %v317
        %v3835 = vmul.f32 %v3830, %v318
        %v3836 = vmul.f32 %v3829, %v319
        %v3837 = vmul.f32 %v3828, %v320
        %v3838 = vmul.f32 %v3827, %v321
        %v3839 = vmul.f32 %v3826, %v322
        %v3840 = vmul.f32 %v3825, %v323
        %v3841 = vmul.f32 %v3824, %v324
        %v3842 = vmul.f32 %v3823, %v325
        %v3843 = vmul.f32 %v3822, %v326
        %v3844 = vmul.f32 %v3821, %v327
        %v3845 = vmul.f32 %v3820, %v328
        %v3846 = vmul.f32 %v3819, %v329
        %v3847 = vmul.f32 %v3818, %v330
        %v3848 = vmul.f32 %v3817, %v331
        %v3849 = vpack.c.bf16 %v3834, %v3833
        %v3850 = vpack.c.bf16 %v3836, %v3835
        %v3851 = vpack.c.bf16 %v3838, %v3837
        %v3852 = vpack.c.bf16 %v3840, %v3839
        %v3853 = vpack.c.bf16 %v3842, %v3841
        %v3854 = vpack.c.bf16 %v3844, %v3843
        %v3855 = vpack.c.bf16 %v3846, %v3845
        %v3856 = vpack.c.bf16 %v3848, %v3847
        %v3857 = vpack.c.bf16 %v3786, %v3785
        %v3858 = vpack.c.bf16 %v3788, %v3787
        %v3859 = vpack.c.bf16 %v3790, %v3789
        %v3860 = vpack.c.bf16 %v3792, %v3791
        %v3861 = vpack.c.bf16 %v3794, %v3793
        %v3862 = vpack.c.bf16 %v3796, %v3795
        %v3863 = vpack.c.bf16 %v3798, %v3797
        %v3864 = vpack.c.bf16 %v3800, %v3799
        %v3865 = vrot.slane %v3785, 1
        %v3866 = vrot.slane %v3786, 1
        %v3867 = vrot.slane %v3787, 1
        %v3868 = vrot.slane %v3788, 1
        %v3869 = vrot.slane %v3789, 1
        %v3870 = vrot.slane %v3790, 1
        %v3871 = vrot.slane %v3791, 1
        %v3872 = vrot.slane %v3792, 1
        %v3873 = vrot.slane %v3793, 1
        %v3874 = vrot.slane %v3794, 1
        %v3875 = vrot.slane %v3795, 1
        %v3876 = vrot.slane %v3796, 1
        %v3877 = vrot.slane %v3797, 1
        %v3878 = vrot.slane %v3798, 1
        %v3879 = vrot.slane %v3799, 1
        %v3880 = vrot.slane %v3800, 1
        %v3881 = vsel %vm506, %v3879, %v3880
        %v3882 = vsel %vm506, %v3878, %v3879
        %v3883 = vsel %vm506, %v3877, %v3878
        %v3884 = vsel %vm506, %v3876, %v3877
        %v3885 = vsel %vm506, %v3875, %v3876
        %v3886 = vsel %vm506, %v3874, %v3875
        %v3887 = vsel %vm506, %v3873, %v3874
        %v3888 = vsel %vm506, %v3872, %v3873
        %v3889 = vsel %vm506, %v3871, %v3872
        %v3890 = vsel %vm506, %v3870, %v3871
        %v3891 = vsel %vm506, %v3869, %v3870
        %v3892 = vsel %vm506, %v3868, %v3869
        %v3893 = vsel %vm506, %v3867, %v3868
        %v3894 = vsel %vm506, %v3866, %v3867
        %v3895 = vsel %vm506, %v3865, %v3866
        %v3896 = vsel %vm506, %v3880, %v3865
        %v3897 = vmul.f32 %v3895, %v348
        %v3898 = vmul.f32 %v3894, %v349
        %v3899 = vmul.f32 %v3893, %v350
        %v3900 = vmul.f32 %v3892, %v351
        %v3901 = vmul.f32 %v3891, %v352
        %v3902 = vmul.f32 %v3890, %v353
        %v3903 = vmul.f32 %v3889, %v354
        %v3904 = vmul.f32 %v3888, %v355
        %v3905 = vmul.f32 %v3887, %v356
        %v3906 = vmul.f32 %v3886, %v357
        %v3907 = vmul.f32 %v3885, %v358
        %v3908 = vmul.f32 %v3884, %v359
        %v3909 = vmul.f32 %v3883, %v360
        %v3910 = vmul.f32 %v3882, %v361
        %v3911 = vmul.f32 %v3881, %v362
        %v3912 = vmul.f32 %v3896, %v363
        %v3913 = vpack.c.bf16 %v3898, %v3897
        %v3914 = vpack.c.bf16 %v3900, %v3899
        %v3915 = vpack.c.bf16 %v3902, %v3901
        %v3916 = vpack.c.bf16 %v3904, %v3903
        %v3917 = vpack.c.bf16 %v3906, %v3905
        %v3918 = vpack.c.bf16 %v3908, %v3907
        %v3919 = vpack.c.bf16 %v3910, %v3909
        %v3920 = vpack.c.bf16 %v3912, %v3911
        %v3921 = vld [vmem:[%s2] sm:$0xff]
        %v3922 = vld [vmem:[%s2 + $0x8] sm:$0xff]
        %v3923 = vld [vmem:[%s2 + $0x10] sm:$0xff]
        %v3924 = vld [vmem:[%s2 + $0x18] sm:$0xff]
        %v3925 = vld [vmem:[%s2 + $0x20] sm:$0xff]
        %v3926 = vld [vmem:[%s2 + $0x28] sm:$0xff]
        %v3927 = vld [vmem:[%s2 + $0x30] sm:$0xff]
        %v3928 = vld [vmem:[%s2 + $0x38] sm:$0xff]
        %v3929 = vld [vmem:[%s2 + $0x40] sm:$0xff]
        %v3930 = vld [vmem:[%s2 + $0x48] sm:$0xff]
        %v3931 = vld [vmem:[%s2 + $0x50] sm:$0xff]
        %v3932 = vld [vmem:[%s2 + $0x58] sm:$0xff]
        %v3933 = vld [vmem:[%s2 + $0x60] sm:$0xff]
        %v3934 = vld [vmem:[%s2 + $0x68] sm:$0xff]
        %v3935 = vld [vmem:[%s2 + $0x70] sm:$0xff]
        %v3936 = vld [vmem:[%s2 + $0x78] sm:$0xff]
        %v3953 = vunpack.c.l.b16 %v3921
        %v3954 = vunpack.c.h.b16 %v3921
        %v3955 = vunpack.c.l.b16 %v3922
        %v3956 = vunpack.c.h.b16 %v3922
        %v3957 = vunpack.c.l.b16 %v3923
        %v3958 = vunpack.c.h.b16 %v3923
        %v3959 = vunpack.c.l.b16 %v3924
        %v3960 = vunpack.c.h.b16 %v3924
        %v3961 = vunpack.c.l.b16 %v3925
        %v3962 = vunpack.c.h.b16 %v3925
        %v3963 = vunpack.c.l.b16 %v3926
        %v3964 = vunpack.c.h.b16 %v3926
        %v3965 = vunpack.c.l.b16 %v3927
        %v3966 = vunpack.c.h.b16 %v3927
        %v3967 = vunpack.c.l.b16 %v3928
        %v3968 = vunpack.c.h.b16 %v3928
        %v3969 = vunpack.c.l.b16 %v3929
        %v3970 = vunpack.c.h.b16 %v3929
        %v3971 = vunpack.c.l.b16 %v3930
        %v3972 = vunpack.c.h.b16 %v3930
        %v3973 = vunpack.c.l.b16 %v3931
        %v3974 = vunpack.c.h.b16 %v3931
        %v3975 = vunpack.c.l.b16 %v3932
        %v3976 = vunpack.c.h.b16 %v3932
        %v3977 = vunpack.c.l.b16 %v3933
        %v3978 = vunpack.c.h.b16 %v3933
        %v3979 = vunpack.c.l.b16 %v3934
        %v3980 = vunpack.c.h.b16 %v3934
        %v3981 = vunpack.c.l.b16 %v3935
        %v3982 = vunpack.c.h.b16 %v3935
        %v3983 = vunpack.c.l.b16 %v3936
        %v3984 = vunpack.c.h.b16 %v3936
        %v3985 = vpack.c.b16 %v3955, %v3953
        %v3986 = vpack.c.b16 %v3956, %v3954
        %v3987 = vpack.c.b16 %v3959, %v3957
        %v3988 = vpack.c.b16 %v3960, %v3958
        %v3989 = vpack.c.b16 %v3963, %v3961
        %v3990 = vpack.c.b16 %v3964, %v3962
        %v3991 = vpack.c.b16 %v3967, %v3965
        %v3992 = vpack.c.b16 %v3968, %v3966
        %v3993 = vpack.c.b16 %v3971, %v3969
        %v3994 = vpack.c.b16 %v3972, %v3970
        %v3995 = vpack.c.b16 %v3975, %v3973
        %v3996 = vpack.c.b16 %v3976, %v3974
        %v3997 = vpack.c.b16 %v3979, %v3977
        %v3998 = vpack.c.b16 %v3980, %v3978
        %v3999 = vpack.c.b16 %v3983, %v3981
        %v4000 = vpack.c.b16 %v3984, %v3982
        %4017 = vmatprep.subr.bf16.mxu0 %v3986
        %4018 = vmatpush1.bf16.msra.mxu0 %v3985
        %4019 = vmatprep.subr.bf16.mxu0 %v3988
        %4020 = vmatpush1.bf16.msra.mxu0 %v3987
        %4021 = vmatprep.subr.bf16.mxu0 %v3990
        %4022 = vmatpush1.bf16.msra.mxu0 %v3989
        %4023 = vmatprep.subr.bf16.mxu0 %v3992
        %4024 = vmatpush1.bf16.msra.mxu0 %v3991
        %4025 = vmatprep.subr.bf16.mxu0 %v3994
        %4026 = vmatpush1.bf16.msra.mxu0 %v3993
        %4027 = vmatprep.subr.bf16.mxu0 %v3996
        %4028 = vmatpush1.bf16.msra.mxu0 %v3995
        %4029 = vmatprep.subr.bf16.mxu0 %v3998
        %4030 = vmatpush1.bf16.msra.mxu0 %v3997
        %4031 = vmatprep.subr.bf16.mxu0 %v4000
        %4032 = vmatpush1.bf16.msra.mxu0 %v3999
        %4033 = vmatprep.subr.bf16.mxu0 0
        %4034 = vmatpush1.bf16.msra.mxu0 0
        %4035 = vmatprep.subr.bf16.mxu0 0
        %4036 = vmatpush1.bf16.msra.mxu0 0
        %4037 = vmatprep.subr.bf16.mxu0 0
        %4038 = vmatpush1.bf16.msra.mxu0 0
        %4039 = vmatprep.subr.bf16.mxu0 0
        %4040 = vmatpush1.bf16.msra.mxu0 0
        %4041 = vmatprep.subr.bf16.mxu0 0
        %4042 = vmatpush1.bf16.msra.mxu0 0
        %4043 = vmatprep.subr.bf16.mxu0 0
        %4044 = vmatpush1.bf16.msra.mxu0 0
        %4045 = vmatprep.subr.bf16.mxu0 0
        %4046 = vmatpush1.bf16.msra.mxu0 0
        %4047 = vmatprep.subr.bf16.mxu0 0
        %4048 = vmatpush1.bf16.msra.mxu0 0
        %4049 = vmatprep.mubr.bf16.mxu0 0
        %4050 = vmatmul.mubr.bf16.gmra.mrb[0].mxu0 %v3857
        %v4051 = vpop.f32.mrb[0].mxu0
        %v4052 = vadd.f32 0.0, %v4051
        %v4053 = vpop.f32.mrb[0].mxu0
        %v4054 = vadd.f32 0.0, %v4053
        %v4055 = vpop.f32.mrb[0].mxu0
        %v4056 = vadd.f32 0.0, %v4055
        %v4057 = vpop.f32.mrb[0].mxu0
        %v4058 = vadd.f32 0.0, %v4057
        %4059 = vmatprep.mubr.bf16.mxu0 0
        %4060 = vmatmul.mubr.bf16.gmra.mrb[0].mxu0 %v3858
        %v4061 = vpop.f32.mrb[0].mxu0
        %v4062 = vadd.f32 0.0, %v4061
        %v4063 = vpop.f32.mrb[0].mxu0
        %v4064 = vadd.f32 0.0, %v4063
        %v4065 = vpop.f32.mrb[0].mxu0
        %v4066 = vadd.f32 0.0, %v4065
        %v4067 = vpop.f32.mrb[0].mxu0
        %v4068 = vadd.f32 0.0, %v4067
        %4069 = vmatprep.mubr.bf16.mxu0 0
        %4070 = vmatmul.mubr.bf16.gmra.mrb[0].mxu0 %v3859
        %v4071 = vpop.f32.mrb[0].mxu0
        %v4072 = vadd.f32 0.0, %v4071
        %v4073 = vpop.f32.mrb[0].mxu0
        %v4074 = vadd.f32 0.0, %v4073
        %v4075 = vpop.f32.mrb[0].mxu0
        %v4076 = vadd.f32 0.0, %v4075
        %v4077 = vpop.f32.mrb[0].mxu0
        %v4078 = vadd.f32 0.0, %v4077
        %4079 = vmatprep.mubr.bf16.mxu0 0
        %4080 = vmatmul.mubr.bf16.gmra.mrb[0].mxu0 %v3860
        %v4081 = vpop.f32.mrb[0].mxu0
        %v4082 = vadd.f32 0.0, %v4081
        %v4083 = vpop.f32.mrb[0].mxu0
        %v4084 = vadd.f32 0.0, %v4083
        %v4085 = vpop.f32.mrb[0].mxu0
        %v4086 = vadd.f32 0.0, %v4085
        %v4087 = vpop.f32.mrb[0].mxu0
        %v4088 = vadd.f32 0.0, %v4087
        %4089 = vmatprep.mubr.bf16.mxu0 0
        %4090 = vmatmul.mubr.bf16.gmra.mrb[0].mxu0 %v3861
        %v4091 = vpop.f32.mrb[0].mxu0
        %v4092 = vadd.f32 0.0, %v4091
        %v4093 = vpop.f32.mrb[0].mxu0
        %v4094 = vadd.f32 0.0, %v4093
        %v4095 = vpop.f32.mrb[0].mxu0
        %v4096 = vadd.f32 0.0, %v4095
        %v4097 = vpop.f32.mrb[0].mxu0
        %v4098 = vadd.f32 0.0, %v4097
        %4099 = vmatprep.mubr.bf16.mxu0 0
        %4100 = vmatmul.mubr.bf16.gmra.mrb[0].mxu0 %v3862
        %v4101 = vpop.f32.mrb[0].mxu0
        %v4102 = vadd.f32 0.0, %v4101
        %v4103 = vpop.f32.mrb[0].mxu0
        %v4104 = vadd.f32 0.0, %v4103
        %v4105 = vpop.f32.mrb[0].mxu0
        %v4106 = vadd.f32 0.0, %v4105
        %v4107 = vpop.f32.mrb[0].mxu0
        %v4108 = vadd.f32 0.0, %v4107
        %4109 = vmatprep.mubr.bf16.mxu0 0
        %4110 = vmatmul.mubr.bf16.gmra.mrb[0].mxu0 %v3863
        %v4111 = vpop.f32.mrb[0].mxu0
        %v4112 = vadd.f32 0.0, %v4111
        %v4113 = vpop.f32.mrb[0].mxu0
        %v4114 = vadd.f32 0.0, %v4113
        %v4115 = vpop.f32.mrb[0].mxu0
        %v4116 = vadd.f32 0.0, %v4115
        %v4117 = vpop.f32.mrb[0].mxu0
        %v4118 = vadd.f32 0.0, %v4117
        %4119 = vmatprep.mubr.bf16.mxu0 0
        %4120 = vmatmul.mubr.bf16.gmra.mrb[0].mxu0 %v3864
        %v4121 = vpop.f32.mrb[0].mxu0
        %v4122 = vadd.f32 0.0, %v4121
        %v4123 = vpop.f32.mrb[0].mxu0
        %v4124 = vadd.f32 0.0, %v4123
        %v4125 = vpop.f32.mrb[0].mxu0
        %v4126 = vadd.f32 0.0, %v4125
        %v4127 = vpop.f32.mrb[0].mxu0
        %v4128 = vadd.f32 0.0, %v4127
        %4129 = vdwg.mxu0
        %s4130 = scalar_lea.vmem %s1, 960
        %v4131 = vld [vmem:[%s4130] sm:$0xf]
        %v4132 = vld [vmem:[%s4130 + $0x4] sm:$0xf]
        %v4133 = vld [vmem:[%s4130 + $0x8] sm:$0xf]
        %v4134 = vld [vmem:[%s4130 + $0xc] sm:$0xf]
        %v4135 = vld [vmem:[%s4130 + $0x10] sm:$0xf]
        %v4136 = vld [vmem:[%s4130 + $0x14] sm:$0xf]
        %v4137 = vld [vmem:[%s4130 + $0x18] sm:$0xf]
        %v4138 = vld [vmem:[%s4130 + $0x1c] sm:$0xf]
        %v4139 = vld [vmem:[%s4130 + $0x20] sm:$0xf]
        %v4140 = vld [vmem:[%s4130 + $0x24] sm:$0xf]
        %v4141 = vld [vmem:[%s4130 + $0x28] sm:$0xf]
        %v4142 = vld [vmem:[%s4130 + $0x2c] sm:$0xf]
        %v4143 = vld [vmem:[%s4130 + $0x30] sm:$0xf]
        %v4144 = vld [vmem:[%s4130 + $0x34] sm:$0xf]
        %v4145 = vld [vmem:[%s4130 + $0x38] sm:$0xf]
        %v4146 = vld [vmem:[%s4130 + $0x3c] sm:$0xf]
        %v4163 = vunpack.c.l.b16 %v4131
        %v4164 = vunpack.c.l.b16 %v4132
        %v4165 = vunpack.c.l.b16 %v4133
        %v4166 = vunpack.c.l.b16 %v4134
        %v4167 = vunpack.c.l.b16 %v4135
        %v4168 = vunpack.c.l.b16 %v4136
        %v4169 = vunpack.c.l.b16 %v4137
        %v4170 = vunpack.c.l.b16 %v4138
        %v4171 = vunpack.c.l.b16 %v4139
        %v4172 = vunpack.c.l.b16 %v4140
        %v4173 = vunpack.c.l.b16 %v4141
        %v4174 = vunpack.c.l.b16 %v4142
        %v4175 = vunpack.c.l.b16 %v4143
        %v4176 = vunpack.c.l.b16 %v4144
        %v4177 = vunpack.c.l.b16 %v4145
        %v4178 = vunpack.c.l.b16 %v4146
        %v4179 = vpack.c.b16 %v4164, %v4163
        %v4180 = vpack.c.b16 %v4166, %v4165
        %v4181 = vpack.c.b16 %v4168, %v4167
        %v4182 = vpack.c.b16 %v4170, %v4169
        %v4183 = vpack.c.b16 %v4172, %v4171
        %v4184 = vpack.c.b16 %v4174, %v4173
        %v4185 = vpack.c.b16 %v4176, %v4175
        %v4186 = vpack.c.b16 %v4178, %v4177
        %4195 = vmatprep.subr.bf16.mxu0 0
        %4196 = vmatpush1.bf16.msra.mxu0 %v4179
        %4197 = vmatprep.subr.bf16.mxu0 0
        %4198 = vmatpush1.bf16.msra.mxu0 %v4180
        %4199 = vmatprep.subr.bf16.mxu0 0
        %4200 = vmatpush1.bf16.msra.mxu0 %v4181
        %4201 = vmatprep.subr.bf16.mxu0 0
        %4202 = vmatpush1.bf16.msra.mxu0 %v4182
        %4203 = vmatprep.subr.bf16.mxu0 0
        %4204 = vmatpush1.bf16.msra.mxu0 %v4183
        %4205 = vmatprep.subr.bf16.mxu0 0
        %4206 = vmatpush1.bf16.msra.mxu0 %v4184
        %4207 = vmatprep.subr.bf16.mxu0 0
        %4208 = vmatpush1.bf16.msra.mxu0 %v4185
        %4209 = vmatprep.subr.bf16.mxu0 0
        %4210 = vmatpush1.bf16.msra.mxu0 %v4186
        %4211 = vmatprep.subr.bf16.mxu0 0
        %4212 = vmatpush1.bf16.msra.mxu0 0
        %4213 = vmatprep.subr.bf16.mxu0 0
        %4214 = vmatpush1.bf16.msra.mxu0 0
        %4215 = vmatprep.subr.bf16.mxu0 0
        %4216 = vmatpush1.bf16.msra.mxu0 0
        %4217 = vmatprep.subr.bf16.mxu0 0
        %4218 = vmatpush1.bf16.msra.mxu0 0
        %4219 = vmatprep.subr.bf16.mxu0 0
        %4220 = vmatpush1.bf16.msra.mxu0 0
        %4221 = vmatprep.subr.bf16.mxu0 0
        %4222 = vmatpush1.bf16.msra.mxu0 0
        %4223 = vmatprep.subr.bf16.mxu0 0
        %4224 = vmatpush1.bf16.msra.mxu0 0
        %4225 = vmatprep.subr.bf16.mxu0 0
        %4226 = vmatpush1.bf16.msra.mxu0 0
        %4227 = vmatprep.mubr.bf16.mxu0 0
        %4228 = vmatmul.mubr.bf16.gmra.mrb[0].mxu0 %v3849
        %v4229 = vpop.f32.mrb[0].mxu0
        %v4230 = vadd.f32 %v4052, %v4229
        %v4231 = vpop.f32.mrb[0].mxu0
        %v4232 = vpop.f32.mrb[0].mxu0
        %v4233 = vadd.f32 %v4056, %v4232
        %v4234 = vpop.f32.mrb[0].mxu0
        %4235 = vmatprep.mubr.bf16.mxu0 0
        %4236 = vmatmul.mubr.bf16.gmra.mrb[0].mxu0 %v3850
        %v4237 = vpop.f32.mrb[0].mxu0
        %v4238 = vadd.f32 %v4062, %v4237
        %v4239 = vpop.f32.mrb[0].mxu0
        %v4240 = vpop.f32.mrb[0].mxu0
        %v4241 = vadd.f32 %v4066, %v4240
        %v4242 = vpop.f32.mrb[0].mxu0
        %4243 = vmatprep.mubr.bf16.mxu0 0
        %4244 = vmatmul.mubr.bf16.gmra.mrb[0].mxu0 %v3851
        %v4245 = vpop.f32.mrb[0].mxu0
        %v4246 = vadd.f32 %v4072, %v4245
        %v4247 = vpop.f32.mrb[0].mxu0
        %v4248 = vpop.f32.mrb[0].mxu0
        %v4249 = vadd.f32 %v4076, %v4248
        %v4250 = vpop.f32.mrb[0].mxu0
        %4251 = vmatprep.mubr.bf16.mxu0 0
        %4252 = vmatmul.mubr.bf16.gmra.mrb[0].mxu0 %v3852
        %v4253 = vpop.f32.mrb[0].mxu0
        %v4254 = vadd.f32 %v4082, %v4253
        %v4255 = vpop.f32.mrb[0].mxu0
        %v4256 = vpop.f32.mrb[0].mxu0
        %v4257 = vadd.f32 %v4086, %v4256
        %v4258 = vpop.f32.mrb[0].mxu0
        %4259 = vmatprep.mubr.bf16.mxu0 0
        %4260 = vmatmul.mubr.bf16.gmra.mrb[0].mxu0 %v3853
        %v4261 = vpop.f32.mrb[0].mxu0
        %v4262 = vadd.f32 %v4092, %v4261
        %v4263 = vpop.f32.mrb[0].mxu0
        %v4264 = vpop.f32.mrb[0].mxu0
        %v4265 = vadd.f32 %v4096, %v4264
        %v4266 = vpop.f32.mrb[0].mxu0
        %4267 = vmatprep.mubr.bf16.mxu0 0
        %4268 = vmatmul.mubr.bf16.gmra.mrb[0].mxu0 %v3854
        %v4269 = vpop.f32.mrb[0].mxu0
        %v4270 = vadd.f32 %v4102, %v4269
        %v4271 = vpop.f32.mrb[0].mxu0
        %v4272 = vpop.f32.mrb[0].mxu0
        %v4273 = vadd.f32 %v4106, %v4272
        %v4274 = vpop.f32.mrb[0].mxu0
        %4275 = vmatprep.mubr.bf16.mxu0 0
        %4276 = vmatmul.mubr.bf16.gmra.mrb[0].mxu0 %v3855
        %v4277 = vpop.f32.mrb[0].mxu0
        %v4278 = vadd.f32 %v4112, %v4277
        %v4279 = vpop.f32.mrb[0].mxu0
        %v4280 = vpop.f32.mrb[0].mxu0
        %v4281 = vadd.f32 %v4116, %v4280
        %v4282 = vpop.f32.mrb[0].mxu0
        %4283 = vmatprep.mubr.bf16.mxu0 0
        %4284 = vmatmul.mubr.bf16.gmra.mrb[0].mxu0 %v3856
        %v4285 = vpop.f32.mrb[0].mxu0
        %v4286 = vadd.f32 %v4122, %v4285
        %v4287 = vpop.f32.mrb[0].mxu0
        %v4288 = vpop.f32.mrb[0].mxu0
        %v4289 = vadd.f32 %v4126, %v4288
        %v4290 = vpop.f32.mrb[0].mxu0
        %4291 = vdwg.mxu0
        %s4292 = scalar_lea.vmem %s1, 1024
        %v4293 = vld [vmem:[%s4292] sm:$0xf]
        %v4294 = vld [vmem:[%s4292 + $0x4] sm:$0xf]
        %v4295 = vld [vmem:[%s4292 + $0x8] sm:$0xf]
        %v4296 = vld [vmem:[%s4292 + $0xc] sm:$0xf]
        %v4297 = vld [vmem:[%s4292 + $0x10] sm:$0xf]
        %v4298 = vld [vmem:[%s4292 + $0x14] sm:$0xf]
        %v4299 = vld [vmem:[%s4292 + $0x18] sm:$0xf]
        %v4300 = vld [vmem:[%s4292 + $0x1c] sm:$0xf]
        %v4301 = vld [vmem:[%s4292 + $0x20] sm:$0xf]
        %v4302 = vld [vmem:[%s4292 + $0x24] sm:$0xf]
        %v4303 = vld [vmem:[%s4292 + $0x28] sm:$0xf]
        %v4304 = vld [vmem:[%s4292 + $0x2c] sm:$0xf]
        %v4305 = vld [vmem:[%s4292 + $0x30] sm:$0xf]
        %v4306 = vld [vmem:[%s4292 + $0x34] sm:$0xf]
        %v4307 = vld [vmem:[%s4292 + $0x38] sm:$0xf]
        %v4308 = vld [vmem:[%s4292 + $0x3c] sm:$0xf]
        %v4325 = vunpack.c.l.b16 %v4293
        %v4326 = vunpack.c.l.b16 %v4294
        %v4327 = vunpack.c.l.b16 %v4295
        %v4328 = vunpack.c.l.b16 %v4296
        %v4329 = vunpack.c.l.b16 %v4297
        %v4330 = vunpack.c.l.b16 %v4298
        %v4331 = vunpack.c.l.b16 %v4299
        %v4332 = vunpack.c.l.b16 %v4300
        %v4333 = vunpack.c.l.b16 %v4301
        %v4334 = vunpack.c.l.b16 %v4302
        %v4335 = vunpack.c.l.b16 %v4303
        %v4336 = vunpack.c.l.b16 %v4304
        %v4337 = vunpack.c.l.b16 %v4305
        %v4338 = vunpack.c.l.b16 %v4306
        %v4339 = vunpack.c.l.b16 %v4307
        %v4340 = vunpack.c.l.b16 %v4308
        %v4341 = vpack.c.b16 %v4326, %v4325
        %v4342 = vpack.c.b16 %v4328, %v4327
        %v4343 = vpack.c.b16 %v4330, %v4329
        %v4344 = vpack.c.b16 %v4332, %v4331
        %v4345 = vpack.c.b16 %v4334, %v4333
        %v4346 = vpack.c.b16 %v4336, %v4335
        %v4347 = vpack.c.b16 %v4338, %v4337
        %v4348 = vpack.c.b16 %v4340, %v4339
        %4357 = vmatprep.subr.bf16.mxu0 0
        %4358 = vmatpush1.bf16.msra.mxu0 %v4341
        %4359 = vmatprep.subr.bf16.mxu0 0
        %4360 = vmatpush1.bf16.msra.mxu0 %v4342
        %4361 = vmatprep.subr.bf16.mxu0 0
        %4362 = vmatpush1.bf16.msra.mxu0 %v4343
        %4363 = vmatprep.subr.bf16.mxu0 0
        %4364 = vmatpush1.bf16.msra.mxu0 %v4344
        %4365 = vmatprep.subr.bf16.mxu0 0
        %4366 = vmatpush1.bf16.msra.mxu0 %v4345
        %4367 = vmatprep.subr.bf16.mxu0 0
        %4368 = vmatpush1.bf16.msra.mxu0 %v4346
        %4369 = vmatprep.subr.bf16.mxu0 0
        %4370 = vmatpush1.bf16.msra.mxu0 %v4347
        %4371 = vmatprep.subr.bf16.mxu0 0
        %4372 = vmatpush1.bf16.msra.mxu0 %v4348
        %4373 = vmatprep.subr.bf16.mxu0 0
        %4374 = vmatpush1.bf16.msra.mxu0 0
        %4375 = vmatprep.subr.bf16.mxu0 0
        %4376 = vmatpush1.bf16.msra.mxu0 0
        %4377 = vmatprep.subr.bf16.mxu0 0
        %4378 = vmatpush1.bf16.msra.mxu0 0
        %4379 = vmatprep.subr.bf16.mxu0 0
        %4380 = vmatpush1.bf16.msra.mxu0 0
        %4381 = vmatprep.subr.bf16.mxu0 0
        %4382 = vmatpush1.bf16.msra.mxu0 0
        %4383 = vmatprep.subr.bf16.mxu0 0
        %4384 = vmatpush1.bf16.msra.mxu0 0
        %4385 = vmatprep.subr.bf16.mxu0 0
        %4386 = vmatpush1.bf16.msra.mxu0 0
        %4387 = vmatprep.subr.bf16.mxu0 0
        %4388 = vmatpush1.bf16.msra.mxu0 0
        %4389 = vmatprep.mubr.bf16.mxu0 0
        %4390 = vmatmul.mubr.bf16.gmra.mrb[0].mxu0 %v3913
        %v4391 = vpop.f32.mrb[0].mxu0
        %v4392 = vadd.f32 0.0, %v4391
        %v4393 = vpop.f32.mrb[0].mxu0
        %v4394 = vpop.f32.mrb[0].mxu0
        %v4395 = vadd.f32 0.0, %v4394
        %v4396 = vpop.f32.mrb[0].mxu0
        %4397 = vmatprep.mubr.bf16.mxu0 0
        %4398 = vmatmul.mubr.bf16.gmra.mrb[0].mxu0 %v3914
        %v4399 = vpop.f32.mrb[0].mxu0
        %v4400 = vadd.f32 0.0, %v4399
        %v4401 = vpop.f32.mrb[0].mxu0
        %v4402 = vpop.f32.mrb[0].mxu0
        %v4403 = vadd.f32 0.0, %v4402
        %v4404 = vpop.f32.mrb[0].mxu0
        %4405 = vmatprep.mubr.bf16.mxu0 0
        %4406 = vmatmul.mubr.bf16.gmra.mrb[0].mxu0 %v3915
        %v4407 = vpop.f32.mrb[0].mxu0
        %v4408 = vadd.f32 0.0, %v4407
        %v4409 = vpop.f32.mrb[0].mxu0
        %v4410 = vpop.f32.mrb[0].mxu0
        %v4411 = vadd.f32 0.0, %v4410
        %v4412 = vpop.f32.mrb[0].mxu0
        %4413 = vmatprep.mubr.bf16.mxu0 0
        %4414 = vmatmul.mubr.bf16.gmra.mrb[0].mxu0 %v3916
        %v4415 = vpop.f32.mrb[0].mxu0
        %v4416 = vadd.f32 0.0, %v4415
        %v4417 = vpop.f32.mrb[0].mxu0
        %v4418 = vpop.f32.mrb[0].mxu0
        %v4419 = vadd.f32 0.0, %v4418
        %v4420 = vpop.f32.mrb[0].mxu0
        %4421 = vmatprep.mubr.bf16.mxu0 0
        %4422 = vmatmul.mubr.bf16.gmra.mrb[0].mxu0 %v3917
        %v4423 = vpop.f32.mrb[0].mxu0
        %v4424 = vadd.f32 0.0, %v4423
        %v4425 = vpop.f32.mrb[0].mxu0
        %v4426 = vpop.f32.mrb[0].mxu0
        %v4427 = vadd.f32 0.0, %v4426
        %v4428 = vpop.f32.mrb[0].mxu0
        %4429 = vmatprep.mubr.bf16.mxu0 0
        %4430 = vmatmul.mubr.bf16.gmra.mrb[0].mxu0 %v3918
        %v4431 = vpop.f32.mrb[0].mxu0
        %v4432 = vadd.f32 0.0, %v4431
        %v4433 = vpop.f32.mrb[0].mxu0
        %v4434 = vpop.f32.mrb[0].mxu0
        %v4435 = vadd.f32 0.0, %v4434
        %v4436 = vpop.f32.mrb[0].mxu0
        %4437 = vmatprep.mubr.bf16.mxu0 0
        %4438 = vmatmul.mubr.bf16.gmra.mrb[0].mxu0 %v3919
        %v4439 = vpop.f32.mrb[0].mxu0
        %v4440 = vadd.f32 0.0, %v4439
        %v4441 = vpop.f32.mrb[0].mxu0
        %v4442 = vpop.f32.mrb[0].mxu0
        %v4443 = vadd.f32 0.0, %v4442
        %v4444 = vpop.f32.mrb[0].mxu0
        %4445 = vmatprep.mubr.bf16.mxu0 0
        %4446 = vmatmul.mubr.bf16.gmra.mrb[0].mxu0 %v3920
        %v4447 = vpop.f32.mrb[0].mxu0
        %v4448 = vadd.f32 0.0, %v4447
        %v4449 = vpop.f32.mrb[0].mxu0
        %v4450 = vpop.f32.mrb[0].mxu0
        %v4451 = vadd.f32 0.0, %v4450
        %v4452 = vpop.f32.mrb[0].mxu0
        %4453 = vdwg.mxu0
        %v4454 = vadd.f32 %v4230, %v4392
        %v4455 = vadd.f32 %v4233, %v4395
        %v4456 = vadd.f32 %v4238, %v4400
        %v4457 = vadd.f32 %v4241, %v4403
        %v4458 = vadd.f32 %v4246, %v4408
        %v4459 = vadd.f32 %v4249, %v4411
        %v4460 = vadd.f32 %v4254, %v4416
        %v4461 = vadd.f32 %v4257, %v4419
        %v4462 = vadd.f32 %v4262, %v4424
        %v4463 = vadd.f32 %v4265, %v4427
        %v4464 = vadd.f32 %v4270, %v4432
        %v4465 = vadd.f32 %v4273, %v4435
        %v4466 = vadd.f32 %v4278, %v4440
        %v4467 = vadd.f32 %v4281, %v4443
        %v4468 = vadd.f32 %v4286, %v4448
        %v4469 = vadd.f32 %v4289, %v4451
        %v4470 = vpack.c.bf16 %v4455, %v4454
        %v4471 = vpack.c.bf16 %v4058, %v4054
        %v4472 = vpack.c.bf16 %v4457, %v4456
        %v4473 = vpack.c.bf16 %v4068, %v4064
        %v4474 = vpack.c.bf16 %v4459, %v4458
        %v4475 = vpack.c.bf16 %v4078, %v4074
        %v4476 = vpack.c.bf16 %v4461, %v4460
        %v4477 = vpack.c.bf16 %v4088, %v4084
        %v4478 = vpack.c.bf16 %v4463, %v4462
        %v4479 = vpack.c.bf16 %v4098, %v4094
        %v4480 = vpack.c.bf16 %v4465, %v4464
        %v4481 = vpack.c.bf16 %v4108, %v4104
        %v4482 = vpack.c.bf16 %v4467, %v4466
        %v4483 = vpack.c.bf16 %v4118, %v4114
        %v4484 = vpack.c.bf16 %v4469, %v4468
        %v4485 = vpack.c.bf16 %v4128, %v4124
        %4486 = vmatprep.subr.bf16.mxu0 %v4471
        %4487 = vmatpush1.bf16.msra.mxu0 %v4470
        %4488 = vmatprep.subr.bf16.mxu0 %v4473
        %4489 = vmatpush1.bf16.msra.mxu0 %v4472
        %4490 = vmatprep.subr.bf16.mxu0 %v4475
        %4491 = vmatpush1.bf16.msra.mxu0 %v4474
        %4492 = vmatprep.subr.bf16.mxu0 %v4477
        %4493 = vmatpush1.bf16.msra.mxu0 %v4476
        %4494 = vmatprep.subr.bf16.mxu0 %v4479
        %4495 = vmatpush1.bf16.msra.mxu0 %v4478
        %4496 = vmatprep.subr.bf16.mxu0 %v4481
        %4497 = vmatpush1.bf16.msra.mxu0 %v4480
        %4498 = vmatprep.subr.bf16.mxu0 %v4483
        %4499 = vmatpush1.bf16.msra.mxu0 %v4482
        %4500 = vmatprep.subr.bf16.mxu0 %v4485
        %4501 = vmatpush1.bf16.msra.mxu0 %v4484
        %4502 = vmatprep.subr.bf16.mxu0 0
        %4503 = vmatpush1.bf16.msra.mxu0 0
        %4504 = vmatprep.subr.bf16.mxu0 0
        %4505 = vmatpush1.bf16.msra.mxu0 0
        %4506 = vmatprep.subr.bf16.mxu0 0
        %4507 = vmatpush1.bf16.msra.mxu0 0
        %4508 = vmatprep.subr.bf16.mxu0 0
        %4509 = vmatpush1.bf16.msra.mxu0 0
        %4510 = vmatprep.subr.bf16.mxu0 0
        %4511 = vmatpush1.bf16.msra.mxu0 0
        %4512 = vmatprep.subr.bf16.mxu0 0
        %4513 = vmatpush1.bf16.msra.mxu0 0
        %4514 = vmatprep.subr.bf16.mxu0 0
        %4515 = vmatpush1.bf16.msra.mxu0 0
        %4516 = vmatprep.subr.bf16.mxu0 0
        %4517 = vmatpush1.bf16.msra.mxu0 0
        %4518 = vmatprep.mubr.bf16.mxu0 0
        %4519 = vmatmul.mubr.bf16.gmra.mrb[0].mxu0 %v372
        %v4520 = vpop.f32.mrb[0].mxu0
        %v4521 = vadd.f32 0.0, %v4520
        %v4522 = vpop.f32.mrb[0].mxu0
        %v4523 = vadd.f32 0.0, %v4522
        %v4524 = vpop.f32.mrb[0].mxu0
        %v4525 = vadd.f32 0.0, %v4524
        %v4526 = vpop.f32.mrb[0].mxu0
        %v4527 = vadd.f32 0.0, %v4526
        %4528 = vmatprep.mubr.bf16.mxu0 0
        %4529 = vmatmul.mubr.bf16.gmra.mrb[0].mxu0 %v379
        %v4530 = vpop.f32.mrb[0].mxu0
        %v4531 = vadd.f32 0.0, %v4530
        %v4532 = vpop.f32.mrb[0].mxu0
        %v4533 = vadd.f32 0.0, %v4532
        %v4534 = vpop.f32.mrb[0].mxu0
        %v4535 = vadd.f32 0.0, %v4534
        %v4536 = vpop.f32.mrb[0].mxu0
        %v4537 = vadd.f32 0.0, %v4536
        %4538 = vmatprep.mubr.bf16.mxu0 0
        %4539 = vmatmul.mubr.bf16.gmra.mrb[0].mxu0 %v392
        %v4540 = vpop.f32.mrb[0].mxu0
        %v4541 = vadd.f32 0.0, %v4540
        %v4542 = vpop.f32.mrb[0].mxu0
        %v4543 = vadd.f32 0.0, %v4542
        %v4544 = vpop.f32.mrb[0].mxu0
        %v4545 = vadd.f32 0.0, %v4544
        %v4546 = vpop.f32.mrb[0].mxu0
        %v4547 = vadd.f32 0.0, %v4546
        %4548 = vmatprep.mubr.bf16.mxu0 0
        %4549 = vmatmul.mubr.bf16.gmra.mrb[0].mxu0 %v393
        %v4550 = vpop.f32.mrb[0].mxu0
        %v4551 = vadd.f32 0.0, %v4550
        %v4552 = vpop.f32.mrb[0].mxu0
        %v4553 = vadd.f32 0.0, %v4552
        %v4554 = vpop.f32.mrb[0].mxu0
        %v4555 = vadd.f32 0.0, %v4554
        %v4556 = vpop.f32.mrb[0].mxu0
        %v4557 = vadd.f32 0.0, %v4556
        %4558 = vdwg.mxu0
        %v4559 = vld [vmem:[%s3 + $0x5] sm:$0x1]
        %v4560 = vlaneseq
        %v4561 = vshrl.u32 %v4560, 7
        %v4562 = vsub.s32 0, %v4561
        %v4563 = vrot.slane %v4559, %v4562
        %v4564 = vadd.f32 %v4521, %v4563
        %v4565 = vadd.f32 %v4525, %v4563
        %v4566 = vadd.f32 %v4531, %v4563
        %v4567 = vadd.f32 %v4535, %v4563
        %v4568 = vadd.f32 %v4541, %v4563
        %v4569 = vadd.f32 %v4545, %v4563
        %v4570 = vadd.f32 %v4551, %v4563
        %v4571 = vadd.f32 %v4555, %v4563
        %v4572 = vmax.f32 %v4564, 0.0
        %v4573 = vmax.f32 %v4565, 0.0
        %v4574 = vmax.f32 %v4566, 0.0
        %v4575 = vmax.f32 %v4567, 0.0
        %v4576 = vmax.f32 %v4568, 0.0
        %v4577 = vmax.f32 %v4569, 0.0
        %v4578 = vmax.f32 %v4570, 0.0
        %v4579 = vmax.f32 %v4571, 0.0
        %v4580 = vrot.slane %v4572, 7
        %v4581 = vrot.slane %v4573, 7
        %v4582 = vrot.slane %v4574, 7
        %v4583 = vrot.slane %v4575, 7
        %v4584 = vrot.slane %v4576, 7
        %v4585 = vrot.slane %v4577, 7
        %v4586 = vrot.slane %v4578, 7
        %v4587 = vrot.slane %v4579, 7
        %v4588 = vsel %vm449, %v4586, %v4587
        %v4589 = vsel %vm449, %v4585, %v4586
        %v4590 = vsel %vm449, %v4584, %v4585
        %v4591 = vsel %vm449, %v4583, %v4584
        %v4592 = vsel %vm449, %v4582, %v4583
        %v4593 = vsel %vm449, %v4581, %v4582
        %v4594 = vsel %vm449, %v4580, %v4581
        %v4595 = vsel %vm449, %v4587, %v4580
        %v4596 = vmul.f32 %v4595, %v252
        %v4597 = vmul.f32 %v4594, %v253
        %v4598 = vmul.f32 %v4593, %v254
        %v4599 = vmul.f32 %v4592, %v255
        %v4600 = vmul.f32 %v4591, %v256
        %v4601 = vmul.f32 %v4590, %v257
        %v4602 = vmul.f32 %v4589, %v258
        %v4603 = vmul.f32 %v4588, %v259
        %v4604 = vpack.c.bf16 %v4597, %v4596
        %v4605 = vpack.c.bf16 %v4599, %v4598
        %v4606 = vpack.c.bf16 %v4601, %v4600
        %v4607 = vpack.c.bf16 %v4603, %v4602
        %v4608 = vpack.c.bf16 %v4573, %v4572
        %v4609 = vpack.c.bf16 %v4575, %v4574
        %v4610 = vpack.c.bf16 %v4577, %v4576
        %v4611 = vpack.c.bf16 %v4579, %v4578
        %v4612 = vrot.slane %v4572, 1
        %v4613 = vrot.slane %v4573, 1
        %v4614 = vrot.slane %v4574, 1
        %v4615 = vrot.slane %v4575, 1
        %v4616 = vrot.slane %v4576, 1
        %v4617 = vrot.slane %v4577, 1
        %v4618 = vrot.slane %v4578, 1
        %v4619 = vrot.slane %v4579, 1
        %v4620 = vsel %vm506, %v4618, %v4619
        %v4621 = vsel %vm506, %v4617, %v4618
        %v4622 = vsel %vm506, %v4616, %v4617
        %v4623 = vsel %vm506, %v4615, %v4616
        %v4624 = vsel %vm506, %v4614, %v4615
        %v4625 = vsel %vm506, %v4613, %v4614
        %v4626 = vsel %vm506, %v4612, %v4613
        %v4627 = vsel %vm506, %v4619, %v4612
        %v4628 = vmul.f32 %v4626, %v268
        %v4629 = vmul.f32 %v4625, %v269
        %v4630 = vmul.f32 %v4624, %v270
        %v4631 = vmul.f32 %v4623, %v271
        %v4632 = vmul.f32 %v4622, %v272
        %v4633 = vmul.f32 %v4621, %v273
        %v4634 = vmul.f32 %v4620, %v274
        %v4635 = vmul.f32 %v4627, %v275
        %v4636 = vpack.c.bf16 %v4629, %v4628
        %v4637 = vpack.c.bf16 %v4631, %v4630
        %v4638 = vpack.c.bf16 %v4633, %v4632
        %v4639 = vpack.c.bf16 %v4635, %v4634
        %s4640 = scalar_lea.vmem %s1, 1088
        %v4641 = vld [vmem:[%s4640] sm:$0xf]
        %v4642 = vld [vmem:[%s4640 + $0x4] sm:$0xf]
        %v4643 = vld [vmem:[%s4640 + $0x8] sm:$0xf]
        %v4644 = vld [vmem:[%s4640 + $0xc] sm:$0xf]
        %v4645 = vld [vmem:[%s4640 + $0x10] sm:$0xf]
        %v4646 = vld [vmem:[%s4640 + $0x14] sm:$0xf]
        %v4647 = vld [vmem:[%s4640 + $0x18] sm:$0xf]
        %v4648 = vld [vmem:[%s4640 + $0x1c] sm:$0xf]
        %v4649 = vld [vmem:[%s4640 + $0x20] sm:$0xf]
        %v4650 = vld [vmem:[%s4640 + $0x24] sm:$0xf]
        %v4651 = vld [vmem:[%s4640 + $0x28] sm:$0xf]
        %v4652 = vld [vmem:[%s4640 + $0x2c] sm:$0xf]
        %v4653 = vld [vmem:[%s4640 + $0x30] sm:$0xf]
        %v4654 = vld [vmem:[%s4640 + $0x34] sm:$0xf]
        %v4655 = vld [vmem:[%s4640 + $0x38] sm:$0xf]
        %v4656 = vld [vmem:[%s4640 + $0x3c] sm:$0xf]
        %s4657 = scalar_lea.vmem %s1, 1152
        %v4658 = vld [vmem:[%s4657] sm:$0xf]
        %v4659 = vld [vmem:[%s4657 + $0x4] sm:$0xf]
        %v4660 = vld [vmem:[%s4657 + $0x8] sm:$0xf]
        %v4661 = vld [vmem:[%s4657 + $0xc] sm:$0xf]
        %v4662 = vld [vmem:[%s4657 + $0x10] sm:$0xf]
        %v4663 = vld [vmem:[%s4657 + $0x14] sm:$0xf]
        %v4664 = vld [vmem:[%s4657 + $0x18] sm:$0xf]
        %v4665 = vld [vmem:[%s4657 + $0x1c] sm:$0xf]
        %v4666 = vld [vmem:[%s4657 + $0x20] sm:$0xf]
        %v4667 = vld [vmem:[%s4657 + $0x24] sm:$0xf]
        %v4668 = vld [vmem:[%s4657 + $0x28] sm:$0xf]
        %v4669 = vld [vmem:[%s4657 + $0x2c] sm:$0xf]
        %v4670 = vld [vmem:[%s4657 + $0x30] sm:$0xf]
        %v4671 = vld [vmem:[%s4657 + $0x34] sm:$0xf]
        %v4672 = vld [vmem:[%s4657 + $0x38] sm:$0xf]
        %v4673 = vld [vmem:[%s4657 + $0x3c] sm:$0xf]
        %v4690 = vunpack.c.l.b16 %v4658
        %v4691 = vunpack.c.l.b16 %v4659
        %v4692 = vunpack.c.l.b16 %v4660
        %v4693 = vunpack.c.l.b16 %v4661
        %v4694 = vunpack.c.l.b16 %v4662
        %v4695 = vunpack.c.l.b16 %v4663
        %v4696 = vunpack.c.l.b16 %v4664
        %v4697 = vunpack.c.l.b16 %v4665
        %v4698 = vunpack.c.l.b16 %v4666
        %v4699 = vunpack.c.l.b16 %v4667
        %v4700 = vunpack.c.l.b16 %v4668
        %v4701 = vunpack.c.l.b16 %v4669
        %v4702 = vunpack.c.l.b16 %v4670
        %v4703 = vunpack.c.l.b16 %v4671
        %v4704 = vunpack.c.l.b16 %v4672
        %v4705 = vunpack.c.l.b16 %v4673
        %v4706 = vpack.c.b16 %v4691, %v4690
        %v4707 = vpack.c.b16 %v4693, %v4692
        %v4708 = vpack.c.b16 %v4695, %v4694
        %v4709 = vpack.c.b16 %v4697, %v4696
        %v4710 = vpack.c.b16 %v4699, %v4698
        %v4711 = vpack.c.b16 %v4701, %v4700
        %v4712 = vpack.c.b16 %v4703, %v4702
        %v4713 = vpack.c.b16 %v4705, %v4704
        %4722 = vmatprep.subr.bf16.mxu0 0
        %4723 = vmatpush1.bf16.msra.mxu0 %v4706
        %4724 = vmatprep.subr.bf16.mxu0 0
        %4725 = vmatpush1.bf16.msra.mxu0 %v4707
        %4726 = vmatprep.subr.bf16.mxu0 0
        %4727 = vmatpush1.bf16.msra.mxu0 %v4708
        %4728 = vmatprep.subr.bf16.mxu0 0
        %4729 = vmatpush1.bf16.msra.mxu0 %v4709
        %4730 = vmatprep.subr.bf16.mxu0 0
        %4731 = vmatpush1.bf16.msra.mxu0 %v4710
        %4732 = vmatprep.subr.bf16.mxu0 0
        %4733 = vmatpush1.bf16.msra.mxu0 %v4711
        %4734 = vmatprep.subr.bf16.mxu0 0
        %4735 = vmatpush1.bf16.msra.mxu0 %v4712
        %4736 = vmatprep.subr.bf16.mxu0 0
        %4737 = vmatpush1.bf16.msra.mxu0 %v4713
        %4738 = vmatprep.subr.bf16.mxu0 0
        %4739 = vmatpush1.bf16.msra.mxu0 0
        %4740 = vmatprep.subr.bf16.mxu0 0
        %4741 = vmatpush1.bf16.msra.mxu0 0
        %4742 = vmatprep.subr.bf16.mxu0 0
        %4743 = vmatpush1.bf16.msra.mxu0 0
        %4744 = vmatprep.subr.bf16.mxu0 0
        %4745 = vmatpush1.bf16.msra.mxu0 0
        %4746 = vmatprep.subr.bf16.mxu0 0
        %4747 = vmatpush1.bf16.msra.mxu0 0
        %4748 = vmatprep.subr.bf16.mxu0 0
        %4749 = vmatpush1.bf16.msra.mxu0 0
        %4750 = vmatprep.subr.bf16.mxu0 0
        %4751 = vmatpush1.bf16.msra.mxu0 0
        %4752 = vmatprep.subr.bf16.mxu0 0
        %4753 = vmatpush1.bf16.msra.mxu0 0
        %4754 = vmatprep.mubr.bf16.mxu0 0
        %4755 = vmatmul.mubr.bf16.gmra.mrb[0].mxu0 %v4608
        %v4756 = vpop.f32.mrb[0].mxu0
        %v4757 = vadd.f32 0.0, %v4756
        %v4758 = vpop.f32.mrb[0].mxu0
        %v4759 = vpop.f32.mrb[0].mxu0
        %v4760 = vadd.f32 0.0, %v4759
        %v4761 = vpop.f32.mrb[0].mxu0
        %4762 = vmatprep.mubr.bf16.mxu0 0
        %4763 = vmatmul.mubr.bf16.gmra.mrb[0].mxu0 %v4609
        %v4764 = vpop.f32.mrb[0].mxu0
        %v4765 = vadd.f32 0.0, %v4764
        %v4766 = vpop.f32.mrb[0].mxu0
        %v4767 = vpop.f32.mrb[0].mxu0
        %v4768 = vadd.f32 0.0, %v4767
        %v4769 = vpop.f32.mrb[0].mxu0
        %4770 = vmatprep.mubr.bf16.mxu0 0
        %4771 = vmatmul.mubr.bf16.gmra.mrb[0].mxu0 %v4610
        %v4772 = vpop.f32.mrb[0].mxu0
        %v4773 = vadd.f32 0.0, %v4772
        %v4774 = vpop.f32.mrb[0].mxu0
        %v4775 = vpop.f32.mrb[0].mxu0
        %v4776 = vadd.f32 0.0, %v4775
        %v4777 = vpop.f32.mrb[0].mxu0
        %4778 = vmatprep.mubr.bf16.mxu0 0
        %4779 = vmatmul.mubr.bf16.gmra.mrb[0].mxu0 %v4611
        %v4780 = vpop.f32.mrb[0].mxu0
        %v4781 = vadd.f32 0.0, %v4780
        %v4782 = vpop.f32.mrb[0].mxu0
        %v4783 = vpop.f32.mrb[0].mxu0
        %v4784 = vadd.f32 0.0, %v4783
        %v4785 = vpop.f32.mrb[0].mxu0
        %4786 = vdwg.mxu0
        %v4803 = vunpack.c.l.b16 %v4641
        %v4804 = vunpack.c.l.b16 %v4642
        %v4805 = vunpack.c.l.b16 %v4643
        %v4806 = vunpack.c.l.b16 %v4644
        %v4807 = vunpack.c.l.b16 %v4645
        %v4808 = vunpack.c.l.b16 %v4646
        %v4809 = vunpack.c.l.b16 %v4647
        %v4810 = vunpack.c.l.b16 %v4648
        %v4811 = vunpack.c.l.b16 %v4649
        %v4812 = vunpack.c.l.b16 %v4650
        %v4813 = vunpack.c.l.b16 %v4651
        %v4814 = vunpack.c.l.b16 %v4652
        %v4815 = vunpack.c.l.b16 %v4653
        %v4816 = vunpack.c.l.b16 %v4654
        %v4817 = vunpack.c.l.b16 %v4655
        %v4818 = vunpack.c.l.b16 %v4656
        %v4819 = vpack.c.b16 %v4804, %v4803
        %v4820 = vpack.c.b16 %v4806, %v4805
        %v4821 = vpack.c.b16 %v4808, %v4807
        %v4822 = vpack.c.b16 %v4810, %v4809
        %v4823 = vpack.c.b16 %v4812, %v4811
        %v4824 = vpack.c.b16 %v4814, %v4813
        %v4825 = vpack.c.b16 %v4816, %v4815
        %v4826 = vpack.c.b16 %v4818, %v4817
        %4835 = vmatprep.subr.bf16.mxu0 0
        %4836 = vmatpush1.bf16.msra.mxu0 %v4819
        %4837 = vmatprep.subr.bf16.mxu0 0
        %4838 = vmatpush1.bf16.msra.mxu0 %v4820
        %4839 = vmatprep.subr.bf16.mxu0 0
        %4840 = vmatpush1.bf16.msra.mxu0 %v4821
        %4841 = vmatprep.subr.bf16.mxu0 0
        %4842 = vmatpush1.bf16.msra.mxu0 %v4822
        %4843 = vmatprep.subr.bf16.mxu0 0
        %4844 = vmatpush1.bf16.msra.mxu0 %v4823
        %4845 = vmatprep.subr.bf16.mxu0 0
        %4846 = vmatpush1.bf16.msra.mxu0 %v4824
        %4847 = vmatprep.subr.bf16.mxu0 0
        %4848 = vmatpush1.bf16.msra.mxu0 %v4825
        %4849 = vmatprep.subr.bf16.mxu0 0
        %4850 = vmatpush1.bf16.msra.mxu0 %v4826
        %4851 = vmatprep.subr.bf16.mxu0 0
        %4852 = vmatpush1.bf16.msra.mxu0 0
        %4853 = vmatprep.subr.bf16.mxu0 0
        %4854 = vmatpush1.bf16.msra.mxu0 0
        %4855 = vmatprep.subr.bf16.mxu0 0
        %4856 = vmatpush1.bf16.msra.mxu0 0
        %4857 = vmatprep.subr.bf16.mxu0 0
        %4858 = vmatpush1.bf16.msra.mxu0 0
        %4859 = vmatprep.subr.bf16.mxu0 0
        %4860 = vmatpush1.bf16.msra.mxu0 0
        %4861 = vmatprep.subr.bf16.mxu0 0
        %4862 = vmatpush1.bf16.msra.mxu0 0
        %4863 = vmatprep.subr.bf16.mxu0 0
        %4864 = vmatpush1.bf16.msra.mxu0 0
        %4865 = vmatprep.subr.bf16.mxu0 0
        %4866 = vmatpush1.bf16.msra.mxu0 0
        %4867 = vmatprep.mubr.bf16.mxu0 0
        %4868 = vmatmul.mubr.bf16.gmra.mrb[0].mxu0 %v4604
        %v4869 = vpop.f32.mrb[0].mxu0
        %v4870 = vadd.f32 %v4757, %v4869
        %v4871 = vpop.f32.mrb[0].mxu0
        %v4872 = vpop.f32.mrb[0].mxu0
        %v4873 = vadd.f32 %v4760, %v4872
        %v4874 = vpop.f32.mrb[0].mxu0
        %4875 = vmatprep.mubr.bf16.mxu0 0
        %4876 = vmatmul.mubr.bf16.gmra.mrb[0].mxu0 %v4605
        %v4877 = vpop.f32.mrb[0].mxu0
        %v4878 = vadd.f32 %v4765, %v4877
        %v4879 = vpop.f32.mrb[0].mxu0
        %v4880 = vpop.f32.mrb[0].mxu0
        %v4881 = vadd.f32 %v4768, %v4880
        %v4882 = vpop.f32.mrb[0].mxu0
        %4883 = vmatprep.mubr.bf16.mxu0 0
        %4884 = vmatmul.mubr.bf16.gmra.mrb[0].mxu0 %v4606
        %v4885 = vpop.f32.mrb[0].mxu0
        %v4886 = vadd.f32 %v4773, %v4885
        %v4887 = vpop.f32.mrb[0].mxu0
        %v4888 = vpop.f32.mrb[0].mxu0
        %v4889 = vadd.f32 %v4776, %v4888
        %v4890 = vpop.f32.mrb[0].mxu0
        %4891 = vmatprep.mubr.bf16.mxu0 0
        %4892 = vmatmul.mubr.bf16.gmra.mrb[0].mxu0 %v4607
        %v4893 = vpop.f32.mrb[0].mxu0
        %v4894 = vadd.f32 %v4781, %v4893
        %v4895 = vpop.f32.mrb[0].mxu0
        %v4896 = vpop.f32.mrb[0].mxu0
        %v4897 = vadd.f32 %v4784, %v4896
        %v4898 = vpop.f32.mrb[0].mxu0
        %4899 = vdwg.mxu0
        %s4900 = scalar_lea.vmem %s1, 1216
        %v4901 = vld [vmem:[%s4900] sm:$0xf]
        %v4902 = vld [vmem:[%s4900 + $0x4] sm:$0xf]
        %v4903 = vld [vmem:[%s4900 + $0x8] sm:$0xf]
        %v4904 = vld [vmem:[%s4900 + $0xc] sm:$0xf]
        %v4905 = vld [vmem:[%s4900 + $0x10] sm:$0xf]
        %v4906 = vld [vmem:[%s4900 + $0x14] sm:$0xf]
        %v4907 = vld [vmem:[%s4900 + $0x18] sm:$0xf]
        %v4908 = vld [vmem:[%s4900 + $0x1c] sm:$0xf]
        %v4909 = vld [vmem:[%s4900 + $0x20] sm:$0xf]
        %v4910 = vld [vmem:[%s4900 + $0x24] sm:$0xf]
        %v4911 = vld [vmem:[%s4900 + $0x28] sm:$0xf]
        %v4912 = vld [vmem:[%s4900 + $0x2c] sm:$0xf]
        %v4913 = vld [vmem:[%s4900 + $0x30] sm:$0xf]
        %v4914 = vld [vmem:[%s4900 + $0x34] sm:$0xf]
        %v4915 = vld [vmem:[%s4900 + $0x38] sm:$0xf]
        %v4916 = vld [vmem:[%s4900 + $0x3c] sm:$0xf]
        %v4933 = vunpack.c.l.b16 %v4901
        %v4934 = vunpack.c.l.b16 %v4902
        %v4935 = vunpack.c.l.b16 %v4903
        %v4936 = vunpack.c.l.b16 %v4904
        %v4937 = vunpack.c.l.b16 %v4905
        %v4938 = vunpack.c.l.b16 %v4906
        %v4939 = vunpack.c.l.b16 %v4907
        %v4940 = vunpack.c.l.b16 %v4908
        %v4941 = vunpack.c.l.b16 %v4909
        %v4942 = vunpack.c.l.b16 %v4910
        %v4943 = vunpack.c.l.b16 %v4911
        %v4944 = vunpack.c.l.b16 %v4912
        %v4945 = vunpack.c.l.b16 %v4913
        %v4946 = vunpack.c.l.b16 %v4914
        %v4947 = vunpack.c.l.b16 %v4915
        %v4948 = vunpack.c.l.b16 %v4916
        %v4949 = vpack.c.b16 %v4934, %v4933
        %v4950 = vpack.c.b16 %v4936, %v4935
        %v4951 = vpack.c.b16 %v4938, %v4937
        %v4952 = vpack.c.b16 %v4940, %v4939
        %v4953 = vpack.c.b16 %v4942, %v4941
        %v4954 = vpack.c.b16 %v4944, %v4943
        %v4955 = vpack.c.b16 %v4946, %v4945
        %v4956 = vpack.c.b16 %v4948, %v4947
        %4965 = vmatprep.subr.bf16.mxu0 0
        %4966 = vmatpush1.bf16.msra.mxu0 %v4949
        %4967 = vmatprep.subr.bf16.mxu0 0
        %4968 = vmatpush1.bf16.msra.mxu0 %v4950
        %4969 = vmatprep.subr.bf16.mxu0 0
        %4970 = vmatpush1.bf16.msra.mxu0 %v4951
        %4971 = vmatprep.subr.bf16.mxu0 0
        %4972 = vmatpush1.bf16.msra.mxu0 %v4952
        %4973 = vmatprep.subr.bf16.mxu0 0
        %4974 = vmatpush1.bf16.msra.mxu0 %v4953
        %4975 = vmatprep.subr.bf16.mxu0 0
        %4976 = vmatpush1.bf16.msra.mxu0 %v4954
        %4977 = vmatprep.subr.bf16.mxu0 0
        %4978 = vmatpush1.bf16.msra.mxu0 %v4955
        %4979 = vmatprep.subr.bf16.mxu0 0
        %4980 = vmatpush1.bf16.msra.mxu0 %v4956
        %4981 = vmatprep.subr.bf16.mxu0 0
        %4982 = vmatpush1.bf16.msra.mxu0 0
        %4983 = vmatprep.subr.bf16.mxu0 0
        %4984 = vmatpush1.bf16.msra.mxu0 0
        %4985 = vmatprep.subr.bf16.mxu0 0
        %4986 = vmatpush1.bf16.msra.mxu0 0
        %4987 = vmatprep.subr.bf16.mxu0 0
        %4988 = vmatpush1.bf16.msra.mxu0 0
        %4989 = vmatprep.subr.bf16.mxu0 0
        %4990 = vmatpush1.bf16.msra.mxu0 0
        %4991 = vmatprep.subr.bf16.mxu0 0
        %4992 = vmatpush1.bf16.msra.mxu0 0
        %4993 = vmatprep.subr.bf16.mxu0 0
        %4994 = vmatpush1.bf16.msra.mxu0 0
        %4995 = vmatprep.subr.bf16.mxu0 0
        %4996 = vmatpush1.bf16.msra.mxu0 0
        %4997 = vmatprep.mubr.bf16.mxu0 0
        %4998 = vmatmul.mubr.bf16.gmra.mrb[0].mxu0 %v4636
        %v4999 = vpop.f32.mrb[0].mxu0
        %v5000 = vadd.f32 0.0, %v4999
        %v5001 = vpop.f32.mrb[0].mxu0
        %v5002 = vpop.f32.mrb[0].mxu0
        %v5003 = vadd.f32 0.0, %v5002
        %v5004 = vpop.f32.mrb[0].mxu0
        %5005 = vmatprep.mubr.bf16.mxu0 0
        %5006 = vmatmul.mubr.bf16.gmra.mrb[0].mxu0 %v4637
        %v5007 = vpop.f32.mrb[0].mxu0
        %v5008 = vadd.f32 0.0, %v5007
        %v5009 = vpop.f32.mrb[0].mxu0
        %v5010 = vpop.f32.mrb[0].mxu0
        %v5011 = vadd.f32 0.0, %v5010
        %v5012 = vpop.f32.mrb[0].mxu0
        %5013 = vmatprep.mubr.bf16.mxu0 0
        %5014 = vmatmul.mubr.bf16.gmra.mrb[0].mxu0 %v4638
        %v5015 = vpop.f32.mrb[0].mxu0
        %v5016 = vadd.f32 0.0, %v5015
        %v5017 = vpop.f32.mrb[0].mxu0
        %v5018 = vpop.f32.mrb[0].mxu0
        %v5019 = vadd.f32 0.0, %v5018
        %v5020 = vpop.f32.mrb[0].mxu0
        %5021 = vmatprep.mubr.bf16.mxu0 0
        %5022 = vmatmul.mubr.bf16.gmra.mrb[0].mxu0 %v4639
        %v5023 = vpop.f32.mrb[0].mxu0
        %v5024 = vadd.f32 0.0, %v5023
        %v5025 = vpop.f32.mrb[0].mxu0
        %v5026 = vpop.f32.mrb[0].mxu0
        %v5027 = vadd.f32 0.0, %v5026
        %v5028 = vpop.f32.mrb[0].mxu0
        %5029 = vdwg.mxu0
        %v5030 = vadd.f32 %v4870, %v5000
        %v5031 = vadd.f32 %v4873, %v5003
        %v5032 = vadd.f32 %v4878, %v5008
        %v5033 = vadd.f32 %v4881, %v5011
        %v5034 = vadd.f32 %v4886, %v5016
        %v5035 = vadd.f32 %v4889, %v5019
        %v5036 = vadd.f32 %v4894, %v5024
        %v5037 = vadd.f32 %v4897, %v5027
        %v5038 = vld [vmem:[%s3 + $0x7] sm:$0x1]
        %v5039 = vlaneseq
        %v5040 = vshrl.u32 %v5039, 7
        %v5041 = vsub.s32 0, %v5040
        %v5042 = vrot.slane %v5038, %v5041
        %v5043 = vadd.f32 %v5030, %v5042
        %v5044 = vadd.f32 %v5031, %v5042
        %v5045 = vadd.f32 %v5032, %v5042
        %v5046 = vadd.f32 %v5033, %v5042
        %v5047 = vadd.f32 %v5034, %v5042
        %v5048 = vadd.f32 %v5035, %v5042
        %v5049 = vadd.f32 %v5036, %v5042
        %v5050 = vadd.f32 %v5037, %v5042
        %v5051 = vld [vmem:[%s3 + $0x6] sm:$0x1]
        %v5052 = vlaneseq
        %v5053 = vshrl.u32 %v5052, 7
        %v5054 = vsub.s32 0, %v5053
        %v5055 = vrot.slane %v5051, %v5054
        %v5056 = vadd.f32 %v4523, %v5055
        %v5057 = vadd.f32 %v4527, %v5055
        %v5058 = vadd.f32 %v4533, %v5055
        %v5059 = vadd.f32 %v4537, %v5055
        %v5060 = vadd.f32 %v4543, %v5055
        %v5061 = vadd.f32 %v4547, %v5055
        %v5062 = vadd.f32 %v4553, %v5055
        %v5063 = vadd.f32 %v4557, %v5055
        %v5064 = vadd.f32 %v5043, %v5056
        %v5065 = vadd.f32 %v5044, %v5057
        %v5066 = vadd.f32 %v5045, %v5058
        %v5067 = vadd.f32 %v5046, %v5059
        %v5068 = vadd.f32 %v5047, %v5060
        %v5069 = vadd.f32 %v5048, %v5061
        %v5070 = vadd.f32 %v5049, %v5062
        %v5071 = vadd.f32 %v5050, %v5063
        %v5072 = vmax.f32 %v5064, 0.0
        %v5073 = vmax.f32 %v5065, 0.0
        %v5074 = vmax.f32 %v5066, 0.0
        %v5075 = vmax.f32 %v5067, 0.0
        %v5076 = vmax.f32 %v5068, 0.0
        %v5077 = vmax.f32 %v5069, 0.0
        %v5078 = vmax.f32 %v5070, 0.0
        %v5079 = vmax.f32 %v5071, 0.0
        %v5080 = vrot.slane %v5072, 7
        %v5081 = vrot.slane %v5073, 7
        %v5082 = vrot.slane %v5074, 7
        %v5083 = vrot.slane %v5075, 7
        %v5084 = vrot.slane %v5076, 7
        %v5085 = vrot.slane %v5077, 7
        %v5086 = vrot.slane %v5078, 7
        %v5087 = vrot.slane %v5079, 7
        %v5088 = vsel %vm449, %v5086, %v5087
        %v5089 = vsel %vm449, %v5085, %v5086
        %v5090 = vsel %vm449, %v5084, %v5085
        %v5091 = vsel %vm449, %v5083, %v5084
        %v5092 = vsel %vm449, %v5082, %v5083
        %v5093 = vsel %vm449, %v5081, %v5082
        %v5094 = vsel %vm449, %v5080, %v5081
        %v5095 = vsel %vm449, %v5087, %v5080
        %v5096 = vmul.f32 %v5095, %v252
        %v5097 = vmul.f32 %v5094, %v253
        %v5098 = vmul.f32 %v5093, %v254
        %v5099 = vmul.f32 %v5092, %v255
        %v5100 = vmul.f32 %v5091, %v256
        %v5101 = vmul.f32 %v5090, %v257
        %v5102 = vmul.f32 %v5089, %v258
        %v5103 = vmul.f32 %v5088, %v259
        %v5104 = vpack.c.bf16 %v5097, %v5096
        %v5105 = vpack.c.bf16 %v5099, %v5098
        %v5106 = vpack.c.bf16 %v5101, %v5100
        %v5107 = vpack.c.bf16 %v5103, %v5102
        %v5108 = vpack.c.bf16 %v5073, %v5072
        %v5109 = vpack.c.bf16 %v5075, %v5074
        %v5110 = vpack.c.bf16 %v5077, %v5076
        %v5111 = vpack.c.bf16 %v5079, %v5078
        %v5112 = vrot.slane %v5072, 1
        %v5113 = vrot.slane %v5073, 1
        %v5114 = vrot.slane %v5074, 1
        %v5115 = vrot.slane %v5075, 1
        %v5116 = vrot.slane %v5076, 1
        %v5117 = vrot.slane %v5077, 1
        %v5118 = vrot.slane %v5078, 1
        %v5119 = vrot.slane %v5079, 1
        %v5120 = vsel %vm506, %v5118, %v5119
        %v5121 = vsel %vm506, %v5117, %v5118
        %v5122 = vsel %vm506, %v5116, %v5117
        %v5123 = vsel %vm506, %v5115, %v5116
        %v5124 = vsel %vm506, %v5114, %v5115
        %v5125 = vsel %vm506, %v5113, %v5114
        %v5126 = vsel %vm506, %v5112, %v5113
        %v5127 = vsel %vm506, %v5119, %v5112
        %v5128 = vmul.f32 %v5126, %v268
        %v5129 = vmul.f32 %v5125, %v269
        %v5130 = vmul.f32 %v5124, %v270
        %v5131 = vmul.f32 %v5123, %v271
        %v5132 = vmul.f32 %v5122, %v272
        %v5133 = vmul.f32 %v5121, %v273
        %v5134 = vmul.f32 %v5120, %v274
        %v5135 = vmul.f32 %v5127, %v275
        %v5136 = vpack.c.bf16 %v5129, %v5128
        %v5137 = vpack.c.bf16 %v5131, %v5130
        %v5138 = vpack.c.bf16 %v5133, %v5132
        %v5139 = vpack.c.bf16 %v5135, %v5134
        %s5140 = scalar_lea.vmem %s1, 1280
        %v5141 = vld [vmem:[%s5140] sm:$0xf]
        %v5142 = vld [vmem:[%s5140 + $0x4] sm:$0xf]
        %v5143 = vld [vmem:[%s5140 + $0x8] sm:$0xf]
        %v5144 = vld [vmem:[%s5140 + $0xc] sm:$0xf]
        %v5145 = vld [vmem:[%s5140 + $0x10] sm:$0xf]
        %v5146 = vld [vmem:[%s5140 + $0x14] sm:$0xf]
        %v5147 = vld [vmem:[%s5140 + $0x18] sm:$0xf]
        %v5148 = vld [vmem:[%s5140 + $0x1c] sm:$0xf]
        %v5149 = vld [vmem:[%s5140 + $0x20] sm:$0xf]
        %v5150 = vld [vmem:[%s5140 + $0x24] sm:$0xf]
        %v5151 = vld [vmem:[%s5140 + $0x28] sm:$0xf]
        %v5152 = vld [vmem:[%s5140 + $0x2c] sm:$0xf]
        %v5153 = vld [vmem:[%s5140 + $0x30] sm:$0xf]
        %v5154 = vld [vmem:[%s5140 + $0x34] sm:$0xf]
        %v5155 = vld [vmem:[%s5140 + $0x38] sm:$0xf]
        %v5156 = vld [vmem:[%s5140 + $0x3c] sm:$0xf]
        %s5157 = scalar_lea.vmem %s1, 1344
        %v5158 = vld [vmem:[%s5157] sm:$0xf]
        %v5159 = vld [vmem:[%s5157 + $0x4] sm:$0xf]
        %v5160 = vld [vmem:[%s5157 + $0x8] sm:$0xf]
        %v5161 = vld [vmem:[%s5157 + $0xc] sm:$0xf]
        %v5162 = vld [vmem:[%s5157 + $0x10] sm:$0xf]
        %v5163 = vld [vmem:[%s5157 + $0x14] sm:$0xf]
        %v5164 = vld [vmem:[%s5157 + $0x18] sm:$0xf]
        %v5165 = vld [vmem:[%s5157 + $0x1c] sm:$0xf]
        %v5166 = vld [vmem:[%s5157 + $0x20] sm:$0xf]
        %v5167 = vld [vmem:[%s5157 + $0x24] sm:$0xf]
        %v5168 = vld [vmem:[%s5157 + $0x28] sm:$0xf]
        %v5169 = vld [vmem:[%s5157 + $0x2c] sm:$0xf]
        %v5170 = vld [vmem:[%s5157 + $0x30] sm:$0xf]
        %v5171 = vld [vmem:[%s5157 + $0x34] sm:$0xf]
        %v5172 = vld [vmem:[%s5157 + $0x38] sm:$0xf]
        %v5173 = vld [vmem:[%s5157 + $0x3c] sm:$0xf]
        %v5190 = vunpack.c.l.b16 %v5158
        %v5191 = vunpack.c.l.b16 %v5159
        %v5192 = vunpack.c.l.b16 %v5160
        %v5193 = vunpack.c.l.b16 %v5161
        %v5194 = vunpack.c.l.b16 %v5162
        %v5195 = vunpack.c.l.b16 %v5163
        %v5196 = vunpack.c.l.b16 %v5164
        %v5197 = vunpack.c.l.b16 %v5165
        %v5198 = vunpack.c.l.b16 %v5166
        %v5199 = vunpack.c.l.b16 %v5167
        %v5200 = vunpack.c.l.b16 %v5168
        %v5201 = vunpack.c.l.b16 %v5169
        %v5202 = vunpack.c.l.b16 %v5170
        %v5203 = vunpack.c.l.b16 %v5171
        %v5204 = vunpack.c.l.b16 %v5172
        %v5205 = vunpack.c.l.b16 %v5173
        %v5206 = vpack.c.b16 %v5191, %v5190
        %v5207 = vpack.c.b16 %v5193, %v5192
        %v5208 = vpack.c.b16 %v5195, %v5194
        %v5209 = vpack.c.b16 %v5197, %v5196
        %v5210 = vpack.c.b16 %v5199, %v5198
        %v5211 = vpack.c.b16 %v5201, %v5200
        %v5212 = vpack.c.b16 %v5203, %v5202
        %v5213 = vpack.c.b16 %v5205, %v5204
        %5222 = vmatprep.subr.bf16.mxu0 0
        %5223 = vmatpush1.bf16.msra.mxu0 %v5206
        %5224 = vmatprep.subr.bf16.mxu0 0
        %5225 = vmatpush1.bf16.msra.mxu0 %v5207
        %5226 = vmatprep.subr.bf16.mxu0 0
        %5227 = vmatpush1.bf16.msra.mxu0 %v5208
        %5228 = vmatprep.subr.bf16.mxu0 0
        %5229 = vmatpush1.bf16.msra.mxu0 %v5209
        %5230 = vmatprep.subr.bf16.mxu0 0
        %5231 = vmatpush1.bf16.msra.mxu0 %v5210
        %5232 = vmatprep.subr.bf16.mxu0 0
        %5233 = vmatpush1.bf16.msra.mxu0 %v5211
        %5234 = vmatprep.subr.bf16.mxu0 0
        %5235 = vmatpush1.bf16.msra.mxu0 %v5212
        %5236 = vmatprep.subr.bf16.mxu0 0
        %5237 = vmatpush1.bf16.msra.mxu0 %v5213
        %5238 = vmatprep.subr.bf16.mxu0 0
        %5239 = vmatpush1.bf16.msra.mxu0 0
        %5240 = vmatprep.subr.bf16.mxu0 0
        %5241 = vmatpush1.bf16.msra.mxu0 0
        %5242 = vmatprep.subr.bf16.mxu0 0
        %5243 = vmatpush1.bf16.msra.mxu0 0
        %5244 = vmatprep.subr.bf16.mxu0 0
        %5245 = vmatpush1.bf16.msra.mxu0 0
        %5246 = vmatprep.subr.bf16.mxu0 0
        %5247 = vmatpush1.bf16.msra.mxu0 0
        %5248 = vmatprep.subr.bf16.mxu0 0
        %5249 = vmatpush1.bf16.msra.mxu0 0
        %5250 = vmatprep.subr.bf16.mxu0 0
        %5251 = vmatpush1.bf16.msra.mxu0 0
        %5252 = vmatprep.subr.bf16.mxu0 0
        %5253 = vmatpush1.bf16.msra.mxu0 0
        %5254 = vmatprep.mubr.bf16.mxu0 0
        %5255 = vmatmul.mubr.bf16.gmra.mrb[0].mxu0 %v5108
        %v5256 = vpop.f32.mrb[0].mxu0
        %v5257 = vadd.f32 0.0, %v5256
        %v5258 = vpop.f32.mrb[0].mxu0
        %v5259 = vpop.f32.mrb[0].mxu0
        %v5260 = vadd.f32 0.0, %v5259
        %v5261 = vpop.f32.mrb[0].mxu0
        %5262 = vmatprep.mubr.bf16.mxu0 0
        %5263 = vmatmul.mubr.bf16.gmra.mrb[0].mxu0 %v5109
        %v5264 = vpop.f32.mrb[0].mxu0
        %v5265 = vadd.f32 0.0, %v5264
        %v5266 = vpop.f32.mrb[0].mxu0
        %v5267 = vpop.f32.mrb[0].mxu0
        %v5268 = vadd.f32 0.0, %v5267
        %v5269 = vpop.f32.mrb[0].mxu0
        %5270 = vmatprep.mubr.bf16.mxu0 0
        %5271 = vmatmul.mubr.bf16.gmra.mrb[0].mxu0 %v5110
        %v5272 = vpop.f32.mrb[0].mxu0
        %v5273 = vadd.f32 0.0, %v5272
        %v5274 = vpop.f32.mrb[0].mxu0
        %v5275 = vpop.f32.mrb[0].mxu0
        %v5276 = vadd.f32 0.0, %v5275
        %v5277 = vpop.f32.mrb[0].mxu0
        %5278 = vmatprep.mubr.bf16.mxu0 0
        %5279 = vmatmul.mubr.bf16.gmra.mrb[0].mxu0 %v5111
        %v5280 = vpop.f32.mrb[0].mxu0
        %v5281 = vadd.f32 0.0, %v5280
        %v5282 = vpop.f32.mrb[0].mxu0
        %v5283 = vpop.f32.mrb[0].mxu0
        %v5284 = vadd.f32 0.0, %v5283
        %v5285 = vpop.f32.mrb[0].mxu0
        %5286 = vdwg.mxu0
        %v5303 = vunpack.c.l.b16 %v5141
        %v5304 = vunpack.c.l.b16 %v5142
        %v5305 = vunpack.c.l.b16 %v5143
        %v5306 = vunpack.c.l.b16 %v5144
        %v5307 = vunpack.c.l.b16 %v5145
        %v5308 = vunpack.c.l.b16 %v5146
        %v5309 = vunpack.c.l.b16 %v5147
        %v5310 = vunpack.c.l.b16 %v5148
        %v5311 = vunpack.c.l.b16 %v5149
        %v5312 = vunpack.c.l.b16 %v5150
        %v5313 = vunpack.c.l.b16 %v5151
        %v5314 = vunpack.c.l.b16 %v5152
        %v5315 = vunpack.c.l.b16 %v5153
        %v5316 = vunpack.c.l.b16 %v5154
        %v5317 = vunpack.c.l.b16 %v5155
        %v5318 = vunpack.c.l.b16 %v5156
        %v5319 = vpack.c.b16 %v5304, %v5303
        %v5320 = vpack.c.b16 %v5306, %v5305
        %v5321 = vpack.c.b16 %v5308, %v5307
        %v5322 = vpack.c.b16 %v5310, %v5309
        %v5323 = vpack.c.b16 %v5312, %v5311
        %v5324 = vpack.c.b16 %v5314, %v5313
        %v5325 = vpack.c.b16 %v5316, %v5315
        %v5326 = vpack.c.b16 %v5318, %v5317
        %5335 = vmatprep.subr.bf16.mxu0 0
        %5336 = vmatpush1.bf16.msra.mxu0 %v5319
        %5337 = vmatprep.subr.bf16.mxu0 0
        %5338 = vmatpush1.bf16.msra.mxu0 %v5320
        %5339 = vmatprep.subr.bf16.mxu0 0
        %5340 = vmatpush1.bf16.msra.mxu0 %v5321
        %5341 = vmatprep.subr.bf16.mxu0 0
        %5342 = vmatpush1.bf16.msra.mxu0 %v5322
        %5343 = vmatprep.subr.bf16.mxu0 0
        %5344 = vmatpush1.bf16.msra.mxu0 %v5323
        %5345 = vmatprep.subr.bf16.mxu0 0
        %5346 = vmatpush1.bf16.msra.mxu0 %v5324
        %5347 = vmatprep.subr.bf16.mxu0 0
        %5348 = vmatpush1.bf16.msra.mxu0 %v5325
        %5349 = vmatprep.subr.bf16.mxu0 0
        %5350 = vmatpush1.bf16.msra.mxu0 %v5326
        %5351 = vmatprep.subr.bf16.mxu0 0
        %5352 = vmatpush1.bf16.msra.mxu0 0
        %5353 = vmatprep.subr.bf16.mxu0 0
        %5354 = vmatpush1.bf16.msra.mxu0 0
        %5355 = vmatprep.subr.bf16.mxu0 0
        %5356 = vmatpush1.bf16.msra.mxu0 0
        %5357 = vmatprep.subr.bf16.mxu0 0
        %5358 = vmatpush1.bf16.msra.mxu0 0
        %5359 = vmatprep.subr.bf16.mxu0 0
        %5360 = vmatpush1.bf16.msra.mxu0 0
        %5361 = vmatprep.subr.bf16.mxu0 0
        %5362 = vmatpush1.bf16.msra.mxu0 0
        %5363 = vmatprep.subr.bf16.mxu0 0
        %5364 = vmatpush1.bf16.msra.mxu0 0
        %5365 = vmatprep.subr.bf16.mxu0 0
        %5366 = vmatpush1.bf16.msra.mxu0 0
        %5367 = vmatprep.mubr.bf16.mxu0 0
        %5368 = vmatmul.mubr.bf16.gmra.mrb[0].mxu0 %v5104
        %v5369 = vpop.f32.mrb[0].mxu0
        %v5370 = vadd.f32 %v5257, %v5369
        %v5371 = vpop.f32.mrb[0].mxu0
        %v5372 = vpop.f32.mrb[0].mxu0
        %v5373 = vadd.f32 %v5260, %v5372
        %v5374 = vpop.f32.mrb[0].mxu0
        %5375 = vmatprep.mubr.bf16.mxu0 0
        %5376 = vmatmul.mubr.bf16.gmra.mrb[0].mxu0 %v5105
        %v5377 = vpop.f32.mrb[0].mxu0
        %v5378 = vadd.f32 %v5265, %v5377
        %v5379 = vpop.f32.mrb[0].mxu0
        %v5380 = vpop.f32.mrb[0].mxu0
        %v5381 = vadd.f32 %v5268, %v5380
        %v5382 = vpop.f32.mrb[0].mxu0
        %5383 = vmatprep.mubr.bf16.mxu0 0
        %5384 = vmatmul.mubr.bf16.gmra.mrb[0].mxu0 %v5106
        %v5385 = vpop.f32.mrb[0].mxu0
        %v5386 = vadd.f32 %v5273, %v5385
        %v5387 = vpop.f32.mrb[0].mxu0
        %v5388 = vpop.f32.mrb[0].mxu0
        %v5389 = vadd.f32 %v5276, %v5388
        %v5390 = vpop.f32.mrb[0].mxu0
        %5391 = vmatprep.mubr.bf16.mxu0 0
        %5392 = vmatmul.mubr.bf16.gmra.mrb[0].mxu0 %v5107
        %v5393 = vpop.f32.mrb[0].mxu0
        %v5394 = vadd.f32 %v5281, %v5393
        %v5395 = vpop.f32.mrb[0].mxu0
        %v5396 = vpop.f32.mrb[0].mxu0
        %v5397 = vadd.f32 %v5284, %v5396
        %v5398 = vpop.f32.mrb[0].mxu0
        %5399 = vdwg.mxu0
        %s5400 = scalar_lea.vmem %s1, 1408
        %v5401 = vld [vmem:[%s5400] sm:$0xf]
        %v5402 = vld [vmem:[%s5400 + $0x4] sm:$0xf]
        %v5403 = vld [vmem:[%s5400 + $0x8] sm:$0xf]
        %v5404 = vld [vmem:[%s5400 + $0xc] sm:$0xf]
        %v5405 = vld [vmem:[%s5400 + $0x10] sm:$0xf]
        %v5406 = vld [vmem:[%s5400 + $0x14] sm:$0xf]
        %v5407 = vld [vmem:[%s5400 + $0x18] sm:$0xf]
        %v5408 = vld [vmem:[%s5400 + $0x1c] sm:$0xf]
        %v5409 = vld [vmem:[%s5400 + $0x20] sm:$0xf]
        %v5410 = vld [vmem:[%s5400 + $0x24] sm:$0xf]
        %v5411 = vld [vmem:[%s5400 + $0x28] sm:$0xf]
        %v5412 = vld [vmem:[%s5400 + $0x2c] sm:$0xf]
        %v5413 = vld [vmem:[%s5400 + $0x30] sm:$0xf]
        %v5414 = vld [vmem:[%s5400 + $0x34] sm:$0xf]
        %v5415 = vld [vmem:[%s5400 + $0x38] sm:$0xf]
        %v5416 = vld [vmem:[%s5400 + $0x3c] sm:$0xf]
        %v5433 = vunpack.c.l.b16 %v5401
        %v5434 = vunpack.c.l.b16 %v5402
        %v5435 = vunpack.c.l.b16 %v5403
        %v5436 = vunpack.c.l.b16 %v5404
        %v5437 = vunpack.c.l.b16 %v5405
        %v5438 = vunpack.c.l.b16 %v5406
        %v5439 = vunpack.c.l.b16 %v5407
        %v5440 = vunpack.c.l.b16 %v5408
        %v5441 = vunpack.c.l.b16 %v5409
        %v5442 = vunpack.c.l.b16 %v5410
        %v5443 = vunpack.c.l.b16 %v5411
        %v5444 = vunpack.c.l.b16 %v5412
        %v5445 = vunpack.c.l.b16 %v5413
        %v5446 = vunpack.c.l.b16 %v5414
        %v5447 = vunpack.c.l.b16 %v5415
        %v5448 = vunpack.c.l.b16 %v5416
        %v5449 = vpack.c.b16 %v5434, %v5433
        %v5450 = vpack.c.b16 %v5436, %v5435
        %v5451 = vpack.c.b16 %v5438, %v5437
        %v5452 = vpack.c.b16 %v5440, %v5439
        %v5453 = vpack.c.b16 %v5442, %v5441
        %v5454 = vpack.c.b16 %v5444, %v5443
        %v5455 = vpack.c.b16 %v5446, %v5445
        %v5456 = vpack.c.b16 %v5448, %v5447
        %5465 = vmatprep.subr.bf16.mxu0 0
        %5466 = vmatpush1.bf16.msra.mxu0 %v5449
        %5467 = vmatprep.subr.bf16.mxu0 0
        %5468 = vmatpush1.bf16.msra.mxu0 %v5450
        %5469 = vmatprep.subr.bf16.mxu0 0
        %5470 = vmatpush1.bf16.msra.mxu0 %v5451
        %5471 = vmatprep.subr.bf16.mxu0 0
        %5472 = vmatpush1.bf16.msra.mxu0 %v5452
        %5473 = vmatprep.subr.bf16.mxu0 0
        %5474 = vmatpush1.bf16.msra.mxu0 %v5453
        %5475 = vmatprep.subr.bf16.mxu0 0
        %5476 = vmatpush1.bf16.msra.mxu0 %v5454
        %5477 = vmatprep.subr.bf16.mxu0 0
        %5478 = vmatpush1.bf16.msra.mxu0 %v5455
        %5479 = vmatprep.subr.bf16.mxu0 0
        %5480 = vmatpush1.bf16.msra.mxu0 %v5456
        %5481 = vmatprep.subr.bf16.mxu0 0
        %5482 = vmatpush1.bf16.msra.mxu0 0
        %5483 = vmatprep.subr.bf16.mxu0 0
        %5484 = vmatpush1.bf16.msra.mxu0 0
        %5485 = vmatprep.subr.bf16.mxu0 0
        %5486 = vmatpush1.bf16.msra.mxu0 0
        %5487 = vmatprep.subr.bf16.mxu0 0
        %5488 = vmatpush1.bf16.msra.mxu0 0
        %5489 = vmatprep.subr.bf16.mxu0 0
        %5490 = vmatpush1.bf16.msra.mxu0 0
        %5491 = vmatprep.subr.bf16.mxu0 0
        %5492 = vmatpush1.bf16.msra.mxu0 0
        %5493 = vmatprep.subr.bf16.mxu0 0
        %5494 = vmatpush1.bf16.msra.mxu0 0
        %5495 = vmatprep.subr.bf16.mxu0 0
        %5496 = vmatpush1.bf16.msra.mxu0 0
        %5497 = vmatprep.mubr.bf16.mxu0 0
        %5498 = vmatmul.mubr.bf16.gmra.mrb[0].mxu0 %v5136
        %v5499 = vpop.f32.mrb[0].mxu0
        %v5500 = vadd.f32 0.0, %v5499
        %v5501 = vpop.f32.mrb[0].mxu0
        %v5502 = vpop.f32.mrb[0].mxu0
        %v5503 = vadd.f32 0.0, %v5502
        %v5504 = vpop.f32.mrb[0].mxu0
        %5505 = vmatprep.mubr.bf16.mxu0 0
        %5506 = vmatmul.mubr.bf16.gmra.mrb[0].mxu0 %v5137
        %v5507 = vpop.f32.mrb[0].mxu0
        %v5508 = vadd.f32 0.0, %v5507
        %v5509 = vpop.f32.mrb[0].mxu0
        %v5510 = vpop.f32.mrb[0].mxu0
        %v5511 = vadd.f32 0.0, %v5510
        %v5512 = vpop.f32.mrb[0].mxu0
        %5513 = vmatprep.mubr.bf16.mxu0 0
        %5514 = vmatmul.mubr.bf16.gmra.mrb[0].mxu0 %v5138
        %v5515 = vpop.f32.mrb[0].mxu0
        %v5516 = vadd.f32 0.0, %v5515
        %v5517 = vpop.f32.mrb[0].mxu0
        %v5518 = vpop.f32.mrb[0].mxu0
        %v5519 = vadd.f32 0.0, %v5518
        %v5520 = vpop.f32.mrb[0].mxu0
        %5521 = vmatprep.mubr.bf16.mxu0 0
        %5522 = vmatmul.mubr.bf16.gmra.mrb[0].mxu0 %v5139
        %v5523 = vpop.f32.mrb[0].mxu0
        %v5524 = vadd.f32 0.0, %v5523
        %v5525 = vpop.f32.mrb[0].mxu0
        %v5526 = vpop.f32.mrb[0].mxu0
        %v5527 = vadd.f32 0.0, %v5526
        %v5528 = vpop.f32.mrb[0].mxu0
        %5529 = vdwg.mxu0
        %v5530 = vadd.f32 %v5370, %v5500
        %v5531 = vadd.f32 %v5373, %v5503
        %v5532 = vadd.f32 %v5378, %v5508
        %v5533 = vadd.f32 %v5381, %v5511
        %v5534 = vadd.f32 %v5386, %v5516
        %v5535 = vadd.f32 %v5389, %v5519
        %v5536 = vadd.f32 %v5394, %v5524
        %v5537 = vadd.f32 %v5397, %v5527
        %v5538 = vld [vmem:[%s3 + $0x8] sm:$0x1]
        %v5539 = vlaneseq
        %v5540 = vshrl.u32 %v5539, 7
        %v5541 = vsub.s32 0, %v5540
        %v5542 = vrot.slane %v5538, %v5541
        %v5543 = vadd.f32 %v5530, %v5542
        %v5544 = vadd.f32 %v5531, %v5542
        %v5545 = vadd.f32 %v5532, %v5542
        %v5546 = vadd.f32 %v5533, %v5542
        %v5547 = vadd.f32 %v5534, %v5542
        %v5548 = vadd.f32 %v5535, %v5542
        %v5549 = vadd.f32 %v5536, %v5542
        %v5550 = vadd.f32 %v5537, %v5542
        %v5551 = vmax.f32 %v5543, 0.0
        %v5552 = vmax.f32 %v5544, 0.0
        %v5553 = vmax.f32 %v5545, 0.0
        %v5554 = vmax.f32 %v5546, 0.0
        %v5555 = vmax.f32 %v5547, 0.0
        %v5556 = vmax.f32 %v5548, 0.0
        %v5557 = vmax.f32 %v5549, 0.0
        %v5558 = vmax.f32 %v5550, 0.0
        %v5559 = vrot.slane %v5551, 7
        %v5560 = vrot.slane %v5552, 7
        %v5561 = vrot.slane %v5553, 7
        %v5562 = vrot.slane %v5554, 7
        %v5563 = vrot.slane %v5555, 7
        %v5564 = vrot.slane %v5556, 7
        %v5565 = vrot.slane %v5557, 7
        %v5566 = vrot.slane %v5558, 7
        %v5567 = vsel %vm449, %v5565, %v5566
        %v5568 = vsel %vm449, %v5564, %v5565
        %v5569 = vsel %vm449, %v5563, %v5564
        %v5570 = vsel %vm449, %v5562, %v5563
        %v5571 = vsel %vm449, %v5561, %v5562
        %v5572 = vsel %vm449, %v5560, %v5561
        %v5573 = vsel %vm449, %v5559, %v5560
        %v5574 = vsel %vm449, %v5566, %v5559
        %v5575 = vmul.f32 %v5574, %v252
        %v5576 = vmul.f32 %v5573, %v253
        %v5577 = vmul.f32 %v5572, %v254
        %v5578 = vmul.f32 %v5571, %v255
        %v5579 = vmul.f32 %v5570, %v256
        %v5580 = vmul.f32 %v5569, %v257
        %v5581 = vmul.f32 %v5568, %v258
        %v5582 = vmul.f32 %v5567, %v259
        %v5583 = vpack.c.bf16 %v5576, %v5575
        %v5584 = vpack.c.bf16 %v5578, %v5577
        %v5585 = vpack.c.bf16 %v5580, %v5579
        %v5586 = vpack.c.bf16 %v5582, %v5581
        %v5587 = vpack.c.bf16 %v5552, %v5551
        %v5588 = vpack.c.bf16 %v5554, %v5553
        %v5589 = vpack.c.bf16 %v5556, %v5555
        %v5590 = vpack.c.bf16 %v5558, %v5557
        %v5591 = vrot.slane %v5551, 1
        %v5592 = vrot.slane %v5552, 1
        %v5593 = vrot.slane %v5553, 1
        %v5594 = vrot.slane %v5554, 1
        %v5595 = vrot.slane %v5555, 1
        %v5596 = vrot.slane %v5556, 1
        %v5597 = vrot.slane %v5557, 1
        %v5598 = vrot.slane %v5558, 1
        %v5599 = vsel %vm506, %v5597, %v5598
        %v5600 = vsel %vm506, %v5596, %v5597
        %v5601 = vsel %vm506, %v5595, %v5596
        %v5602 = vsel %vm506, %v5594, %v5595
        %v5603 = vsel %vm506, %v5593, %v5594
        %v5604 = vsel %vm506, %v5592, %v5593
        %v5605 = vsel %vm506, %v5591, %v5592
        %v5606 = vsel %vm506, %v5598, %v5591
        %v5607 = vmul.f32 %v5605, %v268
        %v5608 = vmul.f32 %v5604, %v269
        %v5609 = vmul.f32 %v5603, %v270
        %v5610 = vmul.f32 %v5602, %v271
        %v5611 = vmul.f32 %v5601, %v272
        %v5612 = vmul.f32 %v5600, %v273
        %v5613 = vmul.f32 %v5599, %v274
        %v5614 = vmul.f32 %v5606, %v275
        %v5615 = vpack.c.bf16 %v5608, %v5607
        %v5616 = vpack.c.bf16 %v5610, %v5609
        %v5617 = vpack.c.bf16 %v5612, %v5611
        %v5618 = vpack.c.bf16 %v5614, %v5613
        %s5619 = scalar_lea.vmem %s1, 1472
        %v5620 = vld [vmem:[%s5619] sm:$0xf]
        %v5621 = vld [vmem:[%s5619 + $0x4] sm:$0xf]
        %v5622 = vld [vmem:[%s5619 + $0x8] sm:$0xf]
        %v5623 = vld [vmem:[%s5619 + $0xc] sm:$0xf]
        %v5624 = vld [vmem:[%s5619 + $0x10] sm:$0xf]
        %v5625 = vld [vmem:[%s5619 + $0x14] sm:$0xf]
        %v5626 = vld [vmem:[%s5619 + $0x18] sm:$0xf]
        %v5627 = vld [vmem:[%s5619 + $0x1c] sm:$0xf]
        %v5628 = vld [vmem:[%s5619 + $0x20] sm:$0xf]
        %v5629 = vld [vmem:[%s5619 + $0x24] sm:$0xf]
        %v5630 = vld [vmem:[%s5619 + $0x28] sm:$0xf]
        %v5631 = vld [vmem:[%s5619 + $0x2c] sm:$0xf]
        %v5632 = vld [vmem:[%s5619 + $0x30] sm:$0xf]
        %v5633 = vld [vmem:[%s5619 + $0x34] sm:$0xf]
        %v5634 = vld [vmem:[%s5619 + $0x38] sm:$0xf]
        %v5635 = vld [vmem:[%s5619 + $0x3c] sm:$0xf]
        %s5636 = scalar_lea.vmem %s1, 1536
        %v5637 = vld [vmem:[%s5636] sm:$0xf]
        %v5638 = vld [vmem:[%s5636 + $0x4] sm:$0xf]
        %v5639 = vld [vmem:[%s5636 + $0x8] sm:$0xf]
        %v5640 = vld [vmem:[%s5636 + $0xc] sm:$0xf]
        %v5641 = vld [vmem:[%s5636 + $0x10] sm:$0xf]
        %v5642 = vld [vmem:[%s5636 + $0x14] sm:$0xf]
        %v5643 = vld [vmem:[%s5636 + $0x18] sm:$0xf]
        %v5644 = vld [vmem:[%s5636 + $0x1c] sm:$0xf]
        %v5645 = vld [vmem:[%s5636 + $0x20] sm:$0xf]
        %v5646 = vld [vmem:[%s5636 + $0x24] sm:$0xf]
        %v5647 = vld [vmem:[%s5636 + $0x28] sm:$0xf]
        %v5648 = vld [vmem:[%s5636 + $0x2c] sm:$0xf]
        %v5649 = vld [vmem:[%s5636 + $0x30] sm:$0xf]
        %v5650 = vld [vmem:[%s5636 + $0x34] sm:$0xf]
        %v5651 = vld [vmem:[%s5636 + $0x38] sm:$0xf]
        %v5652 = vld [vmem:[%s5636 + $0x3c] sm:$0xf]
        %v5669 = vunpack.c.l.b16 %v5637
        %v5670 = vunpack.c.l.b16 %v5638
        %v5671 = vunpack.c.l.b16 %v5639
        %v5672 = vunpack.c.l.b16 %v5640
        %v5673 = vunpack.c.l.b16 %v5641
        %v5674 = vunpack.c.l.b16 %v5642
        %v5675 = vunpack.c.l.b16 %v5643
        %v5676 = vunpack.c.l.b16 %v5644
        %v5677 = vunpack.c.l.b16 %v5645
        %v5678 = vunpack.c.l.b16 %v5646
        %v5679 = vunpack.c.l.b16 %v5647
        %v5680 = vunpack.c.l.b16 %v5648
        %v5681 = vunpack.c.l.b16 %v5649
        %v5682 = vunpack.c.l.b16 %v5650
        %v5683 = vunpack.c.l.b16 %v5651
        %v5684 = vunpack.c.l.b16 %v5652
        %v5685 = vpack.c.b16 %v5670, %v5669
        %v5686 = vpack.c.b16 %v5672, %v5671
        %v5687 = vpack.c.b16 %v5674, %v5673
        %v5688 = vpack.c.b16 %v5676, %v5675
        %v5689 = vpack.c.b16 %v5678, %v5677
        %v5690 = vpack.c.b16 %v5680, %v5679
        %v5691 = vpack.c.b16 %v5682, %v5681
        %v5692 = vpack.c.b16 %v5684, %v5683
        %5701 = vmatprep.subr.bf16.mxu0 0
        %5702 = vmatpush1.bf16.msra.mxu0 %v5685
        %5703 = vmatprep.subr.bf16.mxu0 0
        %5704 = vmatpush1.bf16.msra.mxu0 %v5686
        %5705 = vmatprep.subr.bf16.mxu0 0
        %5706 = vmatpush1.bf16.msra.mxu0 %v5687
        %5707 = vmatprep.subr.bf16.mxu0 0
        %5708 = vmatpush1.bf16.msra.mxu0 %v5688
        %5709 = vmatprep.subr.bf16.mxu0 0
        %5710 = vmatpush1.bf16.msra.mxu0 %v5689
        %5711 = vmatprep.subr.bf16.mxu0 0
        %5712 = vmatpush1.bf16.msra.mxu0 %v5690
        %5713 = vmatprep.subr.bf16.mxu0 0
        %5714 = vmatpush1.bf16.msra.mxu0 %v5691
        %5715 = vmatprep.subr.bf16.mxu0 0
        %5716 = vmatpush1.bf16.msra.mxu0 %v5692
        %5717 = vmatprep.subr.bf16.mxu0 0
        %5718 = vmatpush1.bf16.msra.mxu0 0
        %5719 = vmatprep.subr.bf16.mxu0 0
        %5720 = vmatpush1.bf16.msra.mxu0 0
        %5721 = vmatprep.subr.bf16.mxu0 0
        %5722 = vmatpush1.bf16.msra.mxu0 0
        %5723 = vmatprep.subr.bf16.mxu0 0
        %5724 = vmatpush1.bf16.msra.mxu0 0
        %5725 = vmatprep.subr.bf16.mxu0 0
        %5726 = vmatpush1.bf16.msra.mxu0 0
        %5727 = vmatprep.subr.bf16.mxu0 0
        %5728 = vmatpush1.bf16.msra.mxu0 0
        %5729 = vmatprep.subr.bf16.mxu0 0
        %5730 = vmatpush1.bf16.msra.mxu0 0
        %5731 = vmatprep.subr.bf16.mxu0 0
        %5732 = vmatpush1.bf16.msra.mxu0 0
        %5733 = vmatprep.mubr.bf16.mxu0 0
        %5734 = vmatmul.mubr.bf16.gmra.mrb[0].mxu0 %v5587
        %v5735 = vpop.f32.mrb[0].mxu0
        %v5736 = vadd.f32 0.0, %v5735
        %v5737 = vpop.f32.mrb[0].mxu0
        %v5738 = vpop.f32.mrb[0].mxu0
        %v5739 = vadd.f32 0.0, %v5738
        %v5740 = vpop.f32.mrb[0].mxu0
        %5741 = vmatprep.mubr.bf16.mxu0 0
        %5742 = vmatmul.mubr.bf16.gmra.mrb[0].mxu0 %v5588
        %v5743 = vpop.f32.mrb[0].mxu0
        %v5744 = vadd.f32 0.0, %v5743
        %v5745 = vpop.f32.mrb[0].mxu0
        %v5746 = vpop.f32.mrb[0].mxu0
        %v5747 = vadd.f32 0.0, %v5746
        %v5748 = vpop.f32.mrb[0].mxu0
        %5749 = vmatprep.mubr.bf16.mxu0 0
        %5750 = vmatmul.mubr.bf16.gmra.mrb[0].mxu0 %v5589
        %v5751 = vpop.f32.mrb[0].mxu0
        %v5752 = vadd.f32 0.0, %v5751
        %v5753 = vpop.f32.mrb[0].mxu0
        %v5754 = vpop.f32.mrb[0].mxu0
        %v5755 = vadd.f32 0.0, %v5754
        %v5756 = vpop.f32.mrb[0].mxu0
        %5757 = vmatprep.mubr.bf16.mxu0 0
        %5758 = vmatmul.mubr.bf16.gmra.mrb[0].mxu0 %v5590
        %v5759 = vpop.f32.mrb[0].mxu0
        %v5760 = vadd.f32 0.0, %v5759
        %v5761 = vpop.f32.mrb[0].mxu0
        %v5762 = vpop.f32.mrb[0].mxu0
        %v5763 = vadd.f32 0.0, %v5762
        %v5764 = vpop.f32.mrb[0].mxu0
        %5765 = vdwg.mxu0
        %v5782 = vunpack.c.l.b16 %v5620
        %v5783 = vunpack.c.l.b16 %v5621
        %v5784 = vunpack.c.l.b16 %v5622
        %v5785 = vunpack.c.l.b16 %v5623
        %v5786 = vunpack.c.l.b16 %v5624
        %v5787 = vunpack.c.l.b16 %v5625
        %v5788 = vunpack.c.l.b16 %v5626
        %v5789 = vunpack.c.l.b16 %v5627
        %v5790 = vunpack.c.l.b16 %v5628
        %v5791 = vunpack.c.l.b16 %v5629
        %v5792 = vunpack.c.l.b16 %v5630
        %v5793 = vunpack.c.l.b16 %v5631
        %v5794 = vunpack.c.l.b16 %v5632
        %v5795 = vunpack.c.l.b16 %v5633
        %v5796 = vunpack.c.l.b16 %v5634
        %v5797 = vunpack.c.l.b16 %v5635
        %v5798 = vpack.c.b16 %v5783, %v5782
        %v5799 = vpack.c.b16 %v5785, %v5784
        %v5800 = vpack.c.b16 %v5787, %v5786
        %v5801 = vpack.c.b16 %v5789, %v5788
        %v5802 = vpack.c.b16 %v5791, %v5790
        %v5803 = vpack.c.b16 %v5793, %v5792
        %v5804 = vpack.c.b16 %v5795, %v5794
        %v5805 = vpack.c.b16 %v5797, %v5796
        %5814 = vmatprep.subr.bf16.mxu0 0
        %5815 = vmatpush1.bf16.msra.mxu0 %v5798
        %5816 = vmatprep.subr.bf16.mxu0 0
        %5817 = vmatpush1.bf16.msra.mxu0 %v5799
        %5818 = vmatprep.subr.bf16.mxu0 0
        %5819 = vmatpush1.bf16.msra.mxu0 %v5800
        %5820 = vmatprep.subr.bf16.mxu0 0
        %5821 = vmatpush1.bf16.msra.mxu0 %v5801
        %5822 = vmatprep.subr.bf16.mxu0 0
        %5823 = vmatpush1.bf16.msra.mxu0 %v5802
        %5824 = vmatprep.subr.bf16.mxu0 0
        %5825 = vmatpush1.bf16.msra.mxu0 %v5803
        %5826 = vmatprep.subr.bf16.mxu0 0
        %5827 = vmatpush1.bf16.msra.mxu0 %v5804
        %5828 = vmatprep.subr.bf16.mxu0 0
        %5829 = vmatpush1.bf16.msra.mxu0 %v5805
        %5830 = vmatprep.subr.bf16.mxu0 0
        %5831 = vmatpush1.bf16.msra.mxu0 0
        %5832 = vmatprep.subr.bf16.mxu0 0
        %5833 = vmatpush1.bf16.msra.mxu0 0
        %5834 = vmatprep.subr.bf16.mxu0 0
        %5835 = vmatpush1.bf16.msra.mxu0 0
        %5836 = vmatprep.subr.bf16.mxu0 0
        %5837 = vmatpush1.bf16.msra.mxu0 0
        %5838 = vmatprep.subr.bf16.mxu0 0
        %5839 = vmatpush1.bf16.msra.mxu0 0
        %5840 = vmatprep.subr.bf16.mxu0 0
        %5841 = vmatpush1.bf16.msra.mxu0 0
        %5842 = vmatprep.subr.bf16.mxu0 0
        %5843 = vmatpush1.bf16.msra.mxu0 0
        %5844 = vmatprep.subr.bf16.mxu0 0
        %5845 = vmatpush1.bf16.msra.mxu0 0
        %5846 = vmatprep.mubr.bf16.mxu0 0
        %5847 = vmatmul.mubr.bf16.gmra.mrb[0].mxu0 %v5583
        %v5848 = vpop.f32.mrb[0].mxu0
        %v5849 = vadd.f32 %v5736, %v5848
        %v5850 = vpop.f32.mrb[0].mxu0
        %v5851 = vpop.f32.mrb[0].mxu0
        %v5852 = vadd.f32 %v5739, %v5851
        %v5853 = vpop.f32.mrb[0].mxu0
        %5854 = vmatprep.mubr.bf16.mxu0 0
        %5855 = vmatmul.mubr.bf16.gmra.mrb[0].mxu0 %v5584
        %v5856 = vpop.f32.mrb[0].mxu0
        %v5857 = vadd.f32 %v5744, %v5856
        %v5858 = vpop.f32.mrb[0].mxu0
        %v5859 = vpop.f32.mrb[0].mxu0
        %v5860 = vadd.f32 %v5747, %v5859
        %v5861 = vpop.f32.mrb[0].mxu0
        %5862 = vmatprep.mubr.bf16.mxu0 0
        %5863 = vmatmul.mubr.bf16.gmra.mrb[0].mxu0 %v5585
        %v5864 = vpop.f32.mrb[0].mxu0
        %v5865 = vadd.f32 %v5752, %v5864
        %v5866 = vpop.f32.mrb[0].mxu0
        %v5867 = vpop.f32.mrb[0].mxu0
        %v5868 = vadd.f32 %v5755, %v5867
        %v5869 = vpop.f32.mrb[0].mxu0
        %5870 = vmatprep.mubr.bf16.mxu0 0
        %5871 = vmatmul.mubr.bf16.gmra.mrb[0].mxu0 %v5586
        %v5872 = vpop.f32.mrb[0].mxu0
        %v5873 = vadd.f32 %v5760, %v5872
        %v5874 = vpop.f32.mrb[0].mxu0
        %v5875 = vpop.f32.mrb[0].mxu0
        %v5876 = vadd.f32 %v5763, %v5875
        %v5877 = vpop.f32.mrb[0].mxu0
        %5878 = vdwg.mxu0
        %s5879 = scalar_lea.vmem %s1, 1600
        %v5880 = vld [vmem:[%s5879] sm:$0xf]
        %v5881 = vld [vmem:[%s5879 + $0x4] sm:$0xf]
        %v5882 = vld [vmem:[%s5879 + $0x8] sm:$0xf]
        %v5883 = vld [vmem:[%s5879 + $0xc] sm:$0xf]
        %v5884 = vld [vmem:[%s5879 + $0x10] sm:$0xf]
        %v5885 = vld [vmem:[%s5879 + $0x14] sm:$0xf]
        %v5886 = vld [vmem:[%s5879 + $0x18] sm:$0xf]
        %v5887 = vld [vmem:[%s5879 + $0x1c] sm:$0xf]
        %v5888 = vld [vmem:[%s5879 + $0x20] sm:$0xf]
        %v5889 = vld [vmem:[%s5879 + $0x24] sm:$0xf]
        %v5890 = vld [vmem:[%s5879 + $0x28] sm:$0xf]
        %v5891 = vld [vmem:[%s5879 + $0x2c] sm:$0xf]
        %v5892 = vld [vmem:[%s5879 + $0x30] sm:$0xf]
        %v5893 = vld [vmem:[%s5879 + $0x34] sm:$0xf]
        %v5894 = vld [vmem:[%s5879 + $0x38] sm:$0xf]
        %v5895 = vld [vmem:[%s5879 + $0x3c] sm:$0xf]
        %v5912 = vunpack.c.l.b16 %v5880
        %v5913 = vunpack.c.l.b16 %v5881
        %v5914 = vunpack.c.l.b16 %v5882
        %v5915 = vunpack.c.l.b16 %v5883
        %v5916 = vunpack.c.l.b16 %v5884
        %v5917 = vunpack.c.l.b16 %v5885
        %v5918 = vunpack.c.l.b16 %v5886
        %v5919 = vunpack.c.l.b16 %v5887
        %v5920 = vunpack.c.l.b16 %v5888
        %v5921 = vunpack.c.l.b16 %v5889
        %v5922 = vunpack.c.l.b16 %v5890
        %v5923 = vunpack.c.l.b16 %v5891
        %v5924 = vunpack.c.l.b16 %v5892
        %v5925 = vunpack.c.l.b16 %v5893
        %v5926 = vunpack.c.l.b16 %v5894
        %v5927 = vunpack.c.l.b16 %v5895
        %v5928 = vpack.c.b16 %v5913, %v5912
        %v5929 = vpack.c.b16 %v5915, %v5914
        %v5930 = vpack.c.b16 %v5917, %v5916
        %v5931 = vpack.c.b16 %v5919, %v5918
        %v5932 = vpack.c.b16 %v5921, %v5920
        %v5933 = vpack.c.b16 %v5923, %v5922
        %v5934 = vpack.c.b16 %v5925, %v5924
        %v5935 = vpack.c.b16 %v5927, %v5926
        %5944 = vmatprep.subr.bf16.mxu0 0
        %5945 = vmatpush1.bf16.msra.mxu0 %v5928
        %5946 = vmatprep.subr.bf16.mxu0 0
        %5947 = vmatpush1.bf16.msra.mxu0 %v5929
        %5948 = vmatprep.subr.bf16.mxu0 0
        %5949 = vmatpush1.bf16.msra.mxu0 %v5930
        %5950 = vmatprep.subr.bf16.mxu0 0
        %5951 = vmatpush1.bf16.msra.mxu0 %v5931
        %5952 = vmatprep.subr.bf16.mxu0 0
        %5953 = vmatpush1.bf16.msra.mxu0 %v5932
        %5954 = vmatprep.subr.bf16.mxu0 0
        %5955 = vmatpush1.bf16.msra.mxu0 %v5933
        %5956 = vmatprep.subr.bf16.mxu0 0
        %5957 = vmatpush1.bf16.msra.mxu0 %v5934
        %5958 = vmatprep.subr.bf16.mxu0 0
        %5959 = vmatpush1.bf16.msra.mxu0 %v5935
        %5960 = vmatprep.subr.bf16.mxu0 0
        %5961 = vmatpush1.bf16.msra.mxu0 0
        %5962 = vmatprep.subr.bf16.mxu0 0
        %5963 = vmatpush1.bf16.msra.mxu0 0
        %5964 = vmatprep.subr.bf16.mxu0 0
        %5965 = vmatpush1.bf16.msra.mxu0 0
        %5966 = vmatprep.subr.bf16.mxu0 0
        %5967 = vmatpush1.bf16.msra.mxu0 0
        %5968 = vmatprep.subr.bf16.mxu0 0
        %5969 = vmatpush1.bf16.msra.mxu0 0
        %5970 = vmatprep.subr.bf16.mxu0 0
        %5971 = vmatpush1.bf16.msra.mxu0 0
        %5972 = vmatprep.subr.bf16.mxu0 0
        %5973 = vmatpush1.bf16.msra.mxu0 0
        %5974 = vmatprep.subr.bf16.mxu0 0
        %5975 = vmatpush1.bf16.msra.mxu0 0
        %5976 = vmatprep.mubr.bf16.mxu0 0
        %5977 = vmatmul.mubr.bf16.gmra.mrb[0].mxu0 %v5615
        %v5978 = vpop.f32.mrb[0].mxu0
        %v5979 = vadd.f32 0.0, %v5978
        %v5980 = vpop.f32.mrb[0].mxu0
        %v5981 = vpop.f32.mrb[0].mxu0
        %v5982 = vadd.f32 0.0, %v5981
        %v5983 = vpop.f32.mrb[0].mxu0
        %5984 = vmatprep.mubr.bf16.mxu0 0
        %5985 = vmatmul.mubr.bf16.gmra.mrb[0].mxu0 %v5616
        %v5986 = vpop.f32.mrb[0].mxu0
        %v5987 = vadd.f32 0.0, %v5986
        %v5988 = vpop.f32.mrb[0].mxu0
        %v5989 = vpop.f32.mrb[0].mxu0
        %v5990 = vadd.f32 0.0, %v5989
        %v5991 = vpop.f32.mrb[0].mxu0
        %5992 = vmatprep.mubr.bf16.mxu0 0
        %5993 = vmatmul.mubr.bf16.gmra.mrb[0].mxu0 %v5617
        %v5994 = vpop.f32.mrb[0].mxu0
        %v5995 = vadd.f32 0.0, %v5994
        %v5996 = vpop.f32.mrb[0].mxu0
        %v5997 = vpop.f32.mrb[0].mxu0
        %v5998 = vadd.f32 0.0, %v5997
        %v5999 = vpop.f32.mrb[0].mxu0
        %6000 = vmatprep.mubr.bf16.mxu0 0
        %6001 = vmatmul.mubr.bf16.gmra.mrb[0].mxu0 %v5618
        %v6002 = vpop.f32.mrb[0].mxu0
        %v6003 = vadd.f32 0.0, %v6002
        %v6004 = vpop.f32.mrb[0].mxu0
        %v6005 = vpop.f32.mrb[0].mxu0
        %v6006 = vadd.f32 0.0, %v6005
        %v6007 = vpop.f32.mrb[0].mxu0
        %6008 = vdwg.mxu0
        %v6009 = vadd.f32 %v5849, %v5979
        %v6010 = vadd.f32 %v5852, %v5982
        %v6011 = vadd.f32 %v5857, %v5987
        %v6012 = vadd.f32 %v5860, %v5990
        %v6013 = vadd.f32 %v5865, %v5995
        %v6014 = vadd.f32 %v5868, %v5998
        %v6015 = vadd.f32 %v5873, %v6003
        %v6016 = vadd.f32 %v5876, %v6006
        %v6017 = vld [vmem:[%s3 + $0x9] sm:$0x1]
        %v6018 = vlaneseq
        %v6019 = vshrl.u32 %v6018, 7
        %v6020 = vsub.s32 0, %v6019
        %v6021 = vrot.slane %v6017, %v6020
        %v6022 = vadd.f32 %v6009, %v6021
        %v6023 = vadd.f32 %v6010, %v6021
        %v6024 = vadd.f32 %v6011, %v6021
        %v6025 = vadd.f32 %v6012, %v6021
        %v6026 = vadd.f32 %v6013, %v6021
        %v6027 = vadd.f32 %v6014, %v6021
        %v6028 = vadd.f32 %v6015, %v6021
        %v6029 = vadd.f32 %v6016, %v6021
        %v6030 = vadd.f32 %v6022, %v5072
        %v6031 = vadd.f32 %v6023, %v5073
        %v6032 = vadd.f32 %v6024, %v5074
        %v6033 = vadd.f32 %v6025, %v5075
        %v6034 = vadd.f32 %v6026, %v5076
        %v6035 = vadd.f32 %v6027, %v5077
        %v6036 = vadd.f32 %v6028, %v5078
        %v6037 = vadd.f32 %v6029, %v5079
        %v6038 = vmax.f32 %v6030, 0.0
        %v6039 = vmax.f32 %v6031, 0.0
        %v6040 = vmax.f32 %v6032, 0.0
        %v6041 = vmax.f32 %v6033, 0.0
        %v6042 = vmax.f32 %v6034, 0.0
        %v6043 = vmax.f32 %v6035, 0.0
        %v6044 = vmax.f32 %v6036, 0.0
        %v6045 = vmax.f32 %v6037, 0.0
        %v6046 = vrot.slane %v6038, 7
        %v6047 = vrot.slane %v6039, 7
        %v6048 = vrot.slane %v6040, 7
        %v6049 = vrot.slane %v6041, 7
        %v6050 = vrot.slane %v6042, 7
        %v6051 = vrot.slane %v6043, 7
        %v6052 = vrot.slane %v6044, 7
        %v6053 = vrot.slane %v6045, 7
        %v6054 = vsel %vm449, %v6052, %v6053
        %v6055 = vsel %vm449, %v6051, %v6052
        %v6056 = vsel %vm449, %v6050, %v6051
        %v6057 = vsel %vm449, %v6049, %v6050
        %v6058 = vsel %vm449, %v6048, %v6049
        %v6059 = vsel %vm449, %v6047, %v6048
        %v6060 = vsel %vm449, %v6046, %v6047
        %v6061 = vsel %vm449, %v6053, %v6046
        %v6062 = vmul.f32 %v6061, %v252
        %v6063 = vmul.f32 %v6060, %v253
        %v6064 = vmul.f32 %v6059, %v254
        %v6065 = vmul.f32 %v6058, %v255
        %v6066 = vmul.f32 %v6057, %v256
        %v6067 = vmul.f32 %v6056, %v257
        %v6068 = vmul.f32 %v6055, %v258
        %v6069 = vmul.f32 %v6054, %v259
        %v6070 = vpack.c.bf16 %v6063, %v6062
        %v6071 = vpack.c.bf16 %v6065, %v6064
        %v6072 = vpack.c.bf16 %v6067, %v6066
        %v6073 = vpack.c.bf16 %v6069, %v6068
        %v6074 = vpack.c.bf16 %v6039, %v6038
        %v6075 = vpack.c.bf16 %v6041, %v6040
        %v6076 = vpack.c.bf16 %v6043, %v6042
        %v6077 = vpack.c.bf16 %v6045, %v6044
        %v6078 = vrot.slane %v6038, 1
        %v6079 = vrot.slane %v6039, 1
        %v6080 = vrot.slane %v6040, 1
        %v6081 = vrot.slane %v6041, 1
        %v6082 = vrot.slane %v6042, 1
        %v6083 = vrot.slane %v6043, 1
        %v6084 = vrot.slane %v6044, 1
        %v6085 = vrot.slane %v6045, 1
        %v6086 = vsel %vm506, %v6084, %v6085
        %v6087 = vsel %vm506, %v6083, %v6084
        %v6088 = vsel %vm506, %v6082, %v6083
        %v6089 = vsel %vm506, %v6081, %v6082
        %v6090 = vsel %vm506, %v6080, %v6081
        %v6091 = vsel %vm506, %v6079, %v6080
        %v6092 = vsel %vm506, %v6078, %v6079
        %v6093 = vsel %vm506, %v6085, %v6078
        %v6094 = vmul.f32 %v6092, %v268
        %v6095 = vmul.f32 %v6091, %v269
        %v6096 = vmul.f32 %v6090, %v270
        %v6097 = vmul.f32 %v6089, %v271
        %v6098 = vmul.f32 %v6088, %v272
        %v6099 = vmul.f32 %v6087, %v273
        %v6100 = vmul.f32 %v6086, %v274
        %v6101 = vmul.f32 %v6093, %v275
        %v6102 = vpack.c.bf16 %v6095, %v6094
        %v6103 = vpack.c.bf16 %v6097, %v6096
        %v6104 = vpack.c.bf16 %v6099, %v6098
        %v6105 = vpack.c.bf16 %v6101, %v6100
        %s6106 = scalar_lea.vmem %s2, 128
        %v6107 = vld [vmem:[%s6106] sm:$0xff]
        %v6108 = vld [vmem:[%s6106 + $0x8] sm:$0xff]
        %v6109 = vld [vmem:[%s6106 + $0x10] sm:$0xff]
        %v6110 = vld [vmem:[%s6106 + $0x18] sm:$0xff]
        %v6111 = vld [vmem:[%s6106 + $0x20] sm:$0xff]
        %v6112 = vld [vmem:[%s6106 + $0x28] sm:$0xff]
        %v6113 = vld [vmem:[%s6106 + $0x30] sm:$0xff]
        %v6114 = vld [vmem:[%s6106 + $0x38] sm:$0xff]
        %v6115 = vld [vmem:[%s6106 + $0x40] sm:$0xff]
        %v6116 = vld [vmem:[%s6106 + $0x48] sm:$0xff]
        %v6117 = vld [vmem:[%s6106 + $0x50] sm:$0xff]
        %v6118 = vld [vmem:[%s6106 + $0x58] sm:$0xff]
        %v6119 = vld [vmem:[%s6106 + $0x60] sm:$0xff]
        %v6120 = vld [vmem:[%s6106 + $0x68] sm:$0xff]
        %v6121 = vld [vmem:[%s6106 + $0x70] sm:$0xff]
        %v6122 = vld [vmem:[%s6106 + $0x78] sm:$0xff]
        %v6139 = vunpack.c.l.b16 %v6107
        %v6140 = vunpack.c.h.b16 %v6107
        %v6141 = vunpack.c.l.b16 %v6108
        %v6142 = vunpack.c.h.b16 %v6108
        %v6143 = vunpack.c.l.b16 %v6109
        %v6144 = vunpack.c.h.b16 %v6109
        %v6145 = vunpack.c.l.b16 %v6110
        %v6146 = vunpack.c.h.b16 %v6110
        %v6147 = vunpack.c.l.b16 %v6111
        %v6148 = vunpack.c.h.b16 %v6111
        %v6149 = vunpack.c.l.b16 %v6112
        %v6150 = vunpack.c.h.b16 %v6112
        %v6151 = vunpack.c.l.b16 %v6113
        %v6152 = vunpack.c.h.b16 %v6113
        %v6153 = vunpack.c.l.b16 %v6114
        %v6154 = vunpack.c.h.b16 %v6114
        %v6155 = vunpack.c.l.b16 %v6115
        %v6156 = vunpack.c.h.b16 %v6115
        %v6157 = vunpack.c.l.b16 %v6116
        %v6158 = vunpack.c.h.b16 %v6116
        %v6159 = vunpack.c.l.b16 %v6117
        %v6160 = vunpack.c.h.b16 %v6117
        %v6161 = vunpack.c.l.b16 %v6118
        %v6162 = vunpack.c.h.b16 %v6118
        %v6163 = vunpack.c.l.b16 %v6119
        %v6164 = vunpack.c.h.b16 %v6119
        %v6165 = vunpack.c.l.b16 %v6120
        %v6166 = vunpack.c.h.b16 %v6120
        %v6167 = vunpack.c.l.b16 %v6121
        %v6168 = vunpack.c.h.b16 %v6121
        %v6169 = vunpack.c.l.b16 %v6122
        %v6170 = vunpack.c.h.b16 %v6122
        %v6171 = vpack.c.b16 %v6141, %v6139
        %v6172 = vpack.c.b16 %v6142, %v6140
        %v6173 = vpack.c.b16 %v6145, %v6143
        %v6174 = vpack.c.b16 %v6146, %v6144
        %v6175 = vpack.c.b16 %v6149, %v6147
        %v6176 = vpack.c.b16 %v6150, %v6148
        %v6177 = vpack.c.b16 %v6153, %v6151
        %v6178 = vpack.c.b16 %v6154, %v6152
        %v6179 = vpack.c.b16 %v6157, %v6155
        %v6180 = vpack.c.b16 %v6158, %v6156
        %v6181 = vpack.c.b16 %v6161, %v6159
        %v6182 = vpack.c.b16 %v6162, %v6160
        %v6183 = vpack.c.b16 %v6165, %v6163
        %v6184 = vpack.c.b16 %v6166, %v6164
        %v6185 = vpack.c.b16 %v6169, %v6167
        %v6186 = vpack.c.b16 %v6170, %v6168
        %6203 = vmatprep.subr.bf16.mxu0 %v6172
        %6204 = vmatpush1.bf16.msra.mxu0 %v6171
        %6205 = vmatprep.subr.bf16.mxu0 %v6174
        %6206 = vmatpush1.bf16.msra.mxu0 %v6173
        %6207 = vmatprep.subr.bf16.mxu0 %v6176
        %6208 = vmatpush1.bf16.msra.mxu0 %v6175
        %6209 = vmatprep.subr.bf16.mxu0 %v6178
        %6210 = vmatpush1.bf16.msra.mxu0 %v6177
        %6211 = vmatprep.subr.bf16.mxu0 %v6180
        %6212 = vmatpush1.bf16.msra.mxu0 %v6179
        %6213 = vmatprep.subr.bf16.mxu0 %v6182
        %6214 = vmatpush1.bf16.msra.mxu0 %v6181
        %6215 = vmatprep.subr.bf16.mxu0 %v6184
        %6216 = vmatpush1.bf16.msra.mxu0 %v6183
        %6217 = vmatprep.subr.bf16.mxu0 %v6186
        %6218 = vmatpush1.bf16.msra.mxu0 %v6185
        %6219 = vmatprep.subr.bf16.mxu0 0
        %6220 = vmatpush1.bf16.msra.mxu0 0
        %6221 = vmatprep.subr.bf16.mxu0 0
        %6222 = vmatpush1.bf16.msra.mxu0 0
        %6223 = vmatprep.subr.bf16.mxu0 0
        %6224 = vmatpush1.bf16.msra.mxu0 0
        %6225 = vmatprep.subr.bf16.mxu0 0
        %6226 = vmatpush1.bf16.msra.mxu0 0
        %6227 = vmatprep.subr.bf16.mxu0 0
        %6228 = vmatpush1.bf16.msra.mxu0 0
        %6229 = vmatprep.subr.bf16.mxu0 0
        %6230 = vmatpush1.bf16.msra.mxu0 0
        %6231 = vmatprep.subr.bf16.mxu0 0
        %6232 = vmatpush1.bf16.msra.mxu0 0
        %6233 = vmatprep.subr.bf16.mxu0 0
        %6234 = vmatpush1.bf16.msra.mxu0 0
        %6235 = vmatprep.mubr.bf16.mxu0 0
        %6236 = vmatmul.mubr.bf16.gmra.mrb[0].mxu0 %v6074
        %v6237 = vpop.f32.mrb[0].mxu0
        %v6238 = vadd.f32 0.0, %v6237
        %v6239 = vpop.f32.mrb[0].mxu0
        %v6240 = vadd.f32 0.0, %v6239
        %v6241 = vpop.f32.mrb[0].mxu0
        %v6242 = vadd.f32 0.0, %v6241
        %v6243 = vpop.f32.mrb[0].mxu0
        %v6244 = vadd.f32 0.0, %v6243
        %6245 = vmatprep.mubr.bf16.mxu0 0
        %6246 = vmatmul.mubr.bf16.gmra.mrb[0].mxu0 %v6075
        %v6247 = vpop.f32.mrb[0].mxu0
        %v6248 = vadd.f32 0.0, %v6247
        %v6249 = vpop.f32.mrb[0].mxu0
        %v6250 = vadd.f32 0.0, %v6249
        %v6251 = vpop.f32.mrb[0].mxu0
        %v6252 = vadd.f32 0.0, %v6251
        %v6253 = vpop.f32.mrb[0].mxu0
        %v6254 = vadd.f32 0.0, %v6253
        %6255 = vmatprep.mubr.bf16.mxu0 0
        %6256 = vmatmul.mubr.bf16.gmra.mrb[0].mxu0 %v6076
        %v6257 = vpop.f32.mrb[0].mxu0
        %v6258 = vadd.f32 0.0, %v6257
        %v6259 = vpop.f32.mrb[0].mxu0
        %v6260 = vadd.f32 0.0, %v6259
        %v6261 = vpop.f32.mrb[0].mxu0
        %v6262 = vadd.f32 0.0, %v6261
        %v6263 = vpop.f32.mrb[0].mxu0
        %v6264 = vadd.f32 0.0, %v6263
        %6265 = vmatprep.mubr.bf16.mxu0 0
        %6266 = vmatmul.mubr.bf16.gmra.mrb[0].mxu0 %v6077
        %v6267 = vpop.f32.mrb[0].mxu0
        %v6268 = vadd.f32 0.0, %v6267
        %v6269 = vpop.f32.mrb[0].mxu0
        %v6270 = vadd.f32 0.0, %v6269
        %v6271 = vpop.f32.mrb[0].mxu0
        %v6272 = vadd.f32 0.0, %v6271
        %v6273 = vpop.f32.mrb[0].mxu0
        %v6274 = vadd.f32 0.0, %v6273
        %6275 = vdwg.mxu0
        %s6276 = scalar_lea.vmem %s1, 1664
        %v6277 = vld [vmem:[%s6276] sm:$0xf]
        %v6278 = vld [vmem:[%s6276 + $0x4] sm:$0xf]
        %v6279 = vld [vmem:[%s6276 + $0x8] sm:$0xf]
        %v6280 = vld [vmem:[%s6276 + $0xc] sm:$0xf]
        %v6281 = vld [vmem:[%s6276 + $0x10] sm:$0xf]
        %v6282 = vld [vmem:[%s6276 + $0x14] sm:$0xf]
        %v6283 = vld [vmem:[%s6276 + $0x18] sm:$0xf]
        %v6284 = vld [vmem:[%s6276 + $0x1c] sm:$0xf]
        %v6285 = vld [vmem:[%s6276 + $0x20] sm:$0xf]
        %v6286 = vld [vmem:[%s6276 + $0x24] sm:$0xf]
        %v6287 = vld [vmem:[%s6276 + $0x28] sm:$0xf]
        %v6288 = vld [vmem:[%s6276 + $0x2c] sm:$0xf]
        %v6289 = vld [vmem:[%s6276 + $0x30] sm:$0xf]
        %v6290 = vld [vmem:[%s6276 + $0x34] sm:$0xf]
        %v6291 = vld [vmem:[%s6276 + $0x38] sm:$0xf]
        %v6292 = vld [vmem:[%s6276 + $0x3c] sm:$0xf]
        %v6309 = vunpack.c.l.b16 %v6277
        %v6310 = vunpack.c.l.b16 %v6278
        %v6311 = vunpack.c.l.b16 %v6279
        %v6312 = vunpack.c.l.b16 %v6280
        %v6313 = vunpack.c.l.b16 %v6281
        %v6314 = vunpack.c.l.b16 %v6282
        %v6315 = vunpack.c.l.b16 %v6283
        %v6316 = vunpack.c.l.b16 %v6284
        %v6317 = vunpack.c.l.b16 %v6285
        %v6318 = vunpack.c.l.b16 %v6286
        %v6319 = vunpack.c.l.b16 %v6287
        %v6320 = vunpack.c.l.b16 %v6288
        %v6321 = vunpack.c.l.b16 %v6289
        %v6322 = vunpack.c.l.b16 %v6290
        %v6323 = vunpack.c.l.b16 %v6291
        %v6324 = vunpack.c.l.b16 %v6292
        %v6325 = vpack.c.b16 %v6310, %v6309
        %v6326 = vpack.c.b16 %v6312, %v6311
        %v6327 = vpack.c.b16 %v6314, %v6313
        %v6328 = vpack.c.b16 %v6316, %v6315
        %v6329 = vpack.c.b16 %v6318, %v6317
        %v6330 = vpack.c.b16 %v6320, %v6319
        %v6331 = vpack.c.b16 %v6322, %v6321
        %v6332 = vpack.c.b16 %v6324, %v6323
        %6341 = vmatprep.subr.bf16.mxu0 0
        %6342 = vmatpush1.bf16.msra.mxu0 %v6325
        %6343 = vmatprep.subr.bf16.mxu0 0
        %6344 = vmatpush1.bf16.msra.mxu0 %v6326
        %6345 = vmatprep.subr.bf16.mxu0 0
        %6346 = vmatpush1.bf16.msra.mxu0 %v6327
        %6347 = vmatprep.subr.bf16.mxu0 0
        %6348 = vmatpush1.bf16.msra.mxu0 %v6328
        %6349 = vmatprep.subr.bf16.mxu0 0
        %6350 = vmatpush1.bf16.msra.mxu0 %v6329
        %6351 = vmatprep.subr.bf16.mxu0 0
        %6352 = vmatpush1.bf16.msra.mxu0 %v6330
        %6353 = vmatprep.subr.bf16.mxu0 0
        %6354 = vmatpush1.bf16.msra.mxu0 %v6331
        %6355 = vmatprep.subr.bf16.mxu0 0
        %6356 = vmatpush1.bf16.msra.mxu0 %v6332
        %6357 = vmatprep.subr.bf16.mxu0 0
        %6358 = vmatpush1.bf16.msra.mxu0 0
        %6359 = vmatprep.subr.bf16.mxu0 0
        %6360 = vmatpush1.bf16.msra.mxu0 0
        %6361 = vmatprep.subr.bf16.mxu0 0
        %6362 = vmatpush1.bf16.msra.mxu0 0
        %6363 = vmatprep.subr.bf16.mxu0 0
        %6364 = vmatpush1.bf16.msra.mxu0 0
        %6365 = vmatprep.subr.bf16.mxu0 0
        %6366 = vmatpush1.bf16.msra.mxu0 0
        %6367 = vmatprep.subr.bf16.mxu0 0
        %6368 = vmatpush1.bf16.msra.mxu0 0
        %6369 = vmatprep.subr.bf16.mxu0 0
        %6370 = vmatpush1.bf16.msra.mxu0 0
        %6371 = vmatprep.subr.bf16.mxu0 0
        %6372 = vmatpush1.bf16.msra.mxu0 0
        %6373 = vmatprep.mubr.bf16.mxu0 0
        %6374 = vmatmul.mubr.bf16.gmra.mrb[0].mxu0 %v6070
        %v6375 = vpop.f32.mrb[0].mxu0
        %v6376 = vadd.f32 %v6238, %v6375
        %v6377 = vpop.f32.mrb[0].mxu0
        %v6378 = vpop.f32.mrb[0].mxu0
        %v6379 = vadd.f32 %v6242, %v6378
        %v6380 = vpop.f32.mrb[0].mxu0
        %6381 = vmatprep.mubr.bf16.mxu0 0
        %6382 = vmatmul.mubr.bf16.gmra.mrb[0].mxu0 %v6071
        %v6383 = vpop.f32.mrb[0].mxu0
        %v6384 = vadd.f32 %v6248, %v6383
        %v6385 = vpop.f32.mrb[0].mxu0
        %v6386 = vpop.f32.mrb[0].mxu0
        %v6387 = vadd.f32 %v6252, %v6386
        %v6388 = vpop.f32.mrb[0].mxu0
        %6389 = vmatprep.mubr.bf16.mxu0 0
        %6390 = vmatmul.mubr.bf16.gmra.mrb[0].mxu0 %v6072
        %v6391 = vpop.f32.mrb[0].mxu0
        %v6392 = vadd.f32 %v6258, %v6391
        %v6393 = vpop.f32.mrb[0].mxu0
        %v6394 = vpop.f32.mrb[0].mxu0
        %v6395 = vadd.f32 %v6262, %v6394
        %v6396 = vpop.f32.mrb[0].mxu0
        %6397 = vmatprep.mubr.bf16.mxu0 0
        %6398 = vmatmul.mubr.bf16.gmra.mrb[0].mxu0 %v6073
        %v6399 = vpop.f32.mrb[0].mxu0
        %v6400 = vadd.f32 %v6268, %v6399
        %v6401 = vpop.f32.mrb[0].mxu0
        %v6402 = vpop.f32.mrb[0].mxu0
        %v6403 = vadd.f32 %v6272, %v6402
        %v6404 = vpop.f32.mrb[0].mxu0
        %6405 = vdwg.mxu0
        %s6406 = scalar_lea.vmem %s1, 1728
        %v6407 = vld [vmem:[%s6406] sm:$0xf]
        %v6408 = vld [vmem:[%s6406 + $0x4] sm:$0xf]
        %v6409 = vld [vmem:[%s6406 + $0x8] sm:$0xf]
        %v6410 = vld [vmem:[%s6406 + $0xc] sm:$0xf]
        %v6411 = vld [vmem:[%s6406 + $0x10] sm:$0xf]
        %v6412 = vld [vmem:[%s6406 + $0x14] sm:$0xf]
        %v6413 = vld [vmem:[%s6406 + $0x18] sm:$0xf]
        %v6414 = vld [vmem:[%s6406 + $0x1c] sm:$0xf]
        %v6415 = vld [vmem:[%s6406 + $0x20] sm:$0xf]
        %v6416 = vld [vmem:[%s6406 + $0x24] sm:$0xf]
        %v6417 = vld [vmem:[%s6406 + $0x28] sm:$0xf]
        %v6418 = vld [vmem:[%s6406 + $0x2c] sm:$0xf]
        %v6419 = vld [vmem:[%s6406 + $0x30] sm:$0xf]
        %v6420 = vld [vmem:[%s6406 + $0x34] sm:$0xf]
        %v6421 = vld [vmem:[%s6406 + $0x38] sm:$0xf]
        %v6422 = vld [vmem:[%s6406 + $0x3c] sm:$0xf]
        %v6439 = vunpack.c.l.b16 %v6407
        %v6440 = vunpack.c.l.b16 %v6408
        %v6441 = vunpack.c.l.b16 %v6409
        %v6442 = vunpack.c.l.b16 %v6410
        %v6443 = vunpack.c.l.b16 %v6411
        %v6444 = vunpack.c.l.b16 %v6412
        %v6445 = vunpack.c.l.b16 %v6413
        %v6446 = vunpack.c.l.b16 %v6414
        %v6447 = vunpack.c.l.b16 %v6415
        %v6448 = vunpack.c.l.b16 %v6416
        %v6449 = vunpack.c.l.b16 %v6417
        %v6450 = vunpack.c.l.b16 %v6418
        %v6451 = vunpack.c.l.b16 %v6419
        %v6452 = vunpack.c.l.b16 %v6420
        %v6453 = vunpack.c.l.b16 %v6421
        %v6454 = vunpack.c.l.b16 %v6422
        %v6455 = vpack.c.b16 %v6440, %v6439
        %v6456 = vpack.c.b16 %v6442, %v6441
        %v6457 = vpack.c.b16 %v6444, %v6443
        %v6458 = vpack.c.b16 %v6446, %v6445
        %v6459 = vpack.c.b16 %v6448, %v6447
        %v6460 = vpack.c.b16 %v6450, %v6449
        %v6461 = vpack.c.b16 %v6452, %v6451
        %v6462 = vpack.c.b16 %v6454, %v6453
        %6471 = vmatprep.subr.bf16.mxu0 0
        %6472 = vmatpush1.bf16.msra.mxu0 %v6455
        %6473 = vmatprep.subr.bf16.mxu0 0
        %6474 = vmatpush1.bf16.msra.mxu0 %v6456
        %6475 = vmatprep.subr.bf16.mxu0 0
        %6476 = vmatpush1.bf16.msra.mxu0 %v6457
        %6477 = vmatprep.subr.bf16.mxu0 0
        %6478 = vmatpush1.bf16.msra.mxu0 %v6458
        %6479 = vmatprep.subr.bf16.mxu0 0
        %6480 = vmatpush1.bf16.msra.mxu0 %v6459
        %6481 = vmatprep.subr.bf16.mxu0 0
        %6482 = vmatpush1.bf16.msra.mxu0 %v6460
        %6483 = vmatprep.subr.bf16.mxu0 0
        %6484 = vmatpush1.bf16.msra.mxu0 %v6461
        %6485 = vmatprep.subr.bf16.mxu0 0
        %6486 = vmatpush1.bf16.msra.mxu0 %v6462
        %6487 = vmatprep.subr.bf16.mxu0 0
        %6488 = vmatpush1.bf16.msra.mxu0 0
        %6489 = vmatprep.subr.bf16.mxu0 0
        %6490 = vmatpush1.bf16.msra.mxu0 0
        %6491 = vmatprep.subr.bf16.mxu0 0
        %6492 = vmatpush1.bf16.msra.mxu0 0
        %6493 = vmatprep.subr.bf16.mxu0 0
        %6494 = vmatpush1.bf16.msra.mxu0 0
        %6495 = vmatprep.subr.bf16.mxu0 0
        %6496 = vmatpush1.bf16.msra.mxu0 0
        %6497 = vmatprep.subr.bf16.mxu0 0
        %6498 = vmatpush1.bf16.msra.mxu0 0
        %6499 = vmatprep.subr.bf16.mxu0 0
        %6500 = vmatpush1.bf16.msra.mxu0 0
        %6501 = vmatprep.subr.bf16.mxu0 0
        %6502 = vmatpush1.bf16.msra.mxu0 0
        %6503 = vmatprep.mubr.bf16.mxu0 0
        %6504 = vmatmul.mubr.bf16.gmra.mrb[0].mxu0 %v6102
        %v6505 = vpop.f32.mrb[0].mxu0
        %v6506 = vadd.f32 0.0, %v6505
        %v6507 = vpop.f32.mrb[0].mxu0
        %v6508 = vpop.f32.mrb[0].mxu0
        %v6509 = vadd.f32 0.0, %v6508
        %v6510 = vpop.f32.mrb[0].mxu0
        %6511 = vmatprep.mubr.bf16.mxu0 0
        %6512 = vmatmul.mubr.bf16.gmra.mrb[0].mxu0 %v6103
        %v6513 = vpop.f32.mrb[0].mxu0
        %v6514 = vadd.f32 0.0, %v6513
        %v6515 = vpop.f32.mrb[0].mxu0
        %v6516 = vpop.f32.mrb[0].mxu0
        %v6517 = vadd.f32 0.0, %v6516
        %v6518 = vpop.f32.mrb[0].mxu0
        %6519 = vmatprep.mubr.bf16.mxu0 0
        %6520 = vmatmul.mubr.bf16.gmra.mrb[0].mxu0 %v6104
        %v6521 = vpop.f32.mrb[0].mxu0
        %v6522 = vadd.f32 0.0, %v6521
        %v6523 = vpop.f32.mrb[0].mxu0
        %v6524 = vpop.f32.mrb[0].mxu0
        %v6525 = vadd.f32 0.0, %v6524
        %v6526 = vpop.f32.mrb[0].mxu0
        %6527 = vmatprep.mubr.bf16.mxu0 0
        %6528 = vmatmul.mubr.bf16.gmra.mrb[0].mxu0 %v6105
        %v6529 = vpop.f32.mrb[0].mxu0
        %v6530 = vadd.f32 0.0, %v6529
        %v6531 = vpop.f32.mrb[0].mxu0
        %v6532 = vpop.f32.mrb[0].mxu0
        %v6533 = vadd.f32 0.0, %v6532
        %v6534 = vpop.f32.mrb[0].mxu0
        %6535 = vdwg.mxu0
        %v6536 = vadd.f32 %v6376, %v6506
        %v6537 = vadd.f32 %v6379, %v6509
        %v6538 = vadd.f32 %v6384, %v6514
        %v6539 = vadd.f32 %v6387, %v6517
        %v6540 = vadd.f32 %v6392, %v6522
        %v6541 = vadd.f32 %v6395, %v6525
        %v6542 = vadd.f32 %v6400, %v6530
        %v6543 = vadd.f32 %v6403, %v6533
        %v6544 = vpack.c.bf16 %v6537, %v6536
        %v6545 = vpack.c.bf16 %v6244, %v6240
        %v6546 = vpack.c.bf16 %v6539, %v6538
        %v6547 = vpack.c.bf16 %v6254, %v6250
        %v6548 = vpack.c.bf16 %v6541, %v6540
        %v6549 = vpack.c.bf16 %v6264, %v6260
        %v6550 = vpack.c.bf16 %v6543, %v6542
        %v6551 = vpack.c.bf16 %v6274, %v6270
        %vm6552 = vcmask 523264
        %v6554 = vsel %vm6552, %v372, 0
        %v6557 = vsel %vm6552, %v379, 0
        %6559 = vmatprep.subr.bf16.mxu0 %v6545
        %6560 = vmatpush1.bf16.msra.mxu0 %v6544
        %6561 = vmatprep.subr.bf16.mxu0 %v6547
        %6562 = vmatpush1.bf16.msra.mxu0 %v6546
        %6563 = vmatprep.subr.bf16.mxu0 %v6549
        %6564 = vmatpush1.bf16.msra.mxu0 %v6548
        %6565 = vmatprep.subr.bf16.mxu0 %v6551
        %6566 = vmatpush1.bf16.msra.mxu0 %v6550
        %6567 = vmatprep.subr.bf16.mxu0 0
        %6568 = vmatpush1.bf16.msra.mxu0 0
        %6569 = vmatprep.subr.bf16.mxu0 0
        %6570 = vmatpush1.bf16.msra.mxu0 0
        %6571 = vmatprep.subr.bf16.mxu0 0
        %6572 = vmatpush1.bf16.msra.mxu0 0
        %6573 = vmatprep.subr.bf16.mxu0 0
        %6574 = vmatpush1.bf16.msra.mxu0 0
        %6575 = vmatprep.subr.bf16.mxu0 0
        %6576 = vmatpush1.bf16.msra.mxu0 0
        %6577 = vmatprep.subr.bf16.mxu0 0
        %6578 = vmatpush1.bf16.msra.mxu0 0
        %6579 = vmatprep.subr.bf16.mxu0 0
        %6580 = vmatpush1.bf16.msra.mxu0 0
        %6581 = vmatprep.subr.bf16.mxu0 0
        %6582 = vmatpush1.bf16.msra.mxu0 0
        %6583 = vmatprep.subr.bf16.mxu0 0
        %6584 = vmatpush1.bf16.msra.mxu0 0
        %6585 = vmatprep.subr.bf16.mxu0 0
        %6586 = vmatpush1.bf16.msra.mxu0 0
        %6587 = vmatprep.subr.bf16.mxu0 0
        %6588 = vmatpush1.bf16.msra.mxu0 0
        %6589 = vmatprep.subr.bf16.mxu0 0
        %6590 = vmatpush1.bf16.msra.mxu0 0
        %6591 = vmatprep.mubr.bf16.mxu0 0
        %6592 = vmatmul.mubr.bf16.gmra.mrb[0].mxu0 %v6554
        %v6593 = vpop.f32.mrb[0].mxu0
        %v6594 = vadd.f32 0.0, %v6593
        %v6595 = vpop.f32.mrb[0].mxu0
        %v6596 = vadd.f32 0.0, %v6595
        %v6597 = vpop.f32.mrb[0].mxu0
        %v6598 = vadd.f32 0.0, %v6597
        %v6599 = vpop.f32.mrb[0].mxu0
        %v6600 = vadd.f32 0.0, %v6599
        %6601 = vmatprep.mubr.bf16.mxu0 0
        %6602 = vmatmul.mubr.bf16.gmra.mrb[0].mxu0 %v6557
        %v6603 = vpop.f32.mrb[0].mxu0
        %v6604 = vadd.f32 0.0, %v6603
        %v6605 = vpop.f32.mrb[0].mxu0
        %v6606 = vadd.f32 0.0, %v6605
        %v6607 = vpop.f32.mrb[0].mxu0
        %v6608 = vadd.f32 0.0, %v6607
        %v6609 = vpop.f32.mrb[0].mxu0
        %v6610 = vadd.f32 0.0, %v6609
        %6611 = vdwg.mxu0
        %v6612 = vld [vmem:[%s3 + $0xa] sm:$0x1]
        %v6613 = vlaneseq
        %v6614 = vshrl.u32 %v6613, 7
        %v6615 = vsub.s32 0, %v6614
        %v6616 = vrot.slane %v6612, %v6615
        %v6617 = vadd.f32 %v6594, %v6616
        %v6618 = vadd.f32 %v6598, %v6616
        %v6619 = vadd.f32 %v6604, %v6616
        %v6620 = vadd.f32 %v6608, %v6616
        %v6621 = vmax.f32 %v6617, 0.0
        %v6622 = vmax.f32 %v6618, 0.0
        %v6623 = vmax.f32 %v6619, 0.0
        %v6624 = vmax.f32 %v6620, 0.0
        %v6625 = vrot.slane %v6621, 7
        %v6626 = vrot.slane %v6622, 7
        %v6627 = vrot.slane %v6623, 7
        %v6628 = vrot.slane %v6624, 7
        %v6629 = vsel %vm449, %v6627, %v6628
        %v6630 = vsel %vm449, %v6626, %v6627
        %v6631 = vsel %vm449, %v6625, %v6626
        %v6632 = vsel %vm449, %v6628, %v6625
        %v6633 = vmul.f32 %v6632, %v220
        %v6634 = vmul.f32 %v6631, %v221
        %v6635 = vmul.f32 %v6630, %v222
        %v6636 = vmul.f32 %v6629, %v223
        %v6637 = vpack.c.bf16 %v6634, %v6633
        %v6638 = vpack.c.bf16 %v6636, %v6635
        %v6639 = vpack.c.bf16 %v6622, %v6621
        %v6640 = vpack.c.bf16 %v6624, %v6623
        %v6641 = vrot.slane %v6621, 1
        %v6642 = vrot.slane %v6622, 1
        %v6643 = vrot.slane %v6623, 1
        %v6644 = vrot.slane %v6624, 1
        %v6645 = vsel %vm506, %v6643, %v6644
        %v6646 = vsel %vm506, %v6642, %v6643
        %v6647 = vsel %vm506, %v6641, %v6642
        %v6648 = vsel %vm506, %v6644, %v6641
        %v6649 = vmul.f32 %v6647, %v228
        %v6650 = vmul.f32 %v6646, %v229
        %v6651 = vmul.f32 %v6645, %v230
        %v6652 = vmul.f32 %v6648, %v231
        %v6653 = vpack.c.bf16 %v6650, %v6649
        %v6654 = vpack.c.bf16 %v6652, %v6651
        %s6655 = scalar_lea.vmem %s1, 1792
        %v6656 = vld [vmem:[%s6655] sm:$0xf]
        %v6657 = vld [vmem:[%s6655 + $0x4] sm:$0xf]
        %v6658 = vld [vmem:[%s6655 + $0x8] sm:$0xf]
        %v6659 = vld [vmem:[%s6655 + $0xc] sm:$0xf]
        %v6660 = vld [vmem:[%s6655 + $0x10] sm:$0xf]
        %v6661 = vld [vmem:[%s6655 + $0x14] sm:$0xf]
        %v6662 = vld [vmem:[%s6655 + $0x18] sm:$0xf]
        %v6663 = vld [vmem:[%s6655 + $0x1c] sm:$0xf]
        %v6664 = vld [vmem:[%s6655 + $0x20] sm:$0xf]
        %v6665 = vld [vmem:[%s6655 + $0x24] sm:$0xf]
        %v6666 = vld [vmem:[%s6655 + $0x28] sm:$0xf]
        %v6667 = vld [vmem:[%s6655 + $0x2c] sm:$0xf]
        %v6668 = vld [vmem:[%s6655 + $0x30] sm:$0xf]
        %v6669 = vld [vmem:[%s6655 + $0x34] sm:$0xf]
        %v6670 = vld [vmem:[%s6655 + $0x38] sm:$0xf]
        %v6671 = vld [vmem:[%s6655 + $0x3c] sm:$0xf]
        %s6672 = scalar_lea.vmem %s1, 1856
        %v6673 = vld [vmem:[%s6672] sm:$0xf]
        %v6674 = vld [vmem:[%s6672 + $0x4] sm:$0xf]
        %v6675 = vld [vmem:[%s6672 + $0x8] sm:$0xf]
        %v6676 = vld [vmem:[%s6672 + $0xc] sm:$0xf]
        %v6677 = vld [vmem:[%s6672 + $0x10] sm:$0xf]
        %v6678 = vld [vmem:[%s6672 + $0x14] sm:$0xf]
        %v6679 = vld [vmem:[%s6672 + $0x18] sm:$0xf]
        %v6680 = vld [vmem:[%s6672 + $0x1c] sm:$0xf]
        %v6681 = vld [vmem:[%s6672 + $0x20] sm:$0xf]
        %v6682 = vld [vmem:[%s6672 + $0x24] sm:$0xf]
        %v6683 = vld [vmem:[%s6672 + $0x28] sm:$0xf]
        %v6684 = vld [vmem:[%s6672 + $0x2c] sm:$0xf]
        %v6685 = vld [vmem:[%s6672 + $0x30] sm:$0xf]
        %v6686 = vld [vmem:[%s6672 + $0x34] sm:$0xf]
        %v6687 = vld [vmem:[%s6672 + $0x38] sm:$0xf]
        %v6688 = vld [vmem:[%s6672 + $0x3c] sm:$0xf]
        %v6705 = vunpack.c.l.b16 %v6673
        %v6706 = vunpack.c.l.b16 %v6674
        %v6707 = vunpack.c.l.b16 %v6675
        %v6708 = vunpack.c.l.b16 %v6676
        %v6709 = vunpack.c.l.b16 %v6677
        %v6710 = vunpack.c.l.b16 %v6678
        %v6711 = vunpack.c.l.b16 %v6679
        %v6712 = vunpack.c.l.b16 %v6680
        %v6713 = vunpack.c.l.b16 %v6681
        %v6714 = vunpack.c.l.b16 %v6682
        %v6715 = vunpack.c.l.b16 %v6683
        %v6716 = vunpack.c.l.b16 %v6684
        %v6717 = vunpack.c.l.b16 %v6685
        %v6718 = vunpack.c.l.b16 %v6686
        %v6719 = vunpack.c.l.b16 %v6687
        %v6720 = vunpack.c.l.b16 %v6688
        %v6721 = vpack.c.b16 %v6706, %v6705
        %v6722 = vpack.c.b16 %v6708, %v6707
        %v6723 = vpack.c.b16 %v6710, %v6709
        %v6724 = vpack.c.b16 %v6712, %v6711
        %v6725 = vpack.c.b16 %v6714, %v6713
        %v6726 = vpack.c.b16 %v6716, %v6715
        %v6727 = vpack.c.b16 %v6718, %v6717
        %v6728 = vpack.c.b16 %v6720, %v6719
        %6737 = vmatprep.subr.bf16.mxu0 0
        %6738 = vmatpush1.bf16.msra.mxu0 %v6721
        %6739 = vmatprep.subr.bf16.mxu0 0
        %6740 = vmatpush1.bf16.msra.mxu0 %v6722
        %6741 = vmatprep.subr.bf16.mxu0 0
        %6742 = vmatpush1.bf16.msra.mxu0 %v6723
        %6743 = vmatprep.subr.bf16.mxu0 0
        %6744 = vmatpush1.bf16.msra.mxu0 %v6724
        %6745 = vmatprep.subr.bf16.mxu0 0
        %6746 = vmatpush1.bf16.msra.mxu0 %v6725
        %6747 = vmatprep.subr.bf16.mxu0 0
        %6748 = vmatpush1.bf16.msra.mxu0 %v6726
        %6749 = vmatprep.subr.bf16.mxu0 0
        %6750 = vmatpush1.bf16.msra.mxu0 %v6727
        %6751 = vmatprep.subr.bf16.mxu0 0
        %6752 = vmatpush1.bf16.msra.mxu0 %v6728
        %6753 = vmatprep.subr.bf16.mxu0 0
        %6754 = vmatpush1.bf16.msra.mxu0 0
        %6755 = vmatprep.subr.bf16.mxu0 0
        %6756 = vmatpush1.bf16.msra.mxu0 0
        %6757 = vmatprep.subr.bf16.mxu0 0
        %6758 = vmatpush1.bf16.msra.mxu0 0
        %6759 = vmatprep.subr.bf16.mxu0 0
        %6760 = vmatpush1.bf16.msra.mxu0 0
        %6761 = vmatprep.subr.bf16.mxu0 0
        %6762 = vmatpush1.bf16.msra.mxu0 0
        %6763 = vmatprep.subr.bf16.mxu0 0
        %6764 = vmatpush1.bf16.msra.mxu0 0
        %6765 = vmatprep.subr.bf16.mxu0 0
        %6766 = vmatpush1.bf16.msra.mxu0 0
        %6767 = vmatprep.subr.bf16.mxu0 0
        %6768 = vmatpush1.bf16.msra.mxu0 0
        %6769 = vmatprep.mubr.bf16.mxu0 0
        %6770 = vmatmul.mubr.bf16.gmra.mrb[0].mxu0 %v6639
        %v6771 = vpop.f32.mrb[0].mxu0
        %v6772 = vadd.f32 0.0, %v6771
        %v6773 = vpop.f32.mrb[0].mxu0
        %v6774 = vpop.f32.mrb[0].mxu0
        %v6775 = vadd.f32 0.0, %v6774
        %v6776 = vpop.f32.mrb[0].mxu0
        %6777 = vmatprep.mubr.bf16.mxu0 0
        %6778 = vmatmul.mubr.bf16.gmra.mrb[0].mxu0 %v6640
        %v6779 = vpop.f32.mrb[0].mxu0
        %v6780 = vadd.f32 0.0, %v6779
        %v6781 = vpop.f32.mrb[0].mxu0
        %v6782 = vpop.f32.mrb[0].mxu0
        %v6783 = vadd.f32 0.0, %v6782
        %v6784 = vpop.f32.mrb[0].mxu0
        %6785 = vdwg.mxu0
        %v6802 = vunpack.c.l.b16 %v6656
        %v6803 = vunpack.c.l.b16 %v6657
        %v6804 = vunpack.c.l.b16 %v6658
        %v6805 = vunpack.c.l.b16 %v6659
        %v6806 = vunpack.c.l.b16 %v6660
        %v6807 = vunpack.c.l.b16 %v6661
        %v6808 = vunpack.c.l.b16 %v6662
        %v6809 = vunpack.c.l.b16 %v6663
        %v6810 = vunpack.c.l.b16 %v6664
        %v6811 = vunpack.c.l.b16 %v6665
        %v6812 = vunpack.c.l.b16 %v6666
        %v6813 = vunpack.c.l.b16 %v6667
        %v6814 = vunpack.c.l.b16 %v6668
        %v6815 = vunpack.c.l.b16 %v6669
        %v6816 = vunpack.c.l.b16 %v6670
        %v6817 = vunpack.c.l.b16 %v6671
        %v6818 = vpack.c.b16 %v6803, %v6802
        %v6819 = vpack.c.b16 %v6805, %v6804
        %v6820 = vpack.c.b16 %v6807, %v6806
        %v6821 = vpack.c.b16 %v6809, %v6808
        %v6822 = vpack.c.b16 %v6811, %v6810
        %v6823 = vpack.c.b16 %v6813, %v6812
        %v6824 = vpack.c.b16 %v6815, %v6814
        %v6825 = vpack.c.b16 %v6817, %v6816
        %6834 = vmatprep.subr.bf16.mxu0 0
        %6835 = vmatpush1.bf16.msra.mxu0 %v6818
        %6836 = vmatprep.subr.bf16.mxu0 0
        %6837 = vmatpush1.bf16.msra.mxu0 %v6819
        %6838 = vmatprep.subr.bf16.mxu0 0
        %6839 = vmatpush1.bf16.msra.mxu0 %v6820
        %6840 = vmatprep.subr.bf16.mxu0 0
        %6841 = vmatpush1.bf16.msra.mxu0 %v6821
        %6842 = vmatprep.subr.bf16.mxu0 0
        %6843 = vmatpush1.bf16.msra.mxu0 %v6822
        %6844 = vmatprep.subr.bf16.mxu0 0
        %6845 = vmatpush1.bf16.msra.mxu0 %v6823
        %6846 = vmatprep.subr.bf16.mxu0 0
        %6847 = vmatpush1.bf16.msra.mxu0 %v6824
        %6848 = vmatprep.subr.bf16.mxu0 0
        %6849 = vmatpush1.bf16.msra.mxu0 %v6825
        %6850 = vmatprep.subr.bf16.mxu0 0
        %6851 = vmatpush1.bf16.msra.mxu0 0
        %6852 = vmatprep.subr.bf16.mxu0 0
        %6853 = vmatpush1.bf16.msra.mxu0 0
        %6854 = vmatprep.subr.bf16.mxu0 0
        %6855 = vmatpush1.bf16.msra.mxu0 0
        %6856 = vmatprep.subr.bf16.mxu0 0
        %6857 = vmatpush1.bf16.msra.mxu0 0
        %6858 = vmatprep.subr.bf16.mxu0 0
        %6859 = vmatpush1.bf16.msra.mxu0 0
        %6860 = vmatprep.subr.bf16.mxu0 0
        %6861 = vmatpush1.bf16.msra.mxu0 0
        %6862 = vmatprep.subr.bf16.mxu0 0
        %6863 = vmatpush1.bf16.msra.mxu0 0
        %6864 = vmatprep.subr.bf16.mxu0 0
        %6865 = vmatpush1.bf16.msra.mxu0 0
        %6866 = vmatprep.mubr.bf16.mxu0 0
        %6867 = vmatmul.mubr.bf16.gmra.mrb[0].mxu0 %v6637
        %v6868 = vpop.f32.mrb[0].mxu0
        %v6869 = vadd.f32 %v6772, %v6868
        %v6870 = vpop.f32.mrb[0].mxu0
        %v6871 = vpop.f32.mrb[0].mxu0
        %v6872 = vadd.f32 %v6775, %v6871
        %v6873 = vpop.f32.mrb[0].mxu0
        %6874 = vmatprep.mubr.bf16.mxu0 0
        %6875 = vmatmul.mubr.bf16.gmra.mrb[0].mxu0 %v6638
        %v6876 = vpop.f32.mrb[0].mxu0
        %v6877 = vadd.f32 %v6780, %v6876
        %v6878 = vpop.f32.mrb[0].mxu0
        %v6879 = vpop.f32.mrb[0].mxu0
        %v6880 = vadd.f32 %v6783, %v6879
        %v6881 = vpop.f32.mrb[0].mxu0
        %6882 = vdwg.mxu0
        %s6883 = scalar_lea.vmem %s1, 1920
        %v6884 = vld [vmem:[%s6883] sm:$0xf]
        %v6885 = vld [vmem:[%s6883 + $0x4] sm:$0xf]
        %v6886 = vld [vmem:[%s6883 + $0x8] sm:$0xf]
        %v6887 = vld [vmem:[%s6883 + $0xc] sm:$0xf]
        %v6888 = vld [vmem:[%s6883 + $0x10] sm:$0xf]
        %v6889 = vld [vmem:[%s6883 + $0x14] sm:$0xf]
        %v6890 = vld [vmem:[%s6883 + $0x18] sm:$0xf]
        %v6891 = vld [vmem:[%s6883 + $0x1c] sm:$0xf]
        %v6892 = vld [vmem:[%s6883 + $0x20] sm:$0xf]
        %v6893 = vld [vmem:[%s6883 + $0x24] sm:$0xf]
        %v6894 = vld [vmem:[%s6883 + $0x28] sm:$0xf]
        %v6895 = vld [vmem:[%s6883 + $0x2c] sm:$0xf]
        %v6896 = vld [vmem:[%s6883 + $0x30] sm:$0xf]
        %v6897 = vld [vmem:[%s6883 + $0x34] sm:$0xf]
        %v6898 = vld [vmem:[%s6883 + $0x38] sm:$0xf]
        %v6899 = vld [vmem:[%s6883 + $0x3c] sm:$0xf]
        %v6916 = vunpack.c.l.b16 %v6884
        %v6917 = vunpack.c.l.b16 %v6885
        %v6918 = vunpack.c.l.b16 %v6886
        %v6919 = vunpack.c.l.b16 %v6887
        %v6920 = vunpack.c.l.b16 %v6888
        %v6921 = vunpack.c.l.b16 %v6889
        %v6922 = vunpack.c.l.b16 %v6890
        %v6923 = vunpack.c.l.b16 %v6891
        %v6924 = vunpack.c.l.b16 %v6892
        %v6925 = vunpack.c.l.b16 %v6893
        %v6926 = vunpack.c.l.b16 %v6894
        %v6927 = vunpack.c.l.b16 %v6895
        %v6928 = vunpack.c.l.b16 %v6896
        %v6929 = vunpack.c.l.b16 %v6897
        %v6930 = vunpack.c.l.b16 %v6898
        %v6931 = vunpack.c.l.b16 %v6899
        %v6932 = vpack.c.b16 %v6917, %v6916
        %v6933 = vpack.c.b16 %v6919, %v6918
        %v6934 = vpack.c.b16 %v6921, %v6920
        %v6935 = vpack.c.b16 %v6923, %v6922
        %v6936 = vpack.c.b16 %v6925, %v6924
        %v6937 = vpack.c.b16 %v6927, %v6926
        %v6938 = vpack.c.b16 %v6929, %v6928
        %v6939 = vpack.c.b16 %v6931, %v6930
        %6948 = vmatprep.subr.bf16.mxu0 0
        %6949 = vmatpush1.bf16.msra.mxu0 %v6932
        %6950 = vmatprep.subr.bf16.mxu0 0
        %6951 = vmatpush1.bf16.msra.mxu0 %v6933
        %6952 = vmatprep.subr.bf16.mxu0 0
        %6953 = vmatpush1.bf16.msra.mxu0 %v6934
        %6954 = vmatprep.subr.bf16.mxu0 0
        %6955 = vmatpush1.bf16.msra.mxu0 %v6935
        %6956 = vmatprep.subr.bf16.mxu0 0
        %6957 = vmatpush1.bf16.msra.mxu0 %v6936
        %6958 = vmatprep.subr.bf16.mxu0 0
        %6959 = vmatpush1.bf16.msra.mxu0 %v6937
        %6960 = vmatprep.subr.bf16.mxu0 0
        %6961 = vmatpush1.bf16.msra.mxu0 %v6938
        %6962 = vmatprep.subr.bf16.mxu0 0
        %6963 = vmatpush1.bf16.msra.mxu0 %v6939
        %6964 = vmatprep.subr.bf16.mxu0 0
        %6965 = vmatpush1.bf16.msra.mxu0 0
        %6966 = vmatprep.subr.bf16.mxu0 0
        %6967 = vmatpush1.bf16.msra.mxu0 0
        %6968 = vmatprep.subr.bf16.mxu0 0
        %6969 = vmatpush1.bf16.msra.mxu0 0
        %6970 = vmatprep.subr.bf16.mxu0 0
        %6971 = vmatpush1.bf16.msra.mxu0 0
        %6972 = vmatprep.subr.bf16.mxu0 0
        %6973 = vmatpush1.bf16.msra.mxu0 0
        %6974 = vmatprep.subr.bf16.mxu0 0
        %6975 = vmatpush1.bf16.msra.mxu0 0
        %6976 = vmatprep.subr.bf16.mxu0 0
        %6977 = vmatpush1.bf16.msra.mxu0 0
        %6978 = vmatprep.subr.bf16.mxu0 0
        %6979 = vmatpush1.bf16.msra.mxu0 0
        %6980 = vmatprep.mubr.bf16.mxu0 0
        %6981 = vmatmul.mubr.bf16.gmra.mrb[0].mxu0 %v6653
        %v6982 = vpop.f32.mrb[0].mxu0
        %v6983 = vadd.f32 0.0, %v6982
        %v6984 = vpop.f32.mrb[0].mxu0
        %v6985 = vpop.f32.mrb[0].mxu0
        %v6986 = vadd.f32 0.0, %v6985
        %v6987 = vpop.f32.mrb[0].mxu0
        %6988 = vmatprep.mubr.bf16.mxu0 0
        %6989 = vmatmul.mubr.bf16.gmra.mrb[0].mxu0 %v6654
        %v6990 = vpop.f32.mrb[0].mxu0
        %v6991 = vadd.f32 0.0, %v6990
        %v6992 = vpop.f32.mrb[0].mxu0
        %v6993 = vpop.f32.mrb[0].mxu0
        %v6994 = vadd.f32 0.0, %v6993
        %v6995 = vpop.f32.mrb[0].mxu0
        %6996 = vdwg.mxu0
        %v6997 = vadd.f32 %v6869, %v6983
        %v6998 = vadd.f32 %v6872, %v6986
        %v6999 = vadd.f32 %v6877, %v6991
        %v7000 = vadd.f32 %v6880, %v6994
        %v7001 = vld [vmem:[%s3 + $0xc] sm:$0x1]
        %v7002 = vlaneseq
        %v7003 = vshrl.u32 %v7002, 7
        %v7004 = vsub.s32 0, %v7003
        %v7005 = vrot.slane %v7001, %v7004
        %v7006 = vadd.f32 %v6997, %v7005
        %v7007 = vadd.f32 %v6998, %v7005
        %v7008 = vadd.f32 %v6999, %v7005
        %v7009 = vadd.f32 %v7000, %v7005
        %v7010 = vld [vmem:[%s3 + $0xb] sm:$0x1]
        %v7011 = vlaneseq
        %v7012 = vshrl.u32 %v7011, 7
        %v7013 = vsub.s32 0, %v7012
        %v7014 = vrot.slane %v7010, %v7013
        %v7015 = vadd.f32 %v6596, %v7014
        %v7016 = vadd.f32 %v6600, %v7014
        %v7017 = vadd.f32 %v6606, %v7014
        %v7018 = vadd.f32 %v6610, %v7014
        %v7019 = vadd.f32 %v7006, %v7015
        %v7020 = vadd.f32 %v7007, %v7016
        %v7021 = vadd.f32 %v7008, %v7017
        %v7022 = vadd.f32 %v7009, %v7018
        %v7023 = vmax.f32 %v7019, 0.0
        %v7024 = vmax.f32 %v7020, 0.0
        %v7025 = vmax.f32 %v7021, 0.0
        %v7026 = vmax.f32 %v7022, 0.0
        %v7027 = vrot.slane %v7023, 7
        %v7028 = vrot.slane %v7024, 7
        %v7029 = vrot.slane %v7025, 7
        %v7030 = vrot.slane %v7026, 7
        %v7031 = vsel %vm449, %v7029, %v7030
        %v7032 = vsel %vm449, %v7028, %v7029
        %v7033 = vsel %vm449, %v7027, %v7028
        %v7034 = vsel %vm449, %v7030, %v7027
        %v7035 = vmul.f32 %v7034, %v220
        %v7036 = vmul.f32 %v7033, %v221
        %v7037 = vmul.f32 %v7032, %v222
        %v7038 = vmul.f32 %v7031, %v223
        %v7039 = vpack.c.bf16 %v7036, %v7035
        %v7040 = vpack.c.bf16 %v7038, %v7037
        %v7041 = vpack.c.bf16 %v7024, %v7023
        %v7042 = vpack.c.bf16 %v7026, %v7025
        %v7043 = vrot.slane %v7023, 1
        %v7044 = vrot.slane %v7024, 1
        %v7045 = vrot.slane %v7025, 1
        %v7046 = vrot.slane %v7026, 1
        %v7047 = vsel %vm506, %v7045, %v7046
        %v7048 = vsel %vm506, %v7044, %v7045
        %v7049 = vsel %vm506, %v7043, %v7044
        %v7050 = vsel %vm506, %v7046, %v7043
        %v7051 = vmul.f32 %v7049, %v228
        %v7052 = vmul.f32 %v7048, %v229
        %v7053 = vmul.f32 %v7047, %v230
        %v7054 = vmul.f32 %v7050, %v231
        %v7055 = vpack.c.bf16 %v7052, %v7051
        %v7056 = vpack.c.bf16 %v7054, %v7053
        %s7057 = scalar_lea.vmem %s1, 1984
        %v7058 = vld [vmem:[%s7057] sm:$0xf]
        %v7059 = vld [vmem:[%s7057 + $0x4] sm:$0xf]
        %v7060 = vld [vmem:[%s7057 + $0x8] sm:$0xf]
        %v7061 = vld [vmem:[%s7057 + $0xc] sm:$0xf]
        %v7062 = vld [vmem:[%s7057 + $0x10] sm:$0xf]
        %v7063 = vld [vmem:[%s7057 + $0x14] sm:$0xf]
        %v7064 = vld [vmem:[%s7057 + $0x18] sm:$0xf]
        %v7065 = vld [vmem:[%s7057 + $0x1c] sm:$0xf]
        %v7066 = vld [vmem:[%s7057 + $0x20] sm:$0xf]
        %v7067 = vld [vmem:[%s7057 + $0x24] sm:$0xf]
        %v7068 = vld [vmem:[%s7057 + $0x28] sm:$0xf]
        %v7069 = vld [vmem:[%s7057 + $0x2c] sm:$0xf]
        %v7070 = vld [vmem:[%s7057 + $0x30] sm:$0xf]
        %v7071 = vld [vmem:[%s7057 + $0x34] sm:$0xf]
        %v7072 = vld [vmem:[%s7057 + $0x38] sm:$0xf]
        %v7073 = vld [vmem:[%s7057 + $0x3c] sm:$0xf]
        %s7074 = scalar_lea.vmem %s1, 2048
        %v7075 = vld [vmem:[%s7074] sm:$0xf]
        %v7076 = vld [vmem:[%s7074 + $0x4] sm:$0xf]
        %v7077 = vld [vmem:[%s7074 + $0x8] sm:$0xf]
        %v7078 = vld [vmem:[%s7074 + $0xc] sm:$0xf]
        %v7079 = vld [vmem:[%s7074 + $0x10] sm:$0xf]
        %v7080 = vld [vmem:[%s7074 + $0x14] sm:$0xf]
        %v7081 = vld [vmem:[%s7074 + $0x18] sm:$0xf]
        %v7082 = vld [vmem:[%s7074 + $0x1c] sm:$0xf]
        %v7083 = vld [vmem:[%s7074 + $0x20] sm:$0xf]
        %v7084 = vld [vmem:[%s7074 + $0x24] sm:$0xf]
        %v7085 = vld [vmem:[%s7074 + $0x28] sm:$0xf]
        %v7086 = vld [vmem:[%s7074 + $0x2c] sm:$0xf]
        %v7087 = vld [vmem:[%s7074 + $0x30] sm:$0xf]
        %v7088 = vld [vmem:[%s7074 + $0x34] sm:$0xf]
        %v7089 = vld [vmem:[%s7074 + $0x38] sm:$0xf]
        %v7090 = vld [vmem:[%s7074 + $0x3c] sm:$0xf]
        %v7107 = vunpack.c.l.b16 %v7075
        %v7108 = vunpack.c.l.b16 %v7076
        %v7109 = vunpack.c.l.b16 %v7077
        %v7110 = vunpack.c.l.b16 %v7078
        %v7111 = vunpack.c.l.b16 %v7079
        %v7112 = vunpack.c.l.b16 %v7080
        %v7113 = vunpack.c.l.b16 %v7081
        %v7114 = vunpack.c.l.b16 %v7082
        %v7115 = vunpack.c.l.b16 %v7083
        %v7116 = vunpack.c.l.b16 %v7084
        %v7117 = vunpack.c.l.b16 %v7085
        %v7118 = vunpack.c.l.b16 %v7086
        %v7119 = vunpack.c.l.b16 %v7087
        %v7120 = vunpack.c.l.b16 %v7088
        %v7121 = vunpack.c.l.b16 %v7089
        %v7122 = vunpack.c.l.b16 %v7090
        %v7123 = vpack.c.b16 %v7108, %v7107
        %v7124 = vpack.c.b16 %v7110, %v7109
        %v7125 = vpack.c.b16 %v7112, %v7111
        %v7126 = vpack.c.b16 %v7114, %v7113
        %v7127 = vpack.c.b16 %v7116, %v7115
        %v7128 = vpack.c.b16 %v7118, %v7117
        %v7129 = vpack.c.b16 %v7120, %v7119
        %v7130 = vpack.c.b16 %v7122, %v7121
        %7139 = vmatprep.subr.bf16.mxu0 0
        %7140 = vmatpush1.bf16.msra.mxu0 %v7123
        %7141 = vmatprep.subr.bf16.mxu0 0
        %7142 = vmatpush1.bf16.msra.mxu0 %v7124
        %7143 = vmatprep.subr.bf16.mxu0 0
        %7144 = vmatpush1.bf16.msra.mxu0 %v7125
        %7145 = vmatprep.subr.bf16.mxu0 0
        %7146 = vmatpush1.bf16.msra.mxu0 %v7126
        %7147 = vmatprep.subr.bf16.mxu0 0
        %7148 = vmatpush1.bf16.msra.mxu0 %v7127
        %7149 = vmatprep.subr.bf16.mxu0 0
        %7150 = vmatpush1.bf16.msra.mxu0 %v7128
        %7151 = vmatprep.subr.bf16.mxu0 0
        %7152 = vmatpush1.bf16.msra.mxu0 %v7129
        %7153 = vmatprep.subr.bf16.mxu0 0
        %7154 = vmatpush1.bf16.msra.mxu0 %v7130
        %7155 = vmatprep.subr.bf16.mxu0 0
        %7156 = vmatpush1.bf16.msra.mxu0 0
        %7157 = vmatprep.subr.bf16.mxu0 0
        %7158 = vmatpush1.bf16.msra.mxu0 0
        %7159 = vmatprep.subr.bf16.mxu0 0
        %7160 = vmatpush1.bf16.msra.mxu0 0
        %7161 = vmatprep.subr.bf16.mxu0 0
        %7162 = vmatpush1.bf16.msra.mxu0 0
        %7163 = vmatprep.subr.bf16.mxu0 0
        %7164 = vmatpush1.bf16.msra.mxu0 0
        %7165 = vmatprep.subr.bf16.mxu0 0
        %7166 = vmatpush1.bf16.msra.mxu0 0
        %7167 = vmatprep.subr.bf16.mxu0 0
        %7168 = vmatpush1.bf16.msra.mxu0 0
        %7169 = vmatprep.subr.bf16.mxu0 0
        %7170 = vmatpush1.bf16.msra.mxu0 0
        %7171 = vmatprep.mubr.bf16.mxu0 0
        %7172 = vmatmul.mubr.bf16.gmra.mrb[0].mxu0 %v7041
        %v7173 = vpop.f32.mrb[0].mxu0
        %v7174 = vadd.f32 0.0, %v7173
        %v7175 = vpop.f32.mrb[0].mxu0
        %v7176 = vpop.f32.mrb[0].mxu0
        %v7177 = vadd.f32 0.0, %v7176
        %v7178 = vpop.f32.mrb[0].mxu0
        %7179 = vmatprep.mubr.bf16.mxu0 0
        %7180 = vmatmul.mubr.bf16.gmra.mrb[0].mxu0 %v7042
        %v7181 = vpop.f32.mrb[0].mxu0
        %v7182 = vadd.f32 0.0, %v7181
        %v7183 = vpop.f32.mrb[0].mxu0
        %v7184 = vpop.f32.mrb[0].mxu0
        %v7185 = vadd.f32 0.0, %v7184
        %v7186 = vpop.f32.mrb[0].mxu0
        %7187 = vdwg.mxu0
        %v7204 = vunpack.c.l.b16 %v7058
        %v7205 = vunpack.c.l.b16 %v7059
        %v7206 = vunpack.c.l.b16 %v7060
        %v7207 = vunpack.c.l.b16 %v7061
        %v7208 = vunpack.c.l.b16 %v7062
        %v7209 = vunpack.c.l.b16 %v7063
        %v7210 = vunpack.c.l.b16 %v7064
        %v7211 = vunpack.c.l.b16 %v7065
        %v7212 = vunpack.c.l.b16 %v7066
        %v7213 = vunpack.c.l.b16 %v7067
        %v7214 = vunpack.c.l.b16 %v7068
        %v7215 = vunpack.c.l.b16 %v7069
        %v7216 = vunpack.c.l.b16 %v7070
        %v7217 = vunpack.c.l.b16 %v7071
        %v7218 = vunpack.c.l.b16 %v7072
        %v7219 = vunpack.c.l.b16 %v7073
        %v7220 = vpack.c.b16 %v7205, %v7204
        %v7221 = vpack.c.b16 %v7207, %v7206
        %v7222 = vpack.c.b16 %v7209, %v7208
        %v7223 = vpack.c.b16 %v7211, %v7210
        %v7224 = vpack.c.b16 %v7213, %v7212
        %v7225 = vpack.c.b16 %v7215, %v7214
        %v7226 = vpack.c.b16 %v7217, %v7216
        %v7227 = vpack.c.b16 %v7219, %v7218
        %7236 = vmatprep.subr.bf16.mxu0 0
        %7237 = vmatpush1.bf16.msra.mxu0 %v7220
        %7238 = vmatprep.subr.bf16.mxu0 0
        %7239 = vmatpush1.bf16.msra.mxu0 %v7221
        %7240 = vmatprep.subr.bf16.mxu0 0
        %7241 = vmatpush1.bf16.msra.mxu0 %v7222
        %7242 = vmatprep.subr.bf16.mxu0 0
        %7243 = vmatpush1.bf16.msra.mxu0 %v7223
        %7244 = vmatprep.subr.bf16.mxu0 0
        %7245 = vmatpush1.bf16.msra.mxu0 %v7224
        %7246 = vmatprep.subr.bf16.mxu0 0
        %7247 = vmatpush1.bf16.msra.mxu0 %v7225
        %7248 = vmatprep.subr.bf16.mxu0 0
        %7249 = vmatpush1.bf16.msra.mxu0 %v7226
        %7250 = vmatprep.subr.bf16.mxu0 0
        %7251 = vmatpush1.bf16.msra.mxu0 %v7227
        %7252 = vmatprep.subr.bf16.mxu0 0
        %7253 = vmatpush1.bf16.msra.mxu0 0
        %7254 = vmatprep.subr.bf16.mxu0 0
        %7255 = vmatpush1.bf16.msra.mxu0 0
        %7256 = vmatprep.subr.bf16.mxu0 0
        %7257 = vmatpush1.bf16.msra.mxu0 0
        %7258 = vmatprep.subr.bf16.mxu0 0
        %7259 = vmatpush1.bf16.msra.mxu0 0
        %7260 = vmatprep.subr.bf16.mxu0 0
        %7261 = vmatpush1.bf16.msra.mxu0 0
        %7262 = vmatprep.subr.bf16.mxu0 0
        %7263 = vmatpush1.bf16.msra.mxu0 0
        %7264 = vmatprep.subr.bf16.mxu0 0
        %7265 = vmatpush1.bf16.msra.mxu0 0
        %7266 = vmatprep.subr.bf16.mxu0 0
        %7267 = vmatpush1.bf16.msra.mxu0 0
        %7268 = vmatprep.mubr.bf16.mxu0 0
        %7269 = vmatmul.mubr.bf16.gmra.mrb[0].mxu0 %v7039
        %v7270 = vpop.f32.mrb[0].mxu0
        %v7271 = vadd.f32 %v7174, %v7270
        %v7272 = vpop.f32.mrb[0].mxu0
        %v7273 = vpop.f32.mrb[0].mxu0
        %v7274 = vadd.f32 %v7177, %v7273
        %v7275 = vpop.f32.mrb[0].mxu0
        %7276 = vmatprep.mubr.bf16.mxu0 0
        %7277 = vmatmul.mubr.bf16.gmra.mrb[0].mxu0 %v7040
        %v7278 = vpop.f32.mrb[0].mxu0
        %v7279 = vadd.f32 %v7182, %v7278
        %v7280 = vpop.f32.mrb[0].mxu0
        %v7281 = vpop.f32.mrb[0].mxu0
        %v7282 = vadd.f32 %v7185, %v7281
        %v7283 = vpop.f32.mrb[0].mxu0
        %7284 = vdwg.mxu0
        %s7285 = scalar_lea.vmem %s1, 2112
        %v7286 = vld [vmem:[%s7285] sm:$0xf]
        %v7287 = vld [vmem:[%s7285 + $0x4] sm:$0xf]
        %v7288 = vld [vmem:[%s7285 + $0x8] sm:$0xf]
        %v7289 = vld [vmem:[%s7285 + $0xc] sm:$0xf]
        %v7290 = vld [vmem:[%s7285 + $0x10] sm:$0xf]
        %v7291 = vld [vmem:[%s7285 + $0x14] sm:$0xf]
        %v7292 = vld [vmem:[%s7285 + $0x18] sm:$0xf]
        %v7293 = vld [vmem:[%s7285 + $0x1c] sm:$0xf]
        %v7294 = vld [vmem:[%s7285 + $0x20] sm:$0xf]
        %v7295 = vld [vmem:[%s7285 + $0x24] sm:$0xf]
        %v7296 = vld [vmem:[%s7285 + $0x28] sm:$0xf]
        %v7297 = vld [vmem:[%s7285 + $0x2c] sm:$0xf]
        %v7298 = vld [vmem:[%s7285 + $0x30] sm:$0xf]
        %v7299 = vld [vmem:[%s7285 + $0x34] sm:$0xf]
        %v7300 = vld [vmem:[%s7285 + $0x38] sm:$0xf]
        %v7301 = vld [vmem:[%s7285 + $0x3c] sm:$0xf]
        %v7318 = vunpack.c.l.b16 %v7286
        %v7319 = vunpack.c.l.b16 %v7287
        %v7320 = vunpack.c.l.b16 %v7288
        %v7321 = vunpack.c.l.b16 %v7289
        %v7322 = vunpack.c.l.b16 %v7290
        %v7323 = vunpack.c.l.b16 %v7291
        %v7324 = vunpack.c.l.b16 %v7292
        %v7325 = vunpack.c.l.b16 %v7293
        %v7326 = vunpack.c.l.b16 %v7294
        %v7327 = vunpack.c.l.b16 %v7295
        %v7328 = vunpack.c.l.b16 %v7296
        %v7329 = vunpack.c.l.b16 %v7297
        %v7330 = vunpack.c.l.b16 %v7298
        %v7331 = vunpack.c.l.b16 %v7299
        %v7332 = vunpack.c.l.b16 %v7300
        %v7333 = vunpack.c.l.b16 %v7301
        %v7334 = vpack.c.b16 %v7319, %v7318
        %v7335 = vpack.c.b16 %v7321, %v7320
        %v7336 = vpack.c.b16 %v7323, %v7322
        %v7337 = vpack.c.b16 %v7325, %v7324
        %v7338 = vpack.c.b16 %v7327, %v7326
        %v7339 = vpack.c.b16 %v7329, %v7328
        %v7340 = vpack.c.b16 %v7331, %v7330
        %v7341 = vpack.c.b16 %v7333, %v7332
        %7350 = vmatprep.subr.bf16.mxu0 0
        %7351 = vmatpush1.bf16.msra.mxu0 %v7334
        %7352 = vmatprep.subr.bf16.mxu0 0
        %7353 = vmatpush1.bf16.msra.mxu0 %v7335
        %7354 = vmatprep.subr.bf16.mxu0 0
        %7355 = vmatpush1.bf16.msra.mxu0 %v7336
        %7356 = vmatprep.subr.bf16.mxu0 0
        %7357 = vmatpush1.bf16.msra.mxu0 %v7337
        %7358 = vmatprep.subr.bf16.mxu0 0
        %7359 = vmatpush1.bf16.msra.mxu0 %v7338
        %7360 = vmatprep.subr.bf16.mxu0 0
        %7361 = vmatpush1.bf16.msra.mxu0 %v7339
        %7362 = vmatprep.subr.bf16.mxu0 0
        %7363 = vmatpush1.bf16.msra.mxu0 %v7340
        %7364 = vmatprep.subr.bf16.mxu0 0
        %7365 = vmatpush1.bf16.msra.mxu0 %v7341
        %7366 = vmatprep.subr.bf16.mxu0 0
        %7367 = vmatpush1.bf16.msra.mxu0 0
        %7368 = vmatprep.subr.bf16.mxu0 0
        %7369 = vmatpush1.bf16.msra.mxu0 0
        %7370 = vmatprep.subr.bf16.mxu0 0
        %7371 = vmatpush1.bf16.msra.mxu0 0
        %7372 = vmatprep.subr.bf16.mxu0 0
        %7373 = vmatpush1.bf16.msra.mxu0 0
        %7374 = vmatprep.subr.bf16.mxu0 0
        %7375 = vmatpush1.bf16.msra.mxu0 0
        %7376 = vmatprep.subr.bf16.mxu0 0
        %7377 = vmatpush1.bf16.msra.mxu0 0
        %7378 = vmatprep.subr.bf16.mxu0 0
        %7379 = vmatpush1.bf16.msra.mxu0 0
        %7380 = vmatprep.subr.bf16.mxu0 0
        %7381 = vmatpush1.bf16.msra.mxu0 0
        %7382 = vmatprep.mubr.bf16.mxu0 0
        %7383 = vmatmul.mubr.bf16.gmra.mrb[0].mxu0 %v7055
        %v7384 = vpop.f32.mrb[0].mxu0
        %v7385 = vadd.f32 0.0, %v7384
        %v7386 = vpop.f32.mrb[0].mxu0
        %v7387 = vpop.f32.mrb[0].mxu0
        %v7388 = vadd.f32 0.0, %v7387
        %v7389 = vpop.f32.mrb[0].mxu0
        %7390 = vmatprep.mubr.bf16.mxu0 0
        %7391 = vmatmul.mubr.bf16.gmra.mrb[0].mxu0 %v7056
        %v7392 = vpop.f32.mrb[0].mxu0
        %v7393 = vadd.f32 0.0, %v7392
        %v7394 = vpop.f32.mrb[0].mxu0
        %v7395 = vpop.f32.mrb[0].mxu0
        %v7396 = vadd.f32 0.0, %v7395
        %v7397 = vpop.f32.mrb[0].mxu0
        %7398 = vdwg.mxu0
        %v7399 = vadd.f32 %v7271, %v7385
        %v7400 = vadd.f32 %v7274, %v7388
        %v7401 = vadd.f32 %v7279, %v7393
        %v7402 = vadd.f32 %v7282, %v7396
        %v7403 = vld [vmem:[%s3 + $0xd] sm:$0x1]
        %v7404 = vlaneseq
        %v7405 = vshrl.u32 %v7404, 7
        %v7406 = vsub.s32 0, %v7405
        %v7407 = vrot.slane %v7403, %v7406
        %v7408 = vadd.f32 %v7399, %v7407
        %v7409 = vadd.f32 %v7400, %v7407
        %v7410 = vadd.f32 %v7401, %v7407
        %v7411 = vadd.f32 %v7402, %v7407
        %v7412 = vmax.f32 %v7408, 0.0
        %v7413 = vmax.f32 %v7409, 0.0
        %v7414 = vmax.f32 %v7410, 0.0
        %v7415 = vmax.f32 %v7411, 0.0
        %v7416 = vrot.slane %v7412, 7
        %v7417 = vrot.slane %v7413, 7
        %v7418 = vrot.slane %v7414, 7
        %v7419 = vrot.slane %v7415, 7
        %v7420 = vsel %vm449, %v7418, %v7419
        %v7421 = vsel %vm449, %v7417, %v7418
        %v7422 = vsel %vm449, %v7416, %v7417
        %v7423 = vsel %vm449, %v7419, %v7416
        %v7424 = vmul.f32 %v7423, %v220
        %v7425 = vmul.f32 %v7422, %v221
        %v7426 = vmul.f32 %v7421, %v222
        %v7427 = vmul.f32 %v7420, %v223
        %v7428 = vpack.c.bf16 %v7425, %v7424
        %v7429 = vpack.c.bf16 %v7427, %v7426
        %v7430 = vpack.c.bf16 %v7413, %v7412
        %v7431 = vpack.c.bf16 %v7415, %v7414
        %v7432 = vrot.slane %v7412, 1
        %v7433 = vrot.slane %v7413, 1
        %v7434 = vrot.slane %v7414, 1
        %v7435 = vrot.slane %v7415, 1
        %v7436 = vsel %vm506, %v7434, %v7435
        %v7437 = vsel %vm506, %v7433, %v7434
        %v7438 = vsel %vm506, %v7432, %v7433
        %v7439 = vsel %vm506, %v7435, %v7432
        %v7440 = vmul.f32 %v7438, %v228
        %v7441 = vmul.f32 %v7437, %v229
        %v7442 = vmul.f32 %v7436, %v230
        %v7443 = vmul.f32 %v7439, %v231
        %v7444 = vpack.c.bf16 %v7441, %v7440
        %v7445 = vpack.c.bf16 %v7443, %v7442
        %s7446 = scalar_lea.vmem %s1, 2176
        %v7447 = vld [vmem:[%s7446] sm:$0xf]
        %v7448 = vld [vmem:[%s7446 + $0x4] sm:$0xf]
        %v7449 = vld [vmem:[%s7446 + $0x8] sm:$0xf]
        %v7450 = vld [vmem:[%s7446 + $0xc] sm:$0xf]
        %v7451 = vld [vmem:[%s7446 + $0x10] sm:$0xf]
        %v7452 = vld [vmem:[%s7446 + $0x14] sm:$0xf]
        %v7453 = vld [vmem:[%s7446 + $0x18] sm:$0xf]
        %v7454 = vld [vmem:[%s7446 + $0x1c] sm:$0xf]
        %v7455 = vld [vmem:[%s7446 + $0x20] sm:$0xf]
        %v7456 = vld [vmem:[%s7446 + $0x24] sm:$0xf]
        %v7457 = vld [vmem:[%s7446 + $0x28] sm:$0xf]
        %v7458 = vld [vmem:[%s7446 + $0x2c] sm:$0xf]
        %v7459 = vld [vmem:[%s7446 + $0x30] sm:$0xf]
        %v7460 = vld [vmem:[%s7446 + $0x34] sm:$0xf]
        %v7461 = vld [vmem:[%s7446 + $0x38] sm:$0xf]
        %v7462 = vld [vmem:[%s7446 + $0x3c] sm:$0xf]
        %s7463 = scalar_lea.vmem %s1, 2240
        %v7464 = vld [vmem:[%s7463] sm:$0xf]
        %v7465 = vld [vmem:[%s7463 + $0x4] sm:$0xf]
        %v7466 = vld [vmem:[%s7463 + $0x8] sm:$0xf]
        %v7467 = vld [vmem:[%s7463 + $0xc] sm:$0xf]
        %v7468 = vld [vmem:[%s7463 + $0x10] sm:$0xf]
        %v7469 = vld [vmem:[%s7463 + $0x14] sm:$0xf]
        %v7470 = vld [vmem:[%s7463 + $0x18] sm:$0xf]
        %v7471 = vld [vmem:[%s7463 + $0x1c] sm:$0xf]
        %v7472 = vld [vmem:[%s7463 + $0x20] sm:$0xf]
        %v7473 = vld [vmem:[%s7463 + $0x24] sm:$0xf]
        %v7474 = vld [vmem:[%s7463 + $0x28] sm:$0xf]
        %v7475 = vld [vmem:[%s7463 + $0x2c] sm:$0xf]
        %v7476 = vld [vmem:[%s7463 + $0x30] sm:$0xf]
        %v7477 = vld [vmem:[%s7463 + $0x34] sm:$0xf]
        %v7478 = vld [vmem:[%s7463 + $0x38] sm:$0xf]
        %v7479 = vld [vmem:[%s7463 + $0x3c] sm:$0xf]
        %v7496 = vunpack.c.l.b16 %v7464
        %v7497 = vunpack.c.l.b16 %v7465
        %v7498 = vunpack.c.l.b16 %v7466
        %v7499 = vunpack.c.l.b16 %v7467
        %v7500 = vunpack.c.l.b16 %v7468
        %v7501 = vunpack.c.l.b16 %v7469
        %v7502 = vunpack.c.l.b16 %v7470
        %v7503 = vunpack.c.l.b16 %v7471
        %v7504 = vunpack.c.l.b16 %v7472
        %v7505 = vunpack.c.l.b16 %v7473
        %v7506 = vunpack.c.l.b16 %v7474
        %v7507 = vunpack.c.l.b16 %v7475
        %v7508 = vunpack.c.l.b16 %v7476
        %v7509 = vunpack.c.l.b16 %v7477
        %v7510 = vunpack.c.l.b16 %v7478
        %v7511 = vunpack.c.l.b16 %v7479
        %v7512 = vpack.c.b16 %v7497, %v7496
        %v7513 = vpack.c.b16 %v7499, %v7498
        %v7514 = vpack.c.b16 %v7501, %v7500
        %v7515 = vpack.c.b16 %v7503, %v7502
        %v7516 = vpack.c.b16 %v7505, %v7504
        %v7517 = vpack.c.b16 %v7507, %v7506
        %v7518 = vpack.c.b16 %v7509, %v7508
        %v7519 = vpack.c.b16 %v7511, %v7510
        %7528 = vmatprep.subr.bf16.mxu0 0
        %7529 = vmatpush1.bf16.msra.mxu0 %v7512
        %7530 = vmatprep.subr.bf16.mxu0 0
        %7531 = vmatpush1.bf16.msra.mxu0 %v7513
        %7532 = vmatprep.subr.bf16.mxu0 0
        %7533 = vmatpush1.bf16.msra.mxu0 %v7514
        %7534 = vmatprep.subr.bf16.mxu0 0
        %7535 = vmatpush1.bf16.msra.mxu0 %v7515
        %7536 = vmatprep.subr.bf16.mxu0 0
        %7537 = vmatpush1.bf16.msra.mxu0 %v7516
        %7538 = vmatprep.subr.bf16.mxu0 0
        %7539 = vmatpush1.bf16.msra.mxu0 %v7517
        %7540 = vmatprep.subr.bf16.mxu0 0
        %7541 = vmatpush1.bf16.msra.mxu0 %v7518
        %7542 = vmatprep.subr.bf16.mxu0 0
        %7543 = vmatpush1.bf16.msra.mxu0 %v7519
        %7544 = vmatprep.subr.bf16.mxu0 0
        %7545 = vmatpush1.bf16.msra.mxu0 0
        %7546 = vmatprep.subr.bf16.mxu0 0
        %7547 = vmatpush1.bf16.msra.mxu0 0
        %7548 = vmatprep.subr.bf16.mxu0 0
        %7549 = vmatpush1.bf16.msra.mxu0 0
        %7550 = vmatprep.subr.bf16.mxu0 0
        %7551 = vmatpush1.bf16.msra.mxu0 0
        %7552 = vmatprep.subr.bf16.mxu0 0
        %7553 = vmatpush1.bf16.msra.mxu0 0
        %7554 = vmatprep.subr.bf16.mxu0 0
        %7555 = vmatpush1.bf16.msra.mxu0 0
        %7556 = vmatprep.subr.bf16.mxu0 0
        %7557 = vmatpush1.bf16.msra.mxu0 0
        %7558 = vmatprep.subr.bf16.mxu0 0
        %7559 = vmatpush1.bf16.msra.mxu0 0
        %7560 = vmatprep.mubr.bf16.mxu0 0
        %7561 = vmatmul.mubr.bf16.gmra.mrb[0].mxu0 %v7430
        %v7562 = vpop.f32.mrb[0].mxu0
        %v7563 = vadd.f32 0.0, %v7562
        %v7564 = vpop.f32.mrb[0].mxu0
        %v7565 = vpop.f32.mrb[0].mxu0
        %v7566 = vadd.f32 0.0, %v7565
        %v7567 = vpop.f32.mrb[0].mxu0
        %7568 = vmatprep.mubr.bf16.mxu0 0
        %7569 = vmatmul.mubr.bf16.gmra.mrb[0].mxu0 %v7431
        %v7570 = vpop.f32.mrb[0].mxu0
        %v7571 = vadd.f32 0.0, %v7570
        %v7572 = vpop.f32.mrb[0].mxu0
        %v7573 = vpop.f32.mrb[0].mxu0
        %v7574 = vadd.f32 0.0, %v7573
        %v7575 = vpop.f32.mrb[0].mxu0
        %7576 = vdwg.mxu0
        %v7593 = vunpack.c.l.b16 %v7447
        %v7594 = vunpack.c.l.b16 %v7448
        %v7595 = vunpack.c.l.b16 %v7449
        %v7596 = vunpack.c.l.b16 %v7450
        %v7597 = vunpack.c.l.b16 %v7451
        %v7598 = vunpack.c.l.b16 %v7452
        %v7599 = vunpack.c.l.b16 %v7453
        %v7600 = vunpack.c.l.b16 %v7454
        %v7601 = vunpack.c.l.b16 %v7455
        %v7602 = vunpack.c.l.b16 %v7456
        %v7603 = vunpack.c.l.b16 %v7457
        %v7604 = vunpack.c.l.b16 %v7458
        %v7605 = vunpack.c.l.b16 %v7459
        %v7606 = vunpack.c.l.b16 %v7460
        %v7607 = vunpack.c.l.b16 %v7461
        %v7608 = vunpack.c.l.b16 %v7462
        %v7609 = vpack.c.b16 %v7594, %v7593
        %v7610 = vpack.c.b16 %v7596, %v7595
        %v7611 = vpack.c.b16 %v7598, %v7597
        %v7612 = vpack.c.b16 %v7600, %v7599
        %v7613 = vpack.c.b16 %v7602, %v7601
        %v7614 = vpack.c.b16 %v7604, %v7603
        %v7615 = vpack.c.b16 %v7606, %v7605
        %v7616 = vpack.c.b16 %v7608, %v7607
        %7625 = vmatprep.subr.bf16.mxu0 0
        %7626 = vmatpush1.bf16.msra.mxu0 %v7609
        %7627 = vmatprep.subr.bf16.mxu0 0
        %7628 = vmatpush1.bf16.msra.mxu0 %v7610
        %7629 = vmatprep.subr.bf16.mxu0 0
        %7630 = vmatpush1.bf16.msra.mxu0 %v7611
        %7631 = vmatprep.subr.bf16.mxu0 0
        %7632 = vmatpush1.bf16.msra.mxu0 %v7612
        %7633 = vmatprep.subr.bf16.mxu0 0
        %7634 = vmatpush1.bf16.msra.mxu0 %v7613
        %7635 = vmatprep.subr.bf16.mxu0 0
        %7636 = vmatpush1.bf16.msra.mxu0 %v7614
        %7637 = vmatprep.subr.bf16.mxu0 0
        %7638 = vmatpush1.bf16.msra.mxu0 %v7615
        %7639 = vmatprep.subr.bf16.mxu0 0
        %7640 = vmatpush1.bf16.msra.mxu0 %v7616
        %7641 = vmatprep.subr.bf16.mxu0 0
        %7642 = vmatpush1.bf16.msra.mxu0 0
        %7643 = vmatprep.subr.bf16.mxu0 0
        %7644 = vmatpush1.bf16.msra.mxu0 0
        %7645 = vmatprep.subr.bf16.mxu0 0
        %7646 = vmatpush1.bf16.msra.mxu0 0
        %7647 = vmatprep.subr.bf16.mxu0 0
        %7648 = vmatpush1.bf16.msra.mxu0 0
        %7649 = vmatprep.subr.bf16.mxu0 0
        %7650 = vmatpush1.bf16.msra.mxu0 0
        %7651 = vmatprep.subr.bf16.mxu0 0
        %7652 = vmatpush1.bf16.msra.mxu0 0
        %7653 = vmatprep.subr.bf16.mxu0 0
        %7654 = vmatpush1.bf16.msra.mxu0 0
        %7655 = vmatprep.subr.bf16.mxu0 0
        %7656 = vmatpush1.bf16.msra.mxu0 0
        %7657 = vmatprep.mubr.bf16.mxu0 0
        %7658 = vmatmul.mubr.bf16.gmra.mrb[0].mxu0 %v7428
        %v7659 = vpop.f32.mrb[0].mxu0
        %v7660 = vadd.f32 %v7563, %v7659
        %v7661 = vpop.f32.mrb[0].mxu0
        %v7662 = vpop.f32.mrb[0].mxu0
        %v7663 = vadd.f32 %v7566, %v7662
        %v7664 = vpop.f32.mrb[0].mxu0
        %7665 = vmatprep.mubr.bf16.mxu0 0
        %7666 = vmatmul.mubr.bf16.gmra.mrb[0].mxu0 %v7429
        %v7667 = vpop.f32.mrb[0].mxu0
        %v7668 = vadd.f32 %v7571, %v7667
        %v7669 = vpop.f32.mrb[0].mxu0
        %v7670 = vpop.f32.mrb[0].mxu0
        %v7671 = vadd.f32 %v7574, %v7670
        %v7672 = vpop.f32.mrb[0].mxu0
        %7673 = vdwg.mxu0
        %s7674 = scalar_lea.vmem %s1, 2304
        %v7675 = vld [vmem:[%s7674] sm:$0xf]
        %v7676 = vld [vmem:[%s7674 + $0x4] sm:$0xf]
        %v7677 = vld [vmem:[%s7674 + $0x8] sm:$0xf]
        %v7678 = vld [vmem:[%s7674 + $0xc] sm:$0xf]
        %v7679 = vld [vmem:[%s7674 + $0x10] sm:$0xf]
        %v7680 = vld [vmem:[%s7674 + $0x14] sm:$0xf]
        %v7681 = vld [vmem:[%s7674 + $0x18] sm:$0xf]
        %v7682 = vld [vmem:[%s7674 + $0x1c] sm:$0xf]
        %v7683 = vld [vmem:[%s7674 + $0x20] sm:$0xf]
        %v7684 = vld [vmem:[%s7674 + $0x24] sm:$0xf]
        %v7685 = vld [vmem:[%s7674 + $0x28] sm:$0xf]
        %v7686 = vld [vmem:[%s7674 + $0x2c] sm:$0xf]
        %v7687 = vld [vmem:[%s7674 + $0x30] sm:$0xf]
        %v7688 = vld [vmem:[%s7674 + $0x34] sm:$0xf]
        %v7689 = vld [vmem:[%s7674 + $0x38] sm:$0xf]
        %v7690 = vld [vmem:[%s7674 + $0x3c] sm:$0xf]
        %v7707 = vunpack.c.l.b16 %v7675
        %v7708 = vunpack.c.l.b16 %v7676
        %v7709 = vunpack.c.l.b16 %v7677
        %v7710 = vunpack.c.l.b16 %v7678
        %v7711 = vunpack.c.l.b16 %v7679
        %v7712 = vunpack.c.l.b16 %v7680
        %v7713 = vunpack.c.l.b16 %v7681
        %v7714 = vunpack.c.l.b16 %v7682
        %v7715 = vunpack.c.l.b16 %v7683
        %v7716 = vunpack.c.l.b16 %v7684
        %v7717 = vunpack.c.l.b16 %v7685
        %v7718 = vunpack.c.l.b16 %v7686
        %v7719 = vunpack.c.l.b16 %v7687
        %v7720 = vunpack.c.l.b16 %v7688
        %v7721 = vunpack.c.l.b16 %v7689
        %v7722 = vunpack.c.l.b16 %v7690
        %v7723 = vpack.c.b16 %v7708, %v7707
        %v7724 = vpack.c.b16 %v7710, %v7709
        %v7725 = vpack.c.b16 %v7712, %v7711
        %v7726 = vpack.c.b16 %v7714, %v7713
        %v7727 = vpack.c.b16 %v7716, %v7715
        %v7728 = vpack.c.b16 %v7718, %v7717
        %v7729 = vpack.c.b16 %v7720, %v7719
        %v7730 = vpack.c.b16 %v7722, %v7721
        %7739 = vmatprep.subr.bf16.mxu0 0
        %7740 = vmatpush1.bf16.msra.mxu0 %v7723
        %7741 = vmatprep.subr.bf16.mxu0 0
        %7742 = vmatpush1.bf16.msra.mxu0 %v7724
        %7743 = vmatprep.subr.bf16.mxu0 0
        %7744 = vmatpush1.bf16.msra.mxu0 %v7725
        %7745 = vmatprep.subr.bf16.mxu0 0
        %7746 = vmatpush1.bf16.msra.mxu0 %v7726
        %7747 = vmatprep.subr.bf16.mxu0 0
        %7748 = vmatpush1.bf16.msra.mxu0 %v7727
        %7749 = vmatprep.subr.bf16.mxu0 0
        %7750 = vmatpush1.bf16.msra.mxu0 %v7728
        %7751 = vmatprep.subr.bf16.mxu0 0
        %7752 = vmatpush1.bf16.msra.mxu0 %v7729
        %7753 = vmatprep.subr.bf16.mxu0 0
        %7754 = vmatpush1.bf16.msra.mxu0 %v7730
        %7755 = vmatprep.subr.bf16.mxu0 0
        %7756 = vmatpush1.bf16.msra.mxu0 0
        %7757 = vmatprep.subr.bf16.mxu0 0
        %7758 = vmatpush1.bf16.msra.mxu0 0
        %7759 = vmatprep.subr.bf16.mxu0 0
        %7760 = vmatpush1.bf16.msra.mxu0 0
        %7761 = vmatprep.subr.bf16.mxu0 0
        %7762 = vmatpush1.bf16.msra.mxu0 0
        %7763 = vmatprep.subr.bf16.mxu0 0
        %7764 = vmatpush1.bf16.msra.mxu0 0
        %7765 = vmatprep.subr.bf16.mxu0 0
        %7766 = vmatpush1.bf16.msra.mxu0 0
        %7767 = vmatprep.subr.bf16.mxu0 0
        %7768 = vmatpush1.bf16.msra.mxu0 0
        %7769 = vmatprep.subr.bf16.mxu0 0
        %7770 = vmatpush1.bf16.msra.mxu0 0
        %7771 = vmatprep.mubr.bf16.mxu0 0
        %7772 = vmatmul.mubr.bf16.gmra.mrb[0].mxu0 %v7444
        %v7773 = vpop.f32.mrb[0].mxu0
        %v7774 = vadd.f32 0.0, %v7773
        %v7775 = vpop.f32.mrb[0].mxu0
        %v7776 = vpop.f32.mrb[0].mxu0
        %v7777 = vadd.f32 0.0, %v7776
        %v7778 = vpop.f32.mrb[0].mxu0
        %7779 = vmatprep.mubr.bf16.mxu0 0
        %7780 = vmatmul.mubr.bf16.gmra.mrb[0].mxu0 %v7445
        %v7781 = vpop.f32.mrb[0].mxu0
        %v7782 = vadd.f32 0.0, %v7781
        %v7783 = vpop.f32.mrb[0].mxu0
        %v7784 = vpop.f32.mrb[0].mxu0
        %v7785 = vadd.f32 0.0, %v7784
        %v7786 = vpop.f32.mrb[0].mxu0
        %7787 = vdwg.mxu0
        %v7788 = vadd.f32 %v7660, %v7774
        %v7789 = vadd.f32 %v7663, %v7777
        %v7790 = vadd.f32 %v7668, %v7782
        %v7791 = vadd.f32 %v7671, %v7785
        %v7792 = vld [vmem:[%s3 + $0xe] sm:$0x1]
        %v7793 = vlaneseq
        %v7794 = vshrl.u32 %v7793, 7
        %v7795 = vsub.s32 0, %v7794
        %v7796 = vrot.slane %v7792, %v7795
        %v7797 = vadd.f32 %v7788, %v7796
        %v7798 = vadd.f32 %v7789, %v7796
        %v7799 = vadd.f32 %v7790, %v7796
        %v7800 = vadd.f32 %v7791, %v7796
        %v7801 = vadd.f32 %v7797, %v7023
        %v7802 = vadd.f32 %v7798, %v7024
        %v7803 = vadd.f32 %v7799, %v7025
        %v7804 = vadd.f32 %v7800, %v7026
        %v7805 = vmax.f32 %v7801, 0.0
        %v7806 = vmax.f32 %v7802, 0.0
        %v7807 = vmax.f32 %v7803, 0.0
        %v7808 = vmax.f32 %v7804, 0.0
        %v7809 = vrot.slane %v7805, 7
        %v7810 = vrot.slane %v7806, 7
        %v7811 = vrot.slane %v7807, 7
        %v7812 = vrot.slane %v7808, 7
        %v7813 = vsel %vm449, %v7811, %v7812
        %v7814 = vsel %vm449, %v7810, %v7811
        %v7815 = vsel %vm449, %v7809, %v7810
        %v7816 = vsel %vm449, %v7812, %v7809
        %v7817 = vmul.f32 %v7816, %v220
        %v7818 = vmul.f32 %v7815, %v221
        %v7819 = vmul.f32 %v7814, %v222
        %v7820 = vmul.f32 %v7813, %v223
        %v7821 = vpack.c.bf16 %v7818, %v7817
        %v7822 = vpack.c.bf16 %v7820, %v7819
        %v7823 = vpack.c.bf16 %v7806, %v7805
        %v7824 = vpack.c.bf16 %v7808, %v7807
        %v7825 = vrot.slane %v7805, 1
        %v7826 = vrot.slane %v7806, 1
        %v7827 = vrot.slane %v7807, 1
        %v7828 = vrot.slane %v7808, 1
        %v7829 = vsel %vm506, %v7827, %v7828
        %v7830 = vsel %vm506, %v7826, %v7827
        %v7831 = vsel %vm506, %v7825, %v7826
        %v7832 = vsel %vm506, %v7828, %v7825
        %v7833 = vmul.f32 %v7831, %v228
        %v7834 = vmul.f32 %v7830, %v229
        %v7835 = vmul.f32 %v7829, %v230
        %v7836 = vmul.f32 %v7832, %v231
        %v7837 = vpack.c.bf16 %v7834, %v7833
        %v7838 = vpack.c.bf16 %v7836, %v7835
        %s7839 = scalar_lea.vmem %s2, 256
        %v7840 = vld [vmem:[%s7839] sm:$0xff]
        %v7841 = vld [vmem:[%s7839 + $0x8] sm:$0xff]
        %v7842 = vld [vmem:[%s7839 + $0x10] sm:$0xff]
        %v7843 = vld [vmem:[%s7839 + $0x18] sm:$0xff]
        %v7844 = vld [vmem:[%s7839 + $0x20] sm:$0xff]
        %v7845 = vld [vmem:[%s7839 + $0x28] sm:$0xff]
        %v7846 = vld [vmem:[%s7839 + $0x30] sm:$0xff]
        %v7847 = vld [vmem:[%s7839 + $0x38] sm:$0xff]
        %v7848 = vld [vmem:[%s7839 + $0x40] sm:$0xff]
        %v7849 = vld [vmem:[%s7839 + $0x48] sm:$0xff]
        %v7850 = vld [vmem:[%s7839 + $0x50] sm:$0xff]
        %v7851 = vld [vmem:[%s7839 + $0x58] sm:$0xff]
        %v7852 = vld [vmem:[%s7839 + $0x60] sm:$0xff]
        %v7853 = vld [vmem:[%s7839 + $0x68] sm:$0xff]
        %v7854 = vld [vmem:[%s7839 + $0x70] sm:$0xff]
        %v7855 = vld [vmem:[%s7839 + $0x78] sm:$0xff]
        %v7872 = vunpack.c.l.b16 %v7840
        %v7873 = vunpack.c.h.b16 %v7840
        %v7874 = vunpack.c.l.b16 %v7841
        %v7875 = vunpack.c.h.b16 %v7841
        %v7876 = vunpack.c.l.b16 %v7842
        %v7877 = vunpack.c.h.b16 %v7842
        %v7878 = vunpack.c.l.b16 %v7843
        %v7879 = vunpack.c.h.b16 %v7843
        %v7880 = vunpack.c.l.b16 %v7844
        %v7881 = vunpack.c.h.b16 %v7844
        %v7882 = vunpack.c.l.b16 %v7845
        %v7883 = vunpack.c.h.b16 %v7845
        %v7884 = vunpack.c.l.b16 %v7846
        %v7885 = vunpack.c.h.b16 %v7846
        %v7886 = vunpack.c.l.b16 %v7847
        %v7887 = vunpack.c.h.b16 %v7847
        %v7888 = vunpack.c.l.b16 %v7848
        %v7889 = vunpack.c.h.b16 %v7848
        %v7890 = vunpack.c.l.b16 %v7849
        %v7891 = vunpack.c.h.b16 %v7849
        %v7892 = vunpack.c.l.b16 %v7850
        %v7893 = vunpack.c.h.b16 %v7850
        %v7894 = vunpack.c.l.b16 %v7851
        %v7895 = vunpack.c.h.b16 %v7851
        %v7896 = vunpack.c.l.b16 %v7852
        %v7897 = vunpack.c.h.b16 %v7852
        %v7898 = vunpack.c.l.b16 %v7853
        %v7899 = vunpack.c.h.b16 %v7853
        %v7900 = vunpack.c.l.b16 %v7854
        %v7901 = vunpack.c.h.b16 %v7854
        %v7902 = vunpack.c.l.b16 %v7855
        %v7903 = vunpack.c.h.b16 %v7855
        %v7904 = vpack.c.b16 %v7874, %v7872
        %v7905 = vpack.c.b16 %v7875, %v7873
        %v7906 = vpack.c.b16 %v7878, %v7876
        %v7907 = vpack.c.b16 %v7879, %v7877
        %v7908 = vpack.c.b16 %v7882, %v7880
        %v7909 = vpack.c.b16 %v7883, %v7881
        %v7910 = vpack.c.b16 %v7886, %v7884
        %v7911 = vpack.c.b16 %v7887, %v7885
        %v7912 = vpack.c.b16 %v7890, %v7888
        %v7913 = vpack.c.b16 %v7891, %v7889
        %v7914 = vpack.c.b16 %v7894, %v7892
        %v7915 = vpack.c.b16 %v7895, %v7893
        %v7916 = vpack.c.b16 %v7898, %v7896
        %v7917 = vpack.c.b16 %v7899, %v7897
        %v7918 = vpack.c.b16 %v7902, %v7900
        %v7919 = vpack.c.b16 %v7903, %v7901
        %7936 = vmatprep.subr.bf16.mxu0 %v7905
        %7937 = vmatpush1.bf16.msra.mxu0 %v7904
        %7938 = vmatprep.subr.bf16.mxu0 %v7907
        %7939 = vmatpush1.bf16.msra.mxu0 %v7906
        %7940 = vmatprep.subr.bf16.mxu0 %v7909
        %7941 = vmatpush1.bf16.msra.mxu0 %v7908
        %7942 = vmatprep.subr.bf16.mxu0 %v7911
        %7943 = vmatpush1.bf16.msra.mxu0 %v7910
        %7944 = vmatprep.subr.bf16.mxu0 %v7913
        %7945 = vmatpush1.bf16.msra.mxu0 %v7912
        %7946 = vmatprep.subr.bf16.mxu0 %v7915
        %7947 = vmatpush1.bf16.msra.mxu0 %v7914
        %7948 = vmatprep.subr.bf16.mxu0 %v7917
        %7949 = vmatpush1.bf16.msra.mxu0 %v7916
        %7950 = vmatprep.subr.bf16.mxu0 %v7919
        %7951 = vmatpush1.bf16.msra.mxu0 %v7918
        %7952 = vmatprep.subr.bf16.mxu0 0
        %7953 = vmatpush1.bf16.msra.mxu0 0
        %7954 = vmatprep.subr.bf16.mxu0 0
        %7955 = vmatpush1.bf16.msra.mxu0 0
        %7956 = vmatprep.subr.bf16.mxu0 0
        %7957 = vmatpush1.bf16.msra.mxu0 0
        %7958 = vmatprep.subr.bf16.mxu0 0
        %7959 = vmatpush1.bf16.msra.mxu0 0
        %7960 = vmatprep.subr.bf16.mxu0 0
        %7961 = vmatpush1.bf16.msra.mxu0 0
        %7962 = vmatprep.subr.bf16.mxu0 0
        %7963 = vmatpush1.bf16.msra.mxu0 0
        %7964 = vmatprep.subr.bf16.mxu0 0
        %7965 = vmatpush1.bf16.msra.mxu0 0
        %7966 = vmatprep.subr.bf16.mxu0 0
        %7967 = vmatpush1.bf16.msra.mxu0 0
        %7968 = vmatprep.mubr.bf16.mxu0 0
        %7969 = vmatmul.mubr.bf16.gmra.mrb[0].mxu0 %v7823
        %v7970 = vpop.f32.mrb[0].mxu0
        %v7971 = vadd.f32 0.0, %v7970
        %v7972 = vpop.f32.mrb[0].mxu0
        %v7973 = vadd.f32 0.0, %v7972
        %v7974 = vpop.f32.mrb[0].mxu0
        %v7975 = vadd.f32 0.0, %v7974
        %v7976 = vpop.f32.mrb[0].mxu0
        %v7977 = vadd.f32 0.0, %v7976
        %7978 = vmatprep.mubr.bf16.mxu0 0
        %7979 = vmatmul.mubr.bf16.gmra.mrb[0].mxu0 %v7824
        %v7980 = vpop.f32.mrb[0].mxu0
        %v7981 = vadd.f32 0.0, %v7980
        %v7982 = vpop.f32.mrb[0].mxu0
        %v7983 = vadd.f32 0.0, %v7982
        %v7984 = vpop.f32.mrb[0].mxu0
        %v7985 = vadd.f32 0.0, %v7984
        %v7986 = vpop.f32.mrb[0].mxu0
        %v7987 = vadd.f32 0.0, %v7986
        %7988 = vdwg.mxu0
        %s7989 = scalar_lea.vmem %s1, 2368
        %v7990 = vld [vmem:[%s7989] sm:$0xf]
        %v7991 = vld [vmem:[%s7989 + $0x4] sm:$0xf]
        %v7992 = vld [vmem:[%s7989 + $0x8] sm:$0xf]
        %v7993 = vld [vmem:[%s7989 + $0xc] sm:$0xf]
        %v7994 = vld [vmem:[%s7989 + $0x10] sm:$0xf]
        %v7995 = vld [vmem:[%s7989 + $0x14] sm:$0xf]
        %v7996 = vld [vmem:[%s7989 + $0x18] sm:$0xf]
        %v7997 = vld [vmem:[%s7989 + $0x1c] sm:$0xf]
        %v7998 = vld [vmem:[%s7989 + $0x20] sm:$0xf]
        %v7999 = vld [vmem:[%s7989 + $0x24] sm:$0xf]
        %v8000 = vld [vmem:[%s7989 + $0x28] sm:$0xf]
        %v8001 = vld [vmem:[%s7989 + $0x2c] sm:$0xf]
        %v8002 = vld [vmem:[%s7989 + $0x30] sm:$0xf]
        %v8003 = vld [vmem:[%s7989 + $0x34] sm:$0xf]
        %v8004 = vld [vmem:[%s7989 + $0x38] sm:$0xf]
        %v8005 = vld [vmem:[%s7989 + $0x3c] sm:$0xf]
        %v8022 = vunpack.c.l.b16 %v7990
        %v8023 = vunpack.c.l.b16 %v7991
        %v8024 = vunpack.c.l.b16 %v7992
        %v8025 = vunpack.c.l.b16 %v7993
        %v8026 = vunpack.c.l.b16 %v7994
        %v8027 = vunpack.c.l.b16 %v7995
        %v8028 = vunpack.c.l.b16 %v7996
        %v8029 = vunpack.c.l.b16 %v7997
        %v8030 = vunpack.c.l.b16 %v7998
        %v8031 = vunpack.c.l.b16 %v7999
        %v8032 = vunpack.c.l.b16 %v8000
        %v8033 = vunpack.c.l.b16 %v8001
        %v8034 = vunpack.c.l.b16 %v8002
        %v8035 = vunpack.c.l.b16 %v8003
        %v8036 = vunpack.c.l.b16 %v8004
        %v8037 = vunpack.c.l.b16 %v8005
        %v8038 = vpack.c.b16 %v8023, %v8022
        %v8039 = vpack.c.b16 %v8025, %v8024
        %v8040 = vpack.c.b16 %v8027, %v8026
        %v8041 = vpack.c.b16 %v8029, %v8028
        %v8042 = vpack.c.b16 %v8031, %v8030
        %v8043 = vpack.c.b16 %v8033, %v8032
        %v8044 = vpack.c.b16 %v8035, %v8034
        %v8045 = vpack.c.b16 %v8037, %v8036
        %8054 = vmatprep.subr.bf16.mxu0 0
        %8055 = vmatpush1.bf16.msra.mxu0 %v8038
        %8056 = vmatprep.subr.bf16.mxu0 0
        %8057 = vmatpush1.bf16.msra.mxu0 %v8039
        %8058 = vmatprep.subr.bf16.mxu0 0
        %8059 = vmatpush1.bf16.msra.mxu0 %v8040
        %8060 = vmatprep.subr.bf16.mxu0 0
        %8061 = vmatpush1.bf16.msra.mxu0 %v8041
        %8062 = vmatprep.subr.bf16.mxu0 0
        %8063 = vmatpush1.bf16.msra.mxu0 %v8042
        %8064 = vmatprep.subr.bf16.mxu0 0
        %8065 = vmatpush1.bf16.msra.mxu0 %v8043
        %8066 = vmatprep.subr.bf16.mxu0 0
        %8067 = vmatpush1.bf16.msra.mxu0 %v8044
        %8068 = vmatprep.subr.bf16.mxu0 0
        %8069 = vmatpush1.bf16.msra.mxu0 %v8045
        %8070 = vmatprep.subr.bf16.mxu0 0
        %8071 = vmatpush1.bf16.msra.mxu0 0
        %8072 = vmatprep.subr.bf16.mxu0 0
        %8073 = vmatpush1.bf16.msra.mxu0 0
        %8074 = vmatprep.subr.bf16.mxu0 0
        %8075 = vmatpush1.bf16.msra.mxu0 0
        %8076 = vmatprep.subr.bf16.mxu0 0
        %8077 = vmatpush1.bf16.msra.mxu0 0
        %8078 = vmatprep.subr.bf16.mxu0 0
        %8079 = vmatpush1.bf16.msra.mxu0 0
        %8080 = vmatprep.subr.bf16.mxu0 0
        %8081 = vmatpush1.bf16.msra.mxu0 0
        %8082 = vmatprep.subr.bf16.mxu0 0
        %8083 = vmatpush1.bf16.msra.mxu0 0
        %8084 = vmatprep.subr.bf16.mxu0 0
        %8085 = vmatpush1.bf16.msra.mxu0 0
        %8086 = vmatprep.mubr.bf16.mxu0 0
        %8087 = vmatmul.mubr.bf16.gmra.mrb[0].mxu0 %v7821
        %v8088 = vpop.f32.mrb[0].mxu0
        %v8089 = vadd.f32 %v7971, %v8088
        %v8090 = vpop.f32.mrb[0].mxu0
        %v8091 = vpop.f32.mrb[0].mxu0
        %v8092 = vadd.f32 %v7975, %v8091
        %v8093 = vpop.f32.mrb[0].mxu0
        %8094 = vmatprep.mubr.bf16.mxu0 0
        %8095 = vmatmul.mubr.bf16.gmra.mrb[0].mxu0 %v7822
        %v8096 = vpop.f32.mrb[0].mxu0
        %v8097 = vadd.f32 %v7981, %v8096
        %v8098 = vpop.f32.mrb[0].mxu0
        %v8099 = vpop.f32.mrb[0].mxu0
        %v8100 = vadd.f32 %v7985, %v8099
        %v8101 = vpop.f32.mrb[0].mxu0
        %8102 = vdwg.mxu0
        %s8103 = scalar_lea.vmem %s1, 2432
        %v8104 = vld [vmem:[%s8103] sm:$0xf]
        %v8105 = vld [vmem:[%s8103 + $0x4] sm:$0xf]
        %v8106 = vld [vmem:[%s8103 + $0x8] sm:$0xf]
        %v8107 = vld [vmem:[%s8103 + $0xc] sm:$0xf]
        %v8108 = vld [vmem:[%s8103 + $0x10] sm:$0xf]
        %v8109 = vld [vmem:[%s8103 + $0x14] sm:$0xf]
        %v8110 = vld [vmem:[%s8103 + $0x18] sm:$0xf]
        %v8111 = vld [vmem:[%s8103 + $0x1c] sm:$0xf]
        %v8112 = vld [vmem:[%s8103 + $0x20] sm:$0xf]
        %v8113 = vld [vmem:[%s8103 + $0x24] sm:$0xf]
        %v8114 = vld [vmem:[%s8103 + $0x28] sm:$0xf]
        %v8115 = vld [vmem:[%s8103 + $0x2c] sm:$0xf]
        %v8116 = vld [vmem:[%s8103 + $0x30] sm:$0xf]
        %v8117 = vld [vmem:[%s8103 + $0x34] sm:$0xf]
        %v8118 = vld [vmem:[%s8103 + $0x38] sm:$0xf]
        %v8119 = vld [vmem:[%s8103 + $0x3c] sm:$0xf]
        %v8136 = vunpack.c.l.b16 %v8104
        %v8137 = vunpack.c.l.b16 %v8105
        %v8138 = vunpack.c.l.b16 %v8106
        %v8139 = vunpack.c.l.b16 %v8107
        %v8140 = vunpack.c.l.b16 %v8108
        %v8141 = vunpack.c.l.b16 %v8109
        %v8142 = vunpack.c.l.b16 %v8110
        %v8143 = vunpack.c.l.b16 %v8111
        %v8144 = vunpack.c.l.b16 %v8112
        %v8145 = vunpack.c.l.b16 %v8113
        %v8146 = vunpack.c.l.b16 %v8114
        %v8147 = vunpack.c.l.b16 %v8115
        %v8148 = vunpack.c.l.b16 %v8116
        %v8149 = vunpack.c.l.b16 %v8117
        %v8150 = vunpack.c.l.b16 %v8118
        %v8151 = vunpack.c.l.b16 %v8119
        %v8152 = vpack.c.b16 %v8137, %v8136
        %v8153 = vpack.c.b16 %v8139, %v8138
        %v8154 = vpack.c.b16 %v8141, %v8140
        %v8155 = vpack.c.b16 %v8143, %v8142
        %v8156 = vpack.c.b16 %v8145, %v8144
        %v8157 = vpack.c.b16 %v8147, %v8146
        %v8158 = vpack.c.b16 %v8149, %v8148
        %v8159 = vpack.c.b16 %v8151, %v8150
        %8168 = vmatprep.subr.bf16.mxu0 0
        %8169 = vmatpush1.bf16.msra.mxu0 %v8152
        %8170 = vmatprep.subr.bf16.mxu0 0
        %8171 = vmatpush1.bf16.msra.mxu0 %v8153
        %8172 = vmatprep.subr.bf16.mxu0 0
        %8173 = vmatpush1.bf16.msra.mxu0 %v8154
        %8174 = vmatprep.subr.bf16.mxu0 0
        %8175 = vmatpush1.bf16.msra.mxu0 %v8155
        %8176 = vmatprep.subr.bf16.mxu0 0
        %8177 = vmatpush1.bf16.msra.mxu0 %v8156
        %8178 = vmatprep.subr.bf16.mxu0 0
        %8179 = vmatpush1.bf16.msra.mxu0 %v8157
        %8180 = vmatprep.subr.bf16.mxu0 0
        %8181 = vmatpush1.bf16.msra.mxu0 %v8158
        %8182 = vmatprep.subr.bf16.mxu0 0
        %8183 = vmatpush1.bf16.msra.mxu0 %v8159
        %8184 = vmatprep.subr.bf16.mxu0 0
        %8185 = vmatpush1.bf16.msra.mxu0 0
        %8186 = vmatprep.subr.bf16.mxu0 0
        %8187 = vmatpush1.bf16.msra.mxu0 0
        %8188 = vmatprep.subr.bf16.mxu0 0
        %8189 = vmatpush1.bf16.msra.mxu0 0
        %8190 = vmatprep.subr.bf16.mxu0 0
        %8191 = vmatpush1.bf16.msra.mxu0 0
        %8192 = vmatprep.subr.bf16.mxu0 0
        %8193 = vmatpush1.bf16.msra.mxu0 0
        %8194 = vmatprep.subr.bf16.mxu0 0
        %8195 = vmatpush1.bf16.msra.mxu0 0
        %8196 = vmatprep.subr.bf16.mxu0 0
        %8197 = vmatpush1.bf16.msra.mxu0 0
        %8198 = vmatprep.subr.bf16.mxu0 0
        %8199 = vmatpush1.bf16.msra.mxu0 0
        %8200 = vmatprep.mubr.bf16.mxu0 0
        %8201 = vmatmul.mubr.bf16.gmra.mrb[0].mxu0 %v7837
        %v8202 = vpop.f32.mrb[0].mxu0
        %v8203 = vadd.f32 0.0, %v8202
        %v8204 = vpop.f32.mrb[0].mxu0
        %v8205 = vpop.f32.mrb[0].mxu0
        %v8206 = vadd.f32 0.0, %v8205
        %v8207 = vpop.f32.mrb[0].mxu0
        %8208 = vmatprep.mubr.bf16.mxu0 0
        %8209 = vmatmul.mubr.bf16.gmra.mrb[0].mxu0 %v7838
        %v8210 = vpop.f32.mrb[0].mxu0
        %v8211 = vadd.f32 0.0, %v8210
        %v8212 = vpop.f32.mrb[0].mxu0
        %v8213 = vpop.f32.mrb[0].mxu0
        %v8214 = vadd.f32 0.0, %v8213
        %v8215 = vpop.f32.mrb[0].mxu0
        %8216 = vdwg.mxu0
        %v8217 = vadd.f32 %v8089, %v8203
        %v8218 = vadd.f32 %v8092, %v8206
        %v8219 = vadd.f32 %v8097, %v8211
        %v8220 = vadd.f32 %v8100, %v8214
        %v8221 = vpack.c.bf16 %v8218, %v8217
        %v8222 = vpack.c.bf16 %v7977, %v7973
        %v8223 = vpack.c.bf16 %v8220, %v8219
        %v8224 = vpack.c.bf16 %v7987, %v7983
        %vm8225 = vcmask 261120
        %v8226 = vsel %vm8225, %v372, 0
        %8228 = vmatprep.subr.bf16.mxu0 %v8222
        %8229 = vmatpush1.bf16.msra.mxu0 %v8221
        %8230 = vmatprep.subr.bf16.mxu0 %v8224
        %8231 = vmatpush1.bf16.msra.mxu0 %v8223
        %8232 = vmatprep.subr.bf16.mxu0 0
        %8233 = vmatpush1.bf16.msra.mxu0 0
        %8234 = vmatprep.subr.bf16.mxu0 0
        %8235 = vmatpush1.bf16.msra.mxu0 0
        %8236 = vmatprep.subr.bf16.mxu0 0
        %8237 = vmatpush1.bf16.msra.mxu0 0
        %8238 = vmatprep.subr.bf16.mxu0 0
        %8239 = vmatpush1.bf16.msra.mxu0 0
        %8240 = vmatprep.subr.bf16.mxu0 0
        %8241 = vmatpush1.bf16.msra.mxu0 0
        %8242 = vmatprep.subr.bf16.mxu0 0
        %8243 = vmatpush1.bf16.msra.mxu0 0
        %8244 = vmatprep.subr.bf16.mxu0 0
        %8245 = vmatpush1.bf16.msra.mxu0 0
        %8246 = vmatprep.subr.bf16.mxu0 0
        %8247 = vmatpush1.bf16.msra.mxu0 0
        %8248 = vmatprep.subr.bf16.mxu0 0
        %8249 = vmatpush1.bf16.msra.mxu0 0
        %8250 = vmatprep.subr.bf16.mxu0 0
        %8251 = vmatpush1.bf16.msra.mxu0 0
        %8252 = vmatprep.subr.bf16.mxu0 0
        %8253 = vmatpush1.bf16.msra.mxu0 0
        %8254 = vmatprep.subr.bf16.mxu0 0
        %8255 = vmatpush1.bf16.msra.mxu0 0
        %8256 = vmatprep.subr.bf16.mxu0 0
        %8257 = vmatpush1.bf16.msra.mxu0 0
        %8258 = vmatprep.subr.bf16.mxu0 0
        %8259 = vmatpush1.bf16.msra.mxu0 0
        %8260 = vmatprep.mubr.bf16.mxu0 0
        %8261 = vmatmul.mubr.bf16.gmra.mrb[0].mxu0 %v8226
        %v8262 = vpop.f32.mrb[0].mxu0
        %v8263 = vadd.f32 0.0, %v8262
        %v8264 = vpop.f32.mrb[0].mxu0
        %v8265 = vadd.f32 0.0, %v8264
        %v8266 = vpop.f32.mrb[0].mxu0
        %v8267 = vadd.f32 0.0, %v8266
        %v8268 = vpop.f32.mrb[0].mxu0
        %v8269 = vadd.f32 0.0, %v8268
        %8270 = vdwg.mxu0
        %v8271 = vld [vmem:[%s3 + $0xf] sm:$0x1]
        %v8272 = vlaneseq
        %v8273 = vshrl.u32 %v8272, 7
        %v8274 = vsub.s32 0, %v8273
        %v8275 = vrot.slane %v8271, %v8274
        %v8276 = vadd.f32 %v8263, %v8275
        %v8277 = vadd.f32 %v8267, %v8275
        %v8278 = vmax.f32 %v8276, 0.0
        %v8279 = vmax.f32 %v8277, 0.0
        %v8280 = vrot.slane %v8278, 7
        %v8281 = vrot.slane %v8279, 7
        %v8282 = vsel %vm449, %v8280, %v8281
        %v8283 = vsel %vm449, %v8281, %v8280
        %v8284 = vmul.f32 %v8283, %v204
        %v8285 = vmul.f32 %v8282, %v205
        %v8286 = vpack.c.bf16 %v8285, %v8284
        %v8287 = vpack.c.bf16 %v8279, %v8278
        %v8288 = vrot.slane %v8278, 1
        %v8289 = vrot.slane %v8279, 1
        %v8290 = vsel %vm506, %v8288, %v8289
        %v8291 = vsel %vm506, %v8289, %v8288
        %v8292 = vmul.f32 %v8290, %v208
        %v8293 = vmul.f32 %v8291, %v209
        %v8294 = vpack.c.bf16 %v8293, %v8292
        %s8295 = scalar_lea.vmem %s1, 2496
        %v8296 = vld [vmem:[%s8295] sm:$0xf]
        %v8297 = vld [vmem:[%s8295 + $0x4] sm:$0xf]
        %v8298 = vld [vmem:[%s8295 + $0x8] sm:$0xf]
        %v8299 = vld [vmem:[%s8295 + $0xc] sm:$0xf]
        %v8300 = vld [vmem:[%s8295 + $0x10] sm:$0xf]
        %v8301 = vld [vmem:[%s8295 + $0x14] sm:$0xf]
        %v8302 = vld [vmem:[%s8295 + $0x18] sm:$0xf]
        %v8303 = vld [vmem:[%s8295 + $0x1c] sm:$0xf]
        %v8304 = vld [vmem:[%s8295 + $0x20] sm:$0xf]
        %v8305 = vld [vmem:[%s8295 + $0x24] sm:$0xf]
        %v8306 = vld [vmem:[%s8295 + $0x28] sm:$0xf]
        %v8307 = vld [vmem:[%s8295 + $0x2c] sm:$0xf]
        %v8308 = vld [vmem:[%s8295 + $0x30] sm:$0xf]
        %v8309 = vld [vmem:[%s8295 + $0x34] sm:$0xf]
        %v8310 = vld [vmem:[%s8295 + $0x38] sm:$0xf]
        %v8311 = vld [vmem:[%s8295 + $0x3c] sm:$0xf]
        %s8312 = scalar_lea.vmem %s1, 2560
        %v8313 = vld [vmem:[%s8312] sm:$0xf]
        %v8314 = vld [vmem:[%s8312 + $0x4] sm:$0xf]
        %v8315 = vld [vmem:[%s8312 + $0x8] sm:$0xf]
        %v8316 = vld [vmem:[%s8312 + $0xc] sm:$0xf]
        %v8317 = vld [vmem:[%s8312 + $0x10] sm:$0xf]
        %v8318 = vld [vmem:[%s8312 + $0x14] sm:$0xf]
        %v8319 = vld [vmem:[%s8312 + $0x18] sm:$0xf]
        %v8320 = vld [vmem:[%s8312 + $0x1c] sm:$0xf]
        %v8321 = vld [vmem:[%s8312 + $0x20] sm:$0xf]
        %v8322 = vld [vmem:[%s8312 + $0x24] sm:$0xf]
        %v8323 = vld [vmem:[%s8312 + $0x28] sm:$0xf]
        %v8324 = vld [vmem:[%s8312 + $0x2c] sm:$0xf]
        %v8325 = vld [vmem:[%s8312 + $0x30] sm:$0xf]
        %v8326 = vld [vmem:[%s8312 + $0x34] sm:$0xf]
        %v8327 = vld [vmem:[%s8312 + $0x38] sm:$0xf]
        %v8328 = vld [vmem:[%s8312 + $0x3c] sm:$0xf]
        %v8345 = vunpack.c.l.b16 %v8313
        %v8346 = vunpack.c.l.b16 %v8314
        %v8347 = vunpack.c.l.b16 %v8315
        %v8348 = vunpack.c.l.b16 %v8316
        %v8349 = vunpack.c.l.b16 %v8317
        %v8350 = vunpack.c.l.b16 %v8318
        %v8351 = vunpack.c.l.b16 %v8319
        %v8352 = vunpack.c.l.b16 %v8320
        %v8353 = vunpack.c.l.b16 %v8321
        %v8354 = vunpack.c.l.b16 %v8322
        %v8355 = vunpack.c.l.b16 %v8323
        %v8356 = vunpack.c.l.b16 %v8324
        %v8357 = vunpack.c.l.b16 %v8325
        %v8358 = vunpack.c.l.b16 %v8326
        %v8359 = vunpack.c.l.b16 %v8327
        %v8360 = vunpack.c.l.b16 %v8328
        %v8361 = vpack.c.b16 %v8346, %v8345
        %v8362 = vpack.c.b16 %v8348, %v8347
        %v8363 = vpack.c.b16 %v8350, %v8349
        %v8364 = vpack.c.b16 %v8352, %v8351
        %v8365 = vpack.c.b16 %v8354, %v8353
        %v8366 = vpack.c.b16 %v8356, %v8355
        %v8367 = vpack.c.b16 %v8358, %v8357
        %v8368 = vpack.c.b16 %v8360, %v8359
        %8377 = vmatprep.subr.bf16.mxu0 0
        %8378 = vmatpush1.bf16.msra.mxu0 %v8361
        %8379 = vmatprep.subr.bf16.mxu0 0
        %8380 = vmatpush1.bf16.msra.mxu0 %v8362
        %8381 = vmatprep.subr.bf16.mxu0 0
        %8382 = vmatpush1.bf16.msra.mxu0 %v8363
        %8383 = vmatprep.subr.bf16.mxu0 0
        %8384 = vmatpush1.bf16.msra.mxu0 %v8364
        %8385 = vmatprep.subr.bf16.mxu0 0
        %8386 = vmatpush1.bf16.msra.mxu0 %v8365
        %8387 = vmatprep.subr.bf16.mxu0 0
        %8388 = vmatpush1.bf16.msra.mxu0 %v8366
        %8389 = vmatprep.subr.bf16.mxu0 0
        %8390 = vmatpush1.bf16.msra.mxu0 %v8367
        %8391 = vmatprep.subr.bf16.mxu0 0
        %8392 = vmatpush1.bf16.msra.mxu0 %v8368
        %8393 = vmatprep.subr.bf16.mxu0 0
        %8394 = vmatpush1.bf16.msra.mxu0 0
        %8395 = vmatprep.subr.bf16.mxu0 0
        %8396 = vmatpush1.bf16.msra.mxu0 0
        %8397 = vmatprep.subr.bf16.mxu0 0
        %8398 = vmatpush1.bf16.msra.mxu0 0
        %8399 = vmatprep.subr.bf16.mxu0 0
        %8400 = vmatpush1.bf16.msra.mxu0 0
        %8401 = vmatprep.subr.bf16.mxu0 0
        %8402 = vmatpush1.bf16.msra.mxu0 0
        %8403 = vmatprep.subr.bf16.mxu0 0
        %8404 = vmatpush1.bf16.msra.mxu0 0
        %8405 = vmatprep.subr.bf16.mxu0 0
        %8406 = vmatpush1.bf16.msra.mxu0 0
        %8407 = vmatprep.subr.bf16.mxu0 0
        %8408 = vmatpush1.bf16.msra.mxu0 0
        %8409 = vmatprep.mubr.bf16.mxu0 0
        %8410 = vmatmul.mubr.bf16.gmra.mrb[0].mxu0 %v8287
        %v8411 = vpop.f32.mrb[0].mxu0
        %v8412 = vadd.f32 0.0, %v8411
        %v8413 = vpop.f32.mrb[0].mxu0
        %v8414 = vpop.f32.mrb[0].mxu0
        %v8415 = vadd.f32 0.0, %v8414
        %v8416 = vpop.f32.mrb[0].mxu0
        %8417 = vdwg.mxu0
        %v8434 = vunpack.c.l.b16 %v8296
        %v8435 = vunpack.c.l.b16 %v8297
        %v8436 = vunpack.c.l.b16 %v8298
        %v8437 = vunpack.c.l.b16 %v8299
        %v8438 = vunpack.c.l.b16 %v8300
        %v8439 = vunpack.c.l.b16 %v8301
        %v8440 = vunpack.c.l.b16 %v8302
        %v8441 = vunpack.c.l.b16 %v8303
        %v8442 = vunpack.c.l.b16 %v8304
        %v8443 = vunpack.c.l.b16 %v8305
        %v8444 = vunpack.c.l.b16 %v8306
        %v8445 = vunpack.c.l.b16 %v8307
        %v8446 = vunpack.c.l.b16 %v8308
        %v8447 = vunpack.c.l.b16 %v8309
        %v8448 = vunpack.c.l.b16 %v8310
        %v8449 = vunpack.c.l.b16 %v8311
        %v8450 = vpack.c.b16 %v8435, %v8434
        %v8451 = vpack.c.b16 %v8437, %v8436
        %v8452 = vpack.c.b16 %v8439, %v8438
        %v8453 = vpack.c.b16 %v8441, %v8440
        %v8454 = vpack.c.b16 %v8443, %v8442
        %v8455 = vpack.c.b16 %v8445, %v8444
        %v8456 = vpack.c.b16 %v8447, %v8446
        %v8457 = vpack.c.b16 %v8449, %v8448
        %8466 = vmatprep.subr.bf16.mxu0 0
        %8467 = vmatpush1.bf16.msra.mxu0 %v8450
        %8468 = vmatprep.subr.bf16.mxu0 0
        %8469 = vmatpush1.bf16.msra.mxu0 %v8451
        %8470 = vmatprep.subr.bf16.mxu0 0
        %8471 = vmatpush1.bf16.msra.mxu0 %v8452
        %8472 = vmatprep.subr.bf16.mxu0 0
        %8473 = vmatpush1.bf16.msra.mxu0 %v8453
        %8474 = vmatprep.subr.bf16.mxu0 0
        %8475 = vmatpush1.bf16.msra.mxu0 %v8454
        %8476 = vmatprep.subr.bf16.mxu0 0
        %8477 = vmatpush1.bf16.msra.mxu0 %v8455
        %8478 = vmatprep.subr.bf16.mxu0 0
        %8479 = vmatpush1.bf16.msra.mxu0 %v8456
        %8480 = vmatprep.subr.bf16.mxu0 0
        %8481 = vmatpush1.bf16.msra.mxu0 %v8457
        %8482 = vmatprep.subr.bf16.mxu0 0
        %8483 = vmatpush1.bf16.msra.mxu0 0
        %8484 = vmatprep.subr.bf16.mxu0 0
        %8485 = vmatpush1.bf16.msra.mxu0 0
        %8486 = vmatprep.subr.bf16.mxu0 0
        %8487 = vmatpush1.bf16.msra.mxu0 0
        %8488 = vmatprep.subr.bf16.mxu0 0
        %8489 = vmatpush1.bf16.msra.mxu0 0
        %8490 = vmatprep.subr.bf16.mxu0 0
        %8491 = vmatpush1.bf16.msra.mxu0 0
        %8492 = vmatprep.subr.bf16.mxu0 0
        %8493 = vmatpush1.bf16.msra.mxu0 0
        %8494 = vmatprep.subr.bf16.mxu0 0
        %8495 = vmatpush1.bf16.msra.mxu0 0
        %8496 = vmatprep.subr.bf16.mxu0 0
        %8497 = vmatpush1.bf16.msra.mxu0 0
        %8498 = vmatprep.mubr.bf16.mxu0 0
        %8499 = vmatmul.mubr.bf16.gmra.mrb[0].mxu0 %v8286
        %v8500 = vpop.f32.mrb[0].mxu0
        %v8501 = vadd.f32 %v8412, %v8500
        %v8502 = vpop.f32.mrb[0].mxu0
        %v8503 = vpop.f32.mrb[0].mxu0
        %v8504 = vadd.f32 %v8415, %v8503
        %v8505 = vpop.f32.mrb[0].mxu0
        %8506 = vdwg.mxu0
        %s8507 = scalar_lea.vmem %s1, 2624
        %v8508 = vld [vmem:[%s8507] sm:$0xf]
        %v8509 = vld [vmem:[%s8507 + $0x4] sm:$0xf]
        %v8510 = vld [vmem:[%s8507 + $0x8] sm:$0xf]
        %v8511 = vld [vmem:[%s8507 + $0xc] sm:$0xf]
        %v8512 = vld [vmem:[%s8507 + $0x10] sm:$0xf]
        %v8513 = vld [vmem:[%s8507 + $0x14] sm:$0xf]
        %v8514 = vld [vmem:[%s8507 + $0x18] sm:$0xf]
        %v8515 = vld [vmem:[%s8507 + $0x1c] sm:$0xf]
        %v8516 = vld [vmem:[%s8507 + $0x20] sm:$0xf]
        %v8517 = vld [vmem:[%s8507 + $0x24] sm:$0xf]
        %v8518 = vld [vmem:[%s8507 + $0x28] sm:$0xf]
        %v8519 = vld [vmem:[%s8507 + $0x2c] sm:$0xf]
        %v8520 = vld [vmem:[%s8507 + $0x30] sm:$0xf]
        %v8521 = vld [vmem:[%s8507 + $0x34] sm:$0xf]
        %v8522 = vld [vmem:[%s8507 + $0x38] sm:$0xf]
        %v8523 = vld [vmem:[%s8507 + $0x3c] sm:$0xf]
        %v8540 = vunpack.c.l.b16 %v8508
        %v8541 = vunpack.c.l.b16 %v8509
        %v8542 = vunpack.c.l.b16 %v8510
        %v8543 = vunpack.c.l.b16 %v8511
        %v8544 = vunpack.c.l.b16 %v8512
        %v8545 = vunpack.c.l.b16 %v8513
        %v8546 = vunpack.c.l.b16 %v8514
        %v8547 = vunpack.c.l.b16 %v8515
        %v8548 = vunpack.c.l.b16 %v8516
        %v8549 = vunpack.c.l.b16 %v8517
        %v8550 = vunpack.c.l.b16 %v8518
        %v8551 = vunpack.c.l.b16 %v8519
        %v8552 = vunpack.c.l.b16 %v8520
        %v8553 = vunpack.c.l.b16 %v8521
        %v8554 = vunpack.c.l.b16 %v8522
        %v8555 = vunpack.c.l.b16 %v8523
        %v8556 = vpack.c.b16 %v8541, %v8540
        %v8557 = vpack.c.b16 %v8543, %v8542
        %v8558 = vpack.c.b16 %v8545, %v8544
        %v8559 = vpack.c.b16 %v8547, %v8546
        %v8560 = vpack.c.b16 %v8549, %v8548
        %v8561 = vpack.c.b16 %v8551, %v8550
        %v8562 = vpack.c.b16 %v8553, %v8552
        %v8563 = vpack.c.b16 %v8555, %v8554
        %8572 = vmatprep.subr.bf16.mxu0 0
        %8573 = vmatpush1.bf16.msra.mxu0 %v8556
        %8574 = vmatprep.subr.bf16.mxu0 0
        %8575 = vmatpush1.bf16.msra.mxu0 %v8557
        %8576 = vmatprep.subr.bf16.mxu0 0
        %8577 = vmatpush1.bf16.msra.mxu0 %v8558
        %8578 = vmatprep.subr.bf16.mxu0 0
        %8579 = vmatpush1.bf16.msra.mxu0 %v8559
        %8580 = vmatprep.subr.bf16.mxu0 0
        %8581 = vmatpush1.bf16.msra.mxu0 %v8560
        %8582 = vmatprep.subr.bf16.mxu0 0
        %8583 = vmatpush1.bf16.msra.mxu0 %v8561
        %8584 = vmatprep.subr.bf16.mxu0 0
        %8585 = vmatpush1.bf16.msra.mxu0 %v8562
        %8586 = vmatprep.subr.bf16.mxu0 0
        %8587 = vmatpush1.bf16.msra.mxu0 %v8563
        %8588 = vmatprep.subr.bf16.mxu0 0
        %8589 = vmatpush1.bf16.msra.mxu0 0
        %8590 = vmatprep.subr.bf16.mxu0 0
        %8591 = vmatpush1.bf16.msra.mxu0 0
        %8592 = vmatprep.subr.bf16.mxu0 0
        %8593 = vmatpush1.bf16.msra.mxu0 0
        %8594 = vmatprep.subr.bf16.mxu0 0
        %8595 = vmatpush1.bf16.msra.mxu0 0
        %8596 = vmatprep.subr.bf16.mxu0 0
        %8597 = vmatpush1.bf16.msra.mxu0 0
        %8598 = vmatprep.subr.bf16.mxu0 0
        %8599 = vmatpush1.bf16.msra.mxu0 0
        %8600 = vmatprep.subr.bf16.mxu0 0
        %8601 = vmatpush1.bf16.msra.mxu0 0
        %8602 = vmatprep.subr.bf16.mxu0 0
        %8603 = vmatpush1.bf16.msra.mxu0 0
        %8604 = vmatprep.mubr.bf16.mxu0 0
        %8605 = vmatmul.mubr.bf16.gmra.mrb[0].mxu0 %v8294
        %v8606 = vpop.f32.mrb[0].mxu0
        %v8607 = vadd.f32 0.0, %v8606
        %v8608 = vpop.f32.mrb[0].mxu0
        %v8609 = vpop.f32.mrb[0].mxu0
        %v8610 = vadd.f32 0.0, %v8609
        %v8611 = vpop.f32.mrb[0].mxu0
        %8612 = vdwg.mxu0
        %v8613 = vadd.f32 %v8501, %v8607
        %v8614 = vadd.f32 %v8504, %v8610
        %v8615 = vld [vmem:[%s3 + $0x11] sm:$0x1]
        %v8616 = vlaneseq
        %v8617 = vshrl.u32 %v8616, 7
        %v8618 = vsub.s32 0, %v8617
        %v8619 = vrot.slane %v8615, %v8618
        %v8620 = vadd.f32 %v8613, %v8619
        %v8621 = vadd.f32 %v8614, %v8619
        %v8622 = vld [vmem:[%s3 + $0x10] sm:$0x1]
        %v8623 = vlaneseq
        %v8624 = vshrl.u32 %v8623, 7
        %v8625 = vsub.s32 0, %v8624
        %v8626 = vrot.slane %v8622, %v8625
        %v8627 = vadd.f32 %v8265, %v8626
        %v8628 = vadd.f32 %v8269, %v8626
        %v8629 = vadd.f32 %v8620, %v8627
        %v8630 = vadd.f32 %v8621, %v8628
        %v8631 = vmax.f32 %v8629, 0.0
        %v8632 = vmax.f32 %v8630, 0.0
        %v8633 = vrot.slane %v8631, 7
        %v8634 = vrot.slane %v8632, 7
        %v8635 = vsel %vm449, %v8633, %v8634
        %v8636 = vsel %vm449, %v8634, %v8633
        %v8637 = vmul.f32 %v8636, %v204
        %v8638 = vmul.f32 %v8635, %v205
        %v8639 = vpack.c.bf16 %v8638, %v8637
        %v8640 = vpack.c.bf16 %v8632, %v8631
        %v8641 = vrot.slane %v8631, 1
        %v8642 = vrot.slane %v8632, 1
        %v8643 = vsel %vm506, %v8641, %v8642
        %v8644 = vsel %vm506, %v8642, %v8641
        %v8645 = vmul.f32 %v8643, %v208
        %v8646 = vmul.f32 %v8644, %v209
        %v8647 = vpack.c.bf16 %v8646, %v8645
        %s8648 = scalar_lea.vmem %s1, 2688
        %v8649 = vld [vmem:[%s8648] sm:$0xf]
        %v8650 = vld [vmem:[%s8648 + $0x4] sm:$0xf]
        %v8651 = vld [vmem:[%s8648 + $0x8] sm:$0xf]
        %v8652 = vld [vmem:[%s8648 + $0xc] sm:$0xf]
        %v8653 = vld [vmem:[%s8648 + $0x10] sm:$0xf]
        %v8654 = vld [vmem:[%s8648 + $0x14] sm:$0xf]
        %v8655 = vld [vmem:[%s8648 + $0x18] sm:$0xf]
        %v8656 = vld [vmem:[%s8648 + $0x1c] sm:$0xf]
        %v8657 = vld [vmem:[%s8648 + $0x20] sm:$0xf]
        %v8658 = vld [vmem:[%s8648 + $0x24] sm:$0xf]
        %v8659 = vld [vmem:[%s8648 + $0x28] sm:$0xf]
        %v8660 = vld [vmem:[%s8648 + $0x2c] sm:$0xf]
        %v8661 = vld [vmem:[%s8648 + $0x30] sm:$0xf]
        %v8662 = vld [vmem:[%s8648 + $0x34] sm:$0xf]
        %v8663 = vld [vmem:[%s8648 + $0x38] sm:$0xf]
        %v8664 = vld [vmem:[%s8648 + $0x3c] sm:$0xf]
        %s8665 = scalar_lea.vmem %s1, 2752
        %v8666 = vld [vmem:[%s8665] sm:$0xf]
        %v8667 = vld [vmem:[%s8665 + $0x4] sm:$0xf]
        %v8668 = vld [vmem:[%s8665 + $0x8] sm:$0xf]
        %v8669 = vld [vmem:[%s8665 + $0xc] sm:$0xf]
        %v8670 = vld [vmem:[%s8665 + $0x10] sm:$0xf]
        %v8671 = vld [vmem:[%s8665 + $0x14] sm:$0xf]
        %v8672 = vld [vmem:[%s8665 + $0x18] sm:$0xf]
        %v8673 = vld [vmem:[%s8665 + $0x1c] sm:$0xf]
        %v8674 = vld [vmem:[%s8665 + $0x20] sm:$0xf]
        %v8675 = vld [vmem:[%s8665 + $0x24] sm:$0xf]
        %v8676 = vld [vmem:[%s8665 + $0x28] sm:$0xf]
        %v8677 = vld [vmem:[%s8665 + $0x2c] sm:$0xf]
        %v8678 = vld [vmem:[%s8665 + $0x30] sm:$0xf]
        %v8679 = vld [vmem:[%s8665 + $0x34] sm:$0xf]
        %v8680 = vld [vmem:[%s8665 + $0x38] sm:$0xf]
        %v8681 = vld [vmem:[%s8665 + $0x3c] sm:$0xf]
        %v8698 = vunpack.c.l.b16 %v8666
        %v8699 = vunpack.c.l.b16 %v8667
        %v8700 = vunpack.c.l.b16 %v8668
        %v8701 = vunpack.c.l.b16 %v8669
        %v8702 = vunpack.c.l.b16 %v8670
        %v8703 = vunpack.c.l.b16 %v8671
        %v8704 = vunpack.c.l.b16 %v8672
        %v8705 = vunpack.c.l.b16 %v8673
        %v8706 = vunpack.c.l.b16 %v8674
        %v8707 = vunpack.c.l.b16 %v8675
        %v8708 = vunpack.c.l.b16 %v8676
        %v8709 = vunpack.c.l.b16 %v8677
        %v8710 = vunpack.c.l.b16 %v8678
        %v8711 = vunpack.c.l.b16 %v8679
        %v8712 = vunpack.c.l.b16 %v8680
        %v8713 = vunpack.c.l.b16 %v8681
        %v8714 = vpack.c.b16 %v8699, %v8698
        %v8715 = vpack.c.b16 %v8701, %v8700
        %v8716 = vpack.c.b16 %v8703, %v8702
        %v8717 = vpack.c.b16 %v8705, %v8704
        %v8718 = vpack.c.b16 %v8707, %v8706
        %v8719 = vpack.c.b16 %v8709, %v8708
        %v8720 = vpack.c.b16 %v8711, %v8710
        %v8721 = vpack.c.b16 %v8713, %v8712
        %8730 = vmatprep.subr.bf16.mxu0 0
        %8731 = vmatpush1.bf16.msra.mxu0 %v8714
        %8732 = vmatprep.subr.bf16.mxu0 0
        %8733 = vmatpush1.bf16.msra.mxu0 %v8715
        %8734 = vmatprep.subr.bf16.mxu0 0
        %8735 = vmatpush1.bf16.msra.mxu0 %v8716
        %8736 = vmatprep.subr.bf16.mxu0 0
        %8737 = vmatpush1.bf16.msra.mxu0 %v8717
        %8738 = vmatprep.subr.bf16.mxu0 0
        %8739 = vmatpush1.bf16.msra.mxu0 %v8718
        %8740 = vmatprep.subr.bf16.mxu0 0
        %8741 = vmatpush1.bf16.msra.mxu0 %v8719
        %8742 = vmatprep.subr.bf16.mxu0 0
        %8743 = vmatpush1.bf16.msra.mxu0 %v8720
        %8744 = vmatprep.subr.bf16.mxu0 0
        %8745 = vmatpush1.bf16.msra.mxu0 %v8721
        %8746 = vmatprep.subr.bf16.mxu0 0
        %8747 = vmatpush1.bf16.msra.mxu0 0
        %8748 = vmatprep.subr.bf16.mxu0 0
        %8749 = vmatpush1.bf16.msra.mxu0 0
        %8750 = vmatprep.subr.bf16.mxu0 0
        %8751 = vmatpush1.bf16.msra.mxu0 0
        %8752 = vmatprep.subr.bf16.mxu0 0
        %8753 = vmatpush1.bf16.msra.mxu0 0
        %8754 = vmatprep.subr.bf16.mxu0 0
        %8755 = vmatpush1.bf16.msra.mxu0 0
        %8756 = vmatprep.subr.bf16.mxu0 0
        %8757 = vmatpush1.bf16.msra.mxu0 0
        %8758 = vmatprep.subr.bf16.mxu0 0
        %8759 = vmatpush1.bf16.msra.mxu0 0
        %8760 = vmatprep.subr.bf16.mxu0 0
        %8761 = vmatpush1.bf16.msra.mxu0 0
        %8762 = vmatprep.mubr.bf16.mxu0 0
        %8763 = vmatmul.mubr.bf16.gmra.mrb[0].mxu0 %v8640
        %v8764 = vpop.f32.mrb[0].mxu0
        %v8765 = vadd.f32 0.0, %v8764
        %v8766 = vpop.f32.mrb[0].mxu0
        %v8767 = vpop.f32.mrb[0].mxu0
        %v8768 = vadd.f32 0.0, %v8767
        %v8769 = vpop.f32.mrb[0].mxu0
        %8770 = vdwg.mxu0
        %v8787 = vunpack.c.l.b16 %v8649
        %v8788 = vunpack.c.l.b16 %v8650
        %v8789 = vunpack.c.l.b16 %v8651
        %v8790 = vunpack.c.l.b16 %v8652
        %v8791 = vunpack.c.l.b16 %v8653
        %v8792 = vunpack.c.l.b16 %v8654
        %v8793 = vunpack.c.l.b16 %v8655
        %v8794 = vunpack.c.l.b16 %v8656
        %v8795 = vunpack.c.l.b16 %v8657
        %v8796 = vunpack.c.l.b16 %v8658
        %v8797 = vunpack.c.l.b16 %v8659
        %v8798 = vunpack.c.l.b16 %v8660
        %v8799 = vunpack.c.l.b16 %v8661
        %v8800 = vunpack.c.l.b16 %v8662
        %v8801 = vunpack.c.l.b16 %v8663
        %v8802 = vunpack.c.l.b16 %v8664
        %v8803 = vpack.c.b16 %v8788, %v8787
        %v8804 = vpack.c.b16 %v8790, %v8789
        %v8805 = vpack.c.b16 %v8792, %v8791
        %v8806 = vpack.c.b16 %v8794, %v8793
        %v8807 = vpack.c.b16 %v8796, %v8795
        %v8808 = vpack.c.b16 %v8798, %v8797
        %v8809 = vpack.c.b16 %v8800, %v8799
        %v8810 = vpack.c.b16 %v8802, %v8801
        %8819 = vmatprep.subr.bf16.mxu0 0
        %8820 = vmatpush1.bf16.msra.mxu0 %v8803
        %8821 = vmatprep.subr.bf16.mxu0 0
        %8822 = vmatpush1.bf16.msra.mxu0 %v8804
        %8823 = vmatprep.subr.bf16.mxu0 0
        %8824 = vmatpush1.bf16.msra.mxu0 %v8805
        %8825 = vmatprep.subr.bf16.mxu0 0
        %8826 = vmatpush1.bf16.msra.mxu0 %v8806
        %8827 = vmatprep.subr.bf16.mxu0 0
        %8828 = vmatpush1.bf16.msra.mxu0 %v8807
        %8829 = vmatprep.subr.bf16.mxu0 0
        %8830 = vmatpush1.bf16.msra.mxu0 %v8808
        %8831 = vmatprep.subr.bf16.mxu0 0
        %8832 = vmatpush1.bf16.msra.mxu0 %v8809
        %8833 = vmatprep.subr.bf16.mxu0 0
        %8834 = vmatpush1.bf16.msra.mxu0 %v8810
        %8835 = vmatprep.subr.bf16.mxu0 0
        %8836 = vmatpush1.bf16.msra.mxu0 0
        %8837 = vmatprep.subr.bf16.mxu0 0
        %8838 = vmatpush1.bf16.msra.mxu0 0
        %8839 = vmatprep.subr.bf16.mxu0 0
        %8840 = vmatpush1.bf16.msra.mxu0 0
        %8841 = vmatprep.subr.bf16.mxu0 0
        %8842 = vmatpush1.bf16.msra.mxu0 0
        %8843 = vmatprep.subr.bf16.mxu0 0
        %8844 = vmatpush1.bf16.msra.mxu0 0
        %8845 = vmatprep.subr.bf16.mxu0 0
        %8846 = vmatpush1.bf16.msra.mxu0 0
        %8847 = vmatprep.subr.bf16.mxu0 0
        %8848 = vmatpush1.bf16.msra.mxu0 0
        %8849 = vmatprep.subr.bf16.mxu0 0
        %8850 = vmatpush1.bf16.msra.mxu0 0
        %8851 = vmatprep.mubr.bf16.mxu0 0
        %8852 = vmatmul.mubr.bf16.gmra.mrb[0].mxu0 %v8639
        %v8853 = vpop.f32.mrb[0].mxu0
        %v8854 = vadd.f32 %v8765, %v8853
        %v8855 = vpop.f32.mrb[0].mxu0
        %v8856 = vpop.f32.mrb[0].mxu0
        %v8857 = vadd.f32 %v8768, %v8856
        %v8858 = vpop.f32.mrb[0].mxu0
        %8859 = vdwg.mxu0
        %s8860 = scalar_lea.vmem %s1, 2816
        %v8861 = vld [vmem:[%s8860] sm:$0xf]
        %v8862 = vld [vmem:[%s8860 + $0x4] sm:$0xf]
        %v8863 = vld [vmem:[%s8860 + $0x8] sm:$0xf]
        %v8864 = vld [vmem:[%s8860 + $0xc] sm:$0xf]
        %v8865 = vld [vmem:[%s8860 + $0x10] sm:$0xf]
        %v8866 = vld [vmem:[%s8860 + $0x14] sm:$0xf]
        %v8867 = vld [vmem:[%s8860 + $0x18] sm:$0xf]
        %v8868 = vld [vmem:[%s8860 + $0x1c] sm:$0xf]
        %v8869 = vld [vmem:[%s8860 + $0x20] sm:$0xf]
        %v8870 = vld [vmem:[%s8860 + $0x24] sm:$0xf]
        %v8871 = vld [vmem:[%s8860 + $0x28] sm:$0xf]
        %v8872 = vld [vmem:[%s8860 + $0x2c] sm:$0xf]
        %v8873 = vld [vmem:[%s8860 + $0x30] sm:$0xf]
        %v8874 = vld [vmem:[%s8860 + $0x34] sm:$0xf]
        %v8875 = vld [vmem:[%s8860 + $0x38] sm:$0xf]
        %v8876 = vld [vmem:[%s8860 + $0x3c] sm:$0xf]
        %v8893 = vunpack.c.l.b16 %v8861
        %v8894 = vunpack.c.l.b16 %v8862
        %v8895 = vunpack.c.l.b16 %v8863
        %v8896 = vunpack.c.l.b16 %v8864
        %v8897 = vunpack.c.l.b16 %v8865
        %v8898 = vunpack.c.l.b16 %v8866
        %v8899 = vunpack.c.l.b16 %v8867
        %v8900 = vunpack.c.l.b16 %v8868
        %v8901 = vunpack.c.l.b16 %v8869
        %v8902 = vunpack.c.l.b16 %v8870
        %v8903 = vunpack.c.l.b16 %v8871
        %v8904 = vunpack.c.l.b16 %v8872
        %v8905 = vunpack.c.l.b16 %v8873
        %v8906 = vunpack.c.l.b16 %v8874
        %v8907 = vunpack.c.l.b16 %v8875
        %v8908 = vunpack.c.l.b16 %v8876
        %v8909 = vpack.c.b16 %v8894, %v8893
        %v8910 = vpack.c.b16 %v8896, %v8895
        %v8911 = vpack.c.b16 %v8898, %v8897
        %v8912 = vpack.c.b16 %v8900, %v8899
        %v8913 = vpack.c.b16 %v8902, %v8901
        %v8914 = vpack.c.b16 %v8904, %v8903
        %v8915 = vpack.c.b16 %v8906, %v8905
        %v8916 = vpack.c.b16 %v8908, %v8907
        %8925 = vmatprep.subr.bf16.mxu0 0
        %8926 = vmatpush1.bf16.msra.mxu0 %v8909
        %8927 = vmatprep.subr.bf16.mxu0 0
        %8928 = vmatpush1.bf16.msra.mxu0 %v8910
        %8929 = vmatprep.subr.bf16.mxu0 0
        %8930 = vmatpush1.bf16.msra.mxu0 %v8911
        %8931 = vmatprep.subr.bf16.mxu0 0
        %8932 = vmatpush1.bf16.msra.mxu0 %v8912
        %8933 = vmatprep.subr.bf16.mxu0 0
        %8934 = vmatpush1.bf16.msra.mxu0 %v8913
        %8935 = vmatprep.subr.bf16.mxu0 0
        %8936 = vmatpush1.bf16.msra.mxu0 %v8914
        %8937 = vmatprep.subr.bf16.mxu0 0
        %8938 = vmatpush1.bf16.msra.mxu0 %v8915
        %8939 = vmatprep.subr.bf16.mxu0 0
        %8940 = vmatpush1.bf16.msra.mxu0 %v8916
        %8941 = vmatprep.subr.bf16.mxu0 0
        %8942 = vmatpush1.bf16.msra.mxu0 0
        %8943 = vmatprep.subr.bf16.mxu0 0
        %8944 = vmatpush1.bf16.msra.mxu0 0
        %8945 = vmatprep.subr.bf16.mxu0 0
        %8946 = vmatpush1.bf16.msra.mxu0 0
        %8947 = vmatprep.subr.bf16.mxu0 0
        %8948 = vmatpush1.bf16.msra.mxu0 0
        %8949 = vmatprep.subr.bf16.mxu0 0
        %8950 = vmatpush1.bf16.msra.mxu0 0
        %8951 = vmatprep.subr.bf16.mxu0 0
        %8952 = vmatpush1.bf16.msra.mxu0 0
        %8953 = vmatprep.subr.bf16.mxu0 0
        %8954 = vmatpush1.bf16.msra.mxu0 0
        %8955 = vmatprep.subr.bf16.mxu0 0
        %8956 = vmatpush1.bf16.msra.mxu0 0
        %8957 = vmatprep.mubr.bf16.mxu0 0
        %8958 = vmatmul.mubr.bf16.gmra.mrb[0].mxu0 %v8647
        %v8959 = vpop.f32.mrb[0].mxu0
        %v8960 = vadd.f32 0.0, %v8959
        %v8961 = vpop.f32.mrb[0].mxu0
        %v8962 = vpop.f32.mrb[0].mxu0
        %v8963 = vadd.f32 0.0, %v8962
        %v8964 = vpop.f32.mrb[0].mxu0
        %8965 = vdwg.mxu0
        %v8966 = vadd.f32 %v8854, %v8960
        %v8967 = vadd.f32 %v8857, %v8963
        %v8968 = vld [vmem:[%s3 + $0x12] sm:$0x1]
        %v8969 = vlaneseq
        %v8970 = vshrl.u32 %v8969, 7
        %v8971 = vsub.s32 0, %v8970
        %v8972 = vrot.slane %v8968, %v8971
        %v8973 = vadd.f32 %v8966, %v8972
        %v8974 = vadd.f32 %v8967, %v8972
        %v8975 = vmax.f32 %v8973, 0.0
        %v8976 = vmax.f32 %v8974, 0.0
        %v8977 = vrot.slane %v8975, 7
        %v8978 = vrot.slane %v8976, 7
        %v8979 = vsel %vm449, %v8977, %v8978
        %v8980 = vsel %vm449, %v8978, %v8977
        %v8981 = vmul.f32 %v8980, %v204
        %v8982 = vmul.f32 %v8979, %v205
        %v8983 = vpack.c.bf16 %v8982, %v8981
        %v8984 = vpack.c.bf16 %v8976, %v8975
        %v8985 = vrot.slane %v8975, 1
        %v8986 = vrot.slane %v8976, 1
        %v8987 = vsel %vm506, %v8985, %v8986
        %v8988 = vsel %vm506, %v8986, %v8985
        %v8989 = vmul.f32 %v8987, %v208
        %v8990 = vmul.f32 %v8988, %v209
        %v8991 = vpack.c.bf16 %v8990, %v8989
        %s8992 = scalar_lea.vmem %s1, 2880
        %v8993 = vld [vmem:[%s8992] sm:$0xf]
        %v8994 = vld [vmem:[%s8992 + $0x4] sm:$0xf]
        %v8995 = vld [vmem:[%s8992 + $0x8] sm:$0xf]
        %v8996 = vld [vmem:[%s8992 + $0xc] sm:$0xf]
        %v8997 = vld [vmem:[%s8992 + $0x10] sm:$0xf]
        %v8998 = vld [vmem:[%s8992 + $0x14] sm:$0xf]
        %v8999 = vld [vmem:[%s8992 + $0x18] sm:$0xf]
        %v9000 = vld [vmem:[%s8992 + $0x1c] sm:$0xf]
        %v9001 = vld [vmem:[%s8992 + $0x20] sm:$0xf]
        %v9002 = vld [vmem:[%s8992 + $0x24] sm:$0xf]
        %v9003 = vld [vmem:[%s8992 + $0x28] sm:$0xf]
        %v9004 = vld [vmem:[%s8992 + $0x2c] sm:$0xf]
        %v9005 = vld [vmem:[%s8992 + $0x30] sm:$0xf]
        %v9006 = vld [vmem:[%s8992 + $0x34] sm:$0xf]
        %v9007 = vld [vmem:[%s8992 + $0x38] sm:$0xf]
        %v9008 = vld [vmem:[%s8992 + $0x3c] sm:$0xf]
        %s9009 = scalar_lea.vmem %s1, 2944
        %v9010 = vld [vmem:[%s9009] sm:$0xf]
        %v9011 = vld [vmem:[%s9009 + $0x4] sm:$0xf]
        %v9012 = vld [vmem:[%s9009 + $0x8] sm:$0xf]
        %v9013 = vld [vmem:[%s9009 + $0xc] sm:$0xf]
        %v9014 = vld [vmem:[%s9009 + $0x10] sm:$0xf]
        %v9015 = vld [vmem:[%s9009 + $0x14] sm:$0xf]
        %v9016 = vld [vmem:[%s9009 + $0x18] sm:$0xf]
        %v9017 = vld [vmem:[%s9009 + $0x1c] sm:$0xf]
        %v9018 = vld [vmem:[%s9009 + $0x20] sm:$0xf]
        %v9019 = vld [vmem:[%s9009 + $0x24] sm:$0xf]
        %v9020 = vld [vmem:[%s9009 + $0x28] sm:$0xf]
        %v9021 = vld [vmem:[%s9009 + $0x2c] sm:$0xf]
        %v9022 = vld [vmem:[%s9009 + $0x30] sm:$0xf]
        %v9023 = vld [vmem:[%s9009 + $0x34] sm:$0xf]
        %v9024 = vld [vmem:[%s9009 + $0x38] sm:$0xf]
        %v9025 = vld [vmem:[%s9009 + $0x3c] sm:$0xf]
        %v9042 = vunpack.c.l.b16 %v9010
        %v9043 = vunpack.c.l.b16 %v9011
        %v9044 = vunpack.c.l.b16 %v9012
        %v9045 = vunpack.c.l.b16 %v9013
        %v9046 = vunpack.c.l.b16 %v9014
        %v9047 = vunpack.c.l.b16 %v9015
        %v9048 = vunpack.c.l.b16 %v9016
        %v9049 = vunpack.c.l.b16 %v9017
        %v9050 = vunpack.c.l.b16 %v9018
        %v9051 = vunpack.c.l.b16 %v9019
        %v9052 = vunpack.c.l.b16 %v9020
        %v9053 = vunpack.c.l.b16 %v9021
        %v9054 = vunpack.c.l.b16 %v9022
        %v9055 = vunpack.c.l.b16 %v9023
        %v9056 = vunpack.c.l.b16 %v9024
        %v9057 = vunpack.c.l.b16 %v9025
        %v9058 = vpack.c.b16 %v9043, %v9042
        %v9059 = vpack.c.b16 %v9045, %v9044
        %v9060 = vpack.c.b16 %v9047, %v9046
        %v9061 = vpack.c.b16 %v9049, %v9048
        %v9062 = vpack.c.b16 %v9051, %v9050
        %v9063 = vpack.c.b16 %v9053, %v9052
        %v9064 = vpack.c.b16 %v9055, %v9054
        %v9065 = vpack.c.b16 %v9057, %v9056
        %9074 = vmatprep.subr.bf16.mxu0 0
        %9075 = vmatpush1.bf16.msra.mxu0 %v9058
        %9076 = vmatprep.subr.bf16.mxu0 0
        %9077 = vmatpush1.bf16.msra.mxu0 %v9059
        %9078 = vmatprep.subr.bf16.mxu0 0
        %9079 = vmatpush1.bf16.msra.mxu0 %v9060
        %9080 = vmatprep.subr.bf16.mxu0 0
        %9081 = vmatpush1.bf16.msra.mxu0 %v9061
        %9082 = vmatprep.subr.bf16.mxu0 0
        %9083 = vmatpush1.bf16.msra.mxu0 %v9062
        %9084 = vmatprep.subr.bf16.mxu0 0
        %9085 = vmatpush1.bf16.msra.mxu0 %v9063
        %9086 = vmatprep.subr.bf16.mxu0 0
        %9087 = vmatpush1.bf16.msra.mxu0 %v9064
        %9088 = vmatprep.subr.bf16.mxu0 0
        %9089 = vmatpush1.bf16.msra.mxu0 %v9065
        %9090 = vmatprep.subr.bf16.mxu0 0
        %9091 = vmatpush1.bf16.msra.mxu0 0
        %9092 = vmatprep.subr.bf16.mxu0 0
        %9093 = vmatpush1.bf16.msra.mxu0 0
        %9094 = vmatprep.subr.bf16.mxu0 0
        %9095 = vmatpush1.bf16.msra.mxu0 0
        %9096 = vmatprep.subr.bf16.mxu0 0
        %9097 = vmatpush1.bf16.msra.mxu0 0
        %9098 = vmatprep.subr.bf16.mxu0 0
        %9099 = vmatpush1.bf16.msra.mxu0 0
        %9100 = vmatprep.subr.bf16.mxu0 0
        %9101 = vmatpush1.bf16.msra.mxu0 0
        %9102 = vmatprep.subr.bf16.mxu0 0
        %9103 = vmatpush1.bf16.msra.mxu0 0
        %9104 = vmatprep.subr.bf16.mxu0 0
        %9105 = vmatpush1.bf16.msra.mxu0 0
        %9106 = vmatprep.mubr.bf16.mxu0 0
        %9107 = vmatmul.mubr.bf16.gmra.mrb[0].mxu0 %v8984
        %v9108 = vpop.f32.mrb[0].mxu0
        %v9109 = vadd.f32 0.0, %v9108
        %v9110 = vpop.f32.mrb[0].mxu0
        %v9111 = vpop.f32.mrb[0].mxu0
        %v9112 = vadd.f32 0.0, %v9111
        %v9113 = vpop.f32.mrb[0].mxu0
        %9114 = vdwg.mxu0
        %v9131 = vunpack.c.l.b16 %v8993
        %v9132 = vunpack.c.l.b16 %v8994
        %v9133 = vunpack.c.l.b16 %v8995
        %v9134 = vunpack.c.l.b16 %v8996
        %v9135 = vunpack.c.l.b16 %v8997
        %v9136 = vunpack.c.l.b16 %v8998
        %v9137 = vunpack.c.l.b16 %v8999
        %v9138 = vunpack.c.l.b16 %v9000
        %v9139 = vunpack.c.l.b16 %v9001
        %v9140 = vunpack.c.l.b16 %v9002
        %v9141 = vunpack.c.l.b16 %v9003
        %v9142 = vunpack.c.l.b16 %v9004
        %v9143 = vunpack.c.l.b16 %v9005
        %v9144 = vunpack.c.l.b16 %v9006
        %v9145 = vunpack.c.l.b16 %v9007
        %v9146 = vunpack.c.l.b16 %v9008
        %v9147 = vpack.c.b16 %v9132, %v9131
        %v9148 = vpack.c.b16 %v9134, %v9133
        %v9149 = vpack.c.b16 %v9136, %v9135
        %v9150 = vpack.c.b16 %v9138, %v9137
        %v9151 = vpack.c.b16 %v9140, %v9139
        %v9152 = vpack.c.b16 %v9142, %v9141
        %v9153 = vpack.c.b16 %v9144, %v9143
        %v9154 = vpack.c.b16 %v9146, %v9145
        %9163 = vmatprep.subr.bf16.mxu0 0
        %9164 = vmatpush1.bf16.msra.mxu0 %v9147
        %9165 = vmatprep.subr.bf16.mxu0 0
        %9166 = vmatpush1.bf16.msra.mxu0 %v9148
        %9167 = vmatprep.subr.bf16.mxu0 0
        %9168 = vmatpush1.bf16.msra.mxu0 %v9149
        %9169 = vmatprep.subr.bf16.mxu0 0
        %9170 = vmatpush1.bf16.msra.mxu0 %v9150
        %9171 = vmatprep.subr.bf16.mxu0 0
        %9172 = vmatpush1.bf16.msra.mxu0 %v9151
        %9173 = vmatprep.subr.bf16.mxu0 0
        %9174 = vmatpush1.bf16.msra.mxu0 %v9152
        %9175 = vmatprep.subr.bf16.mxu0 0
        %9176 = vmatpush1.bf16.msra.mxu0 %v9153
        %9177 = vmatprep.subr.bf16.mxu0 0
        %9178 = vmatpush1.bf16.msra.mxu0 %v9154
        %9179 = vmatprep.subr.bf16.mxu0 0
        %9180 = vmatpush1.bf16.msra.mxu0 0
        %9181 = vmatprep.subr.bf16.mxu0 0
        %9182 = vmatpush1.bf16.msra.mxu0 0
        %9183 = vmatprep.subr.bf16.mxu0 0
        %9184 = vmatpush1.bf16.msra.mxu0 0
        %9185 = vmatprep.subr.bf16.mxu0 0
        %9186 = vmatpush1.bf16.msra.mxu0 0
        %9187 = vmatprep.subr.bf16.mxu0 0
        %9188 = vmatpush1.bf16.msra.mxu0 0
        %9189 = vmatprep.subr.bf16.mxu0 0
        %9190 = vmatpush1.bf16.msra.mxu0 0
        %9191 = vmatprep.subr.bf16.mxu0 0
        %9192 = vmatpush1.bf16.msra.mxu0 0
        %9193 = vmatprep.subr.bf16.mxu0 0
        %9194 = vmatpush1.bf16.msra.mxu0 0
        %9195 = vmatprep.mubr.bf16.mxu0 0
        %9196 = vmatmul.mubr.bf16.gmra.mrb[0].mxu0 %v8983
        %v9197 = vpop.f32.mrb[0].mxu0
        %v9198 = vadd.f32 %v9109, %v9197
        %v9199 = vpop.f32.mrb[0].mxu0
        %v9200 = vpop.f32.mrb[0].mxu0
        %v9201 = vadd.f32 %v9112, %v9200
        %v9202 = vpop.f32.mrb[0].mxu0
        %9203 = vdwg.mxu0
        %s9204 = scalar_lea.vmem %s1, 3008
        %v9205 = vld [vmem:[%s9204] sm:$0xf]
        %v9206 = vld [vmem:[%s9204 + $0x4] sm:$0xf]
        %v9207 = vld [vmem:[%s9204 + $0x8] sm:$0xf]
        %v9208 = vld [vmem:[%s9204 + $0xc] sm:$0xf]
        %v9209 = vld [vmem:[%s9204 + $0x10] sm:$0xf]
        %v9210 = vld [vmem:[%s9204 + $0x14] sm:$0xf]
        %v9211 = vld [vmem:[%s9204 + $0x18] sm:$0xf]
        %v9212 = vld [vmem:[%s9204 + $0x1c] sm:$0xf]
        %v9213 = vld [vmem:[%s9204 + $0x20] sm:$0xf]
        %v9214 = vld [vmem:[%s9204 + $0x24] sm:$0xf]
        %v9215 = vld [vmem:[%s9204 + $0x28] sm:$0xf]
        %v9216 = vld [vmem:[%s9204 + $0x2c] sm:$0xf]
        %v9217 = vld [vmem:[%s9204 + $0x30] sm:$0xf]
        %v9218 = vld [vmem:[%s9204 + $0x34] sm:$0xf]
        %v9219 = vld [vmem:[%s9204 + $0x38] sm:$0xf]
        %v9220 = vld [vmem:[%s9204 + $0x3c] sm:$0xf]
        %v9237 = vunpack.c.l.b16 %v9205
        %v9238 = vunpack.c.l.b16 %v9206
        %v9239 = vunpack.c.l.b16 %v9207
        %v9240 = vunpack.c.l.b16 %v9208
        %v9241 = vunpack.c.l.b16 %v9209
        %v9242 = vunpack.c.l.b16 %v9210
        %v9243 = vunpack.c.l.b16 %v9211
        %v9244 = vunpack.c.l.b16 %v9212
        %v9245 = vunpack.c.l.b16 %v9213
        %v9246 = vunpack.c.l.b16 %v9214
        %v9247 = vunpack.c.l.b16 %v9215
        %v9248 = vunpack.c.l.b16 %v9216
        %v9249 = vunpack.c.l.b16 %v9217
        %v9250 = vunpack.c.l.b16 %v9218
        %v9251 = vunpack.c.l.b16 %v9219
        %v9252 = vunpack.c.l.b16 %v9220
        %v9253 = vpack.c.b16 %v9238, %v9237
        %v9254 = vpack.c.b16 %v9240, %v9239
        %v9255 = vpack.c.b16 %v9242, %v9241
        %v9256 = vpack.c.b16 %v9244, %v9243
        %v9257 = vpack.c.b16 %v9246, %v9245
        %v9258 = vpack.c.b16 %v9248, %v9247
        %v9259 = vpack.c.b16 %v9250, %v9249
        %v9260 = vpack.c.b16 %v9252, %v9251
        %9269 = vmatprep.subr.bf16.mxu0 0
        %9270 = vmatpush1.bf16.msra.mxu0 %v9253
        %9271 = vmatprep.subr.bf16.mxu0 0
        %9272 = vmatpush1.bf16.msra.mxu0 %v9254
        %9273 = vmatprep.subr.bf16.mxu0 0
        %9274 = vmatpush1.bf16.msra.mxu0 %v9255
        %9275 = vmatprep.subr.bf16.mxu0 0
        %9276 = vmatpush1.bf16.msra.mxu0 %v9256
        %9277 = vmatprep.subr.bf16.mxu0 0
        %9278 = vmatpush1.bf16.msra.mxu0 %v9257
        %9279 = vmatprep.subr.bf16.mxu0 0
        %9280 = vmatpush1.bf16.msra.mxu0 %v9258
        %9281 = vmatprep.subr.bf16.mxu0 0
        %9282 = vmatpush1.bf16.msra.mxu0 %v9259
        %9283 = vmatprep.subr.bf16.mxu0 0
        %9284 = vmatpush1.bf16.msra.mxu0 %v9260
        %9285 = vmatprep.subr.bf16.mxu0 0
        %9286 = vmatpush1.bf16.msra.mxu0 0
        %9287 = vmatprep.subr.bf16.mxu0 0
        %9288 = vmatpush1.bf16.msra.mxu0 0
        %9289 = vmatprep.subr.bf16.mxu0 0
        %9290 = vmatpush1.bf16.msra.mxu0 0
        %9291 = vmatprep.subr.bf16.mxu0 0
        %9292 = vmatpush1.bf16.msra.mxu0 0
        %9293 = vmatprep.subr.bf16.mxu0 0
        %9294 = vmatpush1.bf16.msra.mxu0 0
        %9295 = vmatprep.subr.bf16.mxu0 0
        %9296 = vmatpush1.bf16.msra.mxu0 0
        %9297 = vmatprep.subr.bf16.mxu0 0
        %9298 = vmatpush1.bf16.msra.mxu0 0
        %9299 = vmatprep.subr.bf16.mxu0 0
        %9300 = vmatpush1.bf16.msra.mxu0 0
        %9301 = vmatprep.mubr.bf16.mxu0 0
        %9302 = vmatmul.mubr.bf16.gmra.mrb[0].mxu0 %v8991
        %v9303 = vpop.f32.mrb[0].mxu0
        %v9304 = vadd.f32 0.0, %v9303
        %v9305 = vpop.f32.mrb[0].mxu0
        %v9306 = vpop.f32.mrb[0].mxu0
        %v9307 = vadd.f32 0.0, %v9306
        %v9308 = vpop.f32.mrb[0].mxu0
        %9309 = vdwg.mxu0
        %v9310 = vadd.f32 %v9198, %v9304
        %v9311 = vadd.f32 %v9201, %v9307
        %v9312 = vld [vmem:[%s3 + $0x13] sm:$0x1]
        %v9313 = vlaneseq
        %v9314 = vshrl.u32 %v9313, 7
        %v9315 = vsub.s32 0, %v9314
        %v9316 = vrot.slane %v9312, %v9315
        %v9317 = vadd.f32 %v9310, %v9316
        %v9318 = vadd.f32 %v9311, %v9316
        %v9319 = vadd.f32 %v9317, %v8631
        %v9320 = vadd.f32 %v9318, %v8632
        %v9321 = vmax.f32 %v9319, 0.0
        %v9322 = vmax.f32 %v9320, 0.0
        %v9323 = vpack.c.bf16 %v9322, %v9321
        %vm9324 = vcmask 130048
        %v9326 = vsel %vm9324, %v400, 0
        %9328 = vmatprep.subr.bf16.mxu0 0
        %9329 = vmatpush1.bf16.msra.mxu0 %v9323
        %9330 = vmatprep.subr.bf16.mxu0 0
        %9331 = vmatpush1.bf16.msra.mxu0 0
        %9332 = vmatprep.subr.bf16.mxu0 0
        %9333 = vmatpush1.bf16.msra.mxu0 0
        %9334 = vmatprep.subr.bf16.mxu0 0
        %9335 = vmatpush1.bf16.msra.mxu0 0
        %9336 = vmatprep.subr.bf16.mxu0 0
        %9337 = vmatpush1.bf16.msra.mxu0 0
        %9338 = vmatprep.subr.bf16.mxu0 0
        %9339 = vmatpush1.bf16.msra.mxu0 0
        %9340 = vmatprep.subr.bf16.mxu0 0
        %9341 = vmatpush1.bf16.msra.mxu0 0
        %9342 = vmatprep.subr.bf16.mxu0 0
        %9343 = vmatpush1.bf16.msra.mxu0 0
        %9344 = vmatprep.subr.bf16.mxu0 0
        %9345 = vmatpush1.bf16.msra.mxu0 0
        %9346 = vmatprep.subr.bf16.mxu0 0
        %9347 = vmatpush1.bf16.msra.mxu0 0
        %9348 = vmatprep.subr.bf16.mxu0 0
        %9349 = vmatpush1.bf16.msra.mxu0 0
        %9350 = vmatprep.subr.bf16.mxu0 0
        %9351 = vmatpush1.bf16.msra.mxu0 0
        %9352 = vmatprep.subr.bf16.mxu0 0
        %9353 = vmatpush1.bf16.msra.mxu0 0
        %9354 = vmatprep.subr.bf16.mxu0 0
        %9355 = vmatpush1.bf16.msra.mxu0 0
        %9356 = vmatprep.subr.bf16.mxu0 0
        %9357 = vmatpush1.bf16.msra.mxu0 0
        %9358 = vmatprep.subr.bf16.mxu0 0
        %9359 = vmatpush1.bf16.msra.mxu0 0
        %9360 = vmatprep.mubr.bf16.mxu0 0
        %9361 = vmatmul.mubr.bf16.gmra.mrb[0].mxu0 %v9326
        %v9362 = vpop.f32.mrb[0].mxu0
        %v9363 = vadd.f32 0.0, %v9362
        %v9364 = vpop.f32.mrb[0].mxu0
        %v9365 = vpop.f32.mrb[0].mxu0
        %v9366 = vpop.f32.mrb[0].mxu0
        %9367 = vdwg.mxu0
        %v9368 = vpack.c.bf16 %v9363, %v9363
        %s9369 = scalar_lea.vmem %s1, 3072
        %v9370 = vld [vmem:[%s9369] sm:$0xf]
        %v9371 = vld [vmem:[%s9369 + $0x4] sm:$0xf]
        %v9372 = vld [vmem:[%s9369 + $0x8] sm:$0xf]
        %v9373 = vld [vmem:[%s9369 + $0xc] sm:$0xf]
        %v9374 = vld [vmem:[%s9369 + $0x10] sm:$0xf]
        %v9375 = vld [vmem:[%s9369 + $0x14] sm:$0xf]
        %v9376 = vld [vmem:[%s9369 + $0x18] sm:$0xf]
        %v9377 = vld [vmem:[%s9369 + $0x1c] sm:$0xf]
        %v9378 = vld [vmem:[%s9369 + $0x20] sm:$0xf]
        %v9379 = vld [vmem:[%s9369 + $0x24] sm:$0xf]
        %v9380 = vld [vmem:[%s9369 + $0x28] sm:$0xf]
        %v9381 = vld [vmem:[%s9369 + $0x2c] sm:$0xf]
        %v9382 = vld [vmem:[%s9369 + $0x30] sm:$0xf]
        %v9383 = vld [vmem:[%s9369 + $0x34] sm:$0xf]
        %v9384 = vld [vmem:[%s9369 + $0x38] sm:$0xf]
        %v9385 = vld [vmem:[%s9369 + $0x3c] sm:$0xf]
        %v9386 = vld [vmem:[%s3 + $0x14] sm:$0x1]
        %v9387 = vlaneseq
        %v9388 = vshrl.u32 %v9387, 7
        %v9389 = vsub.s32 0, %v9388
        %v9390 = vrot.slane %v9386, %v9389
        %v9407 = vunpack.c.l.b16 %v9370
        %v9408 = vunpack.c.l.b16 %v9371
        %v9409 = vunpack.c.l.b16 %v9372
        %v9410 = vunpack.c.l.b16 %v9373
        %v9411 = vunpack.c.l.b16 %v9374
        %v9412 = vunpack.c.l.b16 %v9375
        %v9413 = vunpack.c.l.b16 %v9376
        %v9414 = vunpack.c.l.b16 %v9377
        %v9415 = vunpack.c.l.b16 %v9378
        %v9416 = vunpack.c.l.b16 %v9379
        %v9417 = vunpack.c.l.b16 %v9380
        %v9418 = vunpack.c.l.b16 %v9381
        %v9419 = vunpack.c.l.b16 %v9382
        %v9420 = vunpack.c.l.b16 %v9383
        %v9421 = vunpack.c.l.b16 %v9384
        %v9422 = vunpack.c.l.b16 %v9385
        %v9423 = vpack.c.b16 %v9408, %v9407
        %v9424 = vpack.c.b16 %v9410, %v9409
        %v9425 = vpack.c.b16 %v9412, %v9411
        %v9426 = vpack.c.b16 %v9414, %v9413
        %v9427 = vpack.c.b16 %v9416, %v9415
        %v9428 = vpack.c.b16 %v9418, %v9417
        %v9429 = vpack.c.b16 %v9420, %v9419
        %v9430 = vpack.c.b16 %v9422, %v9421
        %9439 = vmatprep.subr.bf16.mxu0 0
        %9440 = vmatpush1.bf16.msra.mxu0 %v9423
        %9441 = vmatprep.subr.bf16.mxu0 0
        %9442 = vmatpush1.bf16.msra.mxu0 %v9424
        %9443 = vmatprep.subr.bf16.mxu0 0
        %9444 = vmatpush1.bf16.msra.mxu0 %v9425
        %9445 = vmatprep.subr.bf16.mxu0 0
        %9446 = vmatpush1.bf16.msra.mxu0 %v9426
        %9447 = vmatprep.subr.bf16.mxu0 0
        %9448 = vmatpush1.bf16.msra.mxu0 %v9427
        %9449 = vmatprep.subr.bf16.mxu0 0
        %9450 = vmatpush1.bf16.msra.mxu0 %v9428
        %9451 = vmatprep.subr.bf16.mxu0 0
        %9452 = vmatpush1.bf16.msra.mxu0 %v9429
        %9453 = vmatprep.subr.bf16.mxu0 0
        %9454 = vmatpush1.bf16.msra.mxu0 %v9430
        %9455 = vmatprep.subr.bf16.mxu0 0
        %9456 = vmatpush1.bf16.msra.mxu0 0
        %9457 = vmatprep.subr.bf16.mxu0 0
        %9458 = vmatpush1.bf16.msra.mxu0 0
        %9459 = vmatprep.subr.bf16.mxu0 0
        %9460 = vmatpush1.bf16.msra.mxu0 0
        %9461 = vmatprep.subr.bf16.mxu0 0
        %9462 = vmatpush1.bf16.msra.mxu0 0
        %9463 = vmatprep.subr.bf16.mxu0 0
        %9464 = vmatpush1.bf16.msra.mxu0 0
        %9465 = vmatprep.subr.bf16.mxu0 0
        %9466 = vmatpush1.bf16.msra.mxu0 0
        %9467 = vmatprep.subr.bf16.mxu0 0
        %9468 = vmatpush1.bf16.msra.mxu0 0
        %9469 = vmatprep.subr.bf16.mxu0 0
        %9470 = vmatpush1.bf16.msra.mxu0 0
        %9471 = vmatprep.mubr.bf16.mxu0 0
        %9472 = vmatmul.mubr.bf16.gmra.mrb[0].mxu0 %v9368
        %v9473 = vpop.f32.mrb[0].mxu0
        %v9474 = vadd.f32 %v9390, %v9473
        %v9475 = vpop.f32.mrb[0].mxu0
        %v9476 = vpop.f32.mrb[0].mxu0
        %v9477 = vpop.f32.mrb[0].mxu0
        %9478 = vdwg.mxu0
        %9479 = vst [vmem:[%s190] sm:$0xff] %v9474
        %s9480 = sand.u32 %s115, 1
        %s9481 = scalar_lea.sflag [#allocation3], %s9480
        %s9482 = sand.u32 %s115, 1
        %s9483 = smul.addr %s9482, 8
        %s9484 = scalar_lea.vmem [#allocation2], %s9483
        // Predicated region
        $region37: #{_lambda_.1} parent=35 // pred_check
          %p9485 = pneg %p125
        $region38: #{_lambda_.1} parent=35 // pred_check_branch
          %9487 = sbr.rel (%p9485) target = $region40
        $region39: #{_lambda_.1} parent=35 // pred_region
          %s9489 = ssub.s32 128, 128
          %9490 = vsyncadd %s9481, %s9489
          %s9491 = smul.addr %s18, 128
          %s9492 = scalar_lea.hbm %s4, %s9491
          %s9494 = sshll.u32 %s9484, 4
          %s9495 = int_to_ptr.vmem [resolvable:$true] %s9494
          %9497 = dma.vmem_to_hbm [thread:$0]  %s9495, 128, %s9492, %s9481
        $region40: #{_lambda_.1} parent=35 // pred_fallthru
          _
      $region36: #{_lambda_.1} parent=5 // pred_fallthru
        _
      %p9498 = scmp.le.s32.totalorder 2, %s13
      // Predicated region
      $region41: #{_lambda_.1} parent=5 // pred_check
        %p9499 = pneg %p9498
      $region42: #{_lambda_.1} parent=5 // pred_check_branch
        %9501 = sbr.rel (%p9499) target = $region44
      $region43: #{_lambda_.1} parent=5 // pred_region
        %s9502 = ssub.s32 %s13, 2
        // Predicated region
        $region45: #{_lambda_.1} parent=43 // pred_check
          %p9503 = pneg %p131
        $region46: #{_lambda_.1} parent=43 // pred_check_branch
          %9505 = sbr.rel (%p9503) target = $region48
        $region47: #{_lambda_.1} parent=43 // pred_region
          %s9506 = sand.u32 %s116, 1
          %s9507 = scalar_lea.sflag [#allocation3], %s9506
          %s9508 = sand.u32 %s116, 1
          %s9509 = smul.addr %s9508, 8
          %s9510 = scalar_lea.vmem [#allocation2], %s9509
          %9511 = dma.done %s9507, 128
        $region48: #{_lambda_.1} parent=43 // pred_fallthru
          _
      $region44: #{_lambda_.1} parent=5 // pred_fallthru
        _
    $region6: #{_lambda_.1} parent=1 // loop_footer
      %s17 = sadd.s32 1, %s13
    $region7: #{_lambda_.1} parent=1 // loop_footer_branch
      %12 = sbr.rel target = $region3
    $region8: #{_lambda_.1} parent=1 // loop_exit
      _
    %9512 = vsyncpa [#allocation3], 1
    %s9513 = scalar_lea.sflag [#allocation3], 1
    %9514 = vsyncpa %s9513, 1

</llo_original>
